<compile_context>
chip_gen: v6e
topology: v6e:2x2x1
jax: 0.10.0
libtpu: 0.0.40
codegen_flags: <defaults>
</compile_context>

<pallas_src>
import functools

import jax
import jax.numpy as jnp
from jax.experimental import pallas as pl
from jax.experimental.pallas import tpu as pltpu

EPS = 1e-5
LANE = 128

_HAS_BUFFERED = hasattr(pl, "Buffered")


def _round_up(x, m):
    return (x + m - 1) // m * m


def _vmem_limit(block_bytes):
    # explicit per-call VMEM budget (review #9); clamp to a safe range
    return int(min(64 * 2 ** 20, max(32 * 2 ** 20, 2 * block_bytes)))


def _const_spec(shape, index_map):
    """BlockSpec for grid-invariant operands (weights / bias): single-buffered."""
    if _HAS_BUFFERED:
        try:
            return pl.BlockSpec(shape, index_map, pipeline_mode=pl.Buffered(1))
        except TypeError:
            pass
    return pl.BlockSpec(shape, index_map)


def _taps3():
    """3x3x3 tap order, centre tap first (so the fused shortcut reads lanes [0, Cin))."""
    centre = (1, 1, 1)
    taps = [centre]
    for kd in range(3):
        for kh in range(3):
            for kw in range(3):
                if (kd, kh, kw) != centre:
                    taps.append((kd, kh, kw))
    return taps


# -----------------------------------------------------------------------------------
# Kernel 1: conv1 + bn1 + relu1, fused with the shortcut branch (1x1 conv+BN / identity)
# -----------------------------------------------------------------------------------
def _front_kernel(patch_ref, w1_ref, b1_ref, ws_ref, bs_ref, y1_ref, res_ref, *,
                  wrow, wo, m2, lplane, cin, d_real):
    dp = pl.program_id(1)                            # dp==0 / dp==d_real+1: conv2 depth halos
    patch = patch_ref[0, 0, :, :]                    # (M2, 27*Cin) bf16

    # one big MXU dot (K = 27*Cin), f32 accumulation
    y = jnp.dot(patch, w1_ref[...], preferred_element_type=jnp.float32)
    y = jnp.maximum(y + b1_ref[...], 0.0)

    # zero the W-halo / pitch-junk columns and the depth-halo planes
    col = jax.lax.broadcasted_iota(jnp.int32, (m2, 1), 0) % wrow
    valid = jnp.logical_and(col < wo, jnp.logical_and(dp >= 1, dp <= d_real))
    y = jnp.where(valid, y, 0.0).astype(y1_ref.dtype)

    cp = y1_ref.shape[-1]
    # conv2-ready zero-halo pitched plane: zeros everywhere, data at row offset Wrow+1
    y1_ref[0, 0, :, :] = jnp.zeros((lplane, cp), y1_ref.dtype)
    y1_ref[0, 0, wrow + 1: wrow + 1 + m2, :] = y

    # fused shortcut: the 1x1(/stride) conv input is exactly the centre tap of the patch
    sc = jnp.dot(patch[:, :cin], ws_ref[...], preferred_element_type=jnp.float32)
    res_ref[0, 0, :, :] = sc + bs_ref[...]           # f32 residual in conv2's layout


# -----------------------------------------------------------------------------------
# Kernel 2: conv2 + bn2 + residual add + relu2
# -----------------------------------------------------------------------------------
def _conv2_kernel(pm1_ref, p0_ref, pp1_ref, w2_ref, b2_ref, res_ref, o_ref,
                  stk_ref, acc_ref, *, wrow, m2, lstack, cp):
    planes = (pm1_ref, p0_ref, pp1_ref)
    # fold depth (kd) and width (kw) taps into K: VMEM stack (Lstack, 9*Cp)
    for kd in range(3):
        for kw in range(3):
            j = kd * 3 + kw
            stk_ref[:, j * cp:(j + 1) * cp] = planes[kd][0, 0, kw:kw + lstack, :]

    # init the f32 accumulator with bias + residual so the epilogue overlaps the matmuls
    acc_ref[...] = res_ref[0, 0, :, :] + b2_ref[...]
    for kh in range(3):                              # 3 dots, K = 9*Cp, aligned row offsets
        acc_ref[...] += jnp.dot(stk_ref[kh * wrow: kh * wrow + m2, :], w2_ref[kh],
                                preferred_element_type=jnp.float32)
    o_ref[0, 0, :, :] = jnp.maximum(acc_ref[...], 0.0).astype(o_ref.dtype)


# -----------------------------------------------------------------------------------
# Glue: patch tensor (K = 27*Cin) for conv1 / shortcut
# -----------------------------------------------------------------------------------
def _build_patches(x, stride, do, ho, wrow, taps):
    """x: (N, D, H, W, Cin) f32 -> patches (N, do, ho*wrow, 27*Cin) bf16 (pitched rows)."""
    n, d, h, w, cin = x.shape
    xb = x.astype(jnp.bfloat16)
    w_need = stride * (wrow - 1) + 3                       # largest W index read + 1
    xp = jnp.pad(xb, ((0, 0), (1, 1), (1, 1),
                      (1, 1 + max(w_need - (w + 2), 0)), (0, 0)))
    pieces = []
    for (kd, kh, kw) in taps:
        pieces.append(xp[:, kd:kd + stride * (do - 1) + 1:stride,
                         kh:kh + stride * (ho - 1) + 1:stride,
                         kw:kw + stride * (wrow - 1) + 1:stride, :])
    p = jnp.stack(pieces, axis=4)                          # (N, do, ho, wrow, 27, Cin)
    return p.reshape(n, do, ho * wrow, len(taps) * cin)


# -----------------------------------------------------------------------------------
# Weight / BN folding (PyTorch layouts, eval-mode BN)
# -----------------------------------------------------------------------------------
def _bn_scale_bias(conv_b, gamma, beta, mean, var):
    scale = gamma / jnp.sqrt(var + EPS)
    return scale, (conv_b - mean) * scale + beta


def _fold_conv1(w, conv_b, gamma, beta, mean, var, taps, k1p, cp):
    cout, cin = w.shape[0], w.shape[1]
    scale, bias = _bn_scale_bias(conv_b, gamma, beta, mean, var)
    wt = jnp.transpose(w, (2, 3, 4, 1, 0))                 # (kd, kh, kw, ci, co)
    rows = [wt[kd, kh, kw] for (kd, kh, kw) in taps]       # each (ci, co), centre first
    wm = jnp.concatenate(rows, axis=0) * scale[None, :]    # (27*ci, co)
    wm = jnp.pad(wm, ((0, k1p - wm.shape[0]), (0, cp - cout)))
    b = jnp.pad(bias, (0, cp - cout)).reshape(1, cp)
    return wm.astype(jnp.bfloat16), b.astype(jnp.float32)


def _fold_shortcut(params, downsample, cin, cp):
    if downsample:
        w = params["w_s"][:, :, 0, 0, 0]                   # (co, ci)
        scale, bias = _bn_scale_bias(params["b_s"], params["g_s"], params["be_s"],
                                     params["m_s"], params["v_s"])
        cout = w.shape[0]
        ws = jnp.pad(w.T * scale[None, :], ((0, 0), (0, cp - cout)))
        bs = jnp.pad(bias, (0, cp - cout)).reshape(1, cp)
    else:
        ws = jnp.eye(cin, cp, dtype=jnp.float32)           # identity shortcut
        bs = jnp.zeros((1, cp), jnp.float32)
    return ws.astype(jnp.bfloat16), bs.astype(jnp.float32)


def _fold_conv2(w, conv_b, gamma, beta, mean, var, cp):
    cout, cin2 = w.shape[0], w.shape[1]
    scale, bias = _bn_scale_bias(conv_b, gamma, beta, mean, var)
    wt = jnp.transpose(w, (2, 3, 4, 1, 0)) * scale[None, None, None, None, :]
    wt = jnp.pad(wt, ((0, 0), (0, 0), (0, 0), (0, cp - cin2), (0, cp - cout)))
    wt = jnp.transpose(wt, (1, 0, 2, 3, 4))                # (kh, kd, kw, ci, co)
    w2 = wt.reshape(3, 9 * cp, cp)                         # K order = (kd, kw, ci)
    b = jnp.pad(bias, (0, cp - cout)).reshape(1, cp)
    return w2.astype(jnp.bfloat16), b.astype(jnp.float32)


# -----------------------------------------------------------------------------------
# Res3dBlock_d forward (Pallas path)
# -----------------------------------------------------------------------------------
def res3d_block_d(x_ncdhw, params, downsample):
    x = jnp.transpose(x_ncdhw, (0, 2, 3, 4, 1))            # NDHWC, f32
    n, d, h, w, cin = x.shape
    cout = params["w1"].shape[0]
    if not downsample:
        assert cin == cout, "identity shortcut requires in_channels == out_channels"
    stride = 2 if downsample else 1
    cp = _round_up(cout, LANE)

    do = (d + 2 - 3) // stride + 1
    ho = (h + 2 - 3) // stride + 1
    wo = (w + 2 - 3) // stride + 1
    wrow = _round_up(wo + 2, 8)          # conv2 pitch: multiple of 8 sublanes
    m2 = ho * wrow                       # pitched rows per depth slice (with junk cols)
    lplane = m2 + 3 * wrow               # padded plane rows (top/bottom halo + slack)
    lstack = m2 + 2 * wrow               # conv2 K-stack rows
    dp2 = do + 2                         # depth incl. conv2 halo planes

    taps = _taps3()
    k1 = 27 * cin
    k1p = _round_up(k1, 8)

    # glue: one pass over x builds the K=27*Cin patch tensor (small Cin => cheap)
    patches = _build_patches(x, stride, do, ho, wrow, taps)         # (n, do, m2, k1)
    patches = jnp.pad(patches, ((0, 0), (1, 1), (0, 0), (0, k1p - k1)))

    w1, b1 = _fold_conv1(params["w1"], params["b1"], params["g1"], params["be1"],
                         params["m1"], params["v1"], taps, k1p, cp)
    ws, bs = _fold_shortcut(params, downsample, cin, cp)
    w2, b2 = _fold_conv2(params["w2"], params["b2"], params["g2"], params["be2"],
                         params["m2"], params["v2"], cp)

    # ---- kernel 1: conv1+bn1+relu1 (+ fused shortcut), grid (N, Do+2) ----------------
    front = functools.partial(_front_kernel, wrow=wrow, wo=wo, m2=m2, lplane=lplane,
                              cin=cin, d_real=do)
    front_bytes = (2 * m2 * k1p * 2 + k1p * cp * 2 + cin * cp * 2 + 2 * cp * 4
                   + 2 * lplane * cp * 2 + 2 * m2 * cp * 4)
    y1buf, resbuf = pl.pallas_call(
        front,
        out_shape=(jax.ShapeDtypeStruct((n, dp2, lplane, cp), jnp.bfloat16),
                   jax.ShapeDtypeStruct((n, dp2, m2, cp), jnp.float32)),
        grid=(n, dp2),
        in_specs=[
            pl.BlockSpec((1, 1, m2, k1p), lambda b, dp: (b, dp, 0, 0)),
            _const_spec((k1p, cp), lambda b, dp: (0, 0)),
            _const_spec((1, cp), lambda b, dp: (0, 0)),
            _const_spec((cin, cp), lambda b, dp: (0, 0)),
            _const_spec((1, cp), lambda b, dp: (0, 0)),
        ],
        out_specs=(pl.BlockSpec((1, 1, lplane, cp), lambda b, dp: (b, dp, 0, 0)),
                   pl.BlockSpec((1, 1, m2, cp), lambda b, dp: (b, dp, 0, 0))),
        compiler_params=pltpu.CompilerParams(
            dimension_semantics=("parallel", "parallel"),
            vmem_limit_bytes=_vmem_limit(front_bytes)),
    )(patches, w1, b1, ws, bs)

    # ---- kernel 2: conv2+bn2 + residual + relu2, grid (N, Do) ------------------------
    conv2 = functools.partial(_conv2_kernel, wrow=wrow, m2=m2, lstack=lstack, cp=cp)
    conv2_bytes = (3 * 2 * lplane * cp * 2 + 3 * 9 * cp * cp * 2 + cp * 4
                   + 2 * m2 * cp * 4 + 2 * m2 * cp * 4
                   + lstack * 9 * cp * 2 + m2 * cp * 4)
    out_flat = pl.pallas_call(
        conv2,
        out_shape=jax.ShapeDtypeStruct((n, do, m2, cp), jnp.float32),
        grid=(n, do),
        in_specs=[
            pl.BlockSpec((1, 1, lplane, cp), lambda b, z: (b, z, 0, 0)),
            pl.BlockSpec((1, 1, lplane, cp), lambda b, z: (b, z + 1, 0, 0)),
            pl.BlockSpec((1, 1, lplane, cp), lambda b, z: (b, z + 2, 0, 0)),
            _const_spec((3, 9 * cp, cp), lambda b, z: (0, 0, 0)),
            _const_spec((1, cp), lambda b, z: (0, 0)),
            pl.BlockSpec((1, 1, m2, cp), lambda b, z: (b, z + 1, 0, 0)),
        ],
        out_specs=pl.BlockSpec((1, 1, m2, cp), lambda b, z: (b, z, 0, 0)),
        scratch_shapes=[pltpu.VMEM((lstack, 9 * cp), jnp.bfloat16),
                        pltpu.VMEM((m2, cp), jnp.float32)],
        compiler_params=pltpu.CompilerParams(
            dimension_semantics=("parallel", "parallel"),
            vmem_limit_bytes=_vmem_limit(conv2_bytes)),
    )(y1buf, y1buf, y1buf, w2, b2, resbuf)

    out = out_flat.reshape(n, do, ho, wrow, cp)[:, :, :, :wo, :cout]
    return jnp.transpose(out, (0, 4, 1, 2, 3))             # NCDHW, f32


# -----------------------------------------------------------------------------------
# Pure-JAX reference (eval-mode BN) for correctness checking
# -----------------------------------------------------------------------------------
def _ref_conv3d(x, w, b, stride, pad):
    w_dhwio = jnp.transpose(w, (2, 3, 4, 1, 0))
    out = jax.lax.conv_general_dilated(
        x, w_dhwio, window_strides=(stride,) * 3, padding=[(pad, pad)] * 3,
        dimension_numbers=("NDHWC", "DHWIO", "NDHWC"))
    return out + b.reshape(1, 1, 1, 1, -1)


def _ref_bn(x, gamma, beta, mean, var):
    return (x - mean) * (gamma / jnp.sqrt(var + EPS)) + beta


def res3d_block_d_reference(x_ncdhw, params, downsample):
    x = jnp.transpose(x_ncdhw, (0, 2, 3, 4, 1)).astype(jnp.float32)
    stride = 2 if downsample else 1
    if downsample:
        sc = _ref_bn(_ref_conv3d(x, params["w_s"], params["b_s"], 2, 0),
                     params["g_s"], params["be_s"], params["m_s"], params["v_s"])
    else:
        sc = x
    y = jnp.maximum(_ref_bn(_ref_conv3d(x, params["w1"], params["b1"], stride, 1),
                            params["g1"], params["be1"], params["m1"], params["v1"]),
                    0.0)
    y = _ref_bn(_ref_conv3d(y, params["w2"], params["b2"], 1, 1),
                params["g2"], params["be2"], params["m2"], params["v2"])
    y = jnp.maximum(y + sc, 0.0)
    return jnp.transpose(y, (0, 4, 1, 2, 3))


# -----------------------------------------------------------------------------------
# Deterministic parameter construction
# -----------------------------------------------------------------------------------
def make_params(key, cin, cout, downsample):
    ks = jax.random.split(key, 20)
    p = {
        "w1": 0.1 * jax.random.normal(ks[0], (cout, cin, 3, 3, 3), jnp.float32),
        "b1": 0.05 * jax.random.normal(ks[1], (cout,), jnp.float32),
        "g1": 1.0 + 0.1 * jax.random.normal(ks[2], (cout,), jnp.float32),
        "be1": 0.05 * jax.random.normal(ks[3], (cout,), jnp.float32),
        "m1": 0.05 * jax.random.normal(ks[4], (cout,), jnp.float32),
        "v1": jax.random.uniform(ks[5], (cout,), jnp.float32, 0.5, 1.5),
        "w2": 0.1 * jax.random.normal(ks[6], (cout, cout, 3, 3, 3), jnp.float32),
        "b2": 0.05 * jax.random.normal(ks[7], (cout,), jnp.float32),
        "g2": 1.0 + 0.1 * jax.random.normal(ks[8], (cout,), jnp.float32),
        "be2": 0.05 * jax.random.normal(ks[9], (cout,), jnp.float32),
        "m2": 0.05 * jax.random.normal(ks[10], (cout,), jnp.float32),
        "v2": jax.random.uniform(ks[11], (cout,), jnp.float32, 0.5, 1.5),
    }
    if downsample:
        p.update({
            "w_s": 0.1 * jax.random.normal(ks[12], (cout, cin, 1, 1, 1), jnp.float32),
            "b_s": 0.05 * jax.random.normal(ks[13], (cout,), jnp.float32),
            "g_s": 1.0 + 0.1 * jax.random.normal(ks[14], (cout,), jnp.float32),
            "be_s": 0.05 * jax.random.normal(ks[15], (cout,), jnp.float32),
            "m_s": 0.05 * jax.random.normal(ks[16], (cout,), jnp.float32),
            "v_s": jax.random.uniform(ks[17], (cout,), jnp.float32, 0.5, 1.5),
        })
    return p


if __name__ == "__main__":
    key = jax.random.PRNGKey(0)
    k_x, k_p, k_x2, k_p2 = jax.random.split(key, 4)

    fwd = jax.jit(res3d_block_d, static_argnums=(2,))
    ref_fwd = jax.jit(res3d_block_d_reference, static_argnums=(2,))

    # ---- downsample block: Cin=4 -> Cout=8, spatial 16 -> 8 -------------------------
    N, Cin, Cout, D, H, W = 2, 4, 8, 16, 16, 16
    x = jax.random.normal(k_x, (N, Cin, D, H, W), jnp.float32)      # NCDHW
    params = make_params(k_p, Cin, Cout, True)

    out = jax.block_until_ready(fwd(x, params, True))
    ref = jax.block_until_ready(ref_fwd(x, params, True))
    assert out.shape == (N, Cout, D // 2, H // 2, W // 2)
    assert bool(jnp.all(jnp.isfinite(out))) and bool(jnp.all(out >= 0.0))
    tol = 5e-2 * float(jnp.max(jnp.abs(ref))) + 5e-2
    err = float(jnp.max(jnp.abs(out - ref)))
    assert err < tol, f"downsample block mismatch: max err {err} (tol {tol})"

    # ---- identity block: Cin == Cout = 8, spatial 8 ---------------------------------
    N2, C2, S2 = 2, 8, 8
    x2 = jax.random.normal(k_x2, (N2, C2, S2, S2, S2), jnp.float32)
    params2 = make_params(k_p2, C2, C2, False)

    out2 = jax.block_until_ready(fwd(x2, params2, False))
    ref2 = jax.block_until_ready(ref_fwd(x2, params2, False))
    assert out2.shape == (N2, C2, S2, S2, S2)
    assert bool(jnp.all(jnp.isfinite(out2))) and bool(jnp.all(out2 >= 0.0))
    tol2 = 5e-2 * float(jnp.max(jnp.abs(ref2))) + 5e-2
    err2 = float(jnp.max(jnp.abs(out2 - ref2)))
    assert err2 < tol2, f"identity block mismatch: max err {err2} (tol {tol2})"

    print("KERNEL_OK")
</pallas_src>

<mosaic_0001>
module attributes {stable_mosaic.version = 11 : i64} {
  func.func @_front_kernel(%arg0: i32, %arg1: i32, %arg2: memref<1x1x128x112xbf16, #tpu.memory_space<vmem>>, %arg3: memref<112x128xbf16, #tpu.memory_space<vmem>>, %arg4: memref<1x128xf32, #tpu.memory_space<vmem>>, %arg5: memref<4x128xbf16, #tpu.memory_space<vmem>>, %arg6: memref<1x128xf32, #tpu.memory_space<vmem>>, %arg7: memref<1x1x176x128xbf16, #tpu.memory_space<vmem>>, %arg8: memref<1x1x128x128xf32, #tpu.memory_space<vmem>>) attributes {dimension_semantics = [#tpu.dimension_semantics<parallel>, #tpu.dimension_semantics<parallel>], iteration_bounds = array<i64: 2, 10>, scalar_prefetch = 0 : i64, scratch_operands = 0 : i64, tpu.core_type = #tpu.core_type<tc>, window_params = [{transform_indices = @transform_0, window_bounds = array<i64: 1, 1, 128, 112>}, {pipeline_mode = #tpu.pipeline_mode<synchronous>, transform_indices = @transform_1, window_bounds = array<i64: 112, 128>}, {pipeline_mode = #tpu.pipeline_mode<synchronous>, transform_indices = @transform_2, window_bounds = array<i64: 1, 128>}, {pipeline_mode = #tpu.pipeline_mode<synchronous>, transform_indices = @transform_3, window_bounds = array<i64: 4, 128>}, {pipeline_mode = #tpu.pipeline_mode<synchronous>, transform_indices = @transform_4, window_bounds = array<i64: 1, 128>}, {transform_indices = @transform_5, window_bounds = array<i64: 1, 1, 176, 128>}, {transform_indices = @transform_6, window_bounds = array<i64: 1, 1, 128, 128>}]} {
    %c0 = arith.constant 0 : index
    %c0_0 = arith.constant 0 : index
    %c0_1 = arith.constant 0 : index
    %c0_2 = arith.constant 0 : index
    %0 = vector.load %arg2[%c0, %c0_0, %c0_1, %c0_2] : memref<1x1x128x112xbf16, #tpu.memory_space<vmem>>, vector<1x1x128x112xbf16>
    %1 = vector.shape_cast %0 : vector<1x1x128x112xbf16> to vector<128x112xbf16>
    %c0_3 = arith.constant 0 : index
    %c0_4 = arith.constant 0 : index
    %2 = vector.load %arg3[%c0_3, %c0_4] : memref<112x128xbf16, #tpu.memory_space<vmem>>, vector<112x128xbf16>
    %cst = arith.constant dense<0.000000e+00> : vector<128x128xf32>
    %3 = tpu.matmul %1, %2, %cst {dimension_numbers = #tpu.dot_dimension_numbers<[1], [0], [0], [1], [0, 0, 1, 1], [], []>} : vector<128x112xbf16>, vector<112x128xbf16>, vector<128x128xf32> -> vector<128x128xf32>
    %c0_5 = arith.constant 0 : index
    %c0_6 = arith.constant 0 : index
    %4 = vector.load %arg4[%c0_5, %c0_6] : memref<1x128xf32, #tpu.memory_space<vmem>>, vector<1x128xf32>
    %5 = vector.broadcast %4 : vector<1x128xf32> to vector<128x128xf32>
    %6 = arith.addf %3, %5 : vector<128x128xf32>
    %cst_7 = arith.constant 0.000000e+00 : f32
    %7 = vector.broadcast %cst_7 : f32 to vector<128x128xf32>
    %8 = arith.maximumf %6, %7 : vector<128x128xf32>
    %9 = tpu.iota {dimensions = array<i32: 0>} : vector<128x1xi32>
    %c16_i32 = arith.constant 16 : i32
    %c0_i32 = arith.constant 0 : i32
    %10 = arith.cmpi eq, %c16_i32, %c0_i32 : i32
    %c1_i32 = arith.constant 1 : i32
    %11 = arith.select %10, %c1_i32, %c16_i32 : i32
    %12 = vector.broadcast %11 : i32 to vector<128x1xi32>
    %13 = arith.remsi %9, %12 : vector<128x1xi32>
    %c0_i32_8 = arith.constant 0 : i32
    %14 = vector.broadcast %c0_i32_8 : i32 to vector<128x1xi32>
    %15 = arith.cmpi ne, %13, %14 : vector<128x1xi32>
    %c0_i32_9 = arith.constant 0 : i32
    %16 = vector.broadcast %c0_i32_9 : i32 to vector<128x1xi32>
    %17 = arith.cmpi slt, %13, %16 : vector<128x1xi32>
    %c0_i32_10 = arith.constant 0 : i32
    %18 = arith.cmpi slt, %11, %c0_i32_10 : i32
    %19 = vector.broadcast %18 : i1 to vector<128x1xi1>
    %20 = vector.broadcast %19 : vector<128x1xi1> to vector<128x1xi1>
    %21 = arith.xori %17, %20 : vector<128x1xi1>
    %22 = arith.andi %21, %15 : vector<128x1xi1>
    %23 = vector.broadcast %11 : i32 to vector<128x1xi32>
    %24 = arith.addi %13, %23 : vector<128x1xi32>
    %25 = arith.select %22, %24, %13 : vector<128x1xi1>, vector<128x1xi32>
    %c8_i32 = arith.constant 8 : i32
    %26 = vector.broadcast %c8_i32 : i32 to vector<128x1xi32>
    %27 = arith.cmpi slt, %25, %26 : vector<128x1xi32>
    %c1_i32_11 = arith.constant 1 : i32
    %28 = arith.cmpi sge, %arg1, %c1_i32_11 : i32
    %c8_i32_12 = arith.constant 8 : i32
    %29 = arith.cmpi sle, %arg1, %c8_i32_12 : i32
    %30 = arith.andi %28, %29 : i1
    %31 = vector.broadcast %30 : i1 to vector<128x1xi1>
    %32 = arith.andi %27, %31 : vector<128x1xi1>
    %cst_13 = arith.constant 0.000000e+00 : f32
    %33 = vector.shape_cast %32 : vector<128x1xi1> to vector<128x1xi1>
    %34 = vector.broadcast %33 : vector<128x1xi1> to vector<128x128xi1>
    %35 = vector.broadcast %cst_13 : f32 to vector<128x128xf32>
    %36 = arith.select %34, %8, %35 : vector<128x128xi1>, vector<128x128xf32>
    %37 = arith.truncf %36 : vector<128x128xf32> to vector<128x128xbf16>
    %cst_14 = arith.constant 0.000000e+00 : bf16
    %38 = vector.broadcast %cst_14 : bf16 to vector<176x128xbf16>
    %c0_15 = arith.constant 0 : index
    %c0_16 = arith.constant 0 : index
    %c0_17 = arith.constant 0 : index
    %c0_18 = arith.constant 0 : index
    %39 = vector.load %arg7[%c0_15, %c0_16, %c0_17, %c0_18] : memref<1x1x176x128xbf16, #tpu.memory_space<vmem>>, vector<1x1x176x128xbf16>
    %40 = vector.shape_cast %39 : vector<1x1x176x128xbf16> to vector<176x128xbf16>
    %41 = vector.shape_cast %38 : vector<176x128xbf16> to vector<1x1x176x128xbf16>
    tpu.vector_store %arg7[%c0_15, %c0_16, %c0_17, %c0_18], %41 {strides = array<i32>} : memref<1x1x176x128xbf16, #tpu.memory_space<vmem>>, vector<1x1x176x128xbf16>,
    %c0_19 = arith.constant 0 : index
    %c0_20 = arith.constant 0 : index
    %c17 = arith.constant 17 : index
    %c0_21 = arith.constant 0 : index
    %42 = vector.load %arg7[%c0_19, %c0_20, %c17, %c0_21] : memref<1x1x176x128xbf16, #tpu.memory_space<vmem>>, vector<1x1x128x128xbf16>
    %43 = vector.shape_cast %42 : vector<1x1x128x128xbf16> to vector<128x128xbf16>
    %44 = vector.shape_cast %37 : vector<128x128xbf16> to vector<1x1x128x128xbf16>
    tpu.vector_store %arg7[%c0_19, %c0_20, %c17, %c0_21], %44 {strides = array<i32>} : memref<1x1x176x128xbf16, #tpu.memory_space<vmem>>, vector<1x1x128x128xbf16>,
    %45 = vector.extract_strided_slice %1 {offsets = [0, 0], sizes = [128, 4], strides = [1, 1]} : vector<128x112xbf16> to vector<128x4xbf16>
    %c0_22 = arith.constant 0 : index
    %c0_23 = arith.constant 0 : index
    %46 = vector.load %arg5[%c0_22, %c0_23] : memref<4x128xbf16, #tpu.memory_space<vmem>>, vector<4x128xbf16>
    %cst_24 = arith.constant dense<0.000000e+00> : vector<128x128xf32>
    %47 = tpu.matmul %45, %46, %cst_24 {dimension_numbers = #tpu.dot_dimension_numbers<[1], [0], [0], [1], [0, 0, 1, 1], [], []>} : vector<128x4xbf16>, vector<4x128xbf16>, vector<128x128xf32> -> vector<128x128xf32>
    %c0_25 = arith.constant 0 : index
    %c0_26 = arith.constant 0 : index
    %48 = vector.load %arg6[%c0_25, %c0_26] : memref<1x128xf32, #tpu.memory_space<vmem>>, vector<1x128xf32>
    %49 = vector.broadcast %48 : vector<1x128xf32> to vector<128x128xf32>
    %50 = arith.addf %47, %49 : vector<128x128xf32>
    %c0_27 = arith.constant 0 : index
    %c0_28 = arith.constant 0 : index
    %c0_29 = arith.constant 0 : index
    %c0_30 = arith.constant 0 : index
    %51 = vector.load %arg8[%c0_27, %c0_28, %c0_29, %c0_30] : memref<1x1x128x128xf32, #tpu.memory_space<vmem>>, vector<1x1x128x128xf32>
    %52 = vector.shape_cast %51 : vector<1x1x128x128xf32> to vector<128x128xf32>
    %53 = vector.shape_cast %50 : vector<128x128xf32> to vector<1x1x128x128xf32>
    tpu.vector_store %arg8[%c0_27, %c0_28, %c0_29, %c0_30], %53 {strides = array<i32>} : memref<1x1x128x128xf32, #tpu.memory_space<vmem>>, vector<1x1x128x128xf32>,
    return
  }
  func.func @transform_0(%arg0: i32, %arg1: i32) -> (i32, i32, i32, i32) {
    %c0_i32 = arith.constant 0 : i32
    %c0_i32_0 = arith.constant 0 : i32
    %c0_i32_1 = arith.constant 0 : i32
    return %arg0, %arg1, %c0_i32, %c0_i32_0 : i32, i32, i32, i32
  }
  func.func @transform_1(%arg0: i32, %arg1: i32) -> (i32, i32) {
    %c0_i32 = arith.constant 0 : i32
    %c0_i32_0 = arith.constant 0 : i32
    %c0_i32_1 = arith.constant 0 : i32
    return %c0_i32, %c0_i32_0 : i32, i32
  }
  func.func @transform_2(%arg0: i32, %arg1: i32) -> (i32, i32) {
    %c0_i32 = arith.constant 0 : i32
    %c0_i32_0 = arith.constant 0 : i32
    %c0_i32_1 = arith.constant 0 : i32
    return %c0_i32, %c0_i32_0 : i32, i32
  }
  func.func @transform_3(%arg0: i32, %arg1: i32) -> (i32, i32) {
    %c0_i32 = arith.constant 0 : i32
    %c0_i32_0 = arith.constant 0 : i32
    %c0_i32_1 = arith.constant 0 : i32
    return %c0_i32, %c0_i32_0 : i32, i32
  }
  func.func @transform_4(%arg0: i32, %arg1: i32) -> (i32, i32) {
    %c0_i32 = arith.constant 0 : i32
    %c0_i32_0 = arith.constant 0 : i32
    %c0_i32_1 = arith.constant 0 : i32
    return %c0_i32, %c0_i32_0 : i32, i32
  }
  func.func @transform_5(%arg0: i32, %arg1: i32) -> (i32, i32, i32, i32) {
    %c0_i32 = arith.constant 0 : i32
    %c0_i32_0 = arith.constant 0 : i32
    %c0_i32_1 = arith.constant 0 : i32
    return %arg0, %arg1, %c0_i32, %c0_i32_0 : i32, i32, i32, i32
  }
  func.func @transform_6(%arg0: i32, %arg1: i32) -> (i32, i32, i32, i32) {
    %c0_i32 = arith.constant 0 : i32
    %c0_i32_0 = arith.constant 0 : i32
    %c0_i32_1 = arith.constant 0 : i32
    return %arg0, %arg1, %c0_i32, %c0_i32_0 : i32, i32, i32, i32
  }
}

module attributes {stable_mosaic.version = 11 : i64} {
  func.func @_conv2_kernel(%arg0: i32, %arg1: i32, %arg2: memref<1x1x176x128xbf16, #tpu.memory_space<vmem>>, %arg3: memref<1x1x176x128xbf16, #tpu.memory_space<vmem>>, %arg4: memref<1x1x176x128xbf16, #tpu.memory_space<vmem>>, %arg5: memref<3x1152x128xbf16, #tpu.memory_space<vmem>>, %arg6: memref<1x128xf32, #tpu.memory_space<vmem>>, %arg7: memref<1x1x128x128xf32, #tpu.memory_space<vmem>>, %arg8: memref<1x1x128x128xf32, #tpu.memory_space<vmem>>, %arg9: memref<160x1152xbf16, #tpu.memory_space<vmem>>, %arg10: memref<128x128xf32, #tpu.memory_space<vmem>>) attributes {dimension_semantics = [#tpu.dimension_semantics<parallel>, #tpu.dimension_semantics<parallel>], iteration_bounds = array<i64: 2, 8>, scalar_prefetch = 0 : i64, scratch_operands = 2 : i64, tpu.core_type = #tpu.core_type<tc>, window_params = [{transform_indices = @transform_0, window_bounds = array<i64: 1, 1, 176, 128>}, {transform_indices = @transform_1, window_bounds = array<i64: 1, 1, 176, 128>}, {transform_indices = @transform_2, window_bounds = array<i64: 1, 1, 176, 128>}, {pipeline_mode = #tpu.pipeline_mode<synchronous>, transform_indices = @transform_3, window_bounds = array<i64: 3, 1152, 128>}, {pipeline_mode = #tpu.pipeline_mode<synchronous>, transform_indices = @transform_4, window_bounds = array<i64: 1, 128>}, {transform_indices = @transform_5, window_bounds = array<i64: 1, 1, 128, 128>}, {transform_indices = @transform_6, window_bounds = array<i64: 1, 1, 128, 128>}]} {
    %c0 = arith.constant 0 : index
    %c0_0 = arith.constant 0 : index
    %c0_1 = arith.constant 0 : index
    %c0_2 = arith.constant 0 : index
    %0 = vector.load %arg2[%c0, %c0_0, %c0_1, %c0_2] : memref<1x1x176x128xbf16, #tpu.memory_space<vmem>>, vector<1x1x160x128xbf16>
    %1 = vector.shape_cast %0 : vector<1x1x160x128xbf16> to vector<160x128xbf16>
    %c0_3 = arith.constant 0 : index
    %c0_4 = arith.constant 0 : index
    %2 = vector.load %arg9[%c0_3, %c0_4] : memref<160x1152xbf16, #tpu.memory_space<vmem>>, vector<160x128xbf16>
    tpu.vector_store %arg9[%c0_3, %c0_4], %1 {strides = array<i32>} : memref<160x1152xbf16, #tpu.memory_space<vmem>>, vector<160x128xbf16>,
    %c0_5 = arith.constant 0 : index
    %c0_6 = arith.constant 0 : index
    %c1 = arith.constant 1 : index
    %c0_7 = arith.constant 0 : index
    %3 = vector.load %arg2[%c0_5, %c0_6, %c1, %c0_7] : memref<1x1x176x128xbf16, #tpu.memory_space<vmem>>, vector<1x1x160x128xbf16>
    %4 = vector.shape_cast %3 : vector<1x1x160x128xbf16> to vector<160x128xbf16>
    %c0_8 = arith.constant 0 : index
    %c128 = arith.constant 128 : index
    %5 = vector.load %arg9[%c0_8, %c128] : memref<160x1152xbf16, #tpu.memory_space<vmem>>, vector<160x128xbf16>
    tpu.vector_store %arg9[%c0_8, %c128], %4 {strides = array<i32>} : memref<160x1152xbf16, #tpu.memory_space<vmem>>, vector<160x128xbf16>,
    %c0_9 = arith.constant 0 : index
    %c0_10 = arith.constant 0 : index
    %c2 = arith.constant 2 : index
    %c0_11 = arith.constant 0 : index
    %6 = vector.load %arg2[%c0_9, %c0_10, %c2, %c0_11] : memref<1x1x176x128xbf16, #tpu.memory_space<vmem>>, vector<1x1x160x128xbf16>
    %7 = vector.shape_cast %6 : vector<1x1x160x128xbf16> to vector<160x128xbf16>
    %c0_12 = arith.constant 0 : index
    %c256 = arith.constant 256 : index
    %8 = vector.load %arg9[%c0_12, %c256] : memref<160x1152xbf16, #tpu.memory_space<vmem>>, vector<160x128xbf16>
    tpu.vector_store %arg9[%c0_12, %c256], %7 {strides = array<i32>} : memref<160x1152xbf16, #tpu.memory_space<vmem>>, vector<160x128xbf16>,
    %c0_13 = arith.constant 0 : index
    %c0_14 = arith.constant 0 : index
    %c0_15 = arith.constant 0 : index
    %c0_16 = arith.constant 0 : index
    %9 = vector.load %arg3[%c0_13, %c0_14, %c0_15, %c0_16] : memref<1x1x176x128xbf16, #tpu.memory_space<vmem>>, vector<1x1x160x128xbf16>
    %10 = vector.shape_cast %9 : vector<1x1x160x128xbf16> to vector<160x128xbf16>
    %c0_17 = arith.constant 0 : index
    %c384 = arith.constant 384 : index
    %11 = vector.load %arg9[%c0_17, %c384] : memref<160x1152xbf16, #tpu.memory_space<vmem>>, vector<160x128xbf16>
    tpu.vector_store %arg9[%c0_17, %c384], %10 {strides = array<i32>} : memref<160x1152xbf16, #tpu.memory_space<vmem>>, vector<160x128xbf16>,
    %c0_18 = arith.constant 0 : index
    %c0_19 = arith.constant 0 : index
    %c1_20 = arith.constant 1 : index
    %c0_21 = arith.constant 0 : index
    %12 = vector.load %arg3[%c0_18, %c0_19, %c1_20, %c0_21] : memref<1x1x176x128xbf16, #tpu.memory_space<vmem>>, vector<1x1x160x128xbf16>
    %13 = vector.shape_cast %12 : vector<1x1x160x128xbf16> to vector<160x128xbf16>
    %c0_22 = arith.constant 0 : index
    %c512 = arith.constant 512 : index
    %14 = vector.load %arg9[%c0_22, %c512] : memref<160x1152xbf16, #tpu.memory_space<vmem>>, vector<160x128xbf16>
    tpu.vector_store %arg9[%c0_22, %c512], %13 {strides = array<i32>} : memref<160x1152xbf16, #tpu.memory_space<vmem>>, vector<160x128xbf16>,
    %c0_23 = arith.constant 0 : index
    %c0_24 = arith.constant 0 : index
    %c2_25 = arith.constant 2 : index
    %c0_26 = arith.constant 0 : index
    %15 = vector.load %arg3[%c0_23, %c0_24, %c2_25, %c0_26] : memref<1x1x176x128xbf16, #tpu.memory_space<vmem>>, vector<1x1x160x128xbf16>
    %16 = vector.shape_cast %15 : vector<1x1x160x128xbf16> to vector<160x128xbf16>
    %c0_27 = arith.constant 0 : index
    %c640 = arith.constant 640 : index
    %17 = vector.load %arg9[%c0_27, %c640] : memref<160x1152xbf16, #tpu.memory_space<vmem>>, vector<160x128xbf16>
    tpu.vector_store %arg9[%c0_27, %c640], %16 {strides = array<i32>} : memref<160x1152xbf16, #tpu.memory_space<vmem>>, vector<160x128xbf16>,
    %c0_28 = arith.constant 0 : index
    %c0_29 = arith.constant 0 : index
    %c0_30 = arith.constant 0 : index
    %c0_31 = arith.constant 0 : index
    %18 = vector.load %arg4[%c0_28, %c0_29, %c0_30, %c0_31] : memref<1x1x176x128xbf16, #tpu.memory_space<vmem>>, vector<1x1x160x128xbf16>
    %19 = vector.shape_cast %18 : vector<1x1x160x128xbf16> to vector<160x128xbf16>
    %c0_32 = arith.constant 0 : index
    %c768 = arith.constant 768 : index
    %20 = vector.load %arg9[%c0_32, %c768] : memref<160x1152xbf16, #tpu.memory_space<vmem>>, vector<160x128xbf16>
    tpu.vector_store %arg9[%c0_32, %c768], %19 {strides = array<i32>} : memref<160x1152xbf16, #tpu.memory_space<vmem>>, vector<160x128xbf16>,
    %c0_33 = arith.constant 0 : index
    %c0_34 = arith.constant 0 : index
    %c1_35 = arith.constant 1 : index
    %c0_36 = arith.constant 0 : index
    %21 = vector.load %arg4[%c0_33, %c0_34, %c1_35, %c0_36] : memref<1x1x176x128xbf16, #tpu.memory_space<vmem>>, vector<1x1x160x128xbf16>
    %22 = vector.shape_cast %21 : vector<1x1x160x128xbf16> to vector<160x128xbf16>
    %c0_37 = arith.constant 0 : index
    %c896 = arith.constant 896 : index
    %23 = vector.load %arg9[%c0_37, %c896] : memref<160x1152xbf16, #tpu.memory_space<vmem>>, vector<160x128xbf16>
    tpu.vector_store %arg9[%c0_37, %c896], %22 {strides = array<i32>} : memref<160x1152xbf16, #tpu.memory_space<vmem>>, vector<160x128xbf16>,
    %c0_38 = arith.constant 0 : index
    %c0_39 = arith.constant 0 : index
    %c2_40 = arith.constant 2 : index
    %c0_41 = arith.constant 0 : index
    %24 = vector.load %arg4[%c0_38, %c0_39, %c2_40, %c0_41] : memref<1x1x176x128xbf16, #tpu.memory_space<vmem>>, vector<1x1x160x128xbf16>
    %25 = vector.shape_cast %24 : vector<1x1x160x128xbf16> to vector<160x128xbf16>
    %c0_42 = arith.constant 0 : index
    %c1024 = arith.constant 1024 : index
    %26 = vector.load %arg9[%c0_42, %c1024] : memref<160x1152xbf16, #tpu.memory_space<vmem>>, vector<160x128xbf16>
    tpu.vector_store %arg9[%c0_42, %c1024], %25 {strides = array<i32>} : memref<160x1152xbf16, #tpu.memory_space<vmem>>, vector<160x128xbf16>,
    %c0_43 = arith.constant 0 : index
    %c0_44 = arith.constant 0 : index
    %c0_45 = arith.constant 0 : index
    %c0_46 = arith.constant 0 : index
    %27 = vector.load %arg7[%c0_43, %c0_44, %c0_45, %c0_46] : memref<1x1x128x128xf32, #tpu.memory_space<vmem>>, vector<1x1x128x128xf32>
    %28 = vector.shape_cast %27 : vector<1x1x128x128xf32> to vector<128x128xf32>
    %c0_47 = arith.constant 0 : index
    %c0_48 = arith.constant 0 : index
    %29 = vector.load %arg6[%c0_47, %c0_48] : memref<1x128xf32, #tpu.memory_space<vmem>>, vector<1x128xf32>
    %30 = vector.broadcast %29 : vector<1x128xf32> to vector<128x128xf32>
    %31 = arith.addf %28, %30 : vector<128x128xf32>
    %c0_49 = arith.constant 0 : index
    %c0_50 = arith.constant 0 : index
    %32 = vector.load %arg10[%c0_49, %c0_50] : memref<128x128xf32, #tpu.memory_space<vmem>>, vector<128x128xf32>
    tpu.vector_store %arg10[%c0_49, %c0_50], %31 {strides = array<i32>} : memref<128x128xf32, #tpu.memory_space<vmem>>, vector<128x128xf32>,
    %c0_51 = arith.constant 0 : index
    %c0_52 = arith.constant 0 : index
    %33 = vector.load %arg10[%c0_51, %c0_52] : memref<128x128xf32, #tpu.memory_space<vmem>>, vector<128x128xf32>
    %c0_53 = arith.constant 0 : index
    %c0_54 = arith.constant 0 : index
    %34 = vector.load %arg9[%c0_53, %c0_54] : memref<160x1152xbf16, #tpu.memory_space<vmem>>, vector<128x1152xbf16>
    %c0_55 = arith.constant 0 : index
    %c0_56 = arith.constant 0 : index
    %c0_57 = arith.constant 0 : index
    %35 = vector.load %arg5[%c0_55, %c0_56, %c0_57] : memref<3x1152x128xbf16, #tpu.memory_space<vmem>>, vector<1x1152x128xbf16>
    %36 = vector.shape_cast %35 : vector<1x1152x128xbf16> to vector<1152x128xbf16>
    %cst = arith.constant dense<0.000000e+00> : vector<128x128xf32>
    %37 = tpu.matmul %34, %36, %cst {dimension_numbers = #tpu.dot_dimension_numbers<[1], [0], [0], [1], [0, 0, 1, 1], [], []>} : vector<128x1152xbf16>, vector<1152x128xbf16>, vector<128x128xf32> -> vector<128x128xf32>
    %38 = arith.addf %33, %37 : vector<128x128xf32>
    %c0_58 = arith.constant 0 : index
    %c0_59 = arith.constant 0 : index
    %39 = vector.load %arg10[%c0_58, %c0_59] : memref<128x128xf32, #tpu.memory_space<vmem>>, vector<128x128xf32>
    tpu.vector_store %arg10[%c0_58, %c0_59], %38 {strides = array<i32>} : memref<128x128xf32, #tpu.memory_space<vmem>>, vector<128x128xf32>,
    %c0_60 = arith.constant 0 : index
    %c0_61 = arith.constant 0 : index
    %40 = vector.load %arg10[%c0_60, %c0_61] : memref<128x128xf32, #tpu.memory_space<vmem>>, vector<128x128xf32>
    %c16 = arith.constant 16 : index
    %c0_62 = arith.constant 0 : index
    %41 = vector.load %arg9[%c16, %c0_62] : memref<160x1152xbf16, #tpu.memory_space<vmem>>, vector<128x1152xbf16>
    %c1_63 = arith.constant 1 : index
    %c0_64 = arith.constant 0 : index
    %c0_65 = arith.constant 0 : index
    %42 = vector.load %arg5[%c1_63, %c0_64, %c0_65] : memref<3x1152x128xbf16, #tpu.memory_space<vmem>>, vector<1x1152x128xbf16>
    %43 = vector.shape_cast %42 : vector<1x1152x128xbf16> to vector<1152x128xbf16>
    %cst_66 = arith.constant dense<0.000000e+00> : vector<128x128xf32>
    %44 = tpu.matmul %41, %43, %cst_66 {dimension_numbers = #tpu.dot_dimension_numbers<[1], [0], [0], [1], [0, 0, 1, 1], [], []>} : vector<128x1152xbf16>, vector<1152x128xbf16>, vector<128x128xf32> -> vector<128x128xf32>
    %45 = arith.addf %40, %44 : vector<128x128xf32>
    %c0_67 = arith.constant 0 : index
    %c0_68 = arith.constant 0 : index
    %46 = vector.load %arg10[%c0_67, %c0_68] : memref<128x128xf32, #tpu.memory_space<vmem>>, vector<128x128xf32>
    tpu.vector_store %arg10[%c0_67, %c0_68], %45 {strides = array<i32>} : memref<128x128xf32, #tpu.memory_space<vmem>>, vector<128x128xf32>,
    %c0_69 = arith.constant 0 : index
    %c0_70 = arith.constant 0 : index
    %47 = vector.load %arg10[%c0_69, %c0_70] : memref<128x128xf32, #tpu.memory_space<vmem>>, vector<128x128xf32>
    %c32 = arith.constant 32 : index
    %c0_71 = arith.constant 0 : index
    %48 = vector.load %arg9[%c32, %c0_71] : memref<160x1152xbf16, #tpu.memory_space<vmem>>, vector<128x1152xbf16>
    %c2_72 = arith.constant 2 : index
    %c0_73 = arith.constant 0 : index
    %c0_74 = arith.constant 0 : index
    %49 = vector.load %arg5[%c2_72, %c0_73, %c0_74] : memref<3x1152x128xbf16, #tpu.memory_space<vmem>>, vector<1x1152x128xbf16>
    %50 = vector.shape_cast %49 : vector<1x1152x128xbf16> to vector<1152x128xbf16>
    %cst_75 = arith.constant dense<0.000000e+00> : vector<128x128xf32>
    %51 = tpu.matmul %48, %50, %cst_75 {dimension_numbers = #tpu.dot_dimension_numbers<[1], [0], [0], [1], [0, 0, 1, 1], [], []>} : vector<128x1152xbf16>, vector<1152x128xbf16>, vector<128x128xf32> -> vector<128x128xf32>
    %52 = arith.addf %47, %51 : vector<128x128xf32>
    %c0_76 = arith.constant 0 : index
    %c0_77 = arith.constant 0 : index
    %53 = vector.load %arg10[%c0_76, %c0_77] : memref<128x128xf32, #tpu.memory_space<vmem>>, vector<128x128xf32>
    tpu.vector_store %arg10[%c0_76, %c0_77], %52 {strides = array<i32>} : memref<128x128xf32, #tpu.memory_space<vmem>>, vector<128x128xf32>,
    %c0_78 = arith.constant 0 : index
    %c0_79 = arith.constant 0 : index
    %54 = vector.load %arg10[%c0_78, %c0_79] : memref<128x128xf32, #tpu.memory_space<vmem>>, vector<128x128xf32>
    %cst_80 = arith.constant 0.000000e+00 : f32
    %55 = vector.broadcast %cst_80 : f32 to vector<128x128xf32>
    %56 = arith.maximumf %54, %55 : vector<128x128xf32>
    %c0_81 = arith.constant 0 : index
    %c0_82 = arith.constant 0 : index
    %c0_83 = arith.constant 0 : index
    %c0_84 = arith.constant 0 : index
    %57 = vector.load %arg8[%c0_81, %c0_82, %c0_83, %c0_84] : memref<1x1x128x128xf32, #tpu.memory_space<vmem>>, vector<1x1x128x128xf32>
    %58 = vector.shape_cast %57 : vector<1x1x128x128xf32> to vector<128x128xf32>
    %59 = vector.shape_cast %56 : vector<128x128xf32> to vector<1x1x128x128xf32>
    tpu.vector_store %arg8[%c0_81, %c0_82, %c0_83, %c0_84], %59 {strides = array<i32>} : memref<1x1x128x128xf32, #tpu.memory_space<vmem>>, vector<1x1x128x128xf32>,
    return
  }
  func.func @transform_0(%arg0: i32, %arg1: i32) -> (i32, i32, i32, i32) {
    %c0_i32 = arith.constant 0 : i32
    %c0_i32_0 = arith.constant 0 : i32
    %c0_i32_1 = arith.constant 0 : i32
    return %arg0, %arg1, %c0_i32, %c0_i32_0 : i32, i32, i32, i32
  }
  func.func @transform_1(%arg0: i32, %arg1: i32) -> (i32, i32, i32, i32) {
    %c1_i32 = arith.constant 1 : i32
    %0 = arith.addi %arg1, %c1_i32 : i32
    %c0_i32 = arith.constant 0 : i32
    %c0_i32_0 = arith.constant 0 : i32
    %c0_i32_1 = arith.constant 0 : i32
    return %arg0, %0, %c0_i32, %c0_i32_0 : i32, i32, i32, i32
  }
  func.func @transform_2(%arg0: i32, %arg1: i32) -> (i32, i32, i32, i32) {
    %c2_i32 = arith.constant 2 : i32
    %0 = arith.addi %arg1, %c2_i32 : i32
    %c0_i32 = arith.constant 0 : i32
    %c0_i32_0 = arith.constant 0 : i32
    %c0_i32_1 = arith.constant 0 : i32
    return %arg0, %0, %c0_i32, %c0_i32_0 : i32, i32, i32, i32
  }
  func.func @transform_3(%arg0: i32, %arg1: i32) -> (i32, i32, i32) {
    %c0_i32 = arith.constant 0 : i32
    %c0_i32_0 = arith.constant 0 : i32
    %c0_i32_1 = arith.constant 0 : i32
    %c0_i32_2 = arith.constant 0 : i32
    return %c0_i32, %c0_i32_0, %c0_i32_1 : i32, i32, i32
  }
  func.func @transform_4(%arg0: i32, %arg1: i32) -> (i32, i32) {
    %c0_i32 = arith.constant 0 : i32
    %c0_i32_0 = arith.constant 0 : i32
    %c0_i32_1 = arith.constant 0 : i32
    return %c0_i32, %c0_i32_0 : i32, i32
  }
  func.func @transform_5(%arg0: i32, %arg1: i32) -> (i32, i32, i32, i32) {
    %c1_i32 = arith.constant 1 : i32
    %0 = arith.addi %arg1, %c1_i32 : i32
    %c0_i32 = arith.constant 0 : i32
    %c0_i32_0 = arith.constant 0 : i32
    %c0_i32_1 = arith.constant 0 : i32
    return %arg0, %0, %c0_i32, %c0_i32_0 : i32, i32, i32, i32
  }
  func.func @transform_6(%arg0: i32, %arg1: i32) -> (i32, i32, i32, i32) {
    %c0_i32 = arith.constant 0 : i32
    %c0_i32_0 = arith.constant 0 : i32
    %c0_i32_1 = arith.constant 0 : i32
    return %arg0, %arg1, %c0_i32, %c0_i32_0 : i32, i32, i32, i32
  }
}

</mosaic_0001>

<llo_original>
// kernel: res3d_block_d.2
$region0: #{res3d_block_d.2}
  #allocation0 [shape = 'u32[]', space=smem, size = 0x4, offset = 0x4, fixed_abs, tag = 'smem constant byte address 0x4 - core index']
  #allocation1 [shape = 'u32[144,128]{1,0:T(1,128)}', space=vmem, size = 0x12000, scoped, tag = 'internal scratch']
  %s0 = inlined_call_operand.vmem [shape: bf16[2,10,128,112], index: 0, kind: input, shape index: {}]
  %s1 = inlined_call_operand.vmem [shape: bf16[112,128], index: 1, kind: input, shape index: {}]
  %s2 = inlined_call_operand.vmem [shape: f32[1,128], index: 2, kind: input, shape index: {}]
  %s3 = inlined_call_operand.vmem [shape: bf16[4,128], index: 3, kind: input, shape index: {}]
  %s4 = inlined_call_operand.vmem [shape: f32[1,128], index: 4, kind: input, shape index: {}]
  %s5 = inlined_call_operand.vmem [shape: bf16[2,10,176,128], index: 5, kind: output, shape index: {0}]
  %s6 = inlined_call_operand.vmem [shape: f32[2,10,128,128], index: 6, kind: output, shape index: {1}]
  %7 = xla_tuple %s5, %s6
  %s8 = sld [smem:[#allocation0]]
  $region61: #{res3d_block_d.2} parent=0
    _
  %s10 = ssub.s32 1, %s8
  %s11 = scalar_select 0, %s10, %s8
  loop: start=0, step=1, limit=22
  $region2: #{res3d_block_d.2} parent=0 // loop_pre_header
    _
  $region3: #{res3d_block_d.2} parent=0 // loop_header
    %s13 = sphi 0, %s17
    %p14 = scmp.ge.s32.totalorder %s13, 22
    %s20 = sphi 0, %s32
    %s21 = sphi 0, %s28
    %s22 = sphi 0, %s20
    %s23 = sphi 0, %s21
    %s24 = sphi 0, %s22
    %s25 = sphi 0, %s23
    %s37 = sphi 0, %s39
    %s40 = sphi 0, %s37
    %s41 = sphi 0, %s40
    %s57 = sphi 0, %s41
    %s61 = sphi 0, %s61
    %s63 = sphi 0, %s61
    %s64 = sphi 0, %s63
    %s78 = sphi 0, %s64
    %s82 = sphi 0, %s82
    %s84 = sphi 0, %s82
    %s85 = sphi 0, %s84
    %s99 = sphi 0, %s85
    %s103 = sphi 0, %s103
    %s105 = sphi 0, %s103
    %s106 = sphi 0, %s105
    %s120 = sphi 0, %s106
    %s124 = sphi 0, %s124
    %s126 = sphi 0, %s124
    %s127 = sphi 0, %s126
    %s141 = sphi 0, %s127
    %s149 = sphi 0, %s151
    %s152 = sphi 0, %s149
    %s153 = sphi 0, %s152
    %s169 = sphi 0, %s153
    %s177 = sphi 0, %s179
    %s180 = sphi 0, %s177
    %s181 = sphi 0, %s180
    %s197 = sphi 0, %s181
  $region4: #{res3d_block_d.2} parent=0 // loop_header_branch
    %16 = sbr.rel (%p14) target = $region8
  $region5: #{res3d_block_d.2} parent=0 // loop_body
    %s18 = ssub.s32 %s13, 1
    %s19 = ssub.s32 %s13, 2
    %s26 = sadd.s32 1, %s21
    %p27 = scmp.ge.s32.totalorder %s26, 10
    %s28 = scalar_select %p27, 0, %s26
    %s29 = sadd.s32 1, %s20
    %s30 = scalar_select %p27, %s29, %s20
    %p31 = scmp.ge.s32.totalorder %s30, 2
    %s32 = scalar_select %p31, 0, %s30
    %s33 = ssub.s32 %s20, %s32
    %s34 = ssub.s32 %s21, %s28
    %s35 = sor.u32 %s33, %s34
    %p36 = scmp.eq.s32.totalorder %s35, 0
    %s38 = sadd.s32 %s37, 1
    %s39 = scalar_select %p36, %s37, %s38
    %p42 = pneg %p36
    %p43 = scmp.eq.s32.totalorder %s13, 19
    %p44 = por %p42, %p43
    %p45 = scmp.ne.s32.totalorder %s37, %s40
    %p46 = scmp.eq.s32.totalorder %s13, 0
    %p47 = por %p45, %p46
    %p48 = scmp.ne.s32.totalorder %s37, %s40
    %p49 = scmp.eq.s32.totalorder %s18, 19
    %p50 = por %p48, %p49
    %p51 = scmp.ne.s32.totalorder %s40, %s41
    %p52 = scmp.eq.s32.totalorder %s18, 0
    %p53 = por %p51, %p52
    %p54 = scmp.ne.s32.totalorder %s40, %s41
    %p55 = scmp.eq.s32.totalorder %s19, 19
    %p56 = por %p54, %p55
    %p58 = scmp.ne.s32.totalorder %s41, %s57
    %p59 = scmp.eq.s32.totalorder %s19, 0
    %p60 = por %p58, %p59
    %s62 = sadd.s32 %s61, 1
    %p65 = scmp.eq.s32.totalorder %s13, 19
    %p66 = scmp.ne.s32.totalorder %s61, %s63
    %p67 = scmp.eq.s32.totalorder %s13, 0
    %p68 = por %p66, %p67
    %p69 = scmp.ne.s32.totalorder %s61, %s63
    %p70 = scmp.eq.s32.totalorder %s18, 19
    %p71 = por %p69, %p70
    %p72 = scmp.ne.s32.totalorder %s63, %s64
    %p73 = scmp.eq.s32.totalorder %s18, 0
    %p74 = por %p72, %p73
    %p75 = scmp.ne.s32.totalorder %s63, %s64
    %p76 = scmp.eq.s32.totalorder %s19, 19
    %p77 = por %p75, %p76
    %p79 = scmp.ne.s32.totalorder %s64, %s78
    %p80 = scmp.eq.s32.totalorder %s19, 0
    %p81 = por %p79, %p80
    %s83 = sadd.s32 %s82, 1
    %p86 = scmp.eq.s32.totalorder %s13, 19
    %p87 = scmp.ne.s32.totalorder %s82, %s84
    %p88 = scmp.eq.s32.totalorder %s13, 0
    %p89 = por %p87, %p88
    %p90 = scmp.ne.s32.totalorder %s82, %s84
    %p91 = scmp.eq.s32.totalorder %s18, 19
    %p92 = por %p90, %p91
    %p93 = scmp.ne.s32.totalorder %s84, %s85
    %p94 = scmp.eq.s32.totalorder %s18, 0
    %p95 = por %p93, %p94
    %p96 = scmp.ne.s32.totalorder %s84, %s85
    %p97 = scmp.eq.s32.totalorder %s19, 19
    %p98 = por %p96, %p97
    %p100 = scmp.ne.s32.totalorder %s85, %s99
    %p101 = scmp.eq.s32.totalorder %s19, 0
    %p102 = por %p100, %p101
    %s104 = sadd.s32 %s103, 1
    %p107 = scmp.eq.s32.totalorder %s13, 19
    %p108 = scmp.ne.s32.totalorder %s103, %s105
    %p109 = scmp.eq.s32.totalorder %s13, 0
    %p110 = por %p108, %p109
    %p111 = scmp.ne.s32.totalorder %s103, %s105
    %p112 = scmp.eq.s32.totalorder %s18, 19
    %p113 = por %p111, %p112
    %p114 = scmp.ne.s32.totalorder %s105, %s106
    %p115 = scmp.eq.s32.totalorder %s18, 0
    %p116 = por %p114, %p115
    %p117 = scmp.ne.s32.totalorder %s105, %s106
    %p118 = scmp.eq.s32.totalorder %s19, 19
    %p119 = por %p117, %p118
    %p121 = scmp.ne.s32.totalorder %s106, %s120
    %p122 = scmp.eq.s32.totalorder %s19, 0
    %p123 = por %p121, %p122
    %s125 = sadd.s32 %s124, 1
    %p128 = scmp.eq.s32.totalorder %s13, 19
    %p129 = scmp.ne.s32.totalorder %s124, %s126
    %p130 = scmp.eq.s32.totalorder %s13, 0
    %p131 = por %p129, %p130
    %p132 = scmp.ne.s32.totalorder %s124, %s126
    %p133 = scmp.eq.s32.totalorder %s18, 19
    %p134 = por %p132, %p133
    %p135 = scmp.ne.s32.totalorder %s126, %s127
    %p136 = scmp.eq.s32.totalorder %s18, 0
    %p137 = por %p135, %p136
    %p138 = scmp.ne.s32.totalorder %s126, %s127
    %p139 = scmp.eq.s32.totalorder %s19, 19
    %p140 = por %p138, %p139
    %p142 = scmp.ne.s32.totalorder %s127, %s141
    %p143 = scmp.eq.s32.totalorder %s19, 0
    %p144 = por %p142, %p143
    %s145 = ssub.s32 %s20, %s32
    %s146 = ssub.s32 %s21, %s28
    %s147 = sor.u32 %s145, %s146
    %p148 = scmp.eq.s32.totalorder %s147, 0
    %s150 = sadd.s32 %s149, 1
    %s151 = scalar_select %p148, %s149, %s150
    %p154 = pneg %p148
    %p155 = scmp.eq.s32.totalorder %s13, 19
    %p156 = por %p154, %p155
    %p157 = scmp.ne.s32.totalorder %s149, %s152
    %p158 = scmp.eq.s32.totalorder %s13, 0
    %p159 = por %p157, %p158
    %p160 = scmp.ne.s32.totalorder %s149, %s152
    %p161 = scmp.eq.s32.totalorder %s18, 19
    %p162 = por %p160, %p161
    %p163 = scmp.ne.s32.totalorder %s152, %s153
    %p164 = scmp.eq.s32.totalorder %s18, 0
    %p165 = por %p163, %p164
    %p166 = scmp.ne.s32.totalorder %s152, %s153
    %p167 = scmp.eq.s32.totalorder %s19, 19
    %p168 = por %p166, %p167
    %p170 = scmp.ne.s32.totalorder %s153, %s169
    %p171 = scmp.eq.s32.totalorder %s19, 0
    %p172 = por %p170, %p171
    %s173 = ssub.s32 %s20, %s32
    %s174 = ssub.s32 %s21, %s28
    %s175 = sor.u32 %s173, %s174
    %p176 = scmp.eq.s32.totalorder %s175, 0
    %s178 = sadd.s32 %s177, 1
    %s179 = scalar_select %p176, %s177, %s178
    %p182 = pneg %p176
    %p183 = scmp.eq.s32.totalorder %s13, 19
    %p184 = por %p182, %p183
    %p185 = scmp.ne.s32.totalorder %s177, %s180
    %p186 = scmp.eq.s32.totalorder %s13, 0
    %p187 = por %p185, %p186
    %p188 = scmp.ne.s32.totalorder %s177, %s180
    %p189 = scmp.eq.s32.totalorder %s18, 19
    %p190 = por %p188, %p189
    %p191 = scmp.ne.s32.totalorder %s180, %s181
    %p192 = scmp.eq.s32.totalorder %s18, 0
    %p193 = por %p191, %p192
    %p194 = scmp.ne.s32.totalorder %s180, %s181
    %p195 = scmp.eq.s32.totalorder %s19, 19
    %p196 = por %p194, %p195
    %p198 = scmp.ne.s32.totalorder %s181, %s197
    %p199 = scmp.eq.s32.totalorder %s19, 0
    %p200 = por %p198, %p199
    %p201 = scmp.le.s32.totalorder 1, %s13
    %p202 = scmp.lt.s32.totalorder %s13, 21
    %p203 = pnand %p201, %p202
    %p204 = pneg %p203
    // Predicated region
    $region9: #{res3d_block_d.2} parent=5 // pred_check
      _
    $region10: #{res3d_block_d.2} parent=5 // pred_check_branch
      %206 = sbr.rel (%p203) target = $region12
    $region11: #{res3d_block_d.2} parent=5 // pred_region
      %s207 = ssub.s32 %s13, 1
      // Predicated region
      $region13: #{res3d_block_d.2} parent=11 // pred_check
        %p208 = pneg %p74
      $region14: #{res3d_block_d.2} parent=11 // pred_check_branch
        %210 = sbr.rel (%p208) target = $region16
      $region15: #{res3d_block_d.2} parent=11 // pred_region
        _
      $region16: #{res3d_block_d.2} parent=11 // pred_fallthru
        _
      // Predicated region
      $region17: #{res3d_block_d.2} parent=11 // pred_check
        %p211 = pneg %p95
      $region18: #{res3d_block_d.2} parent=11 // pred_check_branch
        %213 = sbr.rel (%p211) target = $region20
      $region19: #{res3d_block_d.2} parent=11 // pred_region
        _
      $region20: #{res3d_block_d.2} parent=11 // pred_fallthru
        _
      // Predicated region
      $region21: #{res3d_block_d.2} parent=11 // pred_check
        %p214 = pneg %p116
      $region22: #{res3d_block_d.2} parent=11 // pred_check_branch
        %216 = sbr.rel (%p214) target = $region24
      $region23: #{res3d_block_d.2} parent=11 // pred_region
        _
      $region24: #{res3d_block_d.2} parent=11 // pred_fallthru
        _
      // Predicated region
      $region25: #{res3d_block_d.2} parent=11 // pred_check
        %p217 = pneg %p137
      $region26: #{res3d_block_d.2} parent=11 // pred_check_branch
        %219 = sbr.rel (%p217) target = $region28
      $region27: #{res3d_block_d.2} parent=11 // pred_region
        _
      $region28: #{res3d_block_d.2} parent=11 // pred_fallthru
        _
    $region12: #{res3d_block_d.2} parent=5 // pred_fallthru
      _
    %p220 = scmp.lt.s32.totalorder %s13, 20
    // Predicated region
    $region29: #{res3d_block_d.2} parent=5 // pred_check
      %p221 = pneg %p220
    $region30: #{res3d_block_d.2} parent=5 // pred_check_branch
      %223 = sbr.rel (%p221) target = $region32
    $region31: #{res3d_block_d.2} parent=5 // pred_region
      // Predicated region
      $region33: #{res3d_block_d.2} parent=31 // pred_check
        %p224 = pneg %p47
      $region34: #{res3d_block_d.2} parent=31 // pred_check_branch
        %226 = sbr.rel (%p224) target = $region36
      $region35: #{res3d_block_d.2} parent=31 // pred_region
        %p227 = scmp.lt.s32.totalorder %s20, 1
        %s228 = scalar_select %p227, %s20, 1
        %p229 = scmp.lt.s32.totalorder %s21, 9
        %s230 = scalar_select %p229, %s21, 9
        %s231 = smul.addr %s230, 16
        %s232 = smul.addr %s228, 160
        %s233 = sadd.s32 %s231, %s232
        %s234 = smul.addr %s233, 4
        %s235 = scalar_lea.vmem %s0, %s234
      $region36: #{res3d_block_d.2} parent=31 // pred_fallthru
        _
    $region32: #{res3d_block_d.2} parent=5 // pred_fallthru
      _
    %p236 = scmp.le.s32.totalorder 1, %s13
    %p237 = scmp.lt.s32.totalorder %s13, 21
    %p238 = pnand %p236, %p237
    %p239 = pneg %p238
    // Predicated region
    $region37: #{res3d_block_d.2} parent=5 // pred_check
      _
    $region38: #{res3d_block_d.2} parent=5 // pred_check_branch
      %241 = sbr.rel (%p238) target = $region40
    $region39: #{res3d_block_d.2} parent=5 // pred_region
      %s242 = ssub.s32 %s13, 1
      %p243 = scmp.lt.s32.totalorder %s22, 1
      %s244 = scalar_select %p243, %s22, 1
      %p245 = scmp.lt.s32.totalorder %s23, 9
      %s246 = scalar_select %p245, %s23, 9
      %s247 = smul.addr %s246, 16
      %s248 = smul.addr %s244, 160
      %s249 = sadd.s32 %s247, %s248
      %s250 = smul.addr %s249, 4
      %s251 = scalar_lea.vmem %s0, %s250
      %p252 = pneg %p53
      %p253 = pneg %p50
      %p254 = pneg %p74
      %p255 = pneg %p71
      %p256 = pneg %p95
      %p257 = pneg %p92
      %p258 = pneg %p116
      %p259 = pneg %p113
      %p260 = pneg %p137
      %p261 = pneg %p134
      %p262 = pneg %p165
      %p263 = pneg %p162
      %p264 = scmp.lt.s32.totalorder %s22, 1
      %s265 = scalar_select %p264, %s22, 1
      %p266 = scmp.lt.s32.totalorder %s23, 9
      %s267 = scalar_select %p266, %s23, 9
      %s268 = smul.addr %s267, 22
      %s269 = smul.addr %s265, 220
      %s270 = sadd.s32 %s268, %s269
      %s271 = smul.addr %s270, 4
      %s272 = scalar_lea.vmem %s5, %s271
      %p273 = pneg %p193
      %p274 = pneg %p190
      %p275 = scmp.lt.s32.totalorder %s22, 1
      %s276 = scalar_select %p275, %s22, 1
      %p277 = scmp.lt.s32.totalorder %s23, 9
      %s278 = scalar_select %p277, %s23, 9
      %s279 = smul.addr %s278, 16
      %s280 = smul.addr %s276, 160
      %s281 = sadd.s32 %s279, %s280
      %s282 = smul.addr %s281, 8
      %s283 = scalar_lea.vmem %s6, %s282
      %p284 = scmp.lt.s32.totalorder %s22, 1
      %s285 = scalar_select %p284, %s22, 1
      %p286 = scmp.lt.s32.totalorder %s23, 9
      %s287 = scalar_select %p286, %s23, 9
      %s288 = smul.addr %s287, 16
      %s289 = smul.addr %s285, 160
      %s290 = sadd.s32 %s288, %s289
      %s291 = smul.addr %s290, 4
      %s292 = scalar_lea.vmem %s0, %s291
      %p293 = scmp.lt.s32.totalorder %s22, 1
      %s294 = scalar_select %p293, %s22, 1
      %p295 = scmp.lt.s32.totalorder %s23, 9
      %s296 = scalar_select %p295, %s23, 9
      %s297 = smul.addr %s296, 22
      %s298 = smul.addr %s294, 220
      %s299 = sadd.s32 %s297, %s298
      %s300 = smul.addr %s299, 4
      %s301 = scalar_lea.vmem %s5, %s300
      %p302 = scmp.lt.s32.totalorder %s22, 1
      %s303 = scalar_select %p302, %s22, 1
      %p304 = scmp.lt.s32.totalorder %s23, 9
      %s305 = scalar_select %p304, %s23, 9
      %s306 = smul.addr %s305, 16
      %s307 = smul.addr %s303, 160
      %s308 = sadd.s32 %s306, %s307
      %s309 = smul.addr %s308, 8
      %s310 = scalar_lea.vmem %s6, %s309
      %v312 = vld [vmem:[%s292] sm:$0xf]
      %v313 = vld [vmem:[%s292 + $0x4] sm:$0xf]
      %v314 = vld [vmem:[%s292 + $0x8] sm:$0xf]
      %v315 = vld [vmem:[%s292 + $0xc] sm:$0xf]
      %v316 = vld [vmem:[%s292 + $0x10] sm:$0xf]
      %v317 = vld [vmem:[%s292 + $0x14] sm:$0xf]
      %v318 = vld [vmem:[%s292 + $0x18] sm:$0xf]
      %v319 = vld [vmem:[%s292 + $0x1c] sm:$0xf]
      %v320 = vld [vmem:[%s292 + $0x20] sm:$0xf]
      %v321 = vld [vmem:[%s292 + $0x24] sm:$0xf]
      %v322 = vld [vmem:[%s292 + $0x28] sm:$0xf]
      %v323 = vld [vmem:[%s292 + $0x2c] sm:$0xf]
      %v324 = vld [vmem:[%s292 + $0x30] sm:$0xf]
      %v325 = vld [vmem:[%s292 + $0x34] sm:$0xf]
      %v326 = vld [vmem:[%s292 + $0x38] sm:$0xf]
      %v327 = vld [vmem:[%s292 + $0x3c] sm:$0xf]
      %v328 = vld [vmem:[%s1] sm:$0xf]
      %v329 = vld [vmem:[%s1 + $0x4] sm:$0xf]
      %v330 = vld [vmem:[%s1 + $0x8] sm:$0xf]
      %v331 = vld [vmem:[%s1 + $0xc] sm:$0xf]
      %v332 = vld [vmem:[%s1 + $0x10] sm:$0xf]
      %v333 = vld [vmem:[%s1 + $0x14] sm:$0xf]
      %v334 = vld [vmem:[%s1 + $0x18] sm:$0xf]
      %v335 = vld [vmem:[%s1 + $0x1c] sm:$0xf]
      %v336 = vld [vmem:[%s1 + $0x20] sm:$0xf]
      %v337 = vld [vmem:[%s1 + $0x24] sm:$0xf]
      %v338 = vld [vmem:[%s1 + $0x28] sm:$0xf]
      %v339 = vld [vmem:[%s1 + $0x2c] sm:$0xf]
      %v340 = vld [vmem:[%s1 + $0x30] sm:$0xf]
      %v341 = vld [vmem:[%s1 + $0x34] sm:$0xf]
      %v342 = vld [vmem:[%s2] sm:$0x1]
      %v344 = vlaneseq
      %v345 = vshrl.u32 %v344, 7
      %v346 = vsub.s32 0, %v345
      %v347 = vrot.slane %v342, %v346
      %v365 = vunpack.c.l.b16 %v312
      %v366 = vunpack.c.l.b16 %v313
      %v367 = vunpack.c.l.b16 %v314
      %v368 = vunpack.c.l.b16 %v315
      %v369 = vunpack.c.l.b16 %v316
      %v370 = vunpack.c.l.b16 %v317
      %v371 = vunpack.c.l.b16 %v318
      %v372 = vunpack.c.l.b16 %v319
      %v373 = vunpack.c.l.b16 %v320
      %v374 = vunpack.c.l.b16 %v321
      %v375 = vunpack.c.l.b16 %v322
      %v376 = vunpack.c.l.b16 %v323
      %v377 = vunpack.c.l.b16 %v324
      %v378 = vunpack.c.l.b16 %v325
      %v379 = vunpack.c.l.b16 %v326
      %v380 = vunpack.c.l.b16 %v327
      %v381 = vpack.c.b16 %v366, %v365
      %v382 = vpack.c.b16 %v368, %v367
      %v383 = vpack.c.b16 %v370, %v369
      %v384 = vpack.c.b16 %v372, %v371
      %v385 = vpack.c.b16 %v374, %v373
      %v386 = vpack.c.b16 %v376, %v375
      %v387 = vpack.c.b16 %v378, %v377
      %v388 = vpack.c.b16 %v380, %v379
      %v403 = vunpack.c.l.b16 %v328
      %v404 = vunpack.c.l.b16 %v329
      %v405 = vunpack.c.l.b16 %v330
      %v406 = vunpack.c.l.b16 %v331
      %v407 = vunpack.c.l.b16 %v332
      %v408 = vunpack.c.l.b16 %v333
      %v409 = vunpack.c.l.b16 %v334
      %v410 = vunpack.c.l.b16 %v335
      %v411 = vunpack.c.l.b16 %v336
      %v412 = vunpack.c.l.b16 %v337
      %v413 = vunpack.c.l.b16 %v338
      %v414 = vunpack.c.l.b16 %v339
      %v415 = vunpack.c.l.b16 %v340
      %v416 = vunpack.c.l.b16 %v341
      %v417 = vpack.c.b16 %v404, %v403
      %v418 = vpack.c.b16 %v406, %v405
      %v419 = vpack.c.b16 %v408, %v407
      %v420 = vpack.c.b16 %v410, %v409
      %v421 = vpack.c.b16 %v412, %v411
      %v422 = vpack.c.b16 %v414, %v413
      %v423 = vpack.c.b16 %v416, %v415
      %vm431 = vcmask 916480
      %v433 = vsel %vm431, %v381, 0
      %v436 = vsel %vm431, %v382, 0
      %v439 = vsel %vm431, %v383, 0
      %v442 = vsel %vm431, %v384, 0
      %v445 = vsel %vm431, %v385, 0
      %v448 = vsel %vm431, %v386, 0
      %v451 = vsel %vm431, %v387, 0
      %v454 = vsel %vm431, %v388, 0
      %456 = vmatprep.subr.bf16.mxu0 0
      %457 = vmatpush1.bf16.msra.mxu0 0
      %458 = vmatprep.subr.bf16.mxu0 0
      %459 = vmatpush1.bf16.msra.mxu0 %v423
      %460 = vmatprep.subr.bf16.mxu0 0
      %461 = vmatpush1.bf16.msra.mxu0 %v422
      %462 = vmatprep.subr.bf16.mxu0 0
      %463 = vmatpush1.bf16.msra.mxu0 %v421
      %464 = vmatprep.subr.bf16.mxu0 0
      %465 = vmatpush1.bf16.msra.mxu0 %v420
      %466 = vmatprep.subr.bf16.mxu0 0
      %467 = vmatpush1.bf16.msra.mxu0 %v419
      %468 = vmatprep.subr.bf16.mxu0 0
      %469 = vmatpush1.bf16.msra.mxu0 %v418
      %470 = vmatprep.subr.bf16.mxu0 0
      %471 = vmatpush1.bf16.msra.mxu0 %v417
      %472 = vmatprep.subr.bf16.mxu0 0
      %473 = vmatpush2.bf16.msra.mxu0 0
      %474 = vmatprep.subr.bf16.mxu0 0
      %475 = vmatpush2.bf16.msra.mxu0 0
      %476 = vmatprep.subr.bf16.mxu0 0
      %477 = vmatpush2.bf16.msra.mxu0 0
      %478 = vmatprep.subr.bf16.mxu0 0
      %479 = vmatpush2.bf16.msra.mxu0 0
      %480 = vmatprep.subr.bf16.mxu0 0
      %481 = vmatpush2.bf16.msra.mxu0 0
      %482 = vmatprep.subr.bf16.mxu0 0
      %483 = vmatpush2.bf16.msra.mxu0 0
      %484 = vmatprep.subr.bf16.mxu0 0
      %485 = vmatpush2.bf16.msra.mxu0 0
      %486 = vmatprep.subr.bf16.mxu0 0
      %487 = vmatpush2.bf16.msra.mxu0 0
      %488 = vmatprep.mubr.bf16.mxu0 0
      %489 = vmatmul.mubr.bf16.gmra.mxu0 %v433
      %v490 = vpop.f32.mrf.mxu0
      %v491 = vadd.f32 %v347, %v490
      %v492 = vpop.f32.mrf.mxu0
      %v493 = vpop.f32.mrf.mxu0
      %v494 = vadd.f32 %v347, %v493
      %v495 = vpop.f32.mrf.mxu0
      %496 = vmatprep.mubr.bf16.mxu0 0
      %497 = vmatmul.mubr.bf16.gmra.mxu0 %v436
      %v498 = vpop.f32.mrf.mxu0
      %v499 = vadd.f32 %v347, %v498
      %v500 = vpop.f32.mrf.mxu0
      %v501 = vpop.f32.mrf.mxu0
      %v502 = vadd.f32 %v347, %v501
      %v503 = vpop.f32.mrf.mxu0
      %504 = vmatprep.mubr.bf16.mxu0 0
      %505 = vmatmul.mubr.bf16.gmra.mxu0 %v439
      %v506 = vpop.f32.mrf.mxu0
      %v507 = vadd.f32 %v347, %v506
      %v508 = vpop.f32.mrf.mxu0
      %v509 = vpop.f32.mrf.mxu0
      %v510 = vadd.f32 %v347, %v509
      %v511 = vpop.f32.mrf.mxu0
      %512 = vmatprep.mubr.bf16.mxu0 0
      %513 = vmatmul.mubr.bf16.gmra.mxu0 %v442
      %v514 = vpop.f32.mrf.mxu0
      %v515 = vadd.f32 %v347, %v514
      %v516 = vpop.f32.mrf.mxu0
      %v517 = vpop.f32.mrf.mxu0
      %v518 = vadd.f32 %v347, %v517
      %v519 = vpop.f32.mrf.mxu0
      %520 = vmatprep.mubr.bf16.mxu0 0
      %521 = vmatmul.mubr.bf16.gmra.mxu0 %v445
      %v522 = vpop.f32.mrf.mxu0
      %v523 = vadd.f32 %v347, %v522
      %v524 = vpop.f32.mrf.mxu0
      %v525 = vpop.f32.mrf.mxu0
      %v526 = vadd.f32 %v347, %v525
      %v527 = vpop.f32.mrf.mxu0
      %528 = vmatprep.mubr.bf16.mxu0 0
      %529 = vmatmul.mubr.bf16.gmra.mxu0 %v448
      %v530 = vpop.f32.mrf.mxu0
      %v531 = vadd.f32 %v347, %v530
      %v532 = vpop.f32.mrf.mxu0
      %v533 = vpop.f32.mrf.mxu0
      %v534 = vadd.f32 %v347, %v533
      %v535 = vpop.f32.mrf.mxu0
      %536 = vmatprep.mubr.bf16.mxu0 0
      %537 = vmatmul.mubr.bf16.gmra.mxu0 %v451
      %v538 = vpop.f32.mrf.mxu0
      %v539 = vadd.f32 %v347, %v538
      %v540 = vpop.f32.mrf.mxu0
      %v541 = vpop.f32.mrf.mxu0
      %v542 = vadd.f32 %v347, %v541
      %v543 = vpop.f32.mrf.mxu0
      %544 = vmatprep.mubr.bf16.mxu0 0
      %545 = vmatmul.mubr.bf16.gmra.mxu0 %v454
      %v546 = vpop.f32.mrf.mxu0
      %v547 = vadd.f32 %v347, %v546
      %v548 = vpop.f32.mrf.mxu0
      %v549 = vpop.f32.mrf.mxu0
      %v550 = vadd.f32 %v347, %v549
      %v551 = vpop.f32.mrf.mxu0
      %552 = vdwg.mxu0
      %v553 = vmax.f32 %v491, 0.0
      %v554 = vmax.f32 %v494, 0.0
      %v555 = vmax.f32 %v499, 0.0
      %v556 = vmax.f32 %v502, 0.0
      %v557 = vmax.f32 %v507, 0.0
      %v558 = vmax.f32 %v510, 0.0
      %v559 = vmax.f32 %v515, 0.0
      %v560 = vmax.f32 %v518, 0.0
      %v561 = vmax.f32 %v523, 0.0
      %v562 = vmax.f32 %v526, 0.0
      %v563 = vmax.f32 %v531, 0.0
      %v564 = vmax.f32 %v534, 0.0
      %v565 = vmax.f32 %v539, 0.0
      %v566 = vmax.f32 %v542, 0.0
      %v567 = vmax.f32 %v547, 0.0
      %v568 = vmax.f32 %v550, 0.0
      %v569 = vlaneseq
      %v570 = vshrl.u32 %v569, 7
      %v571 = vadd.s32 %v570, 8
      %v572 = vadd.s32 %v570, 16
      %v573 = vadd.s32 %v570, 24
      %v574 = vadd.s32 %v570, 32
      %v575 = vadd.s32 %v570, 40
      %v576 = vadd.s32 %v570, 48
      %v577 = vadd.s32 %v570, 56
      %v578 = vadd.s32 %v570, 64
      %v579 = vadd.s32 %v570, 72
      %v580 = vadd.s32 %v570, 80
      %v581 = vadd.s32 %v570, 88
      %v582 = vadd.s32 %v570, 96
      %v583 = vadd.s32 %v570, 104
      %v584 = vadd.s32 %v570, 112
      %v585 = vadd.s32 %v570, 120
      %vm586 = vcmp.lt.s32.totalorder %v570, 0
      %v587 = vsub.s32 0, %v570
      %v588 = vsel %vm586, %v587, %v570
      %v589 = vshrl.u32 %v588, 4
      %v590 = vand.u32 %v588, 15
      %v591 = vsub.s32 0, %v590
      %v592 = vsel %vm586, %v591, %v590
      %vm593 = vcmp.lt.s32.totalorder %v571, 0
      %v594 = vsub.s32 0, %v571
      %v595 = vsel %vm593, %v594, %v571
      %v596 = vshrl.u32 %v595, 4
      %v597 = vand.u32 %v595, 15
      %v598 = vsub.s32 0, %v597
      %v599 = vsel %vm593, %v598, %v597
      %vm600 = vcmp.lt.s32.totalorder %v572, 0
      %v601 = vsub.s32 0, %v572
      %v602 = vsel %vm600, %v601, %v572
      %v603 = vshrl.u32 %v602, 4
      %v604 = vand.u32 %v602, 15
      %v605 = vsub.s32 0, %v604
      %v606 = vsel %vm600, %v605, %v604
      %vm607 = vcmp.lt.s32.totalorder %v573, 0
      %v608 = vsub.s32 0, %v573
      %v609 = vsel %vm607, %v608, %v573
      %v610 = vshrl.u32 %v609, 4
      %v611 = vand.u32 %v609, 15
      %v612 = vsub.s32 0, %v611
      %v613 = vsel %vm607, %v612, %v611
      %vm614 = vcmp.lt.s32.totalorder %v574, 0
      %v615 = vsub.s32 0, %v574
      %v616 = vsel %vm614, %v615, %v574
      %v617 = vshrl.u32 %v616, 4
      %v618 = vand.u32 %v616, 15
      %v619 = vsub.s32 0, %v618
      %v620 = vsel %vm614, %v619, %v618
      %vm621 = vcmp.lt.s32.totalorder %v575, 0
      %v622 = vsub.s32 0, %v575
      %v623 = vsel %vm621, %v622, %v575
      %v624 = vshrl.u32 %v623, 4
      %v625 = vand.u32 %v623, 15
      %v626 = vsub.s32 0, %v625
      %v627 = vsel %vm621, %v626, %v625
      %vm628 = vcmp.lt.s32.totalorder %v576, 0
      %v629 = vsub.s32 0, %v576
      %v630 = vsel %vm628, %v629, %v576
      %v631 = vshrl.u32 %v630, 4
      %v632 = vand.u32 %v630, 15
      %v633 = vsub.s32 0, %v632
      %v634 = vsel %vm628, %v633, %v632
      %vm635 = vcmp.lt.s32.totalorder %v577, 0
      %v636 = vsub.s32 0, %v577
      %v637 = vsel %vm635, %v636, %v577
      %v638 = vshrl.u32 %v637, 4
      %v639 = vand.u32 %v637, 15
      %v640 = vsub.s32 0, %v639
      %v641 = vsel %vm635, %v640, %v639
      %vm642 = vcmp.lt.s32.totalorder %v578, 0
      %v643 = vsub.s32 0, %v578
      %v644 = vsel %vm642, %v643, %v578
      %v645 = vshrl.u32 %v644, 4
      %v646 = vand.u32 %v644, 15
      %v647 = vsub.s32 0, %v646
      %v648 = vsel %vm642, %v647, %v646
      %vm649 = vcmp.lt.s32.totalorder %v579, 0
      %v650 = vsub.s32 0, %v579
      %v651 = vsel %vm649, %v650, %v579
      %v652 = vshrl.u32 %v651, 4
      %v653 = vand.u32 %v651, 15
      %v654 = vsub.s32 0, %v653
      %v655 = vsel %vm649, %v654, %v653
      %vm656 = vcmp.lt.s32.totalorder %v580, 0
      %v657 = vsub.s32 0, %v580
      %v658 = vsel %vm656, %v657, %v580
      %v659 = vshrl.u32 %v658, 4
      %v660 = vand.u32 %v658, 15
      %v661 = vsub.s32 0, %v660
      %v662 = vsel %vm656, %v661, %v660
      %vm663 = vcmp.lt.s32.totalorder %v581, 0
      %v664 = vsub.s32 0, %v581
      %v665 = vsel %vm663, %v664, %v581
      %v666 = vshrl.u32 %v665, 4
      %v667 = vand.u32 %v665, 15
      %v668 = vsub.s32 0, %v667
      %v669 = vsel %vm663, %v668, %v667
      %vm670 = vcmp.lt.s32.totalorder %v582, 0
      %v671 = vsub.s32 0, %v582
      %v672 = vsel %vm670, %v671, %v582
      %v673 = vshrl.u32 %v672, 4
      %v674 = vand.u32 %v672, 15
      %v675 = vsub.s32 0, %v674
      %v676 = vsel %vm670, %v675, %v674
      %vm677 = vcmp.lt.s32.totalorder %v583, 0
      %v678 = vsub.s32 0, %v583
      %v679 = vsel %vm677, %v678, %v583
      %v680 = vshrl.u32 %v679, 4
      %v681 = vand.u32 %v679, 15
      %v682 = vsub.s32 0, %v681
      %v683 = vsel %vm677, %v682, %v681
      %vm684 = vcmp.lt.s32.totalorder %v584, 0
      %v685 = vsub.s32 0, %v584
      %v686 = vsel %vm684, %v685, %v584
      %v687 = vshrl.u32 %v686, 4
      %v688 = vand.u32 %v686, 15
      %v689 = vsub.s32 0, %v688
      %v690 = vsel %vm684, %v689, %v688
      %vm691 = vcmp.lt.s32.totalorder %v585, 0
      %v692 = vsub.s32 0, %v585
      %v693 = vsel %vm691, %v692, %v585
      %v694 = vshrl.u32 %v693, 4
      %v695 = vand.u32 %v693, 15
      %v696 = vsub.s32 0, %v695
      %v697 = vsel %vm691, %v696, %v695
      %vm698 = vcmp.ne.s32.totalorder %v592, 0
      %vm699 = vcmp.ne.s32.totalorder %v599, 0
      %vm700 = vcmp.ne.s32.totalorder %v606, 0
      %vm701 = vcmp.ne.s32.totalorder %v613, 0
      %vm702 = vcmp.ne.s32.totalorder %v620, 0
      %vm703 = vcmp.ne.s32.totalorder %v627, 0
      %vm704 = vcmp.ne.s32.totalorder %v634, 0
      %vm705 = vcmp.ne.s32.totalorder %v641, 0
      %vm706 = vcmp.ne.s32.totalorder %v648, 0
      %vm707 = vcmp.ne.s32.totalorder %v655, 0
      %vm708 = vcmp.ne.s32.totalorder %v662, 0
      %vm709 = vcmp.ne.s32.totalorder %v669, 0
      %vm710 = vcmp.ne.s32.totalorder %v676, 0
      %vm711 = vcmp.ne.s32.totalorder %v683, 0
      %vm712 = vcmp.ne.s32.totalorder %v690, 0
      %vm713 = vcmp.ne.s32.totalorder %v697, 0
      %vm714 = vcmp.lt.s32.totalorder %v592, 0
      %vm715 = vcmp.lt.s32.totalorder %v599, 0
      %vm716 = vcmp.lt.s32.totalorder %v606, 0
      %vm717 = vcmp.lt.s32.totalorder %v613, 0
      %vm718 = vcmp.lt.s32.totalorder %v620, 0
      %vm719 = vcmp.lt.s32.totalorder %v627, 0
      %vm720 = vcmp.lt.s32.totalorder %v634, 0
      %vm721 = vcmp.lt.s32.totalorder %v641, 0
      %vm722 = vcmp.lt.s32.totalorder %v648, 0
      %vm723 = vcmp.lt.s32.totalorder %v655, 0
      %vm724 = vcmp.lt.s32.totalorder %v662, 0
      %vm725 = vcmp.lt.s32.totalorder %v669, 0
      %vm726 = vcmp.lt.s32.totalorder %v676, 0
      %vm727 = vcmp.lt.s32.totalorder %v683, 0
      %vm728 = vcmp.lt.s32.totalorder %v690, 0
      %vm729 = vcmp.lt.s32.totalorder %v697, 0
      %vm730 = vmand %vm714, %vm698
      %vm731 = vmand %vm715, %vm699
      %vm732 = vmand %vm716, %vm700
      %vm733 = vmand %vm717, %vm701
      %vm734 = vmand %vm718, %vm702
      %vm735 = vmand %vm719, %vm703
      %vm736 = vmand %vm720, %vm704
      %vm737 = vmand %vm721, %vm705
      %vm738 = vmand %vm722, %vm706
      %vm739 = vmand %vm723, %vm707
      %vm740 = vmand %vm724, %vm708
      %vm741 = vmand %vm725, %vm709
      %vm742 = vmand %vm726, %vm710
      %vm743 = vmand %vm727, %vm711
      %vm744 = vmand %vm728, %vm712
      %vm745 = vmand %vm729, %vm713
      %v746 = vadd.s32 %v592, 16
      %v747 = vadd.s32 %v599, 16
      %v748 = vadd.s32 %v606, 16
      %v749 = vadd.s32 %v613, 16
      %v750 = vadd.s32 %v620, 16
      %v751 = vadd.s32 %v627, 16
      %v752 = vadd.s32 %v634, 16
      %v753 = vadd.s32 %v641, 16
      %v754 = vadd.s32 %v648, 16
      %v755 = vadd.s32 %v655, 16
      %v756 = vadd.s32 %v662, 16
      %v757 = vadd.s32 %v669, 16
      %v758 = vadd.s32 %v676, 16
      %v759 = vadd.s32 %v683, 16
      %v760 = vadd.s32 %v690, 16
      %v761 = vadd.s32 %v697, 16
      %v762 = vsel %vm730, %v746, %v592
      %v763 = vsel %vm731, %v747, %v599
      %v764 = vsel %vm732, %v748, %v606
      %v765 = vsel %vm733, %v749, %v613
      %v766 = vsel %vm734, %v750, %v620
      %v767 = vsel %vm735, %v751, %v627
      %v768 = vsel %vm736, %v752, %v634
      %v769 = vsel %vm737, %v753, %v641
      %v770 = vsel %vm738, %v754, %v648
      %v771 = vsel %vm739, %v755, %v655
      %v772 = vsel %vm740, %v756, %v662
      %v773 = vsel %vm741, %v757, %v669
      %v774 = vsel %vm742, %v758, %v676
      %v775 = vsel %vm743, %v759, %v683
      %v776 = vsel %vm744, %v760, %v690
      %v777 = vsel %vm745, %v761, %v697
      %vm778 = vcmp.lt.s32.totalorder %v762, 8
      %vm779 = vcmp.lt.s32.totalorder %v763, 8
      %vm780 = vcmp.lt.s32.totalorder %v764, 8
      %vm781 = vcmp.lt.s32.totalorder %v765, 8
      %vm782 = vcmp.lt.s32.totalorder %v766, 8
      %vm783 = vcmp.lt.s32.totalorder %v767, 8
      %vm784 = vcmp.lt.s32.totalorder %v768, 8
      %vm785 = vcmp.lt.s32.totalorder %v769, 8
      %vm786 = vcmp.lt.s32.totalorder %v770, 8
      %vm787 = vcmp.lt.s32.totalorder %v771, 8
      %vm788 = vcmp.lt.s32.totalorder %v772, 8
      %vm789 = vcmp.lt.s32.totalorder %v773, 8
      %vm790 = vcmp.lt.s32.totalorder %v774, 8
      %vm791 = vcmp.lt.s32.totalorder %v775, 8
      %vm792 = vcmp.lt.s32.totalorder %v776, 8
      %vm793 = vcmp.lt.s32.totalorder %v777, 8
      %p794 = scmp.ge.s32.totalorder %s23, 1
      %p795 = scmp.le.s32.totalorder %s23, 8
      %p796 = pnand %p794, %p795
      %p797 = pneg %p796
      %s798 = scalar_select %p797, 1, 0
      %v799 = vstv %s798
      %vm800 = vcmp.eq.s32.totalorder %v799, 1
      %vm801 = vmand %vm778, %vm800
      %vm802 = vmand %vm779, %vm800
      %vm803 = vmand %vm780, %vm800
      %vm804 = vmand %vm781, %vm800
      %vm805 = vmand %vm782, %vm800
      %vm806 = vmand %vm783, %vm800
      %vm807 = vmand %vm784, %vm800
      %vm808 = vmand %vm785, %vm800
      %vm809 = vmand %vm786, %vm800
      %vm810 = vmand %vm787, %vm800
      %vm811 = vmand %vm788, %vm800
      %vm812 = vmand %vm789, %vm800
      %vm813 = vmand %vm790, %vm800
      %vm814 = vmand %vm791, %vm800
      %vm815 = vmand %vm792, %vm800
      %vm816 = vmand %vm793, %vm800
      %v817 = vsel %vm801, 1, 0
      %v818 = vsel %vm802, 1, 0
      %v819 = vsel %vm803, 1, 0
      %v820 = vsel %vm804, 1, 0
      %v821 = vsel %vm805, 1, 0
      %v822 = vsel %vm806, 1, 0
      %v823 = vsel %vm807, 1, 0
      %v824 = vsel %vm808, 1, 0
      %v825 = vsel %vm809, 1, 0
      %v826 = vsel %vm810, 1, 0
      %v827 = vsel %vm811, 1, 0
      %v828 = vsel %vm812, 1, 0
      %v829 = vsel %vm813, 1, 0
      %v830 = vsel %vm814, 1, 0
      %v831 = vsel %vm815, 1, 0
      %v832 = vsel %vm816, 1, 0
      %vm833 = vcmp.eq.s32.totalorder %v817, 1
      %vm834 = vcmp.eq.s32.totalorder %v818, 1
      %vm835 = vcmp.eq.s32.totalorder %v819, 1
      %vm836 = vcmp.eq.s32.totalorder %v820, 1
      %vm837 = vcmp.eq.s32.totalorder %v821, 1
      %vm838 = vcmp.eq.s32.totalorder %v822, 1
      %vm839 = vcmp.eq.s32.totalorder %v823, 1
      %vm840 = vcmp.eq.s32.totalorder %v824, 1
      %vm841 = vcmp.eq.s32.totalorder %v825, 1
      %vm842 = vcmp.eq.s32.totalorder %v826, 1
      %vm843 = vcmp.eq.s32.totalorder %v827, 1
      %vm844 = vcmp.eq.s32.totalorder %v828, 1
      %vm845 = vcmp.eq.s32.totalorder %v829, 1
      %vm846 = vcmp.eq.s32.totalorder %v830, 1
      %vm847 = vcmp.eq.s32.totalorder %v831, 1
      %vm848 = vcmp.eq.s32.totalorder %v832, 1
      %v849 = vsel %vm833, %v553, 0.0
      %v850 = vsel %vm834, %v554, 0.0
      %v851 = vsel %vm835, %v555, 0.0
      %v852 = vsel %vm836, %v556, 0.0
      %v853 = vsel %vm837, %v557, 0.0
      %v854 = vsel %vm838, %v558, 0.0
      %v855 = vsel %vm839, %v559, 0.0
      %v856 = vsel %vm840, %v560, 0.0
      %v857 = vsel %vm841, %v561, 0.0
      %v858 = vsel %vm842, %v562, 0.0
      %v859 = vsel %vm843, %v563, 0.0
      %v860 = vsel %vm844, %v564, 0.0
      %v861 = vsel %vm845, %v565, 0.0
      %v862 = vsel %vm846, %v566, 0.0
      %v863 = vsel %vm847, %v567, 0.0
      %v864 = vsel %vm848, %v568, 0.0
      %v865 = vpack.c.bf16 %v850, %v849
      %v866 = vpack.c.bf16 %v852, %v851
      %v867 = vpack.c.bf16 %v854, %v853
      %v868 = vpack.c.bf16 %v856, %v855
      %v869 = vpack.c.bf16 %v858, %v857
      %v870 = vpack.c.bf16 %v860, %v859
      %v871 = vpack.c.bf16 %v862, %v861
      %v872 = vpack.c.bf16 %v864, %v863
      %873 = vst [vmem:[%s301] sm:$0xf] 0
      %874 = vst [vmem:[%s301 + $0x4] sm:$0xf] 0
      %875 = vst [vmem:[%s301 + $0x8] sm:$0xf] 0
      %876 = vst [vmem:[%s301 + $0xc] sm:$0xf] 0
      %877 = vst [vmem:[%s301 + $0x10] sm:$0xf] 0
      %878 = vst [vmem:[%s301 + $0x14] sm:$0xf] 0
      %879 = vst [vmem:[%s301 + $0x18] sm:$0xf] 0
      %880 = vst [vmem:[%s301 + $0x1c] sm:$0xf] 0
      %881 = vst [vmem:[%s301 + $0x20] sm:$0xf] 0
      %882 = vst [vmem:[%s301 + $0x24] sm:$0xf] 0
      %883 = vst [vmem:[%s301 + $0x28] sm:$0xf] 0
      %884 = vst [vmem:[%s301 + $0x2c] sm:$0xf] 0
      %885 = vst [vmem:[%s301 + $0x30] sm:$0xf] 0
      %886 = vst [vmem:[%s301 + $0x34] sm:$0xf] 0
      %887 = vst [vmem:[%s301 + $0x38] sm:$0xf] 0
      %888 = vst [vmem:[%s301 + $0x3c] sm:$0xf] 0
      %889 = vst [vmem:[%s301 + $0x40] sm:$0xf] 0
      %890 = vst [vmem:[%s301 + $0x44] sm:$0xf] 0
      %891 = vst [vmem:[%s301 + $0x48] sm:$0xf] 0
      %892 = vst [vmem:[%s301 + $0x4c] sm:$0xf] 0
      %893 = vst [vmem:[%s301 + $0x50] sm:$0xf] 0
      %894 = vst [vmem:[%s301 + $0x54] sm:$0xf] 0
      %v903 = vunpack.c.l.b16 %v865
      %v904 = vunpack.c.h.b16 %v865
      %v905 = vunpack.c.l.b16 %v866
      %v906 = vunpack.c.h.b16 %v866
      %v907 = vunpack.c.l.b16 %v867
      %v908 = vunpack.c.h.b16 %v867
      %v909 = vunpack.c.l.b16 %v868
      %v910 = vunpack.c.h.b16 %v868
      %v911 = vunpack.c.l.b16 %v869
      %v912 = vunpack.c.h.b16 %v869
      %v913 = vunpack.c.l.b16 %v870
      %v914 = vunpack.c.h.b16 %v870
      %v915 = vunpack.c.l.b16 %v871
      %v916 = vunpack.c.h.b16 %v871
      %v917 = vunpack.c.l.b16 %v872
      %v918 = vunpack.c.h.b16 %v872
      %v919 = vpack.c.b16 %v903, %v903
      %v920 = vpack.c.b16 %v904, %v904
      %v921 = vpack.c.b16 %v905, %v905
      %v922 = vpack.c.b16 %v906, %v906
      %v923 = vpack.c.b16 %v907, %v907
      %v924 = vpack.c.b16 %v908, %v908
      %v925 = vpack.c.b16 %v909, %v909
      %v926 = vpack.c.b16 %v910, %v910
      %v927 = vpack.c.b16 %v911, %v911
      %v928 = vpack.c.b16 %v912, %v912
      %v929 = vpack.c.b16 %v913, %v913
      %v930 = vpack.c.b16 %v914, %v914
      %v931 = vpack.c.b16 %v915, %v915
      %v932 = vpack.c.b16 %v916, %v916
      %v933 = vpack.c.b16 %v917, %v917
      %v934 = vpack.c.b16 %v918, %v918
      %vm935 = vsmask.f32 256
      %vm936 = vsmask.f32 4368
      %vm937 = vmor %vm935, %vm936
      %v939 = vshrl.u32 %v919, 16
      %v941 = vrot.slane %v939, 7
      %v942 = vshll.u32 %v919, 16
      %v944 = vor.u32 %v941, %v942
      %v945 = vrot.slane %v941, 4
      %v947 = vshrl.u32 %v920, 16
      %v949 = vrot.slane %v947, 7
      %v950 = vshll.u32 %v920, 16
      %v952 = vor.u32 %v949, %v950
      %v953 = vsel %vm937, %v945, %v952
      %v954 = vrot.slane %v949, 4
      %v956 = vshrl.u32 %v921, 16
      %v958 = vrot.slane %v956, 7
      %v959 = vshll.u32 %v921, 16
      %v961 = vor.u32 %v958, %v959
      %v962 = vsel %vm937, %v954, %v961
      %v963 = vrot.slane %v958, 4
      %v965 = vshrl.u32 %v922, 16
      %v967 = vrot.slane %v965, 7
      %v968 = vshll.u32 %v922, 16
      %v970 = vor.u32 %v967, %v968
      %v971 = vsel %vm937, %v963, %v970
      %v972 = vrot.slane %v967, 4
      %v974 = vshrl.u32 %v923, 16
      %v976 = vrot.slane %v974, 7
      %v977 = vshll.u32 %v923, 16
      %v979 = vor.u32 %v976, %v977
      %v980 = vsel %vm937, %v972, %v979
      %v981 = vrot.slane %v976, 4
      %v983 = vshrl.u32 %v924, 16
      %v985 = vrot.slane %v983, 7
      %v986 = vshll.u32 %v924, 16
      %v988 = vor.u32 %v985, %v986
      %v989 = vsel %vm937, %v981, %v988
      %v990 = vrot.slane %v985, 4
      %v992 = vshrl.u32 %v925, 16
      %v994 = vrot.slane %v992, 7
      %v995 = vshll.u32 %v925, 16
      %v997 = vor.u32 %v994, %v995
      %v998 = vsel %vm937, %v990, %v997
      %v999 = vrot.slane %v994, 4
      %v1001 = vshrl.u32 %v926, 16
      %v1003 = vrot.slane %v1001, 7
      %v1004 = vshll.u32 %v926, 16
      %v1006 = vor.u32 %v1003, %v1004
      %v1007 = vsel %vm937, %v999, %v1006
      %v1008 = vrot.slane %v1003, 4
      %v1010 = vshrl.u32 %v927, 16
      %v1012 = vrot.slane %v1010, 7
      %v1013 = vshll.u32 %v927, 16
      %v1015 = vor.u32 %v1012, %v1013
      %v1016 = vsel %vm937, %v1008, %v1015
      %v1017 = vrot.slane %v1012, 4
      %v1019 = vshrl.u32 %v928, 16
      %v1021 = vrot.slane %v1019, 7
      %v1022 = vshll.u32 %v928, 16
      %v1024 = vor.u32 %v1021, %v1022
      %v1025 = vsel %vm937, %v1017, %v1024
      %v1026 = vrot.slane %v1021, 4
      %v1028 = vshrl.u32 %v929, 16
      %v1030 = vrot.slane %v1028, 7
      %v1031 = vshll.u32 %v929, 16
      %v1033 = vor.u32 %v1030, %v1031
      %v1034 = vsel %vm937, %v1026, %v1033
      %v1035 = vrot.slane %v1030, 4
      %v1037 = vshrl.u32 %v930, 16
      %v1039 = vrot.slane %v1037, 7
      %v1040 = vshll.u32 %v930, 16
      %v1042 = vor.u32 %v1039, %v1040
      %v1043 = vsel %vm937, %v1035, %v1042
      %v1044 = vrot.slane %v1039, 4
      %v1046 = vshrl.u32 %v931, 16
      %v1048 = vrot.slane %v1046, 7
      %v1049 = vshll.u32 %v931, 16
      %v1051 = vor.u32 %v1048, %v1049
      %v1052 = vsel %vm937, %v1044, %v1051
      %v1053 = vrot.slane %v1048, 4
      %v1055 = vshrl.u32 %v932, 16
      %v1057 = vrot.slane %v1055, 7
      %v1058 = vshll.u32 %v932, 16
      %v1060 = vor.u32 %v1057, %v1058
      %v1061 = vsel %vm937, %v1053, %v1060
      %v1062 = vrot.slane %v1057, 4
      %v1064 = vshrl.u32 %v933, 16
      %v1066 = vrot.slane %v1064, 7
      %v1067 = vshll.u32 %v933, 16
      %v1069 = vor.u32 %v1066, %v1067
      %v1070 = vsel %vm937, %v1062, %v1069
      %v1071 = vrot.slane %v1066, 4
      %v1073 = vshrl.u32 %v934, 16
      %v1075 = vrot.slane %v1073, 7
      %v1076 = vshll.u32 %v934, 16
      %v1078 = vor.u32 %v1075, %v1076
      %v1079 = vsel %vm937, %v1071, %v1078
      %v1080 = vrot.slane %v1075, 4
      %vm1098 = vcmask 1043456
      %vm1099 = vsmask.f32 7938
      %vm1100 = vmand %vm1098, %vm1099
      %v1101 = vld [vmem:[%s301 + $0x8] sm:$0xf]
      %v1102 = vsel %vm1100, %v944, %v1101
      %1103 = vst [vmem:[%s301 + $0x8] sm:$0xf] %v1102
      %1104 = vst [vmem:[%s301 + $0xc] sm:$0xf] %v953
      %1105 = vst [vmem:[%s301 + $0x10] sm:$0xf] %v962
      %1106 = vst [vmem:[%s301 + $0x14] sm:$0xf] %v971
      %1107 = vst [vmem:[%s301 + $0x18] sm:$0xf] %v980
      %1108 = vst [vmem:[%s301 + $0x1c] sm:$0xf] %v989
      %1109 = vst [vmem:[%s301 + $0x20] sm:$0xf] %v998
      %1110 = vst [vmem:[%s301 + $0x24] sm:$0xf] %v1007
      %1111 = vst [vmem:[%s301 + $0x28] sm:$0xf] %v1016
      %1112 = vst [vmem:[%s301 + $0x2c] sm:$0xf] %v1025
      %1113 = vst [vmem:[%s301 + $0x30] sm:$0xf] %v1034
      %1114 = vst [vmem:[%s301 + $0x34] sm:$0xf] %v1043
      %1115 = vst [vmem:[%s301 + $0x38] sm:$0xf] %v1052
      %1116 = vst [vmem:[%s301 + $0x3c] sm:$0xf] %v1061
      %1117 = vst [vmem:[%s301 + $0x40] sm:$0xf] %v1070
      %1118 = vst [vmem:[%s301 + $0x44] sm:$0xf] %v1079
      %vm1119 = vcmask 1040384
      %vm1120 = vmand %vm1119, %vm935
      %v1121 = vld [vmem:[%s301 + $0x48] sm:$0x1]
      %v1122 = vsel %vm1120, %v1080, %v1121
      %1123 = vst [vmem:[%s301 + $0x48] sm:$0x1] %v1122
      %v1124 = vld [vmem:[%s3] sm:$0x3]
      %v1125 = vld [vmem:[%s4] sm:$0x1]
      %v1127 = vlaneseq
      %v1128 = vshrl.u32 %v1127, 7
      %v1129 = vsub.s32 0, %v1128
      %v1130 = vrot.slane %v1125, %v1129
      %vm1132 = vcmask 31744
      %v1133 = vsel %vm1132, %v381, 0
      %v1135 = vsel %vm1132, %v382, 0
      %v1137 = vsel %vm1132, %v383, 0
      %v1139 = vsel %vm1132, %v384, 0
      %v1141 = vsel %vm1132, %v385, 0
      %v1143 = vsel %vm1132, %v386, 0
      %v1145 = vsel %vm1132, %v387, 0
      %v1147 = vsel %vm1132, %v388, 0
      %vm1149 = vcmask 1041408
      %v1151 = vsel %vm1149, %v1124, 0
      %1153 = vmatprep.subr.bf16.mxu0 0
      %1154 = vmatpush1.bf16.msra.mxu0 0
      %1155 = vmatprep.subr.bf16.mxu0 0
      %1156 = vmatpush1.bf16.msra.mxu0 0
      %1157 = vmatprep.subr.bf16.mxu0 0
      %1158 = vmatpush1.bf16.msra.mxu0 0
      %1159 = vmatprep.subr.bf16.mxu0 0
      %1160 = vmatpush1.bf16.msra.mxu0 0
      %1161 = vmatprep.subr.bf16.mxu0 0
      %1162 = vmatpush1.bf16.msra.mxu0 0
      %1163 = vmatprep.subr.bf16.mxu0 0
      %1164 = vmatpush1.bf16.msra.mxu0 0
      %1165 = vmatprep.subr.bf16.mxu0 0
      %1166 = vmatpush1.bf16.msra.mxu0 0
      %1167 = vmatprep.subr.bf16.mxu0 0
      %1168 = vmatpush1.bf16.msra.mxu0 %v1151
      %1169 = vmatprep.subr.bf16.mxu0 0
      %1170 = vmatpush2.bf16.msra.mxu0 0
      %1171 = vmatprep.subr.bf16.mxu0 0
      %1172 = vmatpush2.bf16.msra.mxu0 0
      %1173 = vmatprep.subr.bf16.mxu0 0
      %1174 = vmatpush2.bf16.msra.mxu0 0
      %1175 = vmatprep.subr.bf16.mxu0 0
      %1176 = vmatpush2.bf16.msra.mxu0 0
      %1177 = vmatprep.subr.bf16.mxu0 0
      %1178 = vmatpush2.bf16.msra.mxu0 0
      %1179 = vmatprep.subr.bf16.mxu0 0
      %1180 = vmatpush2.bf16.msra.mxu0 0
      %1181 = vmatprep.subr.bf16.mxu0 0
      %1182 = vmatpush2.bf16.msra.mxu0 0
      %1183 = vmatprep.subr.bf16.mxu0 0
      %1184 = vmatpush2.bf16.msra.mxu0 0
      %1185 = vmatprep.mubr.bf16.mxu0 0
      %1186 = vmatmul.mubr.bf16.gmra.mxu0 %v1133
      %v1187 = vpop.f32.mrf.mxu0
      %v1188 = vadd.f32 %v1130, %v1187
      %v1189 = vpop.f32.mrf.mxu0
      %v1190 = vpop.f32.mrf.mxu0
      %v1191 = vadd.f32 %v1130, %v1190
      %v1192 = vpop.f32.mrf.mxu0
      %1193 = vmatprep.mubr.bf16.mxu0 0
      %1194 = vmatmul.mubr.bf16.gmra.mxu0 %v1135
      %v1195 = vpop.f32.mrf.mxu0
      %v1196 = vadd.f32 %v1130, %v1195
      %v1197 = vpop.f32.mrf.mxu0
      %v1198 = vpop.f32.mrf.mxu0
      %v1199 = vadd.f32 %v1130, %v1198
      %v1200 = vpop.f32.mrf.mxu0
      %1201 = vmatprep.mubr.bf16.mxu0 0
      %1202 = vmatmul.mubr.bf16.gmra.mxu0 %v1137
      %v1203 = vpop.f32.mrf.mxu0
      %v1204 = vadd.f32 %v1130, %v1203
      %v1205 = vpop.f32.mrf.mxu0
      %v1206 = vpop.f32.mrf.mxu0
      %v1207 = vadd.f32 %v1130, %v1206
      %v1208 = vpop.f32.mrf.mxu0
      %1209 = vmatprep.mubr.bf16.mxu0 0
      %1210 = vmatmul.mubr.bf16.gmra.mxu0 %v1139
      %v1211 = vpop.f32.mrf.mxu0
      %v1212 = vadd.f32 %v1130, %v1211
      %v1213 = vpop.f32.mrf.mxu0
      %v1214 = vpop.f32.mrf.mxu0
      %v1215 = vadd.f32 %v1130, %v1214
      %v1216 = vpop.f32.mrf.mxu0
      %1217 = vmatprep.mubr.bf16.mxu0 0
      %1218 = vmatmul.mubr.bf16.gmra.mxu0 %v1141
      %v1219 = vpop.f32.mrf.mxu0
      %v1220 = vadd.f32 %v1130, %v1219
      %v1221 = vpop.f32.mrf.mxu0
      %v1222 = vpop.f32.mrf.mxu0
      %v1223 = vadd.f32 %v1130, %v1222
      %v1224 = vpop.f32.mrf.mxu0
      %1225 = vmatprep.mubr.bf16.mxu0 0
      %1226 = vmatmul.mubr.bf16.gmra.mxu0 %v1143
      %v1227 = vpop.f32.mrf.mxu0
      %v1228 = vadd.f32 %v1130, %v1227
      %v1229 = vpop.f32.mrf.mxu0
      %v1230 = vpop.f32.mrf.mxu0
      %v1231 = vadd.f32 %v1130, %v1230
      %v1232 = vpop.f32.mrf.mxu0
      %1233 = vmatprep.mubr.bf16.mxu0 0
      %1234 = vmatmul.mubr.bf16.gmra.mxu0 %v1145
      %v1235 = vpop.f32.mrf.mxu0
      %v1236 = vadd.f32 %v1130, %v1235
      %v1237 = vpop.f32.mrf.mxu0
      %v1238 = vpop.f32.mrf.mxu0
      %v1239 = vadd.f32 %v1130, %v1238
      %v1240 = vpop.f32.mrf.mxu0
      %1241 = vmatprep.mubr.bf16.mxu0 0
      %1242 = vmatmul.mubr.bf16.gmra.mxu0 %v1147
      %v1243 = vpop.f32.mrf.mxu0
      %v1244 = vadd.f32 %v1130, %v1243
      %v1245 = vpop.f32.mrf.mxu0
      %v1246 = vpop.f32.mrf.mxu0
      %v1247 = vadd.f32 %v1130, %v1246
      %v1248 = vpop.f32.mrf.mxu0
      %1249 = vdwg.mxu0
      %1250 = vst [vmem:[%s310] sm:$0xff] %v1188
      %1251 = vst [vmem:[%s310 + $0x8] sm:$0xff] %v1191
      %1252 = vst [vmem:[%s310 + $0x10] sm:$0xff] %v1196
      %1253 = vst [vmem:[%s310 + $0x18] sm:$0xff] %v1199
      %1254 = vst [vmem:[%s310 + $0x20] sm:$0xff] %v1204
      %1255 = vst [vmem:[%s310 + $0x28] sm:$0xff] %v1207
      %1256 = vst [vmem:[%s310 + $0x30] sm:$0xff] %v1212
      %1257 = vst [vmem:[%s310 + $0x38] sm:$0xff] %v1215
      %1258 = vst [vmem:[%s310 + $0x40] sm:$0xff] %v1220
      %1259 = vst [vmem:[%s310 + $0x48] sm:$0xff] %v1223
      %1260 = vst [vmem:[%s310 + $0x50] sm:$0xff] %v1228
      %1261 = vst [vmem:[%s310 + $0x58] sm:$0xff] %v1231
      %1262 = vst [vmem:[%s310 + $0x60] sm:$0xff] %v1236
      %1263 = vst [vmem:[%s310 + $0x68] sm:$0xff] %v1239
      %1264 = vst [vmem:[%s310 + $0x70] sm:$0xff] %v1244
      %1265 = vst [vmem:[%s310 + $0x78] sm:$0xff] %v1247
      %p1266 = scmp.lt.s32.totalorder %s22, 1
      %s1267 = scalar_select %p1266, %s22, 1
      %p1268 = scmp.lt.s32.totalorder %s23, 9
      %s1269 = scalar_select %p1268, %s23, 9
      %s1270 = smul.addr %s1269, 22
      %s1271 = smul.addr %s1267, 220
      %s1272 = sadd.s32 %s1270, %s1271
      %s1273 = smul.addr %s1272, 4
      %s1274 = scalar_lea.vmem %s5, %s1273
      %p1275 = scmp.lt.s32.totalorder %s22, 1
      %s1276 = scalar_select %p1275, %s22, 1
      %p1277 = scmp.lt.s32.totalorder %s23, 9
      %s1278 = scalar_select %p1277, %s23, 9
      %s1279 = smul.addr %s1278, 16
      %s1280 = smul.addr %s1276, 160
      %s1281 = sadd.s32 %s1279, %s1280
      %s1282 = smul.addr %s1281, 8
      %s1283 = scalar_lea.vmem %s6, %s1282
      // Predicated region
      $region41: #{res3d_block_d.2} parent=39 // pred_check
        %p1284 = pneg %p162
      $region42: #{res3d_block_d.2} parent=39 // pred_check_branch
        %1286 = sbr.rel (%p1284) target = $region44
      $region43: #{res3d_block_d.2} parent=39 // pred_region
        _
      $region44: #{res3d_block_d.2} parent=39 // pred_fallthru
        _
      // Predicated region
      $region45: #{res3d_block_d.2} parent=39 // pred_check
        %p1287 = pneg %p190
      $region46: #{res3d_block_d.2} parent=39 // pred_check_branch
        %1289 = sbr.rel (%p1287) target = $region48
      $region47: #{res3d_block_d.2} parent=39 // pred_region
        _
      $region48: #{res3d_block_d.2} parent=39 // pred_fallthru
        _
    $region40: #{res3d_block_d.2} parent=5 // pred_fallthru
      _
    %p1290 = scmp.le.s32.totalorder 2, %s13
    // Predicated region
    $region49: #{res3d_block_d.2} parent=5 // pred_check
      %p1291 = pneg %p1290
    $region50: #{res3d_block_d.2} parent=5 // pred_check_branch
      %1293 = sbr.rel (%p1291) target = $region52
    $region51: #{res3d_block_d.2} parent=5 // pred_region
      %s1294 = ssub.s32 %s13, 2
      // Predicated region
      $region53: #{res3d_block_d.2} parent=51 // pred_check
        %p1295 = pneg %p168
      $region54: #{res3d_block_d.2} parent=51 // pred_check_branch
        %1297 = sbr.rel (%p1295) target = $region56
      $region55: #{res3d_block_d.2} parent=51 // pred_region
        %p1298 = scmp.lt.s32.totalorder %s24, 1
        %s1299 = scalar_select %p1298, %s24, 1
        %p1300 = scmp.lt.s32.totalorder %s25, 9
        %s1301 = scalar_select %p1300, %s25, 9
        %s1302 = smul.addr %s1301, 22
        %s1303 = smul.addr %s1299, 220
        %s1304 = sadd.s32 %s1302, %s1303
        %s1305 = smul.addr %s1304, 4
        %s1306 = scalar_lea.vmem %s5, %s1305
      $region56: #{res3d_block_d.2} parent=51 // pred_fallthru
        _
      // Predicated region
      $region57: #{res3d_block_d.2} parent=51 // pred_check
        %p1307 = pneg %p196
      $region58: #{res3d_block_d.2} parent=51 // pred_check_branch
        %1309 = sbr.rel (%p1307) target = $region60
      $region59: #{res3d_block_d.2} parent=51 // pred_region
        %p1310 = scmp.lt.s32.totalorder %s24, 1
        %s1311 = scalar_select %p1310, %s24, 1
        %p1312 = scmp.lt.s32.totalorder %s25, 9
        %s1313 = scalar_select %p1312, %s25, 9
        %s1314 = smul.addr %s1313, 16
        %s1315 = smul.addr %s1311, 160
        %s1316 = sadd.s32 %s1314, %s1315
        %s1317 = smul.addr %s1316, 8
        %s1318 = scalar_lea.vmem %s6, %s1317
      $region60: #{res3d_block_d.2} parent=51 // pred_fallthru
        _
    $region52: #{res3d_block_d.2} parent=5 // pred_fallthru
      _
  $region6: #{res3d_block_d.2} parent=0 // loop_footer
    %s17 = sadd.s32 1, %s13
  $region7: #{res3d_block_d.2} parent=0 // loop_footer_branch
    %12 = sbr.rel target = $region3
  $region8: #{res3d_block_d.2} parent=0 // loop_exit
    _

// kernel: res3d_block_d.3
$region0: #{res3d_block_d.3}
  #allocation0 [shape = 'u32[]', space=smem, size = 0x4, offset = 0x4, fixed_abs, tag = 'smem constant byte address 0x4 - core index']
  #allocation1 [shape = 'u32[144,128]{1,0:T(1,128)}', space=vmem, size = 0x12000, scoped, tag = 'internal scratch']
  #allocation2 [shape = 'bf16[160,1152]{1,0:T(8,128)(2,1)}', space=vmem, size = 0x5a000, scoped, tag = 'scratch operand']
  #allocation3 [shape = 'f32[128,128]{1,0:T(8,128)}', space=vmem, size = 0x10000, scoped, tag = 'scratch operand']
  %s0 = inlined_call_operand.vmem [shape: bf16[2,10,176,128], index: 0, kind: input, shape index: {}, may-alias: {0,1,2}]
  %s1 = inlined_call_operand.vmem [shape: bf16[2,10,176,128], index: 1, kind: input, shape index: {}, may-alias: {0,1,2}]
  %s2 = inlined_call_operand.vmem [shape: bf16[2,10,176,128], index: 2, kind: input, shape index: {}, may-alias: {0,1,2}]
  %s3 = inlined_call_operand.vmem [shape: bf16[3,1152,128], index: 3, kind: input, shape index: {}]
  %s4 = inlined_call_operand.vmem [shape: f32[1,128], index: 4, kind: input, shape index: {}]
  %s5 = inlined_call_operand.vmem [shape: f32[2,10,128,128], index: 5, kind: input, shape index: {}]
  %s6 = inlined_call_operand.vmem [shape: f32[2,8,128,128], index: 6, kind: output, shape index: {}]
  %s7 = sld [smem:[#allocation0]]
  $region57: #{res3d_block_d.3} parent=0
    _
  %s9 = ssub.s32 1, %s7
  %s10 = scalar_select 0, %s9, %s7
  loop: start=0, step=1, limit=18
  $region2: #{res3d_block_d.3} parent=0 // loop_pre_header
    _
  $region3: #{res3d_block_d.3} parent=0 // loop_header
    %s12 = sphi 0, %s16
    %p13 = scmp.ge.s32.totalorder %s12, 18
    %s19 = sphi 0, %s31
    %s20 = sphi 0, %s27
    %s21 = sphi 0, %s19
    %s22 = sphi 0, %s20
    %s23 = sphi 0, %s21
    %s24 = sphi 0, %s22
    %s36 = sphi 0, %s38
    %s39 = sphi 0, %s36
    %s40 = sphi 0, %s39
    %s56 = sphi 0, %s40
    %s66 = sphi 0, %s68
    %s69 = sphi 0, %s66
    %s70 = sphi 0, %s69
    %s86 = sphi 0, %s70
    %s96 = sphi 0, %s98
    %s99 = sphi 0, %s96
    %s100 = sphi 0, %s99
    %s116 = sphi 0, %s100
    %s120 = sphi 0, %s120
    %s122 = sphi 0, %s120
    %s123 = sphi 0, %s122
    %s137 = sphi 0, %s123
    %s141 = sphi 0, %s141
    %s143 = sphi 0, %s141
    %s144 = sphi 0, %s143
    %s158 = sphi 0, %s144
    %s168 = sphi 0, %s170
    %s171 = sphi 0, %s168
    %s172 = sphi 0, %s171
    %s188 = sphi 0, %s172
    %s196 = sphi 0, %s198
    %s199 = sphi 0, %s196
    %s200 = sphi 0, %s199
    %s216 = sphi 0, %s200
  $region4: #{res3d_block_d.3} parent=0 // loop_header_branch
    %15 = sbr.rel (%p13) target = $region8
  $region5: #{res3d_block_d.3} parent=0 // loop_body
    %s17 = ssub.s32 %s12, 1
    %s18 = ssub.s32 %s12, 2
    %s25 = sadd.s32 1, %s20
    %p26 = scmp.ge.s32.totalorder %s25, 8
    %s27 = scalar_select %p26, 0, %s25
    %s28 = sadd.s32 1, %s19
    %s29 = scalar_select %p26, %s28, %s19
    %p30 = scmp.ge.s32.totalorder %s29, 2
    %s31 = scalar_select %p30, 0, %s29
    %s32 = ssub.s32 %s19, %s31
    %s33 = ssub.s32 %s20, %s27
    %s34 = sor.u32 %s32, %s33
    %p35 = scmp.eq.s32.totalorder %s34, 0
    %s37 = sadd.s32 %s36, 1
    %s38 = scalar_select %p35, %s36, %s37
    %p41 = pneg %p35
    %p42 = scmp.eq.s32.totalorder %s12, 15
    %p43 = por %p41, %p42
    %p44 = scmp.ne.s32.totalorder %s36, %s39
    %p45 = scmp.eq.s32.totalorder %s12, 0
    %p46 = por %p44, %p45
    %p47 = scmp.ne.s32.totalorder %s36, %s39
    %p48 = scmp.eq.s32.totalorder %s17, 15
    %p49 = por %p47, %p48
    %p50 = scmp.ne.s32.totalorder %s39, %s40
    %p51 = scmp.eq.s32.totalorder %s17, 0
    %p52 = por %p50, %p51
    %p53 = scmp.ne.s32.totalorder %s39, %s40
    %p54 = scmp.eq.s32.totalorder %s18, 15
    %p55 = por %p53, %p54
    %p57 = scmp.ne.s32.totalorder %s40, %s56
    %p58 = scmp.eq.s32.totalorder %s18, 0
    %p59 = por %p57, %p58
    %s60 = sadd.s32 %s20, 1
    %s61 = sadd.s32 %s27, 1
    %s62 = ssub.s32 %s19, %s31
    %s63 = ssub.s32 %s60, %s61
    %s64 = sor.u32 %s62, %s63
    %p65 = scmp.eq.s32.totalorder %s64, 0
    %s67 = sadd.s32 %s66, 1
    %s68 = scalar_select %p65, %s66, %s67
    %p71 = pneg %p65
    %p72 = scmp.eq.s32.totalorder %s12, 15
    %p73 = por %p71, %p72
    %p74 = scmp.ne.s32.totalorder %s66, %s69
    %p75 = scmp.eq.s32.totalorder %s12, 0
    %p76 = por %p74, %p75
    %p77 = scmp.ne.s32.totalorder %s66, %s69
    %p78 = scmp.eq.s32.totalorder %s17, 15
    %p79 = por %p77, %p78
    %p80 = scmp.ne.s32.totalorder %s69, %s70
    %p81 = scmp.eq.s32.totalorder %s17, 0
    %p82 = por %p80, %p81
    %p83 = scmp.ne.s32.totalorder %s69, %s70
    %p84 = scmp.eq.s32.totalorder %s18, 15
    %p85 = por %p83, %p84
    %p87 = scmp.ne.s32.totalorder %s70, %s86
    %p88 = scmp.eq.s32.totalorder %s18, 0
    %p89 = por %p87, %p88
    %s90 = sadd.s32 %s20, 2
    %s91 = sadd.s32 %s27, 2
    %s92 = ssub.s32 %s19, %s31
    %s93 = ssub.s32 %s90, %s91
    %s94 = sor.u32 %s92, %s93
    %p95 = scmp.eq.s32.totalorder %s94, 0
    %s97 = sadd.s32 %s96, 1
    %s98 = scalar_select %p95, %s96, %s97
    %p101 = pneg %p95
    %p102 = scmp.eq.s32.totalorder %s12, 15
    %p103 = por %p101, %p102
    %p104 = scmp.ne.s32.totalorder %s96, %s99
    %p105 = scmp.eq.s32.totalorder %s12, 0
    %p106 = por %p104, %p105
    %p107 = scmp.ne.s32.totalorder %s96, %s99
    %p108 = scmp.eq.s32.totalorder %s17, 15
    %p109 = por %p107, %p108
    %p110 = scmp.ne.s32.totalorder %s99, %s100
    %p111 = scmp.eq.s32.totalorder %s17, 0
    %p112 = por %p110, %p111
    %p113 = scmp.ne.s32.totalorder %s99, %s100
    %p114 = scmp.eq.s32.totalorder %s18, 15
    %p115 = por %p113, %p114
    %p117 = scmp.ne.s32.totalorder %s100, %s116
    %p118 = scmp.eq.s32.totalorder %s18, 0
    %p119 = por %p117, %p118
    %s121 = sadd.s32 %s120, 1
    %p124 = scmp.eq.s32.totalorder %s12, 15
    %p125 = scmp.ne.s32.totalorder %s120, %s122
    %p126 = scmp.eq.s32.totalorder %s12, 0
    %p127 = por %p125, %p126
    %p128 = scmp.ne.s32.totalorder %s120, %s122
    %p129 = scmp.eq.s32.totalorder %s17, 15
    %p130 = por %p128, %p129
    %p131 = scmp.ne.s32.totalorder %s122, %s123
    %p132 = scmp.eq.s32.totalorder %s17, 0
    %p133 = por %p131, %p132
    %p134 = scmp.ne.s32.totalorder %s122, %s123
    %p135 = scmp.eq.s32.totalorder %s18, 15
    %p136 = por %p134, %p135
    %p138 = scmp.ne.s32.totalorder %s123, %s137
    %p139 = scmp.eq.s32.totalorder %s18, 0
    %p140 = por %p138, %p139
    %s142 = sadd.s32 %s141, 1
    %p145 = scmp.eq.s32.totalorder %s12, 15
    %p146 = scmp.ne.s32.totalorder %s141, %s143
    %p147 = scmp.eq.s32.totalorder %s12, 0
    %p148 = por %p146, %p147
    %p149 = scmp.ne.s32.totalorder %s141, %s143
    %p150 = scmp.eq.s32.totalorder %s17, 15
    %p151 = por %p149, %p150
    %p152 = scmp.ne.s32.totalorder %s143, %s144
    %p153 = scmp.eq.s32.totalorder %s17, 0
    %p154 = por %p152, %p153
    %p155 = scmp.ne.s32.totalorder %s143, %s144
    %p156 = scmp.eq.s32.totalorder %s18, 15
    %p157 = por %p155, %p156
    %p159 = scmp.ne.s32.totalorder %s144, %s158
    %p160 = scmp.eq.s32.totalorder %s18, 0
    %p161 = por %p159, %p160
    %s162 = sadd.s32 %s20, 1
    %s163 = sadd.s32 %s27, 1
    %s164 = ssub.s32 %s19, %s31
    %s165 = ssub.s32 %s162, %s163
    %s166 = sor.u32 %s164, %s165
    %p167 = scmp.eq.s32.totalorder %s166, 0
    %s169 = sadd.s32 %s168, 1
    %s170 = scalar_select %p167, %s168, %s169
    %p173 = pneg %p167
    %p174 = scmp.eq.s32.totalorder %s12, 15
    %p175 = por %p173, %p174
    %p176 = scmp.ne.s32.totalorder %s168, %s171
    %p177 = scmp.eq.s32.totalorder %s12, 0
    %p178 = por %p176, %p177
    %p179 = scmp.ne.s32.totalorder %s168, %s171
    %p180 = scmp.eq.s32.totalorder %s17, 15
    %p181 = por %p179, %p180
    %p182 = scmp.ne.s32.totalorder %s171, %s172
    %p183 = scmp.eq.s32.totalorder %s17, 0
    %p184 = por %p182, %p183
    %p185 = scmp.ne.s32.totalorder %s171, %s172
    %p186 = scmp.eq.s32.totalorder %s18, 15
    %p187 = por %p185, %p186
    %p189 = scmp.ne.s32.totalorder %s172, %s188
    %p190 = scmp.eq.s32.totalorder %s18, 0
    %p191 = por %p189, %p190
    %s192 = ssub.s32 %s19, %s31
    %s193 = ssub.s32 %s20, %s27
    %s194 = sor.u32 %s192, %s193
    %p195 = scmp.eq.s32.totalorder %s194, 0
    %s197 = sadd.s32 %s196, 1
    %s198 = scalar_select %p195, %s196, %s197
    %p201 = pneg %p195
    %p202 = scmp.eq.s32.totalorder %s12, 15
    %p203 = por %p201, %p202
    %p204 = scmp.ne.s32.totalorder %s196, %s199
    %p205 = scmp.eq.s32.totalorder %s12, 0
    %p206 = por %p204, %p205
    %p207 = scmp.ne.s32.totalorder %s196, %s199
    %p208 = scmp.eq.s32.totalorder %s17, 15
    %p209 = por %p207, %p208
    %p210 = scmp.ne.s32.totalorder %s199, %s200
    %p211 = scmp.eq.s32.totalorder %s17, 0
    %p212 = por %p210, %p211
    %p213 = scmp.ne.s32.totalorder %s199, %s200
    %p214 = scmp.eq.s32.totalorder %s18, 15
    %p215 = por %p213, %p214
    %p217 = scmp.ne.s32.totalorder %s200, %s216
    %p218 = scmp.eq.s32.totalorder %s18, 0
    %p219 = por %p217, %p218
    %p220 = scmp.le.s32.totalorder 1, %s12
    %p221 = scmp.lt.s32.totalorder %s12, 17
    %p222 = pnand %p220, %p221
    %p223 = pneg %p222
    // Predicated region
    $region9: #{res3d_block_d.3} parent=5 // pred_check
      _
    $region10: #{res3d_block_d.3} parent=5 // pred_check_branch
      %225 = sbr.rel (%p222) target = $region12
    $region11: #{res3d_block_d.3} parent=5 // pred_region
      %s226 = ssub.s32 %s12, 1
      // Predicated region
      $region13: #{res3d_block_d.3} parent=11 // pred_check
        %p227 = pneg %p133
      $region14: #{res3d_block_d.3} parent=11 // pred_check_branch
        %229 = sbr.rel (%p227) target = $region16
      $region15: #{res3d_block_d.3} parent=11 // pred_region
        _
      $region16: #{res3d_block_d.3} parent=11 // pred_fallthru
        _
      // Predicated region
      $region17: #{res3d_block_d.3} parent=11 // pred_check
        %p230 = pneg %p154
      $region18: #{res3d_block_d.3} parent=11 // pred_check_branch
        %232 = sbr.rel (%p230) target = $region20
      $region19: #{res3d_block_d.3} parent=11 // pred_region
        _
      $region20: #{res3d_block_d.3} parent=11 // pred_fallthru
        _
    $region12: #{res3d_block_d.3} parent=5 // pred_fallthru
      _
    %p233 = scmp.lt.s32.totalorder %s12, 16
    // Predicated region
    $region21: #{res3d_block_d.3} parent=5 // pred_check
      %p234 = pneg %p233
    $region22: #{res3d_block_d.3} parent=5 // pred_check_branch
      %236 = sbr.rel (%p234) target = $region24
    $region23: #{res3d_block_d.3} parent=5 // pred_region
      // Predicated region
      $region25: #{res3d_block_d.3} parent=23 // pred_check
        %p237 = pneg %p46
      $region26: #{res3d_block_d.3} parent=23 // pred_check_branch
        %239 = sbr.rel (%p237) target = $region28
      $region27: #{res3d_block_d.3} parent=23 // pred_region
        %p240 = scmp.lt.s32.totalorder %s19, 1
        %s241 = scalar_select %p240, %s19, 1
        %p242 = scmp.lt.s32.totalorder %s20, 9
        %s243 = scalar_select %p242, %s20, 9
        %s244 = smul.addr %s243, 22
        %s245 = smul.addr %s241, 220
        %s246 = sadd.s32 %s244, %s245
        %s247 = smul.addr %s246, 4
        %s248 = scalar_lea.vmem %s0, %s247
      $region28: #{res3d_block_d.3} parent=23 // pred_fallthru
        _
      // Predicated region
      $region29: #{res3d_block_d.3} parent=23 // pred_check
        %p249 = pneg %p76
      $region30: #{res3d_block_d.3} parent=23 // pred_check_branch
        %251 = sbr.rel (%p249) target = $region32
      $region31: #{res3d_block_d.3} parent=23 // pred_region
        %s252 = sadd.s32 %s20, 1
        %p253 = scmp.lt.s32.totalorder %s19, 1
        %s254 = scalar_select %p253, %s19, 1
        %p255 = scmp.lt.s32.totalorder %s252, 9
        %s256 = scalar_select %p255, %s252, 9
        %s257 = smul.addr %s256, 22
        %s258 = smul.addr %s254, 220
        %s259 = sadd.s32 %s257, %s258
        %s260 = smul.addr %s259, 4
        %s261 = scalar_lea.vmem %s1, %s260
        %s262 = sadd.s32 %s20, 1
      $region32: #{res3d_block_d.3} parent=23 // pred_fallthru
        _
      // Predicated region
      $region33: #{res3d_block_d.3} parent=23 // pred_check
        %p263 = pneg %p106
      $region34: #{res3d_block_d.3} parent=23 // pred_check_branch
        %265 = sbr.rel (%p263) target = $region36
      $region35: #{res3d_block_d.3} parent=23 // pred_region
        %s266 = sadd.s32 %s20, 2
        %p267 = scmp.lt.s32.totalorder %s19, 1
        %s268 = scalar_select %p267, %s19, 1
        %p269 = scmp.lt.s32.totalorder %s266, 9
        %s270 = scalar_select %p269, %s266, 9
        %s271 = smul.addr %s270, 22
        %s272 = smul.addr %s268, 220
        %s273 = sadd.s32 %s271, %s272
        %s274 = smul.addr %s273, 4
        %s275 = scalar_lea.vmem %s2, %s274
        %s276 = sadd.s32 %s20, 2
      $region36: #{res3d_block_d.3} parent=23 // pred_fallthru
        _
      // Predicated region
      $region37: #{res3d_block_d.3} parent=23 // pred_check
        %p277 = pneg %p178
      $region38: #{res3d_block_d.3} parent=23 // pred_check_branch
        %279 = sbr.rel (%p277) target = $region40
      $region39: #{res3d_block_d.3} parent=23 // pred_region
        %s280 = sadd.s32 %s20, 1
        %p281 = scmp.lt.s32.totalorder %s19, 1
        %s282 = scalar_select %p281, %s19, 1
        %p283 = scmp.lt.s32.totalorder %s280, 9
        %s284 = scalar_select %p283, %s280, 9
        %s285 = smul.addr %s284, 16
        %s286 = smul.addr %s282, 160
        %s287 = sadd.s32 %s285, %s286
        %s288 = smul.addr %s287, 8
        %s289 = scalar_lea.vmem %s5, %s288
        %s290 = sadd.s32 %s20, 1
      $region40: #{res3d_block_d.3} parent=23 // pred_fallthru
        _
    $region24: #{res3d_block_d.3} parent=5 // pred_fallthru
      _
    %p291 = scmp.le.s32.totalorder 1, %s12
    %p292 = scmp.lt.s32.totalorder %s12, 17
    %p293 = pnand %p291, %p292
    %p294 = pneg %p293
    // Predicated region
    $region41: #{res3d_block_d.3} parent=5 // pred_check
      _
    $region42: #{res3d_block_d.3} parent=5 // pred_check_branch
      %296 = sbr.rel (%p293) target = $region44
    $region43: #{res3d_block_d.3} parent=5 // pred_region
      %s297 = ssub.s32 %s12, 1
      %p298 = scmp.lt.s32.totalorder %s21, 1
      %s299 = scalar_select %p298, %s21, 1
      %p300 = scmp.lt.s32.totalorder %s22, 9
      %s301 = scalar_select %p300, %s22, 9
      %s302 = smul.addr %s301, 22
      %s303 = smul.addr %s299, 220
      %s304 = sadd.s32 %s302, %s303
      %s305 = smul.addr %s304, 4
      %s306 = scalar_lea.vmem %s0, %s305
      %p307 = pneg %p52
      %p308 = pneg %p49
      %s309 = sadd.s32 %s22, 1
      %p310 = scmp.lt.s32.totalorder %s21, 1
      %s311 = scalar_select %p310, %s21, 1
      %p312 = scmp.lt.s32.totalorder %s309, 9
      %s313 = scalar_select %p312, %s309, 9
      %s314 = smul.addr %s313, 22
      %s315 = smul.addr %s311, 220
      %s316 = sadd.s32 %s314, %s315
      %s317 = smul.addr %s316, 4
      %s318 = scalar_lea.vmem %s1, %s317
      %p319 = pneg %p82
      %p320 = pneg %p79
      %s321 = sadd.s32 %s22, 2
      %p322 = scmp.lt.s32.totalorder %s21, 1
      %s323 = scalar_select %p322, %s21, 1
      %p324 = scmp.lt.s32.totalorder %s321, 9
      %s325 = scalar_select %p324, %s321, 9
      %s326 = smul.addr %s325, 22
      %s327 = smul.addr %s323, 220
      %s328 = sadd.s32 %s326, %s327
      %s329 = smul.addr %s328, 4
      %s330 = scalar_lea.vmem %s2, %s329
      %p331 = pneg %p112
      %p332 = pneg %p109
      %p333 = pneg %p133
      %p334 = pneg %p130
      %p335 = pneg %p154
      %p336 = pneg %p151
      %s337 = sadd.s32 %s22, 1
      %p338 = scmp.lt.s32.totalorder %s21, 1
      %s339 = scalar_select %p338, %s21, 1
      %p340 = scmp.lt.s32.totalorder %s337, 9
      %s341 = scalar_select %p340, %s337, 9
      %s342 = smul.addr %s341, 16
      %s343 = smul.addr %s339, 160
      %s344 = sadd.s32 %s342, %s343
      %s345 = smul.addr %s344, 8
      %s346 = scalar_lea.vmem %s5, %s345
      %p347 = pneg %p184
      %p348 = pneg %p181
      %p349 = pneg %p212
      %p350 = pneg %p209
      %p351 = scmp.lt.s32.totalorder %s21, 1
      %s352 = scalar_select %p351, %s21, 1
      %p353 = scmp.lt.s32.totalorder %s22, 7
      %s354 = scalar_select %p353, %s22, 7
      %s355 = smul.addr %s354, 16
      %s356 = smul.addr %s352, 128
      %s357 = sadd.s32 %s355, %s356
      %s358 = smul.addr %s357, 8
      %s359 = scalar_lea.vmem %s6, %s358
      %p360 = scmp.lt.s32.totalorder %s21, 1
      %s361 = scalar_select %p360, %s21, 1
      %p362 = scmp.lt.s32.totalorder %s22, 9
      %s363 = scalar_select %p362, %s22, 9
      %s364 = smul.addr %s363, 22
      %s365 = smul.addr %s361, 220
      %s366 = sadd.s32 %s364, %s365
      %s367 = smul.addr %s366, 4
      %s368 = scalar_lea.vmem %s0, %s367
      %s369 = sadd.s32 %s22, 1
      %p370 = scmp.lt.s32.totalorder %s21, 1
      %s371 = scalar_select %p370, %s21, 1
      %p372 = scmp.lt.s32.totalorder %s369, 9
      %s373 = scalar_select %p372, %s369, 9
      %s374 = smul.addr %s373, 22
      %s375 = smul.addr %s371, 220
      %s376 = sadd.s32 %s374, %s375
      %s377 = smul.addr %s376, 4
      %s378 = scalar_lea.vmem %s1, %s377
      %s379 = sadd.s32 %s22, 1
      %s380 = sadd.s32 %s22, 2
      %p381 = scmp.lt.s32.totalorder %s21, 1
      %s382 = scalar_select %p381, %s21, 1
      %p383 = scmp.lt.s32.totalorder %s380, 9
      %s384 = scalar_select %p383, %s380, 9
      %s385 = smul.addr %s384, 22
      %s386 = smul.addr %s382, 220
      %s387 = sadd.s32 %s385, %s386
      %s388 = smul.addr %s387, 4
      %s389 = scalar_lea.vmem %s2, %s388
      %s390 = sadd.s32 %s22, 2
      %s391 = sadd.s32 %s22, 1
      %p392 = scmp.lt.s32.totalorder %s21, 1
      %s393 = scalar_select %p392, %s21, 1
      %p394 = scmp.lt.s32.totalorder %s391, 9
      %s395 = scalar_select %p394, %s391, 9
      %s396 = smul.addr %s395, 16
      %s397 = smul.addr %s393, 160
      %s398 = sadd.s32 %s396, %s397
      %s399 = smul.addr %s398, 8
      %s400 = scalar_lea.vmem %s5, %s399
      %s401 = sadd.s32 %s22, 1
      %p402 = scmp.lt.s32.totalorder %s21, 1
      %s403 = scalar_select %p402, %s21, 1
      %p404 = scmp.lt.s32.totalorder %s22, 7
      %s405 = scalar_select %p404, %s22, 7
      %s406 = smul.addr %s405, 16
      %s407 = smul.addr %s403, 128
      %s408 = sadd.s32 %s406, %s407
      %s409 = smul.addr %s408, 8
      %s410 = scalar_lea.vmem %s6, %s409
      %v412 = vld [vmem:[%s368] sm:$0xf]
      %v413 = vld [vmem:[%s368 + $0x4] sm:$0xf]
      %v414 = vld [vmem:[%s368 + $0x8] sm:$0xf]
      %v415 = vld [vmem:[%s368 + $0xc] sm:$0xf]
      %v416 = vld [vmem:[%s368 + $0x10] sm:$0xf]
      %v417 = vld [vmem:[%s368 + $0x14] sm:$0xf]
      %v418 = vld [vmem:[%s368 + $0x18] sm:$0xf]
      %v419 = vld [vmem:[%s368 + $0x1c] sm:$0xf]
      %v420 = vld [vmem:[%s368 + $0x20] sm:$0xf]
      %v421 = vld [vmem:[%s368 + $0x24] sm:$0xf]
      %v422 = vld [vmem:[%s368 + $0x28] sm:$0xf]
      %v423 = vld [vmem:[%s368 + $0x2c] sm:$0xf]
      %v424 = vld [vmem:[%s368 + $0x30] sm:$0xf]
      %v425 = vld [vmem:[%s368 + $0x34] sm:$0xf]
      %v426 = vld [vmem:[%s368 + $0x38] sm:$0xf]
      %v427 = vld [vmem:[%s368 + $0x3c] sm:$0xf]
      %v428 = vld [vmem:[%s368 + $0x40] sm:$0xf]
      %v429 = vld [vmem:[%s368 + $0x44] sm:$0xf]
      %v430 = vld [vmem:[%s368 + $0x48] sm:$0xf]
      %v431 = vld [vmem:[%s368 + $0x4c] sm:$0xf]
      %432 = vst [vmem:[#allocation2] sm:$0xf] %v412
      %433 = vst [vmem:[#allocation2 + $0x24] sm:$0xf] %v413
      %434 = vst [vmem:[#allocation2 + $0x48] sm:$0xf] %v414
      %435 = vst [vmem:[#allocation2 + $0x6c] sm:$0xf] %v415
      %436 = vst [vmem:[#allocation2 + $0x90] sm:$0xf] %v416
      %437 = vst [vmem:[#allocation2 + $0xb4] sm:$0xf] %v417
      %438 = vst [vmem:[#allocation2 + $0xd8] sm:$0xf] %v418
      %439 = vst [vmem:[#allocation2 + $0xfc] sm:$0xf] %v419
      %440 = vst [vmem:[#allocation2 + $0x120] sm:$0xf] %v420
      %441 = vst [vmem:[#allocation2 + $0x144] sm:$0xf] %v421
      %442 = vst [vmem:[#allocation2 + $0x168] sm:$0xf] %v422
      %443 = vst [vmem:[#allocation2 + $0x18c] sm:$0xf] %v423
      %444 = vst [vmem:[#allocation2 + $0x1b0] sm:$0xf] %v424
      %445 = vst [vmem:[#allocation2 + $0x1d4] sm:$0xf] %v425
      %446 = vst [vmem:[#allocation2 + $0x1f8] sm:$0xf] %v426
      %447 = vst [vmem:[#allocation2 + $0x21c] sm:$0xf] %v427
      %448 = vst [vmem:[#allocation2 + $0x240] sm:$0xf] %v428
      %449 = vst [vmem:[#allocation2 + $0x264] sm:$0xf] %v429
      %450 = vst [vmem:[#allocation2 + $0x288] sm:$0xf] %v430
      %451 = vst [vmem:[#allocation2 + $0x2ac] sm:$0xf] %v431
      %v452 = vld [vmem:[%s368] sm:$0xf]
      %v453 = vld [vmem:[%s368 + $0x4] sm:$0xf]
      %v454 = vld [vmem:[%s368 + $0x8] sm:$0xf]
      %v455 = vld [vmem:[%s368 + $0xc] sm:$0xf]
      %v456 = vld [vmem:[%s368 + $0x10] sm:$0xf]
      %v457 = vld [vmem:[%s368 + $0x14] sm:$0xf]
      %v458 = vld [vmem:[%s368 + $0x18] sm:$0xf]
      %v459 = vld [vmem:[%s368 + $0x1c] sm:$0xf]
      %v460 = vld [vmem:[%s368 + $0x20] sm:$0xf]
      %v461 = vld [vmem:[%s368 + $0x24] sm:$0xf]
      %v462 = vld [vmem:[%s368 + $0x28] sm:$0xf]
      %v463 = vld [vmem:[%s368 + $0x2c] sm:$0xf]
      %v464 = vld [vmem:[%s368 + $0x30] sm:$0xf]
      %v465 = vld [vmem:[%s368 + $0x34] sm:$0xf]
      %v466 = vld [vmem:[%s368 + $0x38] sm:$0xf]
      %v467 = vld [vmem:[%s368 + $0x3c] sm:$0xf]
      %v468 = vld [vmem:[%s368 + $0x40] sm:$0xf]
      %v469 = vld [vmem:[%s368 + $0x44] sm:$0xf]
      %v470 = vld [vmem:[%s368 + $0x48] sm:$0xf]
      %v471 = vld [vmem:[%s368 + $0x4c] sm:$0xf]
      %v472 = vld [vmem:[%s368 + $0x50] sm:$0x1]
      %vm473 = vsmask.f32 3328
      %vm474 = vsmask.f32 7440
      %vm475 = vmor %vm473, %vm474
      %v477 = vshrl.u32 %v452, 16
      %v479 = vrot.slane %v477, 4
      %v480 = vshll.u32 %v452, 16
      %v482 = vrot.slane %v480, 5
      %v483 = vor.u32 %v479, %v482
      %v484 = vrot.slane %v483, 4
      %v486 = vshll.u32 %v453, 16
      %v488 = vrot.slane %v486, 5
      %v489 = vsel %vm475, %v484, %v488
      %v490 = vshrl.u32 %v453, 16
      %v492 = vrot.slane %v490, 4
      %v493 = vor.u32 %v492, %v488
      %v494 = vrot.slane %v493, 4
      %v496 = vshll.u32 %v454, 16
      %v498 = vrot.slane %v496, 5
      %v499 = vsel %vm475, %v494, %v498
      %v500 = vshrl.u32 %v454, 16
      %v502 = vrot.slane %v500, 4
      %v503 = vor.u32 %v502, %v498
      %v504 = vrot.slane %v503, 4
      %v506 = vshll.u32 %v455, 16
      %v508 = vrot.slane %v506, 5
      %v509 = vsel %vm475, %v504, %v508
      %v510 = vshrl.u32 %v455, 16
      %v512 = vrot.slane %v510, 4
      %v513 = vor.u32 %v512, %v508
      %v514 = vrot.slane %v513, 4
      %v516 = vshll.u32 %v456, 16
      %v518 = vrot.slane %v516, 5
      %v519 = vsel %vm475, %v514, %v518
      %v520 = vshrl.u32 %v456, 16
      %v522 = vrot.slane %v520, 4
      %v523 = vor.u32 %v522, %v518
      %v524 = vrot.slane %v523, 4
      %v526 = vshll.u32 %v457, 16
      %v528 = vrot.slane %v526, 5
      %v529 = vsel %vm475, %v524, %v528
      %v530 = vshrl.u32 %v457, 16
      %v532 = vrot.slane %v530, 4
      %v533 = vor.u32 %v532, %v528
      %v534 = vrot.slane %v533, 4
      %v536 = vshll.u32 %v458, 16
      %v538 = vrot.slane %v536, 5
      %v539 = vsel %vm475, %v534, %v538
      %v540 = vshrl.u32 %v458, 16
      %v542 = vrot.slane %v540, 4
      %v543 = vor.u32 %v542, %v538
      %v544 = vrot.slane %v543, 4
      %v546 = vshll.u32 %v459, 16
      %v548 = vrot.slane %v546, 5
      %v549 = vsel %vm475, %v544, %v548
      %v550 = vshrl.u32 %v459, 16
      %v552 = vrot.slane %v550, 4
      %v553 = vor.u32 %v552, %v548
      %v554 = vrot.slane %v553, 4
      %v556 = vshll.u32 %v460, 16
      %v558 = vrot.slane %v556, 5
      %v559 = vsel %vm475, %v554, %v558
      %v560 = vshrl.u32 %v460, 16
      %v562 = vrot.slane %v560, 4
      %v563 = vor.u32 %v562, %v558
      %v564 = vrot.slane %v563, 4
      %v566 = vshll.u32 %v461, 16
      %v568 = vrot.slane %v566, 5
      %v569 = vsel %vm475, %v564, %v568
      %v570 = vshrl.u32 %v461, 16
      %v572 = vrot.slane %v570, 4
      %v573 = vor.u32 %v572, %v568
      %v574 = vrot.slane %v573, 4
      %v576 = vshll.u32 %v462, 16
      %v578 = vrot.slane %v576, 5
      %v579 = vsel %vm475, %v574, %v578
      %v580 = vshrl.u32 %v462, 16
      %v582 = vrot.slane %v580, 4
      %v583 = vor.u32 %v582, %v578
      %v584 = vrot.slane %v583, 4
      %v586 = vshll.u32 %v463, 16
      %v588 = vrot.slane %v586, 5
      %v589 = vsel %vm475, %v584, %v588
      %v590 = vshrl.u32 %v463, 16
      %v592 = vrot.slane %v590, 4
      %v593 = vor.u32 %v592, %v588
      %v594 = vrot.slane %v593, 4
      %v596 = vshll.u32 %v464, 16
      %v598 = vrot.slane %v596, 5
      %v599 = vsel %vm475, %v594, %v598
      %v600 = vshrl.u32 %v464, 16
      %v602 = vrot.slane %v600, 4
      %v603 = vor.u32 %v602, %v598
      %v604 = vrot.slane %v603, 4
      %v606 = vshll.u32 %v465, 16
      %v608 = vrot.slane %v606, 5
      %v609 = vsel %vm475, %v604, %v608
      %v610 = vshrl.u32 %v465, 16
      %v612 = vrot.slane %v610, 4
      %v613 = vor.u32 %v612, %v608
      %v614 = vrot.slane %v613, 4
      %v616 = vshll.u32 %v466, 16
      %v618 = vrot.slane %v616, 5
      %v619 = vsel %vm475, %v614, %v618
      %v620 = vshrl.u32 %v466, 16
      %v622 = vrot.slane %v620, 4
      %v623 = vor.u32 %v622, %v618
      %v624 = vrot.slane %v623, 4
      %v626 = vshll.u32 %v467, 16
      %v628 = vrot.slane %v626, 5
      %v629 = vsel %vm475, %v624, %v628
      %v630 = vshrl.u32 %v467, 16
      %v632 = vrot.slane %v630, 4
      %v633 = vor.u32 %v632, %v628
      %v634 = vrot.slane %v633, 4
      %v636 = vshll.u32 %v468, 16
      %v638 = vrot.slane %v636, 5
      %v639 = vsel %vm475, %v634, %v638
      %v640 = vshrl.u32 %v468, 16
      %v642 = vrot.slane %v640, 4
      %v643 = vor.u32 %v642, %v638
      %v644 = vrot.slane %v643, 4
      %v646 = vshll.u32 %v469, 16
      %v648 = vrot.slane %v646, 5
      %v649 = vsel %vm475, %v644, %v648
      %v650 = vshrl.u32 %v469, 16
      %v652 = vrot.slane %v650, 4
      %v653 = vor.u32 %v652, %v648
      %v654 = vrot.slane %v653, 4
      %v656 = vshll.u32 %v470, 16
      %v658 = vrot.slane %v656, 5
      %v659 = vsel %vm475, %v654, %v658
      %v660 = vshrl.u32 %v470, 16
      %v662 = vrot.slane %v660, 4
      %v663 = vor.u32 %v662, %v658
      %v664 = vrot.slane %v663, 4
      %v666 = vshll.u32 %v471, 16
      %v668 = vrot.slane %v666, 5
      %v669 = vsel %vm475, %v664, %v668
      %v670 = vshrl.u32 %v471, 16
      %v672 = vrot.slane %v670, 4
      %v673 = vor.u32 %v672, %v668
      %v674 = vrot.slane %v673, 4
      %v676 = vshll.u32 %v472, 16
      %v678 = vrot.slane %v676, 5
      %v679 = vsel %vm475, %v674, %v678
      %700 = vst [vmem:[#allocation2 + $0x4] sm:$0xf] %v489
      %701 = vst [vmem:[#allocation2 + $0x28] sm:$0xf] %v499
      %702 = vst [vmem:[#allocation2 + $0x4c] sm:$0xf] %v509
      %703 = vst [vmem:[#allocation2 + $0x70] sm:$0xf] %v519
      %704 = vst [vmem:[#allocation2 + $0x94] sm:$0xf] %v529
      %705 = vst [vmem:[#allocation2 + $0xb8] sm:$0xf] %v539
      %706 = vst [vmem:[#allocation2 + $0xdc] sm:$0xf] %v549
      %707 = vst [vmem:[#allocation2 + $0x100] sm:$0xf] %v559
      %708 = vst [vmem:[#allocation2 + $0x124] sm:$0xf] %v569
      %709 = vst [vmem:[#allocation2 + $0x148] sm:$0xf] %v579
      %710 = vst [vmem:[#allocation2 + $0x16c] sm:$0xf] %v589
      %711 = vst [vmem:[#allocation2 + $0x190] sm:$0xf] %v599
      %712 = vst [vmem:[#allocation2 + $0x1b4] sm:$0xf] %v609
      %713 = vst [vmem:[#allocation2 + $0x1d8] sm:$0xf] %v619
      %714 = vst [vmem:[#allocation2 + $0x1fc] sm:$0xf] %v629
      %715 = vst [vmem:[#allocation2 + $0x220] sm:$0xf] %v639
      %716 = vst [vmem:[#allocation2 + $0x244] sm:$0xf] %v649
      %717 = vst [vmem:[#allocation2 + $0x268] sm:$0xf] %v659
      %718 = vst [vmem:[#allocation2 + $0x28c] sm:$0xf] %v669
      %719 = vst [vmem:[#allocation2 + $0x2b0] sm:$0xf] %v679
      %v720 = vld [vmem:[%s368] sm:$0xe]
      %v721 = vld [vmem:[%s368 + $0x4] sm:$0xf]
      %v722 = vld [vmem:[%s368 + $0x8] sm:$0xf]
      %v723 = vld [vmem:[%s368 + $0xc] sm:$0xf]
      %v724 = vld [vmem:[%s368 + $0x10] sm:$0xf]
      %v725 = vld [vmem:[%s368 + $0x14] sm:$0xf]
      %v726 = vld [vmem:[%s368 + $0x18] sm:$0xf]
      %v727 = vld [vmem:[%s368 + $0x1c] sm:$0xf]
      %v728 = vld [vmem:[%s368 + $0x20] sm:$0xf]
      %v729 = vld [vmem:[%s368 + $0x24] sm:$0xf]
      %v730 = vld [vmem:[%s368 + $0x28] sm:$0xf]
      %v731 = vld [vmem:[%s368 + $0x2c] sm:$0xf]
      %v732 = vld [vmem:[%s368 + $0x30] sm:$0xf]
      %v733 = vld [vmem:[%s368 + $0x34] sm:$0xf]
      %v734 = vld [vmem:[%s368 + $0x38] sm:$0xf]
      %v735 = vld [vmem:[%s368 + $0x3c] sm:$0xf]
      %v736 = vld [vmem:[%s368 + $0x40] sm:$0xf]
      %v737 = vld [vmem:[%s368 + $0x44] sm:$0xf]
      %v738 = vld [vmem:[%s368 + $0x48] sm:$0xf]
      %v739 = vld [vmem:[%s368 + $0x4c] sm:$0xf]
      %v740 = vld [vmem:[%s368 + $0x50] sm:$0x1]
      %vm762 = vcmask 1042432
      %vm763 = vcmask 1046532
      %vm764 = vmor %vm762, %vm763
      %v765 = vrot.slane %v720, 5
      %v766 = vrot.slane %v765, 4
      %v767 = vrot.slane %v721, 5
      %v768 = vsel %vm764, %v766, %v767
      %v769 = vrot.slane %v767, 4
      %v770 = vrot.slane %v722, 5
      %v771 = vsel %vm764, %v769, %v770
      %v772 = vrot.slane %v770, 4
      %v773 = vrot.slane %v723, 5
      %v774 = vsel %vm764, %v772, %v773
      %v775 = vrot.slane %v773, 4
      %v776 = vrot.slane %v724, 5
      %v777 = vsel %vm764, %v775, %v776
      %v778 = vrot.slane %v776, 4
      %v779 = vrot.slane %v725, 5
      %v780 = vsel %vm764, %v778, %v779
      %v781 = vrot.slane %v779, 4
      %v782 = vrot.slane %v726, 5
      %v783 = vsel %vm764, %v781, %v782
      %v784 = vrot.slane %v782, 4
      %v785 = vrot.slane %v727, 5
      %v786 = vsel %vm764, %v784, %v785
      %v787 = vrot.slane %v785, 4
      %v788 = vrot.slane %v728, 5
      %v789 = vsel %vm764, %v787, %v788
      %v790 = vrot.slane %v788, 4
      %v791 = vrot.slane %v729, 5
      %v792 = vsel %vm764, %v790, %v791
      %v793 = vrot.slane %v791, 4
      %v794 = vrot.slane %v730, 5
      %v795 = vsel %vm764, %v793, %v794
      %v796 = vrot.slane %v794, 4
      %v797 = vrot.slane %v731, 5
      %v798 = vsel %vm764, %v796, %v797
      %v799 = vrot.slane %v797, 4
      %v800 = vrot.slane %v732, 5
      %v801 = vsel %vm764, %v799, %v800
      %v802 = vrot.slane %v800, 4
      %v803 = vrot.slane %v733, 5
      %v804 = vsel %vm764, %v802, %v803
      %v805 = vrot.slane %v803, 4
      %v806 = vrot.slane %v734, 5
      %v807 = vsel %vm764, %v805, %v806
      %v808 = vrot.slane %v806, 4
      %v809 = vrot.slane %v735, 5
      %v810 = vsel %vm764, %v808, %v809
      %v811 = vrot.slane %v809, 4
      %v812 = vrot.slane %v736, 5
      %v813 = vsel %vm764, %v811, %v812
      %v814 = vrot.slane %v812, 4
      %v815 = vrot.slane %v737, 5
      %v816 = vsel %vm764, %v814, %v815
      %v817 = vrot.slane %v815, 4
      %v818 = vrot.slane %v738, 5
      %v819 = vsel %vm764, %v817, %v818
      %v820 = vrot.slane %v818, 4
      %v821 = vrot.slane %v739, 5
      %v822 = vsel %vm764, %v820, %v821
      %v823 = vrot.slane %v821, 4
      %v824 = vrot.slane %v740, 5
      %v825 = vsel %vm764, %v823, %v824
      %846 = vst [vmem:[#allocation2 + $0x8] sm:$0xf] %v768
      %847 = vst [vmem:[#allocation2 + $0x2c] sm:$0xf] %v771
      %848 = vst [vmem:[#allocation2 + $0x50] sm:$0xf] %v774
      %849 = vst [vmem:[#allocation2 + $0x74] sm:$0xf] %v777
      %850 = vst [vmem:[#allocation2 + $0x98] sm:$0xf] %v780
      %851 = vst [vmem:[#allocation2 + $0xbc] sm:$0xf] %v783
      %852 = vst [vmem:[#allocation2 + $0xe0] sm:$0xf] %v786
      %853 = vst [vmem:[#allocation2 + $0x104] sm:$0xf] %v789
      %854 = vst [vmem:[#allocation2 + $0x128] sm:$0xf] %v792
      %855 = vst [vmem:[#allocation2 + $0x14c] sm:$0xf] %v795
      %856 = vst [vmem:[#allocation2 + $0x170] sm:$0xf] %v798
      %857 = vst [vmem:[#allocation2 + $0x194] sm:$0xf] %v801
      %858 = vst [vmem:[#allocation2 + $0x1b8] sm:$0xf] %v804
      %859 = vst [vmem:[#allocation2 + $0x1dc] sm:$0xf] %v807
      %860 = vst [vmem:[#allocation2 + $0x200] sm:$0xf] %v810
      %861 = vst [vmem:[#allocation2 + $0x224] sm:$0xf] %v813
      %862 = vst [vmem:[#allocation2 + $0x248] sm:$0xf] %v816
      %863 = vst [vmem:[#allocation2 + $0x26c] sm:$0xf] %v819
      %864 = vst [vmem:[#allocation2 + $0x290] sm:$0xf] %v822
      %865 = vst [vmem:[#allocation2 + $0x2b4] sm:$0xf] %v825
      %v866 = vld [vmem:[%s378] sm:$0xf]
      %v867 = vld [vmem:[%s378 + $0x4] sm:$0xf]
      %v868 = vld [vmem:[%s378 + $0x8] sm:$0xf]
      %v869 = vld [vmem:[%s378 + $0xc] sm:$0xf]
      %v870 = vld [vmem:[%s378 + $0x10] sm:$0xf]
      %v871 = vld [vmem:[%s378 + $0x14] sm:$0xf]
      %v872 = vld [vmem:[%s378 + $0x18] sm:$0xf]
      %v873 = vld [vmem:[%s378 + $0x1c] sm:$0xf]
      %v874 = vld [vmem:[%s378 + $0x20] sm:$0xf]
      %v875 = vld [vmem:[%s378 + $0x24] sm:$0xf]
      %v876 = vld [vmem:[%s378 + $0x28] sm:$0xf]
      %v877 = vld [vmem:[%s378 + $0x2c] sm:$0xf]
      %v878 = vld [vmem:[%s378 + $0x30] sm:$0xf]
      %v879 = vld [vmem:[%s378 + $0x34] sm:$0xf]
      %v880 = vld [vmem:[%s378 + $0x38] sm:$0xf]
      %v881 = vld [vmem:[%s378 + $0x3c] sm:$0xf]
      %v882 = vld [vmem:[%s378 + $0x40] sm:$0xf]
      %v883 = vld [vmem:[%s378 + $0x44] sm:$0xf]
      %v884 = vld [vmem:[%s378 + $0x48] sm:$0xf]
      %v885 = vld [vmem:[%s378 + $0x4c] sm:$0xf]
      %886 = vst [vmem:[#allocation2 + $0xc] sm:$0xf] %v866
      %887 = vst [vmem:[#allocation2 + $0x30] sm:$0xf] %v867
      %888 = vst [vmem:[#allocation2 + $0x54] sm:$0xf] %v868
      %889 = vst [vmem:[#allocation2 + $0x78] sm:$0xf] %v869
      %890 = vst [vmem:[#allocation2 + $0x9c] sm:$0xf] %v870
      %891 = vst [vmem:[#allocation2 + $0xc0] sm:$0xf] %v871
      %892 = vst [vmem:[#allocation2 + $0xe4] sm:$0xf] %v872
      %893 = vst [vmem:[#allocation2 + $0x108] sm:$0xf] %v873
      %894 = vst [vmem:[#allocation2 + $0x12c] sm:$0xf] %v874
      %895 = vst [vmem:[#allocation2 + $0x150] sm:$0xf] %v875
      %896 = vst [vmem:[#allocation2 + $0x174] sm:$0xf] %v876
      %897 = vst [vmem:[#allocation2 + $0x198] sm:$0xf] %v877
      %898 = vst [vmem:[#allocation2 + $0x1bc] sm:$0xf] %v878
      %899 = vst [vmem:[#allocation2 + $0x1e0] sm:$0xf] %v879
      %900 = vst [vmem:[#allocation2 + $0x204] sm:$0xf] %v880
      %901 = vst [vmem:[#allocation2 + $0x228] sm:$0xf] %v881
      %902 = vst [vmem:[#allocation2 + $0x24c] sm:$0xf] %v882
      %903 = vst [vmem:[#allocation2 + $0x270] sm:$0xf] %v883
      %904 = vst [vmem:[#allocation2 + $0x294] sm:$0xf] %v884
      %905 = vst [vmem:[#allocation2 + $0x2b8] sm:$0xf] %v885
      %v906 = vld [vmem:[%s378] sm:$0xf]
      %v907 = vld [vmem:[%s378 + $0x4] sm:$0xf]
      %v908 = vld [vmem:[%s378 + $0x8] sm:$0xf]
      %v909 = vld [vmem:[%s378 + $0xc] sm:$0xf]
      %v910 = vld [vmem:[%s378 + $0x10] sm:$0xf]
      %v911 = vld [vmem:[%s378 + $0x14] sm:$0xf]
      %v912 = vld [vmem:[%s378 + $0x18] sm:$0xf]
      %v913 = vld [vmem:[%s378 + $0x1c] sm:$0xf]
      %v914 = vld [vmem:[%s378 + $0x20] sm:$0xf]
      %v915 = vld [vmem:[%s378 + $0x24] sm:$0xf]
      %v916 = vld [vmem:[%s378 + $0x28] sm:$0xf]
      %v917 = vld [vmem:[%s378 + $0x2c] sm:$0xf]
      %v918 = vld [vmem:[%s378 + $0x30] sm:$0xf]
      %v919 = vld [vmem:[%s378 + $0x34] sm:$0xf]
      %v920 = vld [vmem:[%s378 + $0x38] sm:$0xf]
      %v921 = vld [vmem:[%s378 + $0x3c] sm:$0xf]
      %v922 = vld [vmem:[%s378 + $0x40] sm:$0xf]
      %v923 = vld [vmem:[%s378 + $0x44] sm:$0xf]
      %v924 = vld [vmem:[%s378 + $0x48] sm:$0xf]
      %v925 = vld [vmem:[%s378 + $0x4c] sm:$0xf]
      %v926 = vld [vmem:[%s378 + $0x50] sm:$0x1]
      %v928 = vshrl.u32 %v906, 16
      %v930 = vrot.slane %v928, 4
      %v931 = vshll.u32 %v906, 16
      %v933 = vrot.slane %v931, 5
      %v934 = vor.u32 %v930, %v933
      %v935 = vrot.slane %v934, 4
      %v937 = vshll.u32 %v907, 16
      %v939 = vrot.slane %v937, 5
      %v940 = vsel %vm475, %v935, %v939
      %v941 = vshrl.u32 %v907, 16
      %v943 = vrot.slane %v941, 4
      %v944 = vor.u32 %v943, %v939
      %v945 = vrot.slane %v944, 4
      %v947 = vshll.u32 %v908, 16
      %v949 = vrot.slane %v947, 5
      %v950 = vsel %vm475, %v945, %v949
      %v951 = vshrl.u32 %v908, 16
      %v953 = vrot.slane %v951, 4
      %v954 = vor.u32 %v953, %v949
      %v955 = vrot.slane %v954, 4
      %v957 = vshll.u32 %v909, 16
      %v959 = vrot.slane %v957, 5
      %v960 = vsel %vm475, %v955, %v959
      %v961 = vshrl.u32 %v909, 16
      %v963 = vrot.slane %v961, 4
      %v964 = vor.u32 %v963, %v959
      %v965 = vrot.slane %v964, 4
      %v967 = vshll.u32 %v910, 16
      %v969 = vrot.slane %v967, 5
      %v970 = vsel %vm475, %v965, %v969
      %v971 = vshrl.u32 %v910, 16
      %v973 = vrot.slane %v971, 4
      %v974 = vor.u32 %v973, %v969
      %v975 = vrot.slane %v974, 4
      %v977 = vshll.u32 %v911, 16
      %v979 = vrot.slane %v977, 5
      %v980 = vsel %vm475, %v975, %v979
      %v981 = vshrl.u32 %v911, 16
      %v983 = vrot.slane %v981, 4
      %v984 = vor.u32 %v983, %v979
      %v985 = vrot.slane %v984, 4
      %v987 = vshll.u32 %v912, 16
      %v989 = vrot.slane %v987, 5
      %v990 = vsel %vm475, %v985, %v989
      %v991 = vshrl.u32 %v912, 16
      %v993 = vrot.slane %v991, 4
      %v994 = vor.u32 %v993, %v989
      %v995 = vrot.slane %v994, 4
      %v997 = vshll.u32 %v913, 16
      %v999 = vrot.slane %v997, 5
      %v1000 = vsel %vm475, %v995, %v999
      %v1001 = vshrl.u32 %v913, 16
      %v1003 = vrot.slane %v1001, 4
      %v1004 = vor.u32 %v1003, %v999
      %v1005 = vrot.slane %v1004, 4
      %v1007 = vshll.u32 %v914, 16
      %v1009 = vrot.slane %v1007, 5
      %v1010 = vsel %vm475, %v1005, %v1009
      %v1011 = vshrl.u32 %v914, 16
      %v1013 = vrot.slane %v1011, 4
      %v1014 = vor.u32 %v1013, %v1009
      %v1015 = vrot.slane %v1014, 4
      %v1017 = vshll.u32 %v915, 16
      %v1019 = vrot.slane %v1017, 5
      %v1020 = vsel %vm475, %v1015, %v1019
      %v1021 = vshrl.u32 %v915, 16
      %v1023 = vrot.slane %v1021, 4
      %v1024 = vor.u32 %v1023, %v1019
      %v1025 = vrot.slane %v1024, 4
      %v1027 = vshll.u32 %v916, 16
      %v1029 = vrot.slane %v1027, 5
      %v1030 = vsel %vm475, %v1025, %v1029
      %v1031 = vshrl.u32 %v916, 16
      %v1033 = vrot.slane %v1031, 4
      %v1034 = vor.u32 %v1033, %v1029
      %v1035 = vrot.slane %v1034, 4
      %v1037 = vshll.u32 %v917, 16
      %v1039 = vrot.slane %v1037, 5
      %v1040 = vsel %vm475, %v1035, %v1039
      %v1041 = vshrl.u32 %v917, 16
      %v1043 = vrot.slane %v1041, 4
      %v1044 = vor.u32 %v1043, %v1039
      %v1045 = vrot.slane %v1044, 4
      %v1047 = vshll.u32 %v918, 16
      %v1049 = vrot.slane %v1047, 5
      %v1050 = vsel %vm475, %v1045, %v1049
      %v1051 = vshrl.u32 %v918, 16
      %v1053 = vrot.slane %v1051, 4
      %v1054 = vor.u32 %v1053, %v1049
      %v1055 = vrot.slane %v1054, 4
      %v1057 = vshll.u32 %v919, 16
      %v1059 = vrot.slane %v1057, 5
      %v1060 = vsel %vm475, %v1055, %v1059
      %v1061 = vshrl.u32 %v919, 16
      %v1063 = vrot.slane %v1061, 4
      %v1064 = vor.u32 %v1063, %v1059
      %v1065 = vrot.slane %v1064, 4
      %v1067 = vshll.u32 %v920, 16
      %v1069 = vrot.slane %v1067, 5
      %v1070 = vsel %vm475, %v1065, %v1069
      %v1071 = vshrl.u32 %v920, 16
      %v1073 = vrot.slane %v1071, 4
      %v1074 = vor.u32 %v1073, %v1069
      %v1075 = vrot.slane %v1074, 4
      %v1077 = vshll.u32 %v921, 16
      %v1079 = vrot.slane %v1077, 5
      %v1080 = vsel %vm475, %v1075, %v1079
      %v1081 = vshrl.u32 %v921, 16
      %v1083 = vrot.slane %v1081, 4
      %v1084 = vor.u32 %v1083, %v1079
      %v1085 = vrot.slane %v1084, 4
      %v1087 = vshll.u32 %v922, 16
      %v1089 = vrot.slane %v1087, 5
      %v1090 = vsel %vm475, %v1085, %v1089
      %v1091 = vshrl.u32 %v922, 16
      %v1093 = vrot.slane %v1091, 4
      %v1094 = vor.u32 %v1093, %v1089
      %v1095 = vrot.slane %v1094, 4
      %v1097 = vshll.u32 %v923, 16
      %v1099 = vrot.slane %v1097, 5
      %v1100 = vsel %vm475, %v1095, %v1099
      %v1101 = vshrl.u32 %v923, 16
      %v1103 = vrot.slane %v1101, 4
      %v1104 = vor.u32 %v1103, %v1099
      %v1105 = vrot.slane %v1104, 4
      %v1107 = vshll.u32 %v924, 16
      %v1109 = vrot.slane %v1107, 5
      %v1110 = vsel %vm475, %v1105, %v1109
      %v1111 = vshrl.u32 %v924, 16
      %v1113 = vrot.slane %v1111, 4
      %v1114 = vor.u32 %v1113, %v1109
      %v1115 = vrot.slane %v1114, 4
      %v1117 = vshll.u32 %v925, 16
      %v1119 = vrot.slane %v1117, 5
      %v1120 = vsel %vm475, %v1115, %v1119
      %v1121 = vshrl.u32 %v925, 16
      %v1123 = vrot.slane %v1121, 4
      %v1124 = vor.u32 %v1123, %v1119
      %v1125 = vrot.slane %v1124, 4
      %v1127 = vshll.u32 %v926, 16
      %v1129 = vrot.slane %v1127, 5
      %v1130 = vsel %vm475, %v1125, %v1129
      %1151 = vst [vmem:[#allocation2 + $0x10] sm:$0xf] %v940
      %1152 = vst [vmem:[#allocation2 + $0x34] sm:$0xf] %v950
      %1153 = vst [vmem:[#allocation2 + $0x58] sm:$0xf] %v960
      %1154 = vst [vmem:[#allocation2 + $0x7c] sm:$0xf] %v970
      %1155 = vst [vmem:[#allocation2 + $0xa0] sm:$0xf] %v980
      %1156 = vst [vmem:[#allocation2 + $0xc4] sm:$0xf] %v990
      %1157 = vst [vmem:[#allocation2 + $0xe8] sm:$0xf] %v1000
      %1158 = vst [vmem:[#allocation2 + $0x10c] sm:$0xf] %v1010
      %1159 = vst [vmem:[#allocation2 + $0x130] sm:$0xf] %v1020
      %1160 = vst [vmem:[#allocation2 + $0x154] sm:$0xf] %v1030
      %1161 = vst [vmem:[#allocation2 + $0x178] sm:$0xf] %v1040
      %1162 = vst [vmem:[#allocation2 + $0x19c] sm:$0xf] %v1050
      %1163 = vst [vmem:[#allocation2 + $0x1c0] sm:$0xf] %v1060
      %1164 = vst [vmem:[#allocation2 + $0x1e4] sm:$0xf] %v1070
      %1165 = vst [vmem:[#allocation2 + $0x208] sm:$0xf] %v1080
      %1166 = vst [vmem:[#allocation2 + $0x22c] sm:$0xf] %v1090
      %1167 = vst [vmem:[#allocation2 + $0x250] sm:$0xf] %v1100
      %1168 = vst [vmem:[#allocation2 + $0x274] sm:$0xf] %v1110
      %1169 = vst [vmem:[#allocation2 + $0x298] sm:$0xf] %v1120
      %1170 = vst [vmem:[#allocation2 + $0x2bc] sm:$0xf] %v1130
      %v1171 = vld [vmem:[%s378] sm:$0xe]
      %v1172 = vld [vmem:[%s378 + $0x4] sm:$0xf]
      %v1173 = vld [vmem:[%s378 + $0x8] sm:$0xf]
      %v1174 = vld [vmem:[%s378 + $0xc] sm:$0xf]
      %v1175 = vld [vmem:[%s378 + $0x10] sm:$0xf]
      %v1176 = vld [vmem:[%s378 + $0x14] sm:$0xf]
      %v1177 = vld [vmem:[%s378 + $0x18] sm:$0xf]
      %v1178 = vld [vmem:[%s378 + $0x1c] sm:$0xf]
      %v1179 = vld [vmem:[%s378 + $0x20] sm:$0xf]
      %v1180 = vld [vmem:[%s378 + $0x24] sm:$0xf]
      %v1181 = vld [vmem:[%s378 + $0x28] sm:$0xf]
      %v1182 = vld [vmem:[%s378 + $0x2c] sm:$0xf]
      %v1183 = vld [vmem:[%s378 + $0x30] sm:$0xf]
      %v1184 = vld [vmem:[%s378 + $0x34] sm:$0xf]
      %v1185 = vld [vmem:[%s378 + $0x38] sm:$0xf]
      %v1186 = vld [vmem:[%s378 + $0x3c] sm:$0xf]
      %v1187 = vld [vmem:[%s378 + $0x40] sm:$0xf]
      %v1188 = vld [vmem:[%s378 + $0x44] sm:$0xf]
      %v1189 = vld [vmem:[%s378 + $0x48] sm:$0xf]
      %v1190 = vld [vmem:[%s378 + $0x4c] sm:$0xf]
      %v1191 = vld [vmem:[%s378 + $0x50] sm:$0x1]
      %v1213 = vrot.slane %v1171, 5
      %v1214 = vrot.slane %v1213, 4
      %v1215 = vrot.slane %v1172, 5
      %v1216 = vsel %vm764, %v1214, %v1215
      %v1217 = vrot.slane %v1215, 4
      %v1218 = vrot.slane %v1173, 5
      %v1219 = vsel %vm764, %v1217, %v1218
      %v1220 = vrot.slane %v1218, 4
      %v1221 = vrot.slane %v1174, 5
      %v1222 = vsel %vm764, %v1220, %v1221
      %v1223 = vrot.slane %v1221, 4
      %v1224 = vrot.slane %v1175, 5
      %v1225 = vsel %vm764, %v1223, %v1224
      %v1226 = vrot.slane %v1224, 4
      %v1227 = vrot.slane %v1176, 5
      %v1228 = vsel %vm764, %v1226, %v1227
      %v1229 = vrot.slane %v1227, 4
      %v1230 = vrot.slane %v1177, 5
      %v1231 = vsel %vm764, %v1229, %v1230
      %v1232 = vrot.slane %v1230, 4
      %v1233 = vrot.slane %v1178, 5
      %v1234 = vsel %vm764, %v1232, %v1233
      %v1235 = vrot.slane %v1233, 4
      %v1236 = vrot.slane %v1179, 5
      %v1237 = vsel %vm764, %v1235, %v1236
      %v1238 = vrot.slane %v1236, 4
      %v1239 = vrot.slane %v1180, 5
      %v1240 = vsel %vm764, %v1238, %v1239
      %v1241 = vrot.slane %v1239, 4
      %v1242 = vrot.slane %v1181, 5
      %v1243 = vsel %vm764, %v1241, %v1242
      %v1244 = vrot.slane %v1242, 4
      %v1245 = vrot.slane %v1182, 5
      %v1246 = vsel %vm764, %v1244, %v1245
      %v1247 = vrot.slane %v1245, 4
      %v1248 = vrot.slane %v1183, 5
      %v1249 = vsel %vm764, %v1247, %v1248
      %v1250 = vrot.slane %v1248, 4
      %v1251 = vrot.slane %v1184, 5
      %v1252 = vsel %vm764, %v1250, %v1251
      %v1253 = vrot.slane %v1251, 4
      %v1254 = vrot.slane %v1185, 5
      %v1255 = vsel %vm764, %v1253, %v1254
      %v1256 = vrot.slane %v1254, 4
      %v1257 = vrot.slane %v1186, 5
      %v1258 = vsel %vm764, %v1256, %v1257
      %v1259 = vrot.slane %v1257, 4
      %v1260 = vrot.slane %v1187, 5
      %v1261 = vsel %vm764, %v1259, %v1260
      %v1262 = vrot.slane %v1260, 4
      %v1263 = vrot.slane %v1188, 5
      %v1264 = vsel %vm764, %v1262, %v1263
      %v1265 = vrot.slane %v1263, 4
      %v1266 = vrot.slane %v1189, 5
      %v1267 = vsel %vm764, %v1265, %v1266
      %v1268 = vrot.slane %v1266, 4
      %v1269 = vrot.slane %v1190, 5
      %v1270 = vsel %vm764, %v1268, %v1269
      %v1271 = vrot.slane %v1269, 4
      %v1272 = vrot.slane %v1191, 5
      %v1273 = vsel %vm764, %v1271, %v1272
      %1294 = vst [vmem:[#allocation2 + $0x14] sm:$0xf] %v1216
      %1295 = vst [vmem:[#allocation2 + $0x38] sm:$0xf] %v1219
      %1296 = vst [vmem:[#allocation2 + $0x5c] sm:$0xf] %v1222
      %1297 = vst [vmem:[#allocation2 + $0x80] sm:$0xf] %v1225
      %1298 = vst [vmem:[#allocation2 + $0xa4] sm:$0xf] %v1228
      %1299 = vst [vmem:[#allocation2 + $0xc8] sm:$0xf] %v1231
      %1300 = vst [vmem:[#allocation2 + $0xec] sm:$0xf] %v1234
      %1301 = vst [vmem:[#allocation2 + $0x110] sm:$0xf] %v1237
      %1302 = vst [vmem:[#allocation2 + $0x134] sm:$0xf] %v1240
      %1303 = vst [vmem:[#allocation2 + $0x158] sm:$0xf] %v1243
      %1304 = vst [vmem:[#allocation2 + $0x17c] sm:$0xf] %v1246
      %1305 = vst [vmem:[#allocation2 + $0x1a0] sm:$0xf] %v1249
      %1306 = vst [vmem:[#allocation2 + $0x1c4] sm:$0xf] %v1252
      %1307 = vst [vmem:[#allocation2 + $0x1e8] sm:$0xf] %v1255
      %1308 = vst [vmem:[#allocation2 + $0x20c] sm:$0xf] %v1258
      %1309 = vst [vmem:[#allocation2 + $0x230] sm:$0xf] %v1261
      %1310 = vst [vmem:[#allocation2 + $0x254] sm:$0xf] %v1264
      %1311 = vst [vmem:[#allocation2 + $0x278] sm:$0xf] %v1267
      %1312 = vst [vmem:[#allocation2 + $0x29c] sm:$0xf] %v1270
      %1313 = vst [vmem:[#allocation2 + $0x2c0] sm:$0xf] %v1273
      %v1314 = vld [vmem:[%s389] sm:$0xf]
      %v1315 = vld [vmem:[%s389 + $0x4] sm:$0xf]
      %v1316 = vld [vmem:[%s389 + $0x8] sm:$0xf]
      %v1317 = vld [vmem:[%s389 + $0xc] sm:$0xf]
      %v1318 = vld [vmem:[%s389 + $0x10] sm:$0xf]
      %v1319 = vld [vmem:[%s389 + $0x14] sm:$0xf]
      %v1320 = vld [vmem:[%s389 + $0x18] sm:$0xf]
      %v1321 = vld [vmem:[%s389 + $0x1c] sm:$0xf]
      %v1322 = vld [vmem:[%s389 + $0x20] sm:$0xf]
      %v1323 = vld [vmem:[%s389 + $0x24] sm:$0xf]
      %v1324 = vld [vmem:[%s389 + $0x28] sm:$0xf]
      %v1325 = vld [vmem:[%s389 + $0x2c] sm:$0xf]
      %v1326 = vld [vmem:[%s389 + $0x30] sm:$0xf]
      %v1327 = vld [vmem:[%s389 + $0x34] sm:$0xf]
      %v1328 = vld [vmem:[%s389 + $0x38] sm:$0xf]
      %v1329 = vld [vmem:[%s389 + $0x3c] sm:$0xf]
      %v1330 = vld [vmem:[%s389 + $0x40] sm:$0xf]
      %v1331 = vld [vmem:[%s389 + $0x44] sm:$0xf]
      %v1332 = vld [vmem:[%s389 + $0x48] sm:$0xf]
      %v1333 = vld [vmem:[%s389 + $0x4c] sm:$0xf]
      %1334 = vst [vmem:[#allocation2 + $0x18] sm:$0xf] %v1314
      %1335 = vst [vmem:[#allocation2 + $0x3c] sm:$0xf] %v1315
      %1336 = vst [vmem:[#allocation2 + $0x60] sm:$0xf] %v1316
      %1337 = vst [vmem:[#allocation2 + $0x84] sm:$0xf] %v1317
      %1338 = vst [vmem:[#allocation2 + $0xa8] sm:$0xf] %v1318
      %1339 = vst [vmem:[#allocation2 + $0xcc] sm:$0xf] %v1319
      %1340 = vst [vmem:[#allocation2 + $0xf0] sm:$0xf] %v1320
      %1341 = vst [vmem:[#allocation2 + $0x114] sm:$0xf] %v1321
      %1342 = vst [vmem:[#allocation2 + $0x138] sm:$0xf] %v1322
      %1343 = vst [vmem:[#allocation2 + $0x15c] sm:$0xf] %v1323
      %1344 = vst [vmem:[#allocation2 + $0x180] sm:$0xf] %v1324
      %1345 = vst [vmem:[#allocation2 + $0x1a4] sm:$0xf] %v1325
      %1346 = vst [vmem:[#allocation2 + $0x1c8] sm:$0xf] %v1326
      %1347 = vst [vmem:[#allocation2 + $0x1ec] sm:$0xf] %v1327
      %1348 = vst [vmem:[#allocation2 + $0x210] sm:$0xf] %v1328
      %1349 = vst [vmem:[#allocation2 + $0x234] sm:$0xf] %v1329
      %1350 = vst [vmem:[#allocation2 + $0x258] sm:$0xf] %v1330
      %1351 = vst [vmem:[#allocation2 + $0x27c] sm:$0xf] %v1331
      %1352 = vst [vmem:[#allocation2 + $0x2a0] sm:$0xf] %v1332
      %1353 = vst [vmem:[#allocation2 + $0x2c4] sm:$0xf] %v1333
      %v1354 = vld [vmem:[%s389] sm:$0xf]
      %v1355 = vld [vmem:[%s389 + $0x4] sm:$0xf]
      %v1356 = vld [vmem:[%s389 + $0x8] sm:$0xf]
      %v1357 = vld [vmem:[%s389 + $0xc] sm:$0xf]
      %v1358 = vld [vmem:[%s389 + $0x10] sm:$0xf]
      %v1359 = vld [vmem:[%s389 + $0x14] sm:$0xf]
      %v1360 = vld [vmem:[%s389 + $0x18] sm:$0xf]
      %v1361 = vld [vmem:[%s389 + $0x1c] sm:$0xf]
      %v1362 = vld [vmem:[%s389 + $0x20] sm:$0xf]
      %v1363 = vld [vmem:[%s389 + $0x24] sm:$0xf]
      %v1364 = vld [vmem:[%s389 + $0x28] sm:$0xf]
      %v1365 = vld [vmem:[%s389 + $0x2c] sm:$0xf]
      %v1366 = vld [vmem:[%s389 + $0x30] sm:$0xf]
      %v1367 = vld [vmem:[%s389 + $0x34] sm:$0xf]
      %v1368 = vld [vmem:[%s389 + $0x38] sm:$0xf]
      %v1369 = vld [vmem:[%s389 + $0x3c] sm:$0xf]
      %v1370 = vld [vmem:[%s389 + $0x40] sm:$0xf]
      %v1371 = vld [vmem:[%s389 + $0x44] sm:$0xf]
      %v1372 = vld [vmem:[%s389 + $0x48] sm:$0xf]
      %v1373 = vld [vmem:[%s389 + $0x4c] sm:$0xf]
      %v1374 = vld [vmem:[%s389 + $0x50] sm:$0x1]
      %v1376 = vshrl.u32 %v1354, 16
      %v1378 = vrot.slane %v1376, 4
      %v1379 = vshll.u32 %v1354, 16
      %v1381 = vrot.slane %v1379, 5
      %v1382 = vor.u32 %v1378, %v1381
      %v1383 = vrot.slane %v1382, 4
      %v1385 = vshll.u32 %v1355, 16
      %v1387 = vrot.slane %v1385, 5
      %v1388 = vsel %vm475, %v1383, %v1387
      %v1389 = vshrl.u32 %v1355, 16
      %v1391 = vrot.slane %v1389, 4
      %v1392 = vor.u32 %v1391, %v1387
      %v1393 = vrot.slane %v1392, 4
      %v1395 = vshll.u32 %v1356, 16
      %v1397 = vrot.slane %v1395, 5
      %v1398 = vsel %vm475, %v1393, %v1397
      %v1399 = vshrl.u32 %v1356, 16
      %v1401 = vrot.slane %v1399, 4
      %v1402 = vor.u32 %v1401, %v1397
      %v1403 = vrot.slane %v1402, 4
      %v1405 = vshll.u32 %v1357, 16
      %v1407 = vrot.slane %v1405, 5
      %v1408 = vsel %vm475, %v1403, %v1407
      %v1409 = vshrl.u32 %v1357, 16
      %v1411 = vrot.slane %v1409, 4
      %v1412 = vor.u32 %v1411, %v1407
      %v1413 = vrot.slane %v1412, 4
      %v1415 = vshll.u32 %v1358, 16
      %v1417 = vrot.slane %v1415, 5
      %v1418 = vsel %vm475, %v1413, %v1417
      %v1419 = vshrl.u32 %v1358, 16
      %v1421 = vrot.slane %v1419, 4
      %v1422 = vor.u32 %v1421, %v1417
      %v1423 = vrot.slane %v1422, 4
      %v1425 = vshll.u32 %v1359, 16
      %v1427 = vrot.slane %v1425, 5
      %v1428 = vsel %vm475, %v1423, %v1427
      %v1429 = vshrl.u32 %v1359, 16
      %v1431 = vrot.slane %v1429, 4
      %v1432 = vor.u32 %v1431, %v1427
      %v1433 = vrot.slane %v1432, 4
      %v1435 = vshll.u32 %v1360, 16
      %v1437 = vrot.slane %v1435, 5
      %v1438 = vsel %vm475, %v1433, %v1437
      %v1439 = vshrl.u32 %v1360, 16
      %v1441 = vrot.slane %v1439, 4
      %v1442 = vor.u32 %v1441, %v1437
      %v1443 = vrot.slane %v1442, 4
      %v1445 = vshll.u32 %v1361, 16
      %v1447 = vrot.slane %v1445, 5
      %v1448 = vsel %vm475, %v1443, %v1447
      %v1449 = vshrl.u32 %v1361, 16
      %v1451 = vrot.slane %v1449, 4
      %v1452 = vor.u32 %v1451, %v1447
      %v1453 = vrot.slane %v1452, 4
      %v1455 = vshll.u32 %v1362, 16
      %v1457 = vrot.slane %v1455, 5
      %v1458 = vsel %vm475, %v1453, %v1457
      %v1459 = vshrl.u32 %v1362, 16
      %v1461 = vrot.slane %v1459, 4
      %v1462 = vor.u32 %v1461, %v1457
      %v1463 = vrot.slane %v1462, 4
      %v1465 = vshll.u32 %v1363, 16
      %v1467 = vrot.slane %v1465, 5
      %v1468 = vsel %vm475, %v1463, %v1467
      %v1469 = vshrl.u32 %v1363, 16
      %v1471 = vrot.slane %v1469, 4
      %v1472 = vor.u32 %v1471, %v1467
      %v1473 = vrot.slane %v1472, 4
      %v1475 = vshll.u32 %v1364, 16
      %v1477 = vrot.slane %v1475, 5
      %v1478 = vsel %vm475, %v1473, %v1477
      %v1479 = vshrl.u32 %v1364, 16
      %v1481 = vrot.slane %v1479, 4
      %v1482 = vor.u32 %v1481, %v1477
      %v1483 = vrot.slane %v1482, 4
      %v1485 = vshll.u32 %v1365, 16
      %v1487 = vrot.slane %v1485, 5
      %v1488 = vsel %vm475, %v1483, %v1487
      %v1489 = vshrl.u32 %v1365, 16
      %v1491 = vrot.slane %v1489, 4
      %v1492 = vor.u32 %v1491, %v1487
      %v1493 = vrot.slane %v1492, 4
      %v1495 = vshll.u32 %v1366, 16
      %v1497 = vrot.slane %v1495, 5
      %v1498 = vsel %vm475, %v1493, %v1497
      %v1499 = vshrl.u32 %v1366, 16
      %v1501 = vrot.slane %v1499, 4
      %v1502 = vor.u32 %v1501, %v1497
      %v1503 = vrot.slane %v1502, 4
      %v1505 = vshll.u32 %v1367, 16
      %v1507 = vrot.slane %v1505, 5
      %v1508 = vsel %vm475, %v1503, %v1507
      %v1509 = vshrl.u32 %v1367, 16
      %v1511 = vrot.slane %v1509, 4
      %v1512 = vor.u32 %v1511, %v1507
      %v1513 = vrot.slane %v1512, 4
      %v1515 = vshll.u32 %v1368, 16
      %v1517 = vrot.slane %v1515, 5
      %v1518 = vsel %vm475, %v1513, %v1517
      %v1519 = vshrl.u32 %v1368, 16
      %v1521 = vrot.slane %v1519, 4
      %v1522 = vor.u32 %v1521, %v1517
      %v1523 = vrot.slane %v1522, 4
      %v1525 = vshll.u32 %v1369, 16
      %v1527 = vrot.slane %v1525, 5
      %v1528 = vsel %vm475, %v1523, %v1527
      %v1529 = vshrl.u32 %v1369, 16
      %v1531 = vrot.slane %v1529, 4
      %v1532 = vor.u32 %v1531, %v1527
      %v1533 = vrot.slane %v1532, 4
      %v1535 = vshll.u32 %v1370, 16
      %v1537 = vrot.slane %v1535, 5
      %v1538 = vsel %vm475, %v1533, %v1537
      %v1539 = vshrl.u32 %v1370, 16
      %v1541 = vrot.slane %v1539, 4
      %v1542 = vor.u32 %v1541, %v1537
      %v1543 = vrot.slane %v1542, 4
      %v1545 = vshll.u32 %v1371, 16
      %v1547 = vrot.slane %v1545, 5
      %v1548 = vsel %vm475, %v1543, %v1547
      %v1549 = vshrl.u32 %v1371, 16
      %v1551 = vrot.slane %v1549, 4
      %v1552 = vor.u32 %v1551, %v1547
      %v1553 = vrot.slane %v1552, 4
      %v1555 = vshll.u32 %v1372, 16
      %v1557 = vrot.slane %v1555, 5
      %v1558 = vsel %vm475, %v1553, %v1557
      %v1559 = vshrl.u32 %v1372, 16
      %v1561 = vrot.slane %v1559, 4
      %v1562 = vor.u32 %v1561, %v1557
      %v1563 = vrot.slane %v1562, 4
      %v1565 = vshll.u32 %v1373, 16
      %v1567 = vrot.slane %v1565, 5
      %v1568 = vsel %vm475, %v1563, %v1567
      %v1569 = vshrl.u32 %v1373, 16
      %v1571 = vrot.slane %v1569, 4
      %v1572 = vor.u32 %v1571, %v1567
      %v1573 = vrot.slane %v1572, 4
      %v1575 = vshll.u32 %v1374, 16
      %v1577 = vrot.slane %v1575, 5
      %v1578 = vsel %vm475, %v1573, %v1577
      %1599 = vst [vmem:[#allocation2 + $0x1c] sm:$0xf] %v1388
      %1600 = vst [vmem:[#allocation2 + $0x40] sm:$0xf] %v1398
      %1601 = vst [vmem:[#allocation2 + $0x64] sm:$0xf] %v1408
      %1602 = vst [vmem:[#allocation2 + $0x88] sm:$0xf] %v1418
      %1603 = vst [vmem:[#allocation2 + $0xac] sm:$0xf] %v1428
      %1604 = vst [vmem:[#allocation2 + $0xd0] sm:$0xf] %v1438
      %1605 = vst [vmem:[#allocation2 + $0xf4] sm:$0xf] %v1448
      %1606 = vst [vmem:[#allocation2 + $0x118] sm:$0xf] %v1458
      %1607 = vst [vmem:[#allocation2 + $0x13c] sm:$0xf] %v1468
      %1608 = vst [vmem:[#allocation2 + $0x160] sm:$0xf] %v1478
      %1609 = vst [vmem:[#allocation2 + $0x184] sm:$0xf] %v1488
      %1610 = vst [vmem:[#allocation2 + $0x1a8] sm:$0xf] %v1498
      %1611 = vst [vmem:[#allocation2 + $0x1cc] sm:$0xf] %v1508
      %1612 = vst [vmem:[#allocation2 + $0x1f0] sm:$0xf] %v1518
      %1613 = vst [vmem:[#allocation2 + $0x214] sm:$0xf] %v1528
      %1614 = vst [vmem:[#allocation2 + $0x238] sm:$0xf] %v1538
      %1615 = vst [vmem:[#allocation2 + $0x25c] sm:$0xf] %v1548
      %1616 = vst [vmem:[#allocation2 + $0x280] sm:$0xf] %v1558
      %1617 = vst [vmem:[#allocation2 + $0x2a4] sm:$0xf] %v1568
      %1618 = vst [vmem:[#allocation2 + $0x2c8] sm:$0xf] %v1578
      %v1619 = vld [vmem:[%s389] sm:$0xe]
      %v1620 = vld [vmem:[%s389 + $0x4] sm:$0xf]
      %v1621 = vld [vmem:[%s389 + $0x8] sm:$0xf]
      %v1622 = vld [vmem:[%s389 + $0xc] sm:$0xf]
      %v1623 = vld [vmem:[%s389 + $0x10] sm:$0xf]
      %v1624 = vld [vmem:[%s389 + $0x14] sm:$0xf]
      %v1625 = vld [vmem:[%s389 + $0x18] sm:$0xf]
      %v1626 = vld [vmem:[%s389 + $0x1c] sm:$0xf]
      %v1627 = vld [vmem:[%s389 + $0x20] sm:$0xf]
      %v1628 = vld [vmem:[%s389 + $0x24] sm:$0xf]
      %v1629 = vld [vmem:[%s389 + $0x28] sm:$0xf]
      %v1630 = vld [vmem:[%s389 + $0x2c] sm:$0xf]
      %v1631 = vld [vmem:[%s389 + $0x30] sm:$0xf]
      %v1632 = vld [vmem:[%s389 + $0x34] sm:$0xf]
      %v1633 = vld [vmem:[%s389 + $0x38] sm:$0xf]
      %v1634 = vld [vmem:[%s389 + $0x3c] sm:$0xf]
      %v1635 = vld [vmem:[%s389 + $0x40] sm:$0xf]
      %v1636 = vld [vmem:[%s389 + $0x44] sm:$0xf]
      %v1637 = vld [vmem:[%s389 + $0x48] sm:$0xf]
      %v1638 = vld [vmem:[%s389 + $0x4c] sm:$0xf]
      %v1639 = vld [vmem:[%s389 + $0x50] sm:$0x1]
      %v1661 = vrot.slane %v1619, 5
      %v1662 = vrot.slane %v1661, 4
      %v1663 = vrot.slane %v1620, 5
      %v1664 = vsel %vm764, %v1662, %v1663
      %v1665 = vrot.slane %v1663, 4
      %v1666 = vrot.slane %v1621, 5
      %v1667 = vsel %vm764, %v1665, %v1666
      %v1668 = vrot.slane %v1666, 4
      %v1669 = vrot.slane %v1622, 5
      %v1670 = vsel %vm764, %v1668, %v1669
      %v1671 = vrot.slane %v1669, 4
      %v1672 = vrot.slane %v1623, 5
      %v1673 = vsel %vm764, %v1671, %v1672
      %v1674 = vrot.slane %v1672, 4
      %v1675 = vrot.slane %v1624, 5
      %v1676 = vsel %vm764, %v1674, %v1675
      %v1677 = vrot.slane %v1675, 4
      %v1678 = vrot.slane %v1625, 5
      %v1679 = vsel %vm764, %v1677, %v1678
      %v1680 = vrot.slane %v1678, 4
      %v1681 = vrot.slane %v1626, 5
      %v1682 = vsel %vm764, %v1680, %v1681
      %v1683 = vrot.slane %v1681, 4
      %v1684 = vrot.slane %v1627, 5
      %v1685 = vsel %vm764, %v1683, %v1684
      %v1686 = vrot.slane %v1684, 4
      %v1687 = vrot.slane %v1628, 5
      %v1688 = vsel %vm764, %v1686, %v1687
      %v1689 = vrot.slane %v1687, 4
      %v1690 = vrot.slane %v1629, 5
      %v1691 = vsel %vm764, %v1689, %v1690
      %v1692 = vrot.slane %v1690, 4
      %v1693 = vrot.slane %v1630, 5
      %v1694 = vsel %vm764, %v1692, %v1693
      %v1695 = vrot.slane %v1693, 4
      %v1696 = vrot.slane %v1631, 5
      %v1697 = vsel %vm764, %v1695, %v1696
      %v1698 = vrot.slane %v1696, 4
      %v1699 = vrot.slane %v1632, 5
      %v1700 = vsel %vm764, %v1698, %v1699
      %v1701 = vrot.slane %v1699, 4
      %v1702 = vrot.slane %v1633, 5
      %v1703 = vsel %vm764, %v1701, %v1702
      %v1704 = vrot.slane %v1702, 4
      %v1705 = vrot.slane %v1634, 5
      %v1706 = vsel %vm764, %v1704, %v1705
      %v1707 = vrot.slane %v1705, 4
      %v1708 = vrot.slane %v1635, 5
      %v1709 = vsel %vm764, %v1707, %v1708
      %v1710 = vrot.slane %v1708, 4
      %v1711 = vrot.slane %v1636, 5
      %v1712 = vsel %vm764, %v1710, %v1711
      %v1713 = vrot.slane %v1711, 4
      %v1714 = vrot.slane %v1637, 5
      %v1715 = vsel %vm764, %v1713, %v1714
      %v1716 = vrot.slane %v1714, 4
      %v1717 = vrot.slane %v1638, 5
      %v1718 = vsel %vm764, %v1716, %v1717
      %v1719 = vrot.slane %v1717, 4
      %v1720 = vrot.slane %v1639, 5
      %v1721 = vsel %vm764, %v1719, %v1720
      %1742 = vst [vmem:[#allocation2 + $0x20] sm:$0xf] %v1664
      %1743 = vst [vmem:[#allocation2 + $0x44] sm:$0xf] %v1667
      %1744 = vst [vmem:[#allocation2 + $0x68] sm:$0xf] %v1670
      %1745 = vst [vmem:[#allocation2 + $0x8c] sm:$0xf] %v1673
      %1746 = vst [vmem:[#allocation2 + $0xb0] sm:$0xf] %v1676
      %1747 = vst [vmem:[#allocation2 + $0xd4] sm:$0xf] %v1679
      %1748 = vst [vmem:[#allocation2 + $0xf8] sm:$0xf] %v1682
      %1749 = vst [vmem:[#allocation2 + $0x11c] sm:$0xf] %v1685
      %1750 = vst [vmem:[#allocation2 + $0x140] sm:$0xf] %v1688
      %1751 = vst [vmem:[#allocation2 + $0x164] sm:$0xf] %v1691
      %1752 = vst [vmem:[#allocation2 + $0x188] sm:$0xf] %v1694
      %1753 = vst [vmem:[#allocation2 + $0x1ac] sm:$0xf] %v1697
      %1754 = vst [vmem:[#allocation2 + $0x1d0] sm:$0xf] %v1700
      %1755 = vst [vmem:[#allocation2 + $0x1f4] sm:$0xf] %v1703
      %1756 = vst [vmem:[#allocation2 + $0x218] sm:$0xf] %v1706
      %1757 = vst [vmem:[#allocation2 + $0x23c] sm:$0xf] %v1709
      %1758 = vst [vmem:[#allocation2 + $0x260] sm:$0xf] %v1712
      %1759 = vst [vmem:[#allocation2 + $0x284] sm:$0xf] %v1715
      %1760 = vst [vmem:[#allocation2 + $0x2a8] sm:$0xf] %v1718
      %1761 = vst [vmem:[#allocation2 + $0x2cc] sm:$0xf] %v1721
      %v1762 = vld [vmem:[%s400] sm:$0xff]
      %v1763 = vld [vmem:[%s400 + $0x8] sm:$0xff]
      %v1764 = vld [vmem:[%s400 + $0x10] sm:$0xff]
      %v1765 = vld [vmem:[%s400 + $0x18] sm:$0xff]
      %v1766 = vld [vmem:[%s400 + $0x20] sm:$0xff]
      %v1767 = vld [vmem:[%s400 + $0x28] sm:$0xff]
      %v1768 = vld [vmem:[%s400 + $0x30] sm:$0xff]
      %v1769 = vld [vmem:[%s400 + $0x38] sm:$0xff]
      %v1770 = vld [vmem:[%s400 + $0x40] sm:$0xff]
      %v1771 = vld [vmem:[%s400 + $0x48] sm:$0xff]
      %v1772 = vld [vmem:[%s400 + $0x50] sm:$0xff]
      %v1773 = vld [vmem:[%s400 + $0x58] sm:$0xff]
      %v1774 = vld [vmem:[%s400 + $0x60] sm:$0xff]
      %v1775 = vld [vmem:[%s400 + $0x68] sm:$0xff]
      %v1776 = vld [vmem:[%s400 + $0x70] sm:$0xff]
      %v1777 = vld [vmem:[%s400 + $0x78] sm:$0xff]
      %v1778 = vld [vmem:[%s4] sm:$0x1]
      %v1780 = vlaneseq
      %v1781 = vshrl.u32 %v1780, 7
      %v1782 = vsub.s32 0, %v1781
      %v1783 = vrot.slane %v1778, %v1782
      %v1785 = vadd.f32 %v1762, %v1783
      %v1786 = vadd.f32 %v1763, %v1783
      %v1787 = vadd.f32 %v1764, %v1783
      %v1788 = vadd.f32 %v1765, %v1783
      %v1789 = vadd.f32 %v1766, %v1783
      %v1790 = vadd.f32 %v1767, %v1783
      %v1791 = vadd.f32 %v1768, %v1783
      %v1792 = vadd.f32 %v1769, %v1783
      %v1793 = vadd.f32 %v1770, %v1783
      %v1794 = vadd.f32 %v1771, %v1783
      %v1795 = vadd.f32 %v1772, %v1783
      %v1796 = vadd.f32 %v1773, %v1783
      %v1797 = vadd.f32 %v1774, %v1783
      %v1798 = vadd.f32 %v1775, %v1783
      %v1799 = vadd.f32 %v1776, %v1783
      %v1800 = vadd.f32 %v1777, %v1783
      %1801 = vst [vmem:[#allocation3] sm:$0xff] %v1785
      %1802 = vst [vmem:[#allocation3 + $0x8] sm:$0xff] %v1786
      %1803 = vst [vmem:[#allocation3 + $0x10] sm:$0xff] %v1787
      %1804 = vst [vmem:[#allocation3 + $0x18] sm:$0xff] %v1788
      %1805 = vst [vmem:[#allocation3 + $0x20] sm:$0xff] %v1789
      %1806 = vst [vmem:[#allocation3 + $0x28] sm:$0xff] %v1790
      %1807 = vst [vmem:[#allocation3 + $0x30] sm:$0xff] %v1791
      %1808 = vst [vmem:[#allocation3 + $0x38] sm:$0xff] %v1792
      %1809 = vst [vmem:[#allocation3 + $0x40] sm:$0xff] %v1793
      %1810 = vst [vmem:[#allocation3 + $0x48] sm:$0xff] %v1794
      %1811 = vst [vmem:[#allocation3 + $0x50] sm:$0xff] %v1795
      %1812 = vst [vmem:[#allocation3 + $0x58] sm:$0xff] %v1796
      %1813 = vst [vmem:[#allocation3 + $0x60] sm:$0xff] %v1797
      %1814 = vst [vmem:[#allocation3 + $0x68] sm:$0xff] %v1798
      %1815 = vst [vmem:[#allocation3 + $0x70] sm:$0xff] %v1799
      %1816 = vst [vmem:[#allocation3 + $0x78] sm:$0xff] %v1800
      %v1817 = vld [vmem:[#allocation3] sm:$0xff]
      %v1818 = vld [vmem:[#allocation3 + $0x8] sm:$0xff]
      %v1819 = vld [vmem:[#allocation3 + $0x10] sm:$0xff]
      %v1820 = vld [vmem:[#allocation3 + $0x18] sm:$0xff]
      %v1821 = vld [vmem:[#allocation3 + $0x20] sm:$0xff]
      %v1822 = vld [vmem:[#allocation3 + $0x28] sm:$0xff]
      %v1823 = vld [vmem:[#allocation3 + $0x30] sm:$0xff]
      %v1824 = vld [vmem:[#allocation3 + $0x38] sm:$0xff]
      %v1825 = vld [vmem:[#allocation3 + $0x40] sm:$0xff]
      %v1826 = vld [vmem:[#allocation3 + $0x48] sm:$0xff]
      %v1827 = vld [vmem:[#allocation3 + $0x50] sm:$0xff]
      %v1828 = vld [vmem:[#allocation3 + $0x58] sm:$0xff]
      %v1829 = vld [vmem:[#allocation3 + $0x60] sm:$0xff]
      %v1830 = vld [vmem:[#allocation3 + $0x68] sm:$0xff]
      %v1831 = vld [vmem:[#allocation3 + $0x70] sm:$0xff]
      %v1832 = vld [vmem:[#allocation3 + $0x78] sm:$0xff]
      %v1833 = vld [vmem:[#allocation2] sm:$0xff]
      %v1834 = vld [vmem:[#allocation2 + $0x8] sm:$0xff]
      %v1835 = vld [vmem:[#allocation2 + $0x10] sm:$0xff]
      %v1836 = vld [vmem:[#allocation2 + $0x18] sm:$0xff]
      %v1837 = vld [vmem:[#allocation2 + $0x20] sm:$0xf]
      %v1838 = vld [vmem:[#allocation2 + $0x24] sm:$0xff]
      %v1839 = vld [vmem:[#allocation2 + $0x2c] sm:$0xff]
      %v1840 = vld [vmem:[#allocation2 + $0x34] sm:$0xff]
      %v1841 = vld [vmem:[#allocation2 + $0x3c] sm:$0xff]
      %v1842 = vld [vmem:[#allocation2 + $0x44] sm:$0xf]
      %v1843 = vld [vmem:[#allocation2 + $0x48] sm:$0xff]
      %v1844 = vld [vmem:[#allocation2 + $0x50] sm:$0xff]
      %v1845 = vld [vmem:[#allocation2 + $0x58] sm:$0xff]
      %v1846 = vld [vmem:[#allocation2 + $0x60] sm:$0xff]
      %v1847 = vld [vmem:[#allocation2 + $0x68] sm:$0xf]
      %v1848 = vld [vmem:[#allocation2 + $0x6c] sm:$0xff]
      %v1849 = vld [vmem:[#allocation2 + $0x74] sm:$0xff]
      %v1850 = vld [vmem:[#allocation2 + $0x7c] sm:$0xff]
      %v1851 = vld [vmem:[#allocation2 + $0x84] sm:$0xff]
      %v1852 = vld [vmem:[#allocation2 + $0x8c] sm:$0xf]
      %v1853 = vld [vmem:[#allocation2 + $0x90] sm:$0xff]
      %v1854 = vld [vmem:[#allocation2 + $0x98] sm:$0xff]
      %v1855 = vld [vmem:[#allocation2 + $0xa0] sm:$0xff]
      %v1856 = vld [vmem:[#allocation2 + $0xa8] sm:$0xff]
      %v1857 = vld [vmem:[#allocation2 + $0xb0] sm:$0xf]
      %v1858 = vld [vmem:[#allocation2 + $0xb4] sm:$0xff]
      %v1859 = vld [vmem:[#allocation2 + $0xbc] sm:$0xff]
      %v1860 = vld [vmem:[#allocation2 + $0xc4] sm:$0xff]
      %v1861 = vld [vmem:[#allocation2 + $0xcc] sm:$0xff]
      %v1862 = vld [vmem:[#allocation2 + $0xd4] sm:$0xf]
      %v1863 = vld [vmem:[#allocation2 + $0xd8] sm:$0xff]
      %v1864 = vld [vmem:[#allocation2 + $0xe0] sm:$0xff]
      %v1865 = vld [vmem:[#allocation2 + $0xe8] sm:$0xff]
      %v1866 = vld [vmem:[#allocation2 + $0xf0] sm:$0xff]
      %v1867 = vld [vmem:[#allocation2 + $0xf8] sm:$0xf]
      %v1868 = vld [vmem:[#allocation2 + $0xfc] sm:$0xff]
      %v1869 = vld [vmem:[#allocation2 + $0x104] sm:$0xff]
      %v1870 = vld [vmem:[#allocation2 + $0x10c] sm:$0xff]
      %v1871 = vld [vmem:[#allocation2 + $0x114] sm:$0xff]
      %v1872 = vld [vmem:[#allocation2 + $0x11c] sm:$0xf]
      %v1873 = vld [vmem:[#allocation2 + $0x120] sm:$0xff]
      %v1874 = vld [vmem:[#allocation2 + $0x128] sm:$0xff]
      %v1875 = vld [vmem:[#allocation2 + $0x130] sm:$0xff]
      %v1876 = vld [vmem:[#allocation2 + $0x138] sm:$0xff]
      %v1877 = vld [vmem:[#allocation2 + $0x140] sm:$0xf]
      %v1878 = vld [vmem:[#allocation2 + $0x144] sm:$0xff]
      %v1879 = vld [vmem:[#allocation2 + $0x14c] sm:$0xff]
      %v1880 = vld [vmem:[#allocation2 + $0x154] sm:$0xff]
      %v1881 = vld [vmem:[#allocation2 + $0x15c] sm:$0xff]
      %v1882 = vld [vmem:[#allocation2 + $0x164] sm:$0xf]
      %v1883 = vld [vmem:[#allocation2 + $0x168] sm:$0xff]
      %v1884 = vld [vmem:[#allocation2 + $0x170] sm:$0xff]
      %v1885 = vld [vmem:[#allocation2 + $0x178] sm:$0xff]
      %v1886 = vld [vmem:[#allocation2 + $0x180] sm:$0xff]
      %v1887 = vld [vmem:[#allocation2 + $0x188] sm:$0xf]
      %v1888 = vld [vmem:[#allocation2 + $0x18c] sm:$0xff]
      %v1889 = vld [vmem:[#allocation2 + $0x194] sm:$0xff]
      %v1890 = vld [vmem:[#allocation2 + $0x19c] sm:$0xff]
      %v1891 = vld [vmem:[#allocation2 + $0x1a4] sm:$0xff]
      %v1892 = vld [vmem:[#allocation2 + $0x1ac] sm:$0xf]
      %v1893 = vld [vmem:[#allocation2 + $0x1b0] sm:$0xff]
      %v1894 = vld [vmem:[#allocation2 + $0x1b8] sm:$0xff]
      %v1895 = vld [vmem:[#allocation2 + $0x1c0] sm:$0xff]
      %v1896 = vld [vmem:[#allocation2 + $0x1c8] sm:$0xff]
      %v1897 = vld [vmem:[#allocation2 + $0x1d0] sm:$0xf]
      %v1898 = vld [vmem:[#allocation2 + $0x1d4] sm:$0xff]
      %v1899 = vld [vmem:[#allocation2 + $0x1dc] sm:$0xff]
      %v1900 = vld [vmem:[#allocation2 + $0x1e4] sm:$0xff]
      %v1901 = vld [vmem:[#allocation2 + $0x1ec] sm:$0xff]
      %v1902 = vld [vmem:[#allocation2 + $0x1f4] sm:$0xf]
      %v1903 = vld [vmem:[#allocation2 + $0x1f8] sm:$0xff]
      %v1904 = vld [vmem:[#allocation2 + $0x200] sm:$0xff]
      %v1905 = vld [vmem:[#allocation2 + $0x208] sm:$0xff]
      %v1906 = vld [vmem:[#allocation2 + $0x210] sm:$0xff]
      %v1907 = vld [vmem:[#allocation2 + $0x218] sm:$0xf]
      %v1908 = vld [vmem:[#allocation2 + $0x21c] sm:$0xff]
      %v1909 = vld [vmem:[#allocation2 + $0x224] sm:$0xff]
      %v1910 = vld [vmem:[#allocation2 + $0x22c] sm:$0xff]
      %v1911 = vld [vmem:[#allocation2 + $0x234] sm:$0xff]
      %v1912 = vld [vmem:[#allocation2 + $0x23c] sm:$0xf]
      %v1913 = vld [vmem:[%s3] sm:$0xf]
      %v1914 = vld [vmem:[%s3 + $0x4] sm:$0xf]
      %v1915 = vld [vmem:[%s3 + $0x8] sm:$0xf]
      %v1916 = vld [vmem:[%s3 + $0xc] sm:$0xf]
      %v1917 = vld [vmem:[%s3 + $0x10] sm:$0xf]
      %v1918 = vld [vmem:[%s3 + $0x14] sm:$0xf]
      %v1919 = vld [vmem:[%s3 + $0x18] sm:$0xf]
      %v1920 = vld [vmem:[%s3 + $0x1c] sm:$0xf]
      %v1921 = vld [vmem:[%s3 + $0x20] sm:$0xf]
      %v1922 = vld [vmem:[%s3 + $0x24] sm:$0xf]
      %v1923 = vld [vmem:[%s3 + $0x28] sm:$0xf]
      %v1924 = vld [vmem:[%s3 + $0x2c] sm:$0xf]
      %v1925 = vld [vmem:[%s3 + $0x30] sm:$0xf]
      %v1926 = vld [vmem:[%s3 + $0x34] sm:$0xf]
      %v1927 = vld [vmem:[%s3 + $0x38] sm:$0xf]
      %v1928 = vld [vmem:[%s3 + $0x3c] sm:$0xf]
      %v1929 = vld [vmem:[%s3 + $0x40] sm:$0xf]
      %v1930 = vld [vmem:[%s3 + $0x44] sm:$0xf]
      %v1931 = vld [vmem:[%s3 + $0x48] sm:$0xf]
      %v1932 = vld [vmem:[%s3 + $0x4c] sm:$0xf]
      %v1933 = vld [vmem:[%s3 + $0x50] sm:$0xf]
      %v1934 = vld [vmem:[%s3 + $0x54] sm:$0xf]
      %v1935 = vld [vmem:[%s3 + $0x58] sm:$0xf]
      %v1936 = vld [vmem:[%s3 + $0x5c] sm:$0xf]
      %v1937 = vld [vmem:[%s3 + $0x60] sm:$0xf]
      %v1938 = vld [vmem:[%s3 + $0x64] sm:$0xf]
      %v1939 = vld [vmem:[%s3 + $0x68] sm:$0xf]
      %v1940 = vld [vmem:[%s3 + $0x6c] sm:$0xf]
      %v1941 = vld [vmem:[%s3 + $0x70] sm:$0xf]
      %v1942 = vld [vmem:[%s3 + $0x74] sm:$0xf]
      %v1943 = vld [vmem:[%s3 + $0x78] sm:$0xf]
      %v1944 = vld [vmem:[%s3 + $0x7c] sm:$0xf]
      %v1945 = vld [vmem:[%s3 + $0x80] sm:$0xf]
      %v1946 = vld [vmem:[%s3 + $0x84] sm:$0xf]
      %v1947 = vld [vmem:[%s3 + $0x88] sm:$0xf]
      %v1948 = vld [vmem:[%s3 + $0x8c] sm:$0xf]
      %v1949 = vld [vmem:[%s3 + $0x90] sm:$0xf]
      %v1950 = vld [vmem:[%s3 + $0x94] sm:$0xf]
      %v1951 = vld [vmem:[%s3 + $0x98] sm:$0xf]
      %v1952 = vld [vmem:[%s3 + $0x9c] sm:$0xf]
      %v1953 = vld [vmem:[%s3 + $0xa0] sm:$0xf]
      %v1954 = vld [vmem:[%s3 + $0xa4] sm:$0xf]
      %v1955 = vld [vmem:[%s3 + $0xa8] sm:$0xf]
      %v1956 = vld [vmem:[%s3 + $0xac] sm:$0xf]
      %v1957 = vld [vmem:[%s3 + $0xb0] sm:$0xf]
      %v1958 = vld [vmem:[%s3 + $0xb4] sm:$0xf]
      %v1959 = vld [vmem:[%s3 + $0xb8] sm:$0xf]
      %v1960 = vld [vmem:[%s3 + $0xbc] sm:$0xf]
      %v1961 = vld [vmem:[%s3 + $0xc0] sm:$0xf]
      %v1962 = vld [vmem:[%s3 + $0xc4] sm:$0xf]
      %v1963 = vld [vmem:[%s3 + $0xc8] sm:$0xf]
      %v1964 = vld [vmem:[%s3 + $0xcc] sm:$0xf]
      %v1965 = vld [vmem:[%s3 + $0xd0] sm:$0xf]
      %v1966 = vld [vmem:[%s3 + $0xd4] sm:$0xf]
      %v1967 = vld [vmem:[%s3 + $0xd8] sm:$0xf]
      %v1968 = vld [vmem:[%s3 + $0xdc] sm:$0xf]
      %v1969 = vld [vmem:[%s3 + $0xe0] sm:$0xf]
      %v1970 = vld [vmem:[%s3 + $0xe4] sm:$0xf]
      %v1971 = vld [vmem:[%s3 + $0xe8] sm:$0xf]
      %v1972 = vld [vmem:[%s3 + $0xec] sm:$0xf]
      %v1973 = vld [vmem:[%s3 + $0xf0] sm:$0xf]
      %v1974 = vld [vmem:[%s3 + $0xf4] sm:$0xf]
      %v1975 = vld [vmem:[%s3 + $0xf8] sm:$0xf]
      %v1976 = vld [vmem:[%s3 + $0xfc] sm:$0xf]
      %v1977 = vld [vmem:[%s3 + $0x100] sm:$0xf]
      %v1978 = vld [vmem:[%s3 + $0x104] sm:$0xf]
      %v1979 = vld [vmem:[%s3 + $0x108] sm:$0xf]
      %v1980 = vld [vmem:[%s3 + $0x10c] sm:$0xf]
      %v1981 = vld [vmem:[%s3 + $0x110] sm:$0xf]
      %v1982 = vld [vmem:[%s3 + $0x114] sm:$0xf]
      %v1983 = vld [vmem:[%s3 + $0x118] sm:$0xf]
      %v1984 = vld [vmem:[%s3 + $0x11c] sm:$0xf]
      %v1985 = vld [vmem:[%s3 + $0x120] sm:$0xf]
      %v1986 = vld [vmem:[%s3 + $0x124] sm:$0xf]
      %v1987 = vld [vmem:[%s3 + $0x128] sm:$0xf]
      %v1988 = vld [vmem:[%s3 + $0x12c] sm:$0xf]
      %v1989 = vld [vmem:[%s3 + $0x130] sm:$0xf]
      %v1990 = vld [vmem:[%s3 + $0x134] sm:$0xf]
      %v1991 = vld [vmem:[%s3 + $0x138] sm:$0xf]
      %v1992 = vld [vmem:[%s3 + $0x13c] sm:$0xf]
      %v1993 = vld [vmem:[%s3 + $0x140] sm:$0xf]
      %v1994 = vld [vmem:[%s3 + $0x144] sm:$0xf]
      %v1995 = vld [vmem:[%s3 + $0x148] sm:$0xf]
      %v1996 = vld [vmem:[%s3 + $0x14c] sm:$0xf]
      %v1997 = vld [vmem:[%s3 + $0x150] sm:$0xf]
      %v1998 = vld [vmem:[%s3 + $0x154] sm:$0xf]
      %v1999 = vld [vmem:[%s3 + $0x158] sm:$0xf]
      %v2000 = vld [vmem:[%s3 + $0x15c] sm:$0xf]
      %v2001 = vld [vmem:[%s3 + $0x160] sm:$0xf]
      %v2002 = vld [vmem:[%s3 + $0x164] sm:$0xf]
      %v2003 = vld [vmem:[%s3 + $0x168] sm:$0xf]
      %v2004 = vld [vmem:[%s3 + $0x16c] sm:$0xf]
      %v2005 = vld [vmem:[%s3 + $0x170] sm:$0xf]
      %v2006 = vld [vmem:[%s3 + $0x174] sm:$0xf]
      %v2007 = vld [vmem:[%s3 + $0x178] sm:$0xf]
      %v2008 = vld [vmem:[%s3 + $0x17c] sm:$0xf]
      %v2009 = vld [vmem:[%s3 + $0x180] sm:$0xf]
      %v2010 = vld [vmem:[%s3 + $0x184] sm:$0xf]
      %v2011 = vld [vmem:[%s3 + $0x188] sm:$0xf]
      %v2012 = vld [vmem:[%s3 + $0x18c] sm:$0xf]
      %v2013 = vld [vmem:[%s3 + $0x190] sm:$0xf]
      %v2014 = vld [vmem:[%s3 + $0x194] sm:$0xf]
      %v2015 = vld [vmem:[%s3 + $0x198] sm:$0xf]
      %v2016 = vld [vmem:[%s3 + $0x19c] sm:$0xf]
      %v2017 = vld [vmem:[%s3 + $0x1a0] sm:$0xf]
      %v2018 = vld [vmem:[%s3 + $0x1a4] sm:$0xf]
      %v2019 = vld [vmem:[%s3 + $0x1a8] sm:$0xf]
      %v2020 = vld [vmem:[%s3 + $0x1ac] sm:$0xf]
      %v2021 = vld [vmem:[%s3 + $0x1b0] sm:$0xf]
      %v2022 = vld [vmem:[%s3 + $0x1b4] sm:$0xf]
      %v2023 = vld [vmem:[%s3 + $0x1b8] sm:$0xf]
      %v2024 = vld [vmem:[%s3 + $0x1bc] sm:$0xf]
      %v2025 = vld [vmem:[%s3 + $0x1c0] sm:$0xf]
      %v2026 = vld [vmem:[%s3 + $0x1c4] sm:$0xf]
      %v2027 = vld [vmem:[%s3 + $0x1c8] sm:$0xf]
      %v2028 = vld [vmem:[%s3 + $0x1cc] sm:$0xf]
      %v2029 = vld [vmem:[%s3 + $0x1d0] sm:$0xf]
      %v2030 = vld [vmem:[%s3 + $0x1d4] sm:$0xf]
      %v2031 = vld [vmem:[%s3 + $0x1d8] sm:$0xf]
      %v2032 = vld [vmem:[%s3 + $0x1dc] sm:$0xf]
      %v2033 = vld [vmem:[%s3 + $0x1e0] sm:$0xf]
      %v2034 = vld [vmem:[%s3 + $0x1e4] sm:$0xf]
      %v2035 = vld [vmem:[%s3 + $0x1e8] sm:$0xf]
      %v2036 = vld [vmem:[%s3 + $0x1ec] sm:$0xf]
      %v2037 = vld [vmem:[%s3 + $0x1f0] sm:$0xf]
      %v2038 = vld [vmem:[%s3 + $0x1f4] sm:$0xf]
      %v2039 = vld [vmem:[%s3 + $0x1f8] sm:$0xf]
      %v2040 = vld [vmem:[%s3 + $0x1fc] sm:$0xf]
      %v2041 = vld [vmem:[%s3 + $0x200] sm:$0xf]
      %v2042 = vld [vmem:[%s3 + $0x204] sm:$0xf]
      %v2043 = vld [vmem:[%s3 + $0x208] sm:$0xf]
      %v2044 = vld [vmem:[%s3 + $0x20c] sm:$0xf]
      %v2045 = vld [vmem:[%s3 + $0x210] sm:$0xf]
      %v2046 = vld [vmem:[%s3 + $0x214] sm:$0xf]
      %v2047 = vld [vmem:[%s3 + $0x218] sm:$0xf]
      %v2048 = vld [vmem:[%s3 + $0x21c] sm:$0xf]
      %v2049 = vld [vmem:[%s3 + $0x220] sm:$0xf]
      %v2050 = vld [vmem:[%s3 + $0x224] sm:$0xf]
      %v2051 = vld [vmem:[%s3 + $0x228] sm:$0xf]
      %v2052 = vld [vmem:[%s3 + $0x22c] sm:$0xf]
      %v2053 = vld [vmem:[%s3 + $0x230] sm:$0xf]
      %v2054 = vld [vmem:[%s3 + $0x234] sm:$0xf]
      %v2055 = vld [vmem:[%s3 + $0x238] sm:$0xf]
      %v2056 = vld [vmem:[%s3 + $0x23c] sm:$0xf]
      %v2137 = vunpack.c.l.b16 %v1833
      %v2138 = vunpack.c.h.b16 %v1833
      %v2139 = vunpack.c.l.b16 %v1834
      %v2140 = vunpack.c.h.b16 %v1834
      %v2141 = vunpack.c.l.b16 %v1835
      %v2142 = vunpack.c.h.b16 %v1835
      %v2143 = vunpack.c.l.b16 %v1836
      %v2144 = vunpack.c.h.b16 %v1836
      %v2145 = vunpack.c.l.b16 %v1837
      %v2146 = vunpack.c.l.b16 %v1838
      %v2147 = vunpack.c.h.b16 %v1838
      %v2148 = vunpack.c.l.b16 %v1839
      %v2149 = vunpack.c.h.b16 %v1839
      %v2150 = vunpack.c.l.b16 %v1840
      %v2151 = vunpack.c.h.b16 %v1840
      %v2152 = vunpack.c.l.b16 %v1841
      %v2153 = vunpack.c.h.b16 %v1841
      %v2154 = vunpack.c.l.b16 %v1842
      %v2155 = vunpack.c.l.b16 %v1843
      %v2156 = vunpack.c.h.b16 %v1843
      %v2157 = vunpack.c.l.b16 %v1844
      %v2158 = vunpack.c.h.b16 %v1844
      %v2159 = vunpack.c.l.b16 %v1845
      %v2160 = vunpack.c.h.b16 %v1845
      %v2161 = vunpack.c.l.b16 %v1846
      %v2162 = vunpack.c.h.b16 %v1846
      %v2163 = vunpack.c.l.b16 %v1847
      %v2164 = vunpack.c.l.b16 %v1848
      %v2165 = vunpack.c.h.b16 %v1848
      %v2166 = vunpack.c.l.b16 %v1849
      %v2167 = vunpack.c.h.b16 %v1849
      %v2168 = vunpack.c.l.b16 %v1850
      %v2169 = vunpack.c.h.b16 %v1850
      %v2170 = vunpack.c.l.b16 %v1851
      %v2171 = vunpack.c.h.b16 %v1851
      %v2172 = vunpack.c.l.b16 %v1852
      %v2173 = vunpack.c.l.b16 %v1853
      %v2174 = vunpack.c.h.b16 %v1853
      %v2175 = vunpack.c.l.b16 %v1854
      %v2176 = vunpack.c.h.b16 %v1854
      %v2177 = vunpack.c.l.b16 %v1855
      %v2178 = vunpack.c.h.b16 %v1855
      %v2179 = vunpack.c.l.b16 %v1856
      %v2180 = vunpack.c.h.b16 %v1856
      %v2181 = vunpack.c.l.b16 %v1857
      %v2182 = vunpack.c.l.b16 %v1858
      %v2183 = vunpack.c.h.b16 %v1858
      %v2184 = vunpack.c.l.b16 %v1859
      %v2185 = vunpack.c.h.b16 %v1859
      %v2186 = vunpack.c.l.b16 %v1860
      %v2187 = vunpack.c.h.b16 %v1860
      %v2188 = vunpack.c.l.b16 %v1861
      %v2189 = vunpack.c.h.b16 %v1861
      %v2190 = vunpack.c.l.b16 %v1862
      %v2191 = vunpack.c.l.b16 %v1863
      %v2192 = vunpack.c.h.b16 %v1863
      %v2193 = vunpack.c.l.b16 %v1864
      %v2194 = vunpack.c.h.b16 %v1864
      %v2195 = vunpack.c.l.b16 %v1865
      %v2196 = vunpack.c.h.b16 %v1865
      %v2197 = vunpack.c.l.b16 %v1866
      %v2198 = vunpack.c.h.b16 %v1866
      %v2199 = vunpack.c.l.b16 %v1867
      %v2200 = vunpack.c.l.b16 %v1868
      %v2201 = vunpack.c.h.b16 %v1868
      %v2202 = vunpack.c.l.b16 %v1869
      %v2203 = vunpack.c.h.b16 %v1869
      %v2204 = vunpack.c.l.b16 %v1870
      %v2205 = vunpack.c.h.b16 %v1870
      %v2206 = vunpack.c.l.b16 %v1871
      %v2207 = vunpack.c.h.b16 %v1871
      %v2208 = vunpack.c.l.b16 %v1872
      %v2209 = vunpack.c.l.b16 %v1873
      %v2210 = vunpack.c.h.b16 %v1873
      %v2211 = vunpack.c.l.b16 %v1874
      %v2212 = vunpack.c.h.b16 %v1874
      %v2213 = vunpack.c.l.b16 %v1875
      %v2214 = vunpack.c.h.b16 %v1875
      %v2215 = vunpack.c.l.b16 %v1876
      %v2216 = vunpack.c.h.b16 %v1876
      %v2217 = vunpack.c.l.b16 %v1877
      %v2218 = vunpack.c.l.b16 %v1878
      %v2219 = vunpack.c.h.b16 %v1878
      %v2220 = vunpack.c.l.b16 %v1879
      %v2221 = vunpack.c.h.b16 %v1879
      %v2222 = vunpack.c.l.b16 %v1880
      %v2223 = vunpack.c.h.b16 %v1880
      %v2224 = vunpack.c.l.b16 %v1881
      %v2225 = vunpack.c.h.b16 %v1881
      %v2226 = vunpack.c.l.b16 %v1882
      %v2227 = vunpack.c.l.b16 %v1883
      %v2228 = vunpack.c.h.b16 %v1883
      %v2229 = vunpack.c.l.b16 %v1884
      %v2230 = vunpack.c.h.b16 %v1884
      %v2231 = vunpack.c.l.b16 %v1885
      %v2232 = vunpack.c.h.b16 %v1885
      %v2233 = vunpack.c.l.b16 %v1886
      %v2234 = vunpack.c.h.b16 %v1886
      %v2235 = vunpack.c.l.b16 %v1887
      %v2236 = vunpack.c.l.b16 %v1888
      %v2237 = vunpack.c.h.b16 %v1888
      %v2238 = vunpack.c.l.b16 %v1889
      %v2239 = vunpack.c.h.b16 %v1889
      %v2240 = vunpack.c.l.b16 %v1890
      %v2241 = vunpack.c.h.b16 %v1890
      %v2242 = vunpack.c.l.b16 %v1891
      %v2243 = vunpack.c.h.b16 %v1891
      %v2244 = vunpack.c.l.b16 %v1892
      %v2245 = vunpack.c.l.b16 %v1893
      %v2246 = vunpack.c.h.b16 %v1893
      %v2247 = vunpack.c.l.b16 %v1894
      %v2248 = vunpack.c.h.b16 %v1894
      %v2249 = vunpack.c.l.b16 %v1895
      %v2250 = vunpack.c.h.b16 %v1895
      %v2251 = vunpack.c.l.b16 %v1896
      %v2252 = vunpack.c.h.b16 %v1896
      %v2253 = vunpack.c.l.b16 %v1897
      %v2254 = vunpack.c.l.b16 %v1898
      %v2255 = vunpack.c.h.b16 %v1898
      %v2256 = vunpack.c.l.b16 %v1899
      %v2257 = vunpack.c.h.b16 %v1899
      %v2258 = vunpack.c.l.b16 %v1900
      %v2259 = vunpack.c.h.b16 %v1900
      %v2260 = vunpack.c.l.b16 %v1901
      %v2261 = vunpack.c.h.b16 %v1901
      %v2262 = vunpack.c.l.b16 %v1902
      %v2263 = vunpack.c.l.b16 %v1903
      %v2264 = vunpack.c.h.b16 %v1903
      %v2265 = vunpack.c.l.b16 %v1904
      %v2266 = vunpack.c.h.b16 %v1904
      %v2267 = vunpack.c.l.b16 %v1905
      %v2268 = vunpack.c.h.b16 %v1905
      %v2269 = vunpack.c.l.b16 %v1906
      %v2270 = vunpack.c.h.b16 %v1906
      %v2271 = vunpack.c.l.b16 %v1907
      %v2272 = vunpack.c.l.b16 %v1908
      %v2273 = vunpack.c.h.b16 %v1908
      %v2274 = vunpack.c.l.b16 %v1909
      %v2275 = vunpack.c.h.b16 %v1909
      %v2276 = vunpack.c.l.b16 %v1910
      %v2277 = vunpack.c.h.b16 %v1910
      %v2278 = vunpack.c.l.b16 %v1911
      %v2279 = vunpack.c.h.b16 %v1911
      %v2280 = vunpack.c.l.b16 %v1912
      %v2281 = vpack.c.b16 %v2146, %v2137
      %v2282 = vpack.c.b16 %v2147, %v2138
      %v2283 = vpack.c.b16 %v2148, %v2139
      %v2284 = vpack.c.b16 %v2149, %v2140
      %v2285 = vpack.c.b16 %v2150, %v2141
      %v2286 = vpack.c.b16 %v2151, %v2142
      %v2287 = vpack.c.b16 %v2152, %v2143
      %v2288 = vpack.c.b16 %v2153, %v2144
      %v2289 = vpack.c.b16 %v2154, %v2145
      %v2290 = vpack.c.b16 %v2164, %v2155
      %v2291 = vpack.c.b16 %v2165, %v2156
      %v2292 = vpack.c.b16 %v2166, %v2157
      %v2293 = vpack.c.b16 %v2167, %v2158
      %v2294 = vpack.c.b16 %v2168, %v2159
      %v2295 = vpack.c.b16 %v2169, %v2160
      %v2296 = vpack.c.b16 %v2170, %v2161
      %v2297 = vpack.c.b16 %v2171, %v2162
      %v2298 = vpack.c.b16 %v2172, %v2163
      %v2299 = vpack.c.b16 %v2182, %v2173
      %v2300 = vpack.c.b16 %v2183, %v2174
      %v2301 = vpack.c.b16 %v2184, %v2175
      %v2302 = vpack.c.b16 %v2185, %v2176
      %v2303 = vpack.c.b16 %v2186, %v2177
      %v2304 = vpack.c.b16 %v2187, %v2178
      %v2305 = vpack.c.b16 %v2188, %v2179
      %v2306 = vpack.c.b16 %v2189, %v2180
      %v2307 = vpack.c.b16 %v2190, %v2181
      %v2308 = vpack.c.b16 %v2200, %v2191
      %v2309 = vpack.c.b16 %v2201, %v2192
      %v2310 = vpack.c.b16 %v2202, %v2193
      %v2311 = vpack.c.b16 %v2203, %v2194
      %v2312 = vpack.c.b16 %v2204, %v2195
      %v2313 = vpack.c.b16 %v2205, %v2196
      %v2314 = vpack.c.b16 %v2206, %v2197
      %v2315 = vpack.c.b16 %v2207, %v2198
      %v2316 = vpack.c.b16 %v2208, %v2199
      %v2317 = vpack.c.b16 %v2218, %v2209
      %v2318 = vpack.c.b16 %v2219, %v2210
      %v2319 = vpack.c.b16 %v2220, %v2211
      %v2320 = vpack.c.b16 %v2221, %v2212
      %v2321 = vpack.c.b16 %v2222, %v2213
      %v2322 = vpack.c.b16 %v2223, %v2214
      %v2323 = vpack.c.b16 %v2224, %v2215
      %v2324 = vpack.c.b16 %v2225, %v2216
      %v2325 = vpack.c.b16 %v2226, %v2217
      %v2326 = vpack.c.b16 %v2236, %v2227
      %v2327 = vpack.c.b16 %v2237, %v2228
      %v2328 = vpack.c.b16 %v2238, %v2229
      %v2329 = vpack.c.b16 %v2239, %v2230
      %v2330 = vpack.c.b16 %v2240, %v2231
      %v2331 = vpack.c.b16 %v2241, %v2232
      %v2332 = vpack.c.b16 %v2242, %v2233
      %v2333 = vpack.c.b16 %v2243, %v2234
      %v2334 = vpack.c.b16 %v2244, %v2235
      %v2335 = vpack.c.b16 %v2254, %v2245
      %v2336 = vpack.c.b16 %v2255, %v2246
      %v2337 = vpack.c.b16 %v2256, %v2247
      %v2338 = vpack.c.b16 %v2257, %v2248
      %v2339 = vpack.c.b16 %v2258, %v2249
      %v2340 = vpack.c.b16 %v2259, %v2250
      %v2341 = vpack.c.b16 %v2260, %v2251
      %v2342 = vpack.c.b16 %v2261, %v2252
      %v2343 = vpack.c.b16 %v2262, %v2253
      %v2344 = vpack.c.b16 %v2272, %v2263
      %v2345 = vpack.c.b16 %v2273, %v2264
      %v2346 = vpack.c.b16 %v2274, %v2265
      %v2347 = vpack.c.b16 %v2275, %v2266
      %v2348 = vpack.c.b16 %v2276, %v2267
      %v2349 = vpack.c.b16 %v2277, %v2268
      %v2350 = vpack.c.b16 %v2278, %v2269
      %v2351 = vpack.c.b16 %v2279, %v2270
      %v2352 = vpack.c.b16 %v2280, %v2271
      %v2569 = vunpack.c.l.b16 %v1913
      %v2570 = vunpack.c.l.b16 %v1914
      %v2571 = vunpack.c.l.b16 %v1915
      %v2572 = vunpack.c.l.b16 %v1916
      %v2573 = vunpack.c.l.b16 %v1917
      %v2574 = vunpack.c.l.b16 %v1918
      %v2575 = vunpack.c.l.b16 %v1919
      %v2576 = vunpack.c.l.b16 %v1920
      %v2577 = vunpack.c.l.b16 %v1921
      %v2578 = vunpack.c.l.b16 %v1922
      %v2579 = vunpack.c.l.b16 %v1923
      %v2580 = vunpack.c.l.b16 %v1924
      %v2581 = vunpack.c.l.b16 %v1925
      %v2582 = vunpack.c.l.b16 %v1926
      %v2583 = vunpack.c.l.b16 %v1927
      %v2584 = vunpack.c.l.b16 %v1928
      %v2585 = vunpack.c.l.b16 %v1929
      %v2586 = vunpack.c.l.b16 %v1930
      %v2587 = vunpack.c.l.b16 %v1931
      %v2588 = vunpack.c.l.b16 %v1932
      %v2589 = vunpack.c.l.b16 %v1933
      %v2590 = vunpack.c.l.b16 %v1934
      %v2591 = vunpack.c.l.b16 %v1935
      %v2592 = vunpack.c.l.b16 %v1936
      %v2593 = vunpack.c.l.b16 %v1937
      %v2594 = vunpack.c.l.b16 %v1938
      %v2595 = vunpack.c.l.b16 %v1939
      %v2596 = vunpack.c.l.b16 %v1940
      %v2597 = vunpack.c.l.b16 %v1941
      %v2598 = vunpack.c.l.b16 %v1942
      %v2599 = vunpack.c.l.b16 %v1943
      %v2600 = vunpack.c.l.b16 %v1944
      %v2601 = vunpack.c.l.b16 %v1945
      %v2602 = vunpack.c.l.b16 %v1946
      %v2603 = vunpack.c.l.b16 %v1947
      %v2604 = vunpack.c.l.b16 %v1948
      %v2605 = vunpack.c.l.b16 %v1949
      %v2606 = vunpack.c.l.b16 %v1950
      %v2607 = vunpack.c.l.b16 %v1951
      %v2608 = vunpack.c.l.b16 %v1952
      %v2609 = vunpack.c.l.b16 %v1953
      %v2610 = vunpack.c.l.b16 %v1954
      %v2611 = vunpack.c.l.b16 %v1955
      %v2612 = vunpack.c.l.b16 %v1956
      %v2613 = vunpack.c.l.b16 %v1957
      %v2614 = vunpack.c.l.b16 %v1958
      %v2615 = vunpack.c.l.b16 %v1959
      %v2616 = vunpack.c.l.b16 %v1960
      %v2617 = vunpack.c.l.b16 %v1961
      %v2618 = vunpack.c.l.b16 %v1962
      %v2619 = vunpack.c.l.b16 %v1963
      %v2620 = vunpack.c.l.b16 %v1964
      %v2621 = vunpack.c.l.b16 %v1965
      %v2622 = vunpack.c.l.b16 %v1966
      %v2623 = vunpack.c.l.b16 %v1967
      %v2624 = vunpack.c.l.b16 %v1968
      %v2625 = vunpack.c.l.b16 %v1969
      %v2626 = vunpack.c.l.b16 %v1970
      %v2627 = vunpack.c.l.b16 %v1971
      %v2628 = vunpack.c.l.b16 %v1972
      %v2629 = vunpack.c.l.b16 %v1973
      %v2630 = vunpack.c.l.b16 %v1974
      %v2631 = vunpack.c.l.b16 %v1975
      %v2632 = vunpack.c.l.b16 %v1976
      %v2633 = vunpack.c.l.b16 %v1977
      %v2634 = vunpack.c.l.b16 %v1978
      %v2635 = vunpack.c.l.b16 %v1979
      %v2636 = vunpack.c.l.b16 %v1980
      %v2637 = vunpack.c.l.b16 %v1981
      %v2638 = vunpack.c.l.b16 %v1982
      %v2639 = vunpack.c.l.b16 %v1983
      %v2640 = vunpack.c.l.b16 %v1984
      %v2641 = vunpack.c.l.b16 %v1985
      %v2642 = vunpack.c.l.b16 %v1986
      %v2643 = vunpack.c.l.b16 %v1987
      %v2644 = vunpack.c.l.b16 %v1988
      %v2645 = vunpack.c.l.b16 %v1989
      %v2646 = vunpack.c.l.b16 %v1990
      %v2647 = vunpack.c.l.b16 %v1991
      %v2648 = vunpack.c.l.b16 %v1992
      %v2649 = vunpack.c.l.b16 %v1993
      %v2650 = vunpack.c.l.b16 %v1994
      %v2651 = vunpack.c.l.b16 %v1995
      %v2652 = vunpack.c.l.b16 %v1996
      %v2653 = vunpack.c.l.b16 %v1997
      %v2654 = vunpack.c.l.b16 %v1998
      %v2655 = vunpack.c.l.b16 %v1999
      %v2656 = vunpack.c.l.b16 %v2000
      %v2657 = vunpack.c.l.b16 %v2001
      %v2658 = vunpack.c.l.b16 %v2002
      %v2659 = vunpack.c.l.b16 %v2003
      %v2660 = vunpack.c.l.b16 %v2004
      %v2661 = vunpack.c.l.b16 %v2005
      %v2662 = vunpack.c.l.b16 %v2006
      %v2663 = vunpack.c.l.b16 %v2007
      %v2664 = vunpack.c.l.b16 %v2008
      %v2665 = vunpack.c.l.b16 %v2009
      %v2666 = vunpack.c.l.b16 %v2010
      %v2667 = vunpack.c.l.b16 %v2011
      %v2668 = vunpack.c.l.b16 %v2012
      %v2669 = vunpack.c.l.b16 %v2013
      %v2670 = vunpack.c.l.b16 %v2014
      %v2671 = vunpack.c.l.b16 %v2015
      %v2672 = vunpack.c.l.b16 %v2016
      %v2673 = vunpack.c.l.b16 %v2017
      %v2674 = vunpack.c.l.b16 %v2018
      %v2675 = vunpack.c.l.b16 %v2019
      %v2676 = vunpack.c.l.b16 %v2020
      %v2677 = vunpack.c.l.b16 %v2021
      %v2678 = vunpack.c.l.b16 %v2022
      %v2679 = vunpack.c.l.b16 %v2023
      %v2680 = vunpack.c.l.b16 %v2024
      %v2681 = vunpack.c.l.b16 %v2025
      %v2682 = vunpack.c.l.b16 %v2026
      %v2683 = vunpack.c.l.b16 %v2027
      %v2684 = vunpack.c.l.b16 %v2028
      %v2685 = vunpack.c.l.b16 %v2029
      %v2686 = vunpack.c.l.b16 %v2030
      %v2687 = vunpack.c.l.b16 %v2031
      %v2688 = vunpack.c.l.b16 %v2032
      %v2689 = vunpack.c.l.b16 %v2033
      %v2690 = vunpack.c.l.b16 %v2034
      %v2691 = vunpack.c.l.b16 %v2035
      %v2692 = vunpack.c.l.b16 %v2036
      %v2693 = vunpack.c.l.b16 %v2037
      %v2694 = vunpack.c.l.b16 %v2038
      %v2695 = vunpack.c.l.b16 %v2039
      %v2696 = vunpack.c.l.b16 %v2040
      %v2697 = vunpack.c.l.b16 %v2041
      %v2698 = vunpack.c.l.b16 %v2042
      %v2699 = vunpack.c.l.b16 %v2043
      %v2700 = vunpack.c.l.b16 %v2044
      %v2701 = vunpack.c.l.b16 %v2045
      %v2702 = vunpack.c.l.b16 %v2046
      %v2703 = vunpack.c.l.b16 %v2047
      %v2704 = vunpack.c.l.b16 %v2048
      %v2705 = vunpack.c.l.b16 %v2049
      %v2706 = vunpack.c.l.b16 %v2050
      %v2707 = vunpack.c.l.b16 %v2051
      %v2708 = vunpack.c.l.b16 %v2052
      %v2709 = vunpack.c.l.b16 %v2053
      %v2710 = vunpack.c.l.b16 %v2054
      %v2711 = vunpack.c.l.b16 %v2055
      %v2712 = vunpack.c.l.b16 %v2056
      %v2713 = vpack.c.b16 %v2570, %v2569
      %v2714 = vpack.c.b16 %v2572, %v2571
      %v2715 = vpack.c.b16 %v2574, %v2573
      %v2716 = vpack.c.b16 %v2576, %v2575
      %v2717 = vpack.c.b16 %v2578, %v2577
      %v2718 = vpack.c.b16 %v2580, %v2579
      %v2719 = vpack.c.b16 %v2582, %v2581
      %v2720 = vpack.c.b16 %v2584, %v2583
      %v2721 = vpack.c.b16 %v2586, %v2585
      %v2722 = vpack.c.b16 %v2588, %v2587
      %v2723 = vpack.c.b16 %v2590, %v2589
      %v2724 = vpack.c.b16 %v2592, %v2591
      %v2725 = vpack.c.b16 %v2594, %v2593
      %v2726 = vpack.c.b16 %v2596, %v2595
      %v2727 = vpack.c.b16 %v2598, %v2597
      %v2728 = vpack.c.b16 %v2600, %v2599
      %v2729 = vpack.c.b16 %v2602, %v2601
      %v2730 = vpack.c.b16 %v2604, %v2603
      %v2731 = vpack.c.b16 %v2606, %v2605
      %v2732 = vpack.c.b16 %v2608, %v2607
      %v2733 = vpack.c.b16 %v2610, %v2609
      %v2734 = vpack.c.b16 %v2612, %v2611
      %v2735 = vpack.c.b16 %v2614, %v2613
      %v2736 = vpack.c.b16 %v2616, %v2615
      %v2737 = vpack.c.b16 %v2618, %v2617
      %v2738 = vpack.c.b16 %v2620, %v2619
      %v2739 = vpack.c.b16 %v2622, %v2621
      %v2740 = vpack.c.b16 %v2624, %v2623
      %v2741 = vpack.c.b16 %v2626, %v2625
      %v2742 = vpack.c.b16 %v2628, %v2627
      %v2743 = vpack.c.b16 %v2630, %v2629
      %v2744 = vpack.c.b16 %v2632, %v2631
      %v2745 = vpack.c.b16 %v2634, %v2633
      %v2746 = vpack.c.b16 %v2636, %v2635
      %v2747 = vpack.c.b16 %v2638, %v2637
      %v2748 = vpack.c.b16 %v2640, %v2639
      %v2749 = vpack.c.b16 %v2642, %v2641
      %v2750 = vpack.c.b16 %v2644, %v2643
      %v2751 = vpack.c.b16 %v2646, %v2645
      %v2752 = vpack.c.b16 %v2648, %v2647
      %v2753 = vpack.c.b16 %v2650, %v2649
      %v2754 = vpack.c.b16 %v2652, %v2651
      %v2755 = vpack.c.b16 %v2654, %v2653
      %v2756 = vpack.c.b16 %v2656, %v2655
      %v2757 = vpack.c.b16 %v2658, %v2657
      %v2758 = vpack.c.b16 %v2660, %v2659
      %v2759 = vpack.c.b16 %v2662, %v2661
      %v2760 = vpack.c.b16 %v2664, %v2663
      %v2761 = vpack.c.b16 %v2666, %v2665
      %v2762 = vpack.c.b16 %v2668, %v2667
      %v2763 = vpack.c.b16 %v2670, %v2669
      %v2764 = vpack.c.b16 %v2672, %v2671
      %v2765 = vpack.c.b16 %v2674, %v2673
      %v2766 = vpack.c.b16 %v2676, %v2675
      %v2767 = vpack.c.b16 %v2678, %v2677
      %v2768 = vpack.c.b16 %v2680, %v2679
      %v2769 = vpack.c.b16 %v2682, %v2681
      %v2770 = vpack.c.b16 %v2684, %v2683
      %v2771 = vpack.c.b16 %v2686, %v2685
      %v2772 = vpack.c.b16 %v2688, %v2687
      %v2773 = vpack.c.b16 %v2690, %v2689
      %v2774 = vpack.c.b16 %v2692, %v2691
      %v2775 = vpack.c.b16 %v2694, %v2693
      %v2776 = vpack.c.b16 %v2696, %v2695
      %v2777 = vpack.c.b16 %v2698, %v2697
      %v2778 = vpack.c.b16 %v2700, %v2699
      %v2779 = vpack.c.b16 %v2702, %v2701
      %v2780 = vpack.c.b16 %v2704, %v2703
      %v2781 = vpack.c.b16 %v2706, %v2705
      %v2782 = vpack.c.b16 %v2708, %v2707
      %v2783 = vpack.c.b16 %v2710, %v2709
      %v2784 = vpack.c.b16 %v2712, %v2711
      %2857 = vmatprep.subr.bf16.mxu0 0
      %2858 = vmatpush1.bf16.msra.mxu0 %v2720
      %2859 = vmatprep.subr.bf16.mxu0 0
      %2860 = vmatpush1.bf16.msra.mxu0 %v2719
      %2861 = vmatprep.subr.bf16.mxu0 0
      %2862 = vmatpush1.bf16.msra.mxu0 %v2718
      %2863 = vmatprep.subr.bf16.mxu0 0
      %2864 = vmatpush1.bf16.msra.mxu0 %v2717
      %2865 = vmatprep.subr.bf16.mxu0 0
      %2866 = vmatpush1.bf16.msra.mxu0 %v2716
      %2867 = vmatprep.subr.bf16.mxu0 0
      %2868 = vmatpush1.bf16.msra.mxu0 %v2715
      %2869 = vmatprep.subr.bf16.mxu0 0
      %2870 = vmatpush1.bf16.msra.mxu0 %v2714
      %2871 = vmatprep.subr.bf16.mxu0 0
      %2872 = vmatpush1.bf16.msra.mxu0 %v2713
      %2873 = vmatprep.subr.bf16.mxu0 0
      %2874 = vmatpush2.bf16.msra.mxu0 %v2728
      %2875 = vmatprep.subr.bf16.mxu0 0
      %2876 = vmatpush2.bf16.msra.mxu0 %v2727
      %2877 = vmatprep.subr.bf16.mxu0 0
      %2878 = vmatpush2.bf16.msra.mxu0 %v2726
      %2879 = vmatprep.subr.bf16.mxu0 0
      %2880 = vmatpush2.bf16.msra.mxu0 %v2725
      %2881 = vmatprep.subr.bf16.mxu0 0
      %2882 = vmatpush2.bf16.msra.mxu0 %v2724
      %2883 = vmatprep.subr.bf16.mxu0 0
      %2884 = vmatpush2.bf16.msra.mxu0 %v2723
      %2885 = vmatprep.subr.bf16.mxu0 0
      %2886 = vmatpush2.bf16.msra.mxu0 %v2722
      %2887 = vmatprep.subr.bf16.mxu0 0
      %2888 = vmatpush2.bf16.msra.mxu0 %v2721
      %2889 = vmatprep.mubr.bf16.mxu0 %v2282
      %2890 = vmatmul.mubr.bf16.gmra.mxu0 %v2281
      %v2891 = vpop.f32.mrf.mxu0
      %v2892 = vadd.f32 0.0, %v2891
      %v2893 = vpop.f32.mrf.mxu0
      %v2894 = vpop.f32.mrf.mxu0
      %v2895 = vadd.f32 0.0, %v2894
      %v2896 = vpop.f32.mrf.mxu0
      %2897 = vmatprep.mubr.bf16.mxu0 %v2291
      %2898 = vmatmul.mubr.bf16.gmra.mxu0 %v2290
      %v2899 = vpop.f32.mrf.mxu0
      %v2900 = vadd.f32 0.0, %v2899
      %v2901 = vpop.f32.mrf.mxu0
      %v2902 = vpop.f32.mrf.mxu0
      %v2903 = vadd.f32 0.0, %v2902
      %v2904 = vpop.f32.mrf.mxu0
      %2905 = vmatprep.mubr.bf16.mxu0 %v2300
      %2906 = vmatmul.mubr.bf16.gmra.mxu0 %v2299
      %v2907 = vpop.f32.mrf.mxu0
      %v2908 = vadd.f32 0.0, %v2907
      %v2909 = vpop.f32.mrf.mxu0
      %v2910 = vpop.f32.mrf.mxu0
      %v2911 = vadd.f32 0.0, %v2910
      %v2912 = vpop.f32.mrf.mxu0
      %2913 = vmatprep.mubr.bf16.mxu0 %v2309
      %2914 = vmatmul.mubr.bf16.gmra.mxu0 %v2308
      %v2915 = vpop.f32.mrf.mxu0
      %v2916 = vadd.f32 0.0, %v2915
      %v2917 = vpop.f32.mrf.mxu0
      %v2918 = vpop.f32.mrf.mxu0
      %v2919 = vadd.f32 0.0, %v2918
      %v2920 = vpop.f32.mrf.mxu0
      %2921 = vmatprep.mubr.bf16.mxu0 %v2318
      %2922 = vmatmul.mubr.bf16.gmra.mxu0 %v2317
      %v2923 = vpop.f32.mrf.mxu0
      %v2924 = vadd.f32 0.0, %v2923
      %v2925 = vpop.f32.mrf.mxu0
      %v2926 = vpop.f32.mrf.mxu0
      %v2927 = vadd.f32 0.0, %v2926
      %v2928 = vpop.f32.mrf.mxu0
      %2929 = vmatprep.mubr.bf16.mxu0 %v2327
      %2930 = vmatmul.mubr.bf16.gmra.mxu0 %v2326
      %v2931 = vpop.f32.mrf.mxu0
      %v2932 = vadd.f32 0.0, %v2931
      %v2933 = vpop.f32.mrf.mxu0
      %v2934 = vpop.f32.mrf.mxu0
      %v2935 = vadd.f32 0.0, %v2934
      %v2936 = vpop.f32.mrf.mxu0
      %2937 = vmatprep.mubr.bf16.mxu0 %v2336
      %2938 = vmatmul.mubr.bf16.gmra.mxu0 %v2335
      %v2939 = vpop.f32.mrf.mxu0
      %v2940 = vadd.f32 0.0, %v2939
      %v2941 = vpop.f32.mrf.mxu0
      %v2942 = vpop.f32.mrf.mxu0
      %v2943 = vadd.f32 0.0, %v2942
      %v2944 = vpop.f32.mrf.mxu0
      %2945 = vmatprep.mubr.bf16.mxu0 %v2345
      %2946 = vmatmul.mubr.bf16.gmra.mxu0 %v2344
      %v2947 = vpop.f32.mrf.mxu0
      %v2948 = vadd.f32 0.0, %v2947
      %v2949 = vpop.f32.mrf.mxu0
      %v2950 = vpop.f32.mrf.mxu0
      %v2951 = vadd.f32 0.0, %v2950
      %v2952 = vpop.f32.mrf.mxu0
      %2953 = vdwg.mxu0
      %2954 = vmatprep.subr.bf16.mxu0 0
      %2955 = vmatpush1.bf16.msra.mxu0 %v2736
      %2956 = vmatprep.subr.bf16.mxu0 0
      %2957 = vmatpush1.bf16.msra.mxu0 %v2735
      %2958 = vmatprep.subr.bf16.mxu0 0
      %2959 = vmatpush1.bf16.msra.mxu0 %v2734
      %2960 = vmatprep.subr.bf16.mxu0 0
      %2961 = vmatpush1.bf16.msra.mxu0 %v2733
      %2962 = vmatprep.subr.bf16.mxu0 0
      %2963 = vmatpush1.bf16.msra.mxu0 %v2732
      %2964 = vmatprep.subr.bf16.mxu0 0
      %2965 = vmatpush1.bf16.msra.mxu0 %v2731
      %2966 = vmatprep.subr.bf16.mxu0 0
      %2967 = vmatpush1.bf16.msra.mxu0 %v2730
      %2968 = vmatprep.subr.bf16.mxu0 0
      %2969 = vmatpush1.bf16.msra.mxu0 %v2729
      %2970 = vmatprep.subr.bf16.mxu0 0
      %2971 = vmatpush2.bf16.msra.mxu0 %v2744
      %2972 = vmatprep.subr.bf16.mxu0 0
      %2973 = vmatpush2.bf16.msra.mxu0 %v2743
      %2974 = vmatprep.subr.bf16.mxu0 0
      %2975 = vmatpush2.bf16.msra.mxu0 %v2742
      %2976 = vmatprep.subr.bf16.mxu0 0
      %2977 = vmatpush2.bf16.msra.mxu0 %v2741
      %2978 = vmatprep.subr.bf16.mxu0 0
      %2979 = vmatpush2.bf16.msra.mxu0 %v2740
      %2980 = vmatprep.subr.bf16.mxu0 0
      %2981 = vmatpush2.bf16.msra.mxu0 %v2739
      %2982 = vmatprep.subr.bf16.mxu0 0
      %2983 = vmatpush2.bf16.msra.mxu0 %v2738
      %2984 = vmatprep.subr.bf16.mxu0 0
      %2985 = vmatpush2.bf16.msra.mxu0 %v2737
      %2986 = vmatprep.mubr.bf16.mxu0 %v2284
      %2987 = vmatmul.mubr.bf16.gmra.mxu0 %v2283
      %v2988 = vpop.f32.mrf.mxu0
      %v2989 = vadd.f32 %v2892, %v2988
      %v2990 = vpop.f32.mrf.mxu0
      %v2991 = vpop.f32.mrf.mxu0
      %v2992 = vadd.f32 %v2895, %v2991
      %v2993 = vpop.f32.mrf.mxu0
      %2994 = vmatprep.mubr.bf16.mxu0 %v2293
      %2995 = vmatmul.mubr.bf16.gmra.mxu0 %v2292
      %v2996 = vpop.f32.mrf.mxu0
      %v2997 = vadd.f32 %v2900, %v2996
      %v2998 = vpop.f32.mrf.mxu0
      %v2999 = vpop.f32.mrf.mxu0
      %v3000 = vadd.f32 %v2903, %v2999
      %v3001 = vpop.f32.mrf.mxu0
      %3002 = vmatprep.mubr.bf16.mxu0 %v2302
      %3003 = vmatmul.mubr.bf16.gmra.mxu0 %v2301
      %v3004 = vpop.f32.mrf.mxu0
      %v3005 = vadd.f32 %v2908, %v3004
      %v3006 = vpop.f32.mrf.mxu0
      %v3007 = vpop.f32.mrf.mxu0
      %v3008 = vadd.f32 %v2911, %v3007
      %v3009 = vpop.f32.mrf.mxu0
      %3010 = vmatprep.mubr.bf16.mxu0 %v2311
      %3011 = vmatmul.mubr.bf16.gmra.mxu0 %v2310
      %v3012 = vpop.f32.mrf.mxu0
      %v3013 = vadd.f32 %v2916, %v3012
      %v3014 = vpop.f32.mrf.mxu0
      %v3015 = vpop.f32.mrf.mxu0
      %v3016 = vadd.f32 %v2919, %v3015
      %v3017 = vpop.f32.mrf.mxu0
      %3018 = vmatprep.mubr.bf16.mxu0 %v2320
      %3019 = vmatmul.mubr.bf16.gmra.mxu0 %v2319
      %v3020 = vpop.f32.mrf.mxu0
      %v3021 = vadd.f32 %v2924, %v3020
      %v3022 = vpop.f32.mrf.mxu0
      %v3023 = vpop.f32.mrf.mxu0
      %v3024 = vadd.f32 %v2927, %v3023
      %v3025 = vpop.f32.mrf.mxu0
      %3026 = vmatprep.mubr.bf16.mxu0 %v2329
      %3027 = vmatmul.mubr.bf16.gmra.mxu0 %v2328
      %v3028 = vpop.f32.mrf.mxu0
      %v3029 = vadd.f32 %v2932, %v3028
      %v3030 = vpop.f32.mrf.mxu0
      %v3031 = vpop.f32.mrf.mxu0
      %v3032 = vadd.f32 %v2935, %v3031
      %v3033 = vpop.f32.mrf.mxu0
      %3034 = vmatprep.mubr.bf16.mxu0 %v2338
      %3035 = vmatmul.mubr.bf16.gmra.mxu0 %v2337
      %v3036 = vpop.f32.mrf.mxu0
      %v3037 = vadd.f32 %v2940, %v3036
      %v3038 = vpop.f32.mrf.mxu0
      %v3039 = vpop.f32.mrf.mxu0
      %v3040 = vadd.f32 %v2943, %v3039
      %v3041 = vpop.f32.mrf.mxu0
      %3042 = vmatprep.mubr.bf16.mxu0 %v2347
      %3043 = vmatmul.mubr.bf16.gmra.mxu0 %v2346
      %v3044 = vpop.f32.mrf.mxu0
      %v3045 = vadd.f32 %v2948, %v3044
      %v3046 = vpop.f32.mrf.mxu0
      %v3047 = vpop.f32.mrf.mxu0
      %v3048 = vadd.f32 %v2951, %v3047
      %v3049 = vpop.f32.mrf.mxu0
      %3050 = vdwg.mxu0
      %3051 = vmatprep.subr.bf16.mxu0 0
      %3052 = vmatpush1.bf16.msra.mxu0 %v2752
      %3053 = vmatprep.subr.bf16.mxu0 0
      %3054 = vmatpush1.bf16.msra.mxu0 %v2751
      %3055 = vmatprep.subr.bf16.mxu0 0
      %3056 = vmatpush1.bf16.msra.mxu0 %v2750
      %3057 = vmatprep.subr.bf16.mxu0 0
      %3058 = vmatpush1.bf16.msra.mxu0 %v2749
      %3059 = vmatprep.subr.bf16.mxu0 0
      %3060 = vmatpush1.bf16.msra.mxu0 %v2748
      %3061 = vmatprep.subr.bf16.mxu0 0
      %3062 = vmatpush1.bf16.msra.mxu0 %v2747
      %3063 = vmatprep.subr.bf16.mxu0 0
      %3064 = vmatpush1.bf16.msra.mxu0 %v2746
      %3065 = vmatprep.subr.bf16.mxu0 0
      %3066 = vmatpush1.bf16.msra.mxu0 %v2745
      %3067 = vmatprep.subr.bf16.mxu0 0
      %3068 = vmatpush2.bf16.msra.mxu0 %v2760
      %3069 = vmatprep.subr.bf16.mxu0 0
      %3070 = vmatpush2.bf16.msra.mxu0 %v2759
      %3071 = vmatprep.subr.bf16.mxu0 0
      %3072 = vmatpush2.bf16.msra.mxu0 %v2758
      %3073 = vmatprep.subr.bf16.mxu0 0
      %3074 = vmatpush2.bf16.msra.mxu0 %v2757
      %3075 = vmatprep.subr.bf16.mxu0 0
      %3076 = vmatpush2.bf16.msra.mxu0 %v2756
      %3077 = vmatprep.subr.bf16.mxu0 0
      %3078 = vmatpush2.bf16.msra.mxu0 %v2755
      %3079 = vmatprep.subr.bf16.mxu0 0
      %3080 = vmatpush2.bf16.msra.mxu0 %v2754
      %3081 = vmatprep.subr.bf16.mxu0 0
      %3082 = vmatpush2.bf16.msra.mxu0 %v2753
      %3083 = vmatprep.mubr.bf16.mxu0 %v2286
      %3084 = vmatmul.mubr.bf16.gmra.mxu0 %v2285
      %v3085 = vpop.f32.mrf.mxu0
      %v3086 = vadd.f32 %v2989, %v3085
      %v3087 = vpop.f32.mrf.mxu0
      %v3088 = vpop.f32.mrf.mxu0
      %v3089 = vadd.f32 %v2992, %v3088
      %v3090 = vpop.f32.mrf.mxu0
      %3091 = vmatprep.mubr.bf16.mxu0 %v2295
      %3092 = vmatmul.mubr.bf16.gmra.mxu0 %v2294
      %v3093 = vpop.f32.mrf.mxu0
      %v3094 = vadd.f32 %v2997, %v3093
      %v3095 = vpop.f32.mrf.mxu0
      %v3096 = vpop.f32.mrf.mxu0
      %v3097 = vadd.f32 %v3000, %v3096
      %v3098 = vpop.f32.mrf.mxu0
      %3099 = vmatprep.mubr.bf16.mxu0 %v2304
      %3100 = vmatmul.mubr.bf16.gmra.mxu0 %v2303
      %v3101 = vpop.f32.mrf.mxu0
      %v3102 = vadd.f32 %v3005, %v3101
      %v3103 = vpop.f32.mrf.mxu0
      %v3104 = vpop.f32.mrf.mxu0
      %v3105 = vadd.f32 %v3008, %v3104
      %v3106 = vpop.f32.mrf.mxu0
      %3107 = vmatprep.mubr.bf16.mxu0 %v2313
      %3108 = vmatmul.mubr.bf16.gmra.mxu0 %v2312
      %v3109 = vpop.f32.mrf.mxu0
      %v3110 = vadd.f32 %v3013, %v3109
      %v3111 = vpop.f32.mrf.mxu0
      %v3112 = vpop.f32.mrf.mxu0
      %v3113 = vadd.f32 %v3016, %v3112
      %v3114 = vpop.f32.mrf.mxu0
      %3115 = vmatprep.mubr.bf16.mxu0 %v2322
      %3116 = vmatmul.mubr.bf16.gmra.mxu0 %v2321
      %v3117 = vpop.f32.mrf.mxu0
      %v3118 = vadd.f32 %v3021, %v3117
      %v3119 = vpop.f32.mrf.mxu0
      %v3120 = vpop.f32.mrf.mxu0
      %v3121 = vadd.f32 %v3024, %v3120
      %v3122 = vpop.f32.mrf.mxu0
      %3123 = vmatprep.mubr.bf16.mxu0 %v2331
      %3124 = vmatmul.mubr.bf16.gmra.mxu0 %v2330
      %v3125 = vpop.f32.mrf.mxu0
      %v3126 = vadd.f32 %v3029, %v3125
      %v3127 = vpop.f32.mrf.mxu0
      %v3128 = vpop.f32.mrf.mxu0
      %v3129 = vadd.f32 %v3032, %v3128
      %v3130 = vpop.f32.mrf.mxu0
      %3131 = vmatprep.mubr.bf16.mxu0 %v2340
      %3132 = vmatmul.mubr.bf16.gmra.mxu0 %v2339
      %v3133 = vpop.f32.mrf.mxu0
      %v3134 = vadd.f32 %v3037, %v3133
      %v3135 = vpop.f32.mrf.mxu0
      %v3136 = vpop.f32.mrf.mxu0
      %v3137 = vadd.f32 %v3040, %v3136
      %v3138 = vpop.f32.mrf.mxu0
      %3139 = vmatprep.mubr.bf16.mxu0 %v2349
      %3140 = vmatmul.mubr.bf16.gmra.mxu0 %v2348
      %v3141 = vpop.f32.mrf.mxu0
      %v3142 = vadd.f32 %v3045, %v3141
      %v3143 = vpop.f32.mrf.mxu0
      %v3144 = vpop.f32.mrf.mxu0
      %v3145 = vadd.f32 %v3048, %v3144
      %v3146 = vpop.f32.mrf.mxu0
      %3147 = vdwg.mxu0
      %3148 = vmatprep.subr.bf16.mxu0 0
      %3149 = vmatpush1.bf16.msra.mxu0 %v2768
      %3150 = vmatprep.subr.bf16.mxu0 0
      %3151 = vmatpush1.bf16.msra.mxu0 %v2767
      %3152 = vmatprep.subr.bf16.mxu0 0
      %3153 = vmatpush1.bf16.msra.mxu0 %v2766
      %3154 = vmatprep.subr.bf16.mxu0 0
      %3155 = vmatpush1.bf16.msra.mxu0 %v2765
      %3156 = vmatprep.subr.bf16.mxu0 0
      %3157 = vmatpush1.bf16.msra.mxu0 %v2764
      %3158 = vmatprep.subr.bf16.mxu0 0
      %3159 = vmatpush1.bf16.msra.mxu0 %v2763
      %3160 = vmatprep.subr.bf16.mxu0 0
      %3161 = vmatpush1.bf16.msra.mxu0 %v2762
      %3162 = vmatprep.subr.bf16.mxu0 0
      %3163 = vmatpush1.bf16.msra.mxu0 %v2761
      %3164 = vmatprep.subr.bf16.mxu0 0
      %3165 = vmatpush2.bf16.msra.mxu0 %v2776
      %3166 = vmatprep.subr.bf16.mxu0 0
      %3167 = vmatpush2.bf16.msra.mxu0 %v2775
      %3168 = vmatprep.subr.bf16.mxu0 0
      %3169 = vmatpush2.bf16.msra.mxu0 %v2774
      %3170 = vmatprep.subr.bf16.mxu0 0
      %3171 = vmatpush2.bf16.msra.mxu0 %v2773
      %3172 = vmatprep.subr.bf16.mxu0 0
      %3173 = vmatpush2.bf16.msra.mxu0 %v2772
      %3174 = vmatprep.subr.bf16.mxu0 0
      %3175 = vmatpush2.bf16.msra.mxu0 %v2771
      %3176 = vmatprep.subr.bf16.mxu0 0
      %3177 = vmatpush2.bf16.msra.mxu0 %v2770
      %3178 = vmatprep.subr.bf16.mxu0 0
      %3179 = vmatpush2.bf16.msra.mxu0 %v2769
      %3180 = vmatprep.mubr.bf16.mxu0 %v2288
      %3181 = vmatmul.mubr.bf16.gmra.mxu0 %v2287
      %v3182 = vpop.f32.mrf.mxu0
      %v3183 = vadd.f32 %v3086, %v3182
      %v3184 = vpop.f32.mrf.mxu0
      %v3185 = vpop.f32.mrf.mxu0
      %v3186 = vadd.f32 %v3089, %v3185
      %v3187 = vpop.f32.mrf.mxu0
      %3188 = vmatprep.mubr.bf16.mxu0 %v2297
      %3189 = vmatmul.mubr.bf16.gmra.mxu0 %v2296
      %v3190 = vpop.f32.mrf.mxu0
      %v3191 = vadd.f32 %v3094, %v3190
      %v3192 = vpop.f32.mrf.mxu0
      %v3193 = vpop.f32.mrf.mxu0
      %v3194 = vadd.f32 %v3097, %v3193
      %v3195 = vpop.f32.mrf.mxu0
      %3196 = vmatprep.mubr.bf16.mxu0 %v2306
      %3197 = vmatmul.mubr.bf16.gmra.mxu0 %v2305
      %v3198 = vpop.f32.mrf.mxu0
      %v3199 = vadd.f32 %v3102, %v3198
      %v3200 = vpop.f32.mrf.mxu0
      %v3201 = vpop.f32.mrf.mxu0
      %v3202 = vadd.f32 %v3105, %v3201
      %v3203 = vpop.f32.mrf.mxu0
      %3204 = vmatprep.mubr.bf16.mxu0 %v2315
      %3205 = vmatmul.mubr.bf16.gmra.mxu0 %v2314
      %v3206 = vpop.f32.mrf.mxu0
      %v3207 = vadd.f32 %v3110, %v3206
      %v3208 = vpop.f32.mrf.mxu0
      %v3209 = vpop.f32.mrf.mxu0
      %v3210 = vadd.f32 %v3113, %v3209
      %v3211 = vpop.f32.mrf.mxu0
      %3212 = vmatprep.mubr.bf16.mxu0 %v2324
      %3213 = vmatmul.mubr.bf16.gmra.mxu0 %v2323
      %v3214 = vpop.f32.mrf.mxu0
      %v3215 = vadd.f32 %v3118, %v3214
      %v3216 = vpop.f32.mrf.mxu0
      %v3217 = vpop.f32.mrf.mxu0
      %v3218 = vadd.f32 %v3121, %v3217
      %v3219 = vpop.f32.mrf.mxu0
      %3220 = vmatprep.mubr.bf16.mxu0 %v2333
      %3221 = vmatmul.mubr.bf16.gmra.mxu0 %v2332
      %v3222 = vpop.f32.mrf.mxu0
      %v3223 = vadd.f32 %v3126, %v3222
      %v3224 = vpop.f32.mrf.mxu0
      %v3225 = vpop.f32.mrf.mxu0
      %v3226 = vadd.f32 %v3129, %v3225
      %v3227 = vpop.f32.mrf.mxu0
      %3228 = vmatprep.mubr.bf16.mxu0 %v2342
      %3229 = vmatmul.mubr.bf16.gmra.mxu0 %v2341
      %v3230 = vpop.f32.mrf.mxu0
      %v3231 = vadd.f32 %v3134, %v3230
      %v3232 = vpop.f32.mrf.mxu0
      %v3233 = vpop.f32.mrf.mxu0
      %v3234 = vadd.f32 %v3137, %v3233
      %v3235 = vpop.f32.mrf.mxu0
      %3236 = vmatprep.mubr.bf16.mxu0 %v2351
      %3237 = vmatmul.mubr.bf16.gmra.mxu0 %v2350
      %v3238 = vpop.f32.mrf.mxu0
      %v3239 = vadd.f32 %v3142, %v3238
      %v3240 = vpop.f32.mrf.mxu0
      %v3241 = vpop.f32.mrf.mxu0
      %v3242 = vadd.f32 %v3145, %v3241
      %v3243 = vpop.f32.mrf.mxu0
      %3244 = vdwg.mxu0
      %3245 = vmatprep.subr.bf16.mxu0 0
      %3246 = vmatpush1.bf16.msra.mxu0 %v2784
      %3247 = vmatprep.subr.bf16.mxu0 0
      %3248 = vmatpush1.bf16.msra.mxu0 %v2783
      %3249 = vmatprep.subr.bf16.mxu0 0
      %3250 = vmatpush1.bf16.msra.mxu0 %v2782
      %3251 = vmatprep.subr.bf16.mxu0 0
      %3252 = vmatpush1.bf16.msra.mxu0 %v2781
      %3253 = vmatprep.subr.bf16.mxu0 0
      %3254 = vmatpush1.bf16.msra.mxu0 %v2780
      %3255 = vmatprep.subr.bf16.mxu0 0
      %3256 = vmatpush1.bf16.msra.mxu0 %v2779
      %3257 = vmatprep.subr.bf16.mxu0 0
      %3258 = vmatpush1.bf16.msra.mxu0 %v2778
      %3259 = vmatprep.subr.bf16.mxu0 0
      %3260 = vmatpush1.bf16.msra.mxu0 %v2777
      %3261 = vmatprep.subr.bf16.mxu0 0
      %3262 = vmatpush2.bf16.msra.mxu0 0
      %3263 = vmatprep.subr.bf16.mxu0 0
      %3264 = vmatpush2.bf16.msra.mxu0 0
      %3265 = vmatprep.subr.bf16.mxu0 0
      %3266 = vmatpush2.bf16.msra.mxu0 0
      %3267 = vmatprep.subr.bf16.mxu0 0
      %3268 = vmatpush2.bf16.msra.mxu0 0
      %3269 = vmatprep.subr.bf16.mxu0 0
      %3270 = vmatpush2.bf16.msra.mxu0 0
      %3271 = vmatprep.subr.bf16.mxu0 0
      %3272 = vmatpush2.bf16.msra.mxu0 0
      %3273 = vmatprep.subr.bf16.mxu0 0
      %3274 = vmatpush2.bf16.msra.mxu0 0
      %3275 = vmatprep.subr.bf16.mxu0 0
      %3276 = vmatpush2.bf16.msra.mxu0 0
      %3277 = vmatprep.mubr.bf16.mxu0 0
      %3278 = vmatmul.mubr.bf16.gmra.mxu0 %v2289
      %v3279 = vpop.f32.mrf.mxu0
      %v3280 = vadd.f32 %v3183, %v3279
      %v3281 = vpop.f32.mrf.mxu0
      %v3282 = vpop.f32.mrf.mxu0
      %v3283 = vadd.f32 %v3186, %v3282
      %v3284 = vpop.f32.mrf.mxu0
      %3285 = vmatprep.mubr.bf16.mxu0 0
      %3286 = vmatmul.mubr.bf16.gmra.mxu0 %v2298
      %v3287 = vpop.f32.mrf.mxu0
      %v3288 = vadd.f32 %v3191, %v3287
      %v3289 = vpop.f32.mrf.mxu0
      %v3290 = vpop.f32.mrf.mxu0
      %v3291 = vadd.f32 %v3194, %v3290
      %v3292 = vpop.f32.mrf.mxu0
      %3293 = vmatprep.mubr.bf16.mxu0 0
      %3294 = vmatmul.mubr.bf16.gmra.mxu0 %v2307
      %v3295 = vpop.f32.mrf.mxu0
      %v3296 = vadd.f32 %v3199, %v3295
      %v3297 = vpop.f32.mrf.mxu0
      %v3298 = vpop.f32.mrf.mxu0
      %v3299 = vadd.f32 %v3202, %v3298
      %v3300 = vpop.f32.mrf.mxu0
      %3301 = vmatprep.mubr.bf16.mxu0 0
      %3302 = vmatmul.mubr.bf16.gmra.mxu0 %v2316
      %v3303 = vpop.f32.mrf.mxu0
      %v3304 = vadd.f32 %v3207, %v3303
      %v3305 = vpop.f32.mrf.mxu0
      %v3306 = vpop.f32.mrf.mxu0
      %v3307 = vadd.f32 %v3210, %v3306
      %v3308 = vpop.f32.mrf.mxu0
      %3309 = vmatprep.mubr.bf16.mxu0 0
      %3310 = vmatmul.mubr.bf16.gmra.mxu0 %v2325
      %v3311 = vpop.f32.mrf.mxu0
      %v3312 = vadd.f32 %v3215, %v3311
      %v3313 = vpop.f32.mrf.mxu0
      %v3314 = vpop.f32.mrf.mxu0
      %v3315 = vadd.f32 %v3218, %v3314
      %v3316 = vpop.f32.mrf.mxu0
      %3317 = vmatprep.mubr.bf16.mxu0 0
      %3318 = vmatmul.mubr.bf16.gmra.mxu0 %v2334
      %v3319 = vpop.f32.mrf.mxu0
      %v3320 = vadd.f32 %v3223, %v3319
      %v3321 = vpop.f32.mrf.mxu0
      %v3322 = vpop.f32.mrf.mxu0
      %v3323 = vadd.f32 %v3226, %v3322
      %v3324 = vpop.f32.mrf.mxu0
      %3325 = vmatprep.mubr.bf16.mxu0 0
      %3326 = vmatmul.mubr.bf16.gmra.mxu0 %v2343
      %v3327 = vpop.f32.mrf.mxu0
      %v3328 = vadd.f32 %v3231, %v3327
      %v3329 = vpop.f32.mrf.mxu0
      %v3330 = vpop.f32.mrf.mxu0
      %v3331 = vadd.f32 %v3234, %v3330
      %v3332 = vpop.f32.mrf.mxu0
      %3333 = vmatprep.mubr.bf16.mxu0 0
      %3334 = vmatmul.mubr.bf16.gmra.mxu0 %v2352
      %v3335 = vpop.f32.mrf.mxu0
      %v3336 = vadd.f32 %v3239, %v3335
      %v3337 = vpop.f32.mrf.mxu0
      %v3338 = vpop.f32.mrf.mxu0
      %v3339 = vadd.f32 %v3242, %v3338
      %v3340 = vpop.f32.mrf.mxu0
      %3341 = vdwg.mxu0
      %v3342 = vadd.f32 %v1817, %v3280
      %v3343 = vadd.f32 %v1818, %v3283
      %v3344 = vadd.f32 %v1819, %v3288
      %v3345 = vadd.f32 %v1820, %v3291
      %v3346 = vadd.f32 %v1821, %v3296
      %v3347 = vadd.f32 %v1822, %v3299
      %v3348 = vadd.f32 %v1823, %v3304
      %v3349 = vadd.f32 %v1824, %v3307
      %v3350 = vadd.f32 %v1825, %v3312
      %v3351 = vadd.f32 %v1826, %v3315
      %v3352 = vadd.f32 %v1827, %v3320
      %v3353 = vadd.f32 %v1828, %v3323
      %v3354 = vadd.f32 %v1829, %v3328
      %v3355 = vadd.f32 %v1830, %v3331
      %v3356 = vadd.f32 %v1831, %v3336
      %v3357 = vadd.f32 %v1832, %v3339
      %3358 = vst [vmem:[#allocation3] sm:$0xff] %v3342
      %3359 = vst [vmem:[#allocation3 + $0x8] sm:$0xff] %v3343
      %3360 = vst [vmem:[#allocation3 + $0x10] sm:$0xff] %v3344
      %3361 = vst [vmem:[#allocation3 + $0x18] sm:$0xff] %v3345
      %3362 = vst [vmem:[#allocation3 + $0x20] sm:$0xff] %v3346
      %3363 = vst [vmem:[#allocation3 + $0x28] sm:$0xff] %v3347
      %3364 = vst [vmem:[#allocation3 + $0x30] sm:$0xff] %v3348
      %3365 = vst [vmem:[#allocation3 + $0x38] sm:$0xff] %v3349
      %3366 = vst [vmem:[#allocation3 + $0x40] sm:$0xff] %v3350
      %3367 = vst [vmem:[#allocation3 + $0x48] sm:$0xff] %v3351
      %3368 = vst [vmem:[#allocation3 + $0x50] sm:$0xff] %v3352
      %3369 = vst [vmem:[#allocation3 + $0x58] sm:$0xff] %v3353
      %3370 = vst [vmem:[#allocation3 + $0x60] sm:$0xff] %v3354
      %3371 = vst [vmem:[#allocation3 + $0x68] sm:$0xff] %v3355
      %3372 = vst [vmem:[#allocation3 + $0x70] sm:$0xff] %v3356
      %3373 = vst [vmem:[#allocation3 + $0x78] sm:$0xff] %v3357
      %v3374 = vld [vmem:[#allocation3] sm:$0xff]
      %v3375 = vld [vmem:[#allocation3 + $0x8] sm:$0xff]
      %v3376 = vld [vmem:[#allocation3 + $0x10] sm:$0xff]
      %v3377 = vld [vmem:[#allocation3 + $0x18] sm:$0xff]
      %v3378 = vld [vmem:[#allocation3 + $0x20] sm:$0xff]
      %v3379 = vld [vmem:[#allocation3 + $0x28] sm:$0xff]
      %v3380 = vld [vmem:[#allocation3 + $0x30] sm:$0xff]
      %v3381 = vld [vmem:[#allocation3 + $0x38] sm:$0xff]
      %v3382 = vld [vmem:[#allocation3 + $0x40] sm:$0xff]
      %v3383 = vld [vmem:[#allocation3 + $0x48] sm:$0xff]
      %v3384 = vld [vmem:[#allocation3 + $0x50] sm:$0xff]
      %v3385 = vld [vmem:[#allocation3 + $0x58] sm:$0xff]
      %v3386 = vld [vmem:[#allocation3 + $0x60] sm:$0xff]
      %v3387 = vld [vmem:[#allocation3 + $0x68] sm:$0xff]
      %v3388 = vld [vmem:[#allocation3 + $0x70] sm:$0xff]
      %v3389 = vld [vmem:[#allocation3 + $0x78] sm:$0xff]
      %v3390 = vld [vmem:[#allocation2 + $0x48] sm:$0xff]
      %v3391 = vld [vmem:[#allocation2 + $0x50] sm:$0xff]
      %v3392 = vld [vmem:[#allocation2 + $0x58] sm:$0xff]
      %v3393 = vld [vmem:[#allocation2 + $0x60] sm:$0xff]
      %v3394 = vld [vmem:[#allocation2 + $0x68] sm:$0xf]
      %v3395 = vld [vmem:[#allocation2 + $0x6c] sm:$0xff]
      %v3396 = vld [vmem:[#allocation2 + $0x74] sm:$0xff]
      %v3397 = vld [vmem:[#allocation2 + $0x7c] sm:$0xff]
      %v3398 = vld [vmem:[#allocation2 + $0x84] sm:$0xff]
      %v3399 = vld [vmem:[#allocation2 + $0x8c] sm:$0xf]
      %v3400 = vld [vmem:[#allocation2 + $0x90] sm:$0xff]
      %v3401 = vld [vmem:[#allocation2 + $0x98] sm:$0xff]
      %v3402 = vld [vmem:[#allocation2 + $0xa0] sm:$0xff]
      %v3403 = vld [vmem:[#allocation2 + $0xa8] sm:$0xff]
      %v3404 = vld [vmem:[#allocation2 + $0xb0] sm:$0xf]
      %v3405 = vld [vmem:[#allocation2 + $0xb4] sm:$0xff]
      %v3406 = vld [vmem:[#allocation2 + $0xbc] sm:$0xff]
      %v3407 = vld [vmem:[#allocation2 + $0xc4] sm:$0xff]
      %v3408 = vld [vmem:[#allocation2 + $0xcc] sm:$0xff]
      %v3409 = vld [vmem:[#allocation2 + $0xd4] sm:$0xf]
      %v3410 = vld [vmem:[#allocation2 + $0xd8] sm:$0xff]
      %v3411 = vld [vmem:[#allocation2 + $0xe0] sm:$0xff]
      %v3412 = vld [vmem:[#allocation2 + $0xe8] sm:$0xff]
      %v3413 = vld [vmem:[#allocation2 + $0xf0] sm:$0xff]
      %v3414 = vld [vmem:[#allocation2 + $0xf8] sm:$0xf]
      %v3415 = vld [vmem:[#allocation2 + $0xfc] sm:$0xff]
      %v3416 = vld [vmem:[#allocation2 + $0x104] sm:$0xff]
      %v3417 = vld [vmem:[#allocation2 + $0x10c] sm:$0xff]
      %v3418 = vld [vmem:[#allocation2 + $0x114] sm:$0xff]
      %v3419 = vld [vmem:[#allocation2 + $0x11c] sm:$0xf]
      %v3420 = vld [vmem:[#allocation2 + $0x120] sm:$0xff]
      %v3421 = vld [vmem:[#allocation2 + $0x128] sm:$0xff]
      %v3422 = vld [vmem:[#allocation2 + $0x130] sm:$0xff]
      %v3423 = vld [vmem:[#allocation2 + $0x138] sm:$0xff]
      %v3424 = vld [vmem:[#allocation2 + $0x140] sm:$0xf]
      %v3425 = vld [vmem:[#allocation2 + $0x144] sm:$0xff]
      %v3426 = vld [vmem:[#allocation2 + $0x14c] sm:$0xff]
      %v3427 = vld [vmem:[#allocation2 + $0x154] sm:$0xff]
      %v3428 = vld [vmem:[#allocation2 + $0x15c] sm:$0xff]
      %v3429 = vld [vmem:[#allocation2 + $0x164] sm:$0xf]
      %v3430 = vld [vmem:[#allocation2 + $0x168] sm:$0xff]
      %v3431 = vld [vmem:[#allocation2 + $0x170] sm:$0xff]
      %v3432 = vld [vmem:[#allocation2 + $0x178] sm:$0xff]
      %v3433 = vld [vmem:[#allocation2 + $0x180] sm:$0xff]
      %v3434 = vld [vmem:[#allocation2 + $0x188] sm:$0xf]
      %v3435 = vld [vmem:[#allocation2 + $0x18c] sm:$0xff]
      %v3436 = vld [vmem:[#allocation2 + $0x194] sm:$0xff]
      %v3437 = vld [vmem:[#allocation2 + $0x19c] sm:$0xff]
      %v3438 = vld [vmem:[#allocation2 + $0x1a4] sm:$0xff]
      %v3439 = vld [vmem:[#allocation2 + $0x1ac] sm:$0xf]
      %v3440 = vld [vmem:[#allocation2 + $0x1b0] sm:$0xff]
      %v3441 = vld [vmem:[#allocation2 + $0x1b8] sm:$0xff]
      %v3442 = vld [vmem:[#allocation2 + $0x1c0] sm:$0xff]
      %v3443 = vld [vmem:[#allocation2 + $0x1c8] sm:$0xff]
      %v3444 = vld [vmem:[#allocation2 + $0x1d0] sm:$0xf]
      %v3445 = vld [vmem:[#allocation2 + $0x1d4] sm:$0xff]
      %v3446 = vld [vmem:[#allocation2 + $0x1dc] sm:$0xff]
      %v3447 = vld [vmem:[#allocation2 + $0x1e4] sm:$0xff]
      %v3448 = vld [vmem:[#allocation2 + $0x1ec] sm:$0xff]
      %v3449 = vld [vmem:[#allocation2 + $0x1f4] sm:$0xf]
      %v3450 = vld [vmem:[#allocation2 + $0x1f8] sm:$0xff]
      %v3451 = vld [vmem:[#allocation2 + $0x200] sm:$0xff]
      %v3452 = vld [vmem:[#allocation2 + $0x208] sm:$0xff]
      %v3453 = vld [vmem:[#allocation2 + $0x210] sm:$0xff]
      %v3454 = vld [vmem:[#allocation2 + $0x218] sm:$0xf]
      %v3455 = vld [vmem:[#allocation2 + $0x21c] sm:$0xff]
      %v3456 = vld [vmem:[#allocation2 + $0x224] sm:$0xff]
      %v3457 = vld [vmem:[#allocation2 + $0x22c] sm:$0xff]
      %v3458 = vld [vmem:[#allocation2 + $0x234] sm:$0xff]
      %v3459 = vld [vmem:[#allocation2 + $0x23c] sm:$0xf]
      %v3460 = vld [vmem:[#allocation2 + $0x240] sm:$0xff]
      %v3461 = vld [vmem:[#allocation2 + $0x248] sm:$0xff]
      %v3462 = vld [vmem:[#allocation2 + $0x250] sm:$0xff]
      %v3463 = vld [vmem:[#allocation2 + $0x258] sm:$0xff]
      %v3464 = vld [vmem:[#allocation2 + $0x260] sm:$0xf]
      %v3465 = vld [vmem:[#allocation2 + $0x264] sm:$0xff]
      %v3466 = vld [vmem:[#allocation2 + $0x26c] sm:$0xff]
      %v3467 = vld [vmem:[#allocation2 + $0x274] sm:$0xff]
      %v3468 = vld [vmem:[#allocation2 + $0x27c] sm:$0xff]
      %v3469 = vld [vmem:[#allocation2 + $0x284] sm:$0xf]
      %s3470 = scalar_lea.vmem %s3, 576
      %v3471 = vld [vmem:[%s3470] sm:$0xf]
      %v3472 = vld [vmem:[%s3470 + $0x4] sm:$0xf]
      %v3473 = vld [vmem:[%s3470 + $0x8] sm:$0xf]
      %v3474 = vld [vmem:[%s3470 + $0xc] sm:$0xf]
      %v3475 = vld [vmem:[%s3470 + $0x10] sm:$0xf]
      %v3476 = vld [vmem:[%s3470 + $0x14] sm:$0xf]
      %v3477 = vld [vmem:[%s3470 + $0x18] sm:$0xf]
      %v3478 = vld [vmem:[%s3470 + $0x1c] sm:$0xf]
      %v3479 = vld [vmem:[%s3470 + $0x20] sm:$0xf]
      %v3480 = vld [vmem:[%s3470 + $0x24] sm:$0xf]
      %v3481 = vld [vmem:[%s3470 + $0x28] sm:$0xf]
      %v3482 = vld [vmem:[%s3470 + $0x2c] sm:$0xf]
      %v3483 = vld [vmem:[%s3470 + $0x30] sm:$0xf]
      %v3484 = vld [vmem:[%s3470 + $0x34] sm:$0xf]
      %v3485 = vld [vmem:[%s3470 + $0x38] sm:$0xf]
      %v3486 = vld [vmem:[%s3470 + $0x3c] sm:$0xf]
      %v3487 = vld [vmem:[%s3470 + $0x40] sm:$0xf]
      %v3488 = vld [vmem:[%s3470 + $0x44] sm:$0xf]
      %v3489 = vld [vmem:[%s3470 + $0x48] sm:$0xf]
      %v3490 = vld [vmem:[%s3470 + $0x4c] sm:$0xf]
      %v3491 = vld [vmem:[%s3470 + $0x50] sm:$0xf]
      %v3492 = vld [vmem:[%s3470 + $0x54] sm:$0xf]
      %v3493 = vld [vmem:[%s3470 + $0x58] sm:$0xf]
      %v3494 = vld [vmem:[%s3470 + $0x5c] sm:$0xf]
      %v3495 = vld [vmem:[%s3470 + $0x60] sm:$0xf]
      %v3496 = vld [vmem:[%s3470 + $0x64] sm:$0xf]
      %v3497 = vld [vmem:[%s3470 + $0x68] sm:$0xf]
      %v3498 = vld [vmem:[%s3470 + $0x6c] sm:$0xf]
      %v3499 = vld [vmem:[%s3470 + $0x70] sm:$0xf]
      %v3500 = vld [vmem:[%s3470 + $0x74] sm:$0xf]
      %v3501 = vld [vmem:[%s3470 + $0x78] sm:$0xf]
      %v3502 = vld [vmem:[%s3470 + $0x7c] sm:$0xf]
      %v3503 = vld [vmem:[%s3470 + $0x80] sm:$0xf]
      %v3504 = vld [vmem:[%s3470 + $0x84] sm:$0xf]
      %v3505 = vld [vmem:[%s3470 + $0x88] sm:$0xf]
      %v3506 = vld [vmem:[%s3470 + $0x8c] sm:$0xf]
      %v3507 = vld [vmem:[%s3470 + $0x90] sm:$0xf]
      %v3508 = vld [vmem:[%s3470 + $0x94] sm:$0xf]
      %v3509 = vld [vmem:[%s3470 + $0x98] sm:$0xf]
      %v3510 = vld [vmem:[%s3470 + $0x9c] sm:$0xf]
      %v3511 = vld [vmem:[%s3470 + $0xa0] sm:$0xf]
      %v3512 = vld [vmem:[%s3470 + $0xa4] sm:$0xf]
      %v3513 = vld [vmem:[%s3470 + $0xa8] sm:$0xf]
      %v3514 = vld [vmem:[%s3470 + $0xac] sm:$0xf]
      %v3515 = vld [vmem:[%s3470 + $0xb0] sm:$0xf]
      %v3516 = vld [vmem:[%s3470 + $0xb4] sm:$0xf]
      %v3517 = vld [vmem:[%s3470 + $0xb8] sm:$0xf]
      %v3518 = vld [vmem:[%s3470 + $0xbc] sm:$0xf]
      %v3519 = vld [vmem:[%s3470 + $0xc0] sm:$0xf]
      %v3520 = vld [vmem:[%s3470 + $0xc4] sm:$0xf]
      %v3521 = vld [vmem:[%s3470 + $0xc8] sm:$0xf]
      %v3522 = vld [vmem:[%s3470 + $0xcc] sm:$0xf]
      %v3523 = vld [vmem:[%s3470 + $0xd0] sm:$0xf]
      %v3524 = vld [vmem:[%s3470 + $0xd4] sm:$0xf]
      %v3525 = vld [vmem:[%s3470 + $0xd8] sm:$0xf]
      %v3526 = vld [vmem:[%s3470 + $0xdc] sm:$0xf]
      %v3527 = vld [vmem:[%s3470 + $0xe0] sm:$0xf]
      %v3528 = vld [vmem:[%s3470 + $0xe4] sm:$0xf]
      %v3529 = vld [vmem:[%s3470 + $0xe8] sm:$0xf]
      %v3530 = vld [vmem:[%s3470 + $0xec] sm:$0xf]
      %v3531 = vld [vmem:[%s3470 + $0xf0] sm:$0xf]
      %v3532 = vld [vmem:[%s3470 + $0xf4] sm:$0xf]
      %v3533 = vld [vmem:[%s3470 + $0xf8] sm:$0xf]
      %v3534 = vld [vmem:[%s3470 + $0xfc] sm:$0xf]
      %v3535 = vld [vmem:[%s3470 + $0x100] sm:$0xf]
      %v3536 = vld [vmem:[%s3470 + $0x104] sm:$0xf]
      %v3537 = vld [vmem:[%s3470 + $0x108] sm:$0xf]
      %v3538 = vld [vmem:[%s3470 + $0x10c] sm:$0xf]
      %v3539 = vld [vmem:[%s3470 + $0x110] sm:$0xf]
      %v3540 = vld [vmem:[%s3470 + $0x114] sm:$0xf]
      %v3541 = vld [vmem:[%s3470 + $0x118] sm:$0xf]
      %v3542 = vld [vmem:[%s3470 + $0x11c] sm:$0xf]
      %v3543 = vld [vmem:[%s3470 + $0x120] sm:$0xf]
      %v3544 = vld [vmem:[%s3470 + $0x124] sm:$0xf]
      %v3545 = vld [vmem:[%s3470 + $0x128] sm:$0xf]
      %v3546 = vld [vmem:[%s3470 + $0x12c] sm:$0xf]
      %v3547 = vld [vmem:[%s3470 + $0x130] sm:$0xf]
      %v3548 = vld [vmem:[%s3470 + $0x134] sm:$0xf]
      %v3549 = vld [vmem:[%s3470 + $0x138] sm:$0xf]
      %v3550 = vld [vmem:[%s3470 + $0x13c] sm:$0xf]
      %v3551 = vld [vmem:[%s3470 + $0x140] sm:$0xf]
      %v3552 = vld [vmem:[%s3470 + $0x144] sm:$0xf]
      %v3553 = vld [vmem:[%s3470 + $0x148] sm:$0xf]
      %v3554 = vld [vmem:[%s3470 + $0x14c] sm:$0xf]
      %v3555 = vld [vmem:[%s3470 + $0x150] sm:$0xf]
      %v3556 = vld [vmem:[%s3470 + $0x154] sm:$0xf]
      %v3557 = vld [vmem:[%s3470 + $0x158] sm:$0xf]
      %v3558 = vld [vmem:[%s3470 + $0x15c] sm:$0xf]
      %v3559 = vld [vmem:[%s3470 + $0x160] sm:$0xf]
      %v3560 = vld [vmem:[%s3470 + $0x164] sm:$0xf]
      %v3561 = vld [vmem:[%s3470 + $0x168] sm:$0xf]
      %v3562 = vld [vmem:[%s3470 + $0x16c] sm:$0xf]
      %v3563 = vld [vmem:[%s3470 + $0x170] sm:$0xf]
      %v3564 = vld [vmem:[%s3470 + $0x174] sm:$0xf]
      %v3565 = vld [vmem:[%s3470 + $0x178] sm:$0xf]
      %v3566 = vld [vmem:[%s3470 + $0x17c] sm:$0xf]
      %v3567 = vld [vmem:[%s3470 + $0x180] sm:$0xf]
      %v3568 = vld [vmem:[%s3470 + $0x184] sm:$0xf]
      %v3569 = vld [vmem:[%s3470 + $0x188] sm:$0xf]
      %v3570 = vld [vmem:[%s3470 + $0x18c] sm:$0xf]
      %v3571 = vld [vmem:[%s3470 + $0x190] sm:$0xf]
      %v3572 = vld [vmem:[%s3470 + $0x194] sm:$0xf]
      %v3573 = vld [vmem:[%s3470 + $0x198] sm:$0xf]
      %v3574 = vld [vmem:[%s3470 + $0x19c] sm:$0xf]
      %v3575 = vld [vmem:[%s3470 + $0x1a0] sm:$0xf]
      %v3576 = vld [vmem:[%s3470 + $0x1a4] sm:$0xf]
      %v3577 = vld [vmem:[%s3470 + $0x1a8] sm:$0xf]
      %v3578 = vld [vmem:[%s3470 + $0x1ac] sm:$0xf]
      %v3579 = vld [vmem:[%s3470 + $0x1b0] sm:$0xf]
      %v3580 = vld [vmem:[%s3470 + $0x1b4] sm:$0xf]
      %v3581 = vld [vmem:[%s3470 + $0x1b8] sm:$0xf]
      %v3582 = vld [vmem:[%s3470 + $0x1bc] sm:$0xf]
      %v3583 = vld [vmem:[%s3470 + $0x1c0] sm:$0xf]
      %v3584 = vld [vmem:[%s3470 + $0x1c4] sm:$0xf]
      %v3585 = vld [vmem:[%s3470 + $0x1c8] sm:$0xf]
      %v3586 = vld [vmem:[%s3470 + $0x1cc] sm:$0xf]
      %v3587 = vld [vmem:[%s3470 + $0x1d0] sm:$0xf]
      %v3588 = vld [vmem:[%s3470 + $0x1d4] sm:$0xf]
      %v3589 = vld [vmem:[%s3470 + $0x1d8] sm:$0xf]
      %v3590 = vld [vmem:[%s3470 + $0x1dc] sm:$0xf]
      %v3591 = vld [vmem:[%s3470 + $0x1e0] sm:$0xf]
      %v3592 = vld [vmem:[%s3470 + $0x1e4] sm:$0xf]
      %v3593 = vld [vmem:[%s3470 + $0x1e8] sm:$0xf]
      %v3594 = vld [vmem:[%s3470 + $0x1ec] sm:$0xf]
      %v3595 = vld [vmem:[%s3470 + $0x1f0] sm:$0xf]
      %v3596 = vld [vmem:[%s3470 + $0x1f4] sm:$0xf]
      %v3597 = vld [vmem:[%s3470 + $0x1f8] sm:$0xf]
      %v3598 = vld [vmem:[%s3470 + $0x1fc] sm:$0xf]
      %v3599 = vld [vmem:[%s3470 + $0x200] sm:$0xf]
      %v3600 = vld [vmem:[%s3470 + $0x204] sm:$0xf]
      %v3601 = vld [vmem:[%s3470 + $0x208] sm:$0xf]
      %v3602 = vld [vmem:[%s3470 + $0x20c] sm:$0xf]
      %v3603 = vld [vmem:[%s3470 + $0x210] sm:$0xf]
      %v3604 = vld [vmem:[%s3470 + $0x214] sm:$0xf]
      %v3605 = vld [vmem:[%s3470 + $0x218] sm:$0xf]
      %v3606 = vld [vmem:[%s3470 + $0x21c] sm:$0xf]
      %v3607 = vld [vmem:[%s3470 + $0x220] sm:$0xf]
      %v3608 = vld [vmem:[%s3470 + $0x224] sm:$0xf]
      %v3609 = vld [vmem:[%s3470 + $0x228] sm:$0xf]
      %v3610 = vld [vmem:[%s3470 + $0x22c] sm:$0xf]
      %v3611 = vld [vmem:[%s3470 + $0x230] sm:$0xf]
      %v3612 = vld [vmem:[%s3470 + $0x234] sm:$0xf]
      %v3613 = vld [vmem:[%s3470 + $0x238] sm:$0xf]
      %v3614 = vld [vmem:[%s3470 + $0x23c] sm:$0xf]
      %v3695 = vunpack.c.l.b16 %v3390
      %v3696 = vunpack.c.h.b16 %v3390
      %v3697 = vunpack.c.l.b16 %v3391
      %v3698 = vunpack.c.h.b16 %v3391
      %v3699 = vunpack.c.l.b16 %v3392
      %v3700 = vunpack.c.h.b16 %v3392
      %v3701 = vunpack.c.l.b16 %v3393
      %v3702 = vunpack.c.h.b16 %v3393
      %v3703 = vunpack.c.l.b16 %v3394
      %v3704 = vunpack.c.l.b16 %v3395
      %v3705 = vunpack.c.h.b16 %v3395
      %v3706 = vunpack.c.l.b16 %v3396
      %v3707 = vunpack.c.h.b16 %v3396
      %v3708 = vunpack.c.l.b16 %v3397
      %v3709 = vunpack.c.h.b16 %v3397
      %v3710 = vunpack.c.l.b16 %v3398
      %v3711 = vunpack.c.h.b16 %v3398
      %v3712 = vunpack.c.l.b16 %v3399
      %v3713 = vunpack.c.l.b16 %v3400
      %v3714 = vunpack.c.h.b16 %v3400
      %v3715 = vunpack.c.l.b16 %v3401
      %v3716 = vunpack.c.h.b16 %v3401
      %v3717 = vunpack.c.l.b16 %v3402
      %v3718 = vunpack.c.h.b16 %v3402
      %v3719 = vunpack.c.l.b16 %v3403
      %v3720 = vunpack.c.h.b16 %v3403
      %v3721 = vunpack.c.l.b16 %v3404
      %v3722 = vunpack.c.l.b16 %v3405
      %v3723 = vunpack.c.h.b16 %v3405
      %v3724 = vunpack.c.l.b16 %v3406
      %v3725 = vunpack.c.h.b16 %v3406
      %v3726 = vunpack.c.l.b16 %v3407
      %v3727 = vunpack.c.h.b16 %v3407
      %v3728 = vunpack.c.l.b16 %v3408
      %v3729 = vunpack.c.h.b16 %v3408
      %v3730 = vunpack.c.l.b16 %v3409
      %v3731 = vunpack.c.l.b16 %v3410
      %v3732 = vunpack.c.h.b16 %v3410
      %v3733 = vunpack.c.l.b16 %v3411
      %v3734 = vunpack.c.h.b16 %v3411
      %v3735 = vunpack.c.l.b16 %v3412
      %v3736 = vunpack.c.h.b16 %v3412
      %v3737 = vunpack.c.l.b16 %v3413
      %v3738 = vunpack.c.h.b16 %v3413
      %v3739 = vunpack.c.l.b16 %v3414
      %v3740 = vunpack.c.l.b16 %v3415
      %v3741 = vunpack.c.h.b16 %v3415
      %v3742 = vunpack.c.l.b16 %v3416
      %v3743 = vunpack.c.h.b16 %v3416
      %v3744 = vunpack.c.l.b16 %v3417
      %v3745 = vunpack.c.h.b16 %v3417
      %v3746 = vunpack.c.l.b16 %v3418
      %v3747 = vunpack.c.h.b16 %v3418
      %v3748 = vunpack.c.l.b16 %v3419
      %v3749 = vunpack.c.l.b16 %v3420
      %v3750 = vunpack.c.h.b16 %v3420
      %v3751 = vunpack.c.l.b16 %v3421
      %v3752 = vunpack.c.h.b16 %v3421
      %v3753 = vunpack.c.l.b16 %v3422
      %v3754 = vunpack.c.h.b16 %v3422
      %v3755 = vunpack.c.l.b16 %v3423
      %v3756 = vunpack.c.h.b16 %v3423
      %v3757 = vunpack.c.l.b16 %v3424
      %v3758 = vunpack.c.l.b16 %v3425
      %v3759 = vunpack.c.h.b16 %v3425
      %v3760 = vunpack.c.l.b16 %v3426
      %v3761 = vunpack.c.h.b16 %v3426
      %v3762 = vunpack.c.l.b16 %v3427
      %v3763 = vunpack.c.h.b16 %v3427
      %v3764 = vunpack.c.l.b16 %v3428
      %v3765 = vunpack.c.h.b16 %v3428
      %v3766 = vunpack.c.l.b16 %v3429
      %v3767 = vunpack.c.l.b16 %v3430
      %v3768 = vunpack.c.h.b16 %v3430
      %v3769 = vunpack.c.l.b16 %v3431
      %v3770 = vunpack.c.h.b16 %v3431
      %v3771 = vunpack.c.l.b16 %v3432
      %v3772 = vunpack.c.h.b16 %v3432
      %v3773 = vunpack.c.l.b16 %v3433
      %v3774 = vunpack.c.h.b16 %v3433
      %v3775 = vunpack.c.l.b16 %v3434
      %v3776 = vunpack.c.l.b16 %v3435
      %v3777 = vunpack.c.h.b16 %v3435
      %v3778 = vunpack.c.l.b16 %v3436
      %v3779 = vunpack.c.h.b16 %v3436
      %v3780 = vunpack.c.l.b16 %v3437
      %v3781 = vunpack.c.h.b16 %v3437
      %v3782 = vunpack.c.l.b16 %v3438
      %v3783 = vunpack.c.h.b16 %v3438
      %v3784 = vunpack.c.l.b16 %v3439
      %v3785 = vunpack.c.l.b16 %v3440
      %v3786 = vunpack.c.h.b16 %v3440
      %v3787 = vunpack.c.l.b16 %v3441
      %v3788 = vunpack.c.h.b16 %v3441
      %v3789 = vunpack.c.l.b16 %v3442
      %v3790 = vunpack.c.h.b16 %v3442
      %v3791 = vunpack.c.l.b16 %v3443
      %v3792 = vunpack.c.h.b16 %v3443
      %v3793 = vunpack.c.l.b16 %v3444
      %v3794 = vunpack.c.l.b16 %v3445
      %v3795 = vunpack.c.h.b16 %v3445
      %v3796 = vunpack.c.l.b16 %v3446
      %v3797 = vunpack.c.h.b16 %v3446
      %v3798 = vunpack.c.l.b16 %v3447
      %v3799 = vunpack.c.h.b16 %v3447
      %v3800 = vunpack.c.l.b16 %v3448
      %v3801 = vunpack.c.h.b16 %v3448
      %v3802 = vunpack.c.l.b16 %v3449
      %v3803 = vunpack.c.l.b16 %v3450
      %v3804 = vunpack.c.h.b16 %v3450
      %v3805 = vunpack.c.l.b16 %v3451
      %v3806 = vunpack.c.h.b16 %v3451
      %v3807 = vunpack.c.l.b16 %v3452
      %v3808 = vunpack.c.h.b16 %v3452
      %v3809 = vunpack.c.l.b16 %v3453
      %v3810 = vunpack.c.h.b16 %v3453
      %v3811 = vunpack.c.l.b16 %v3454
      %v3812 = vunpack.c.l.b16 %v3455
      %v3813 = vunpack.c.h.b16 %v3455
      %v3814 = vunpack.c.l.b16 %v3456
      %v3815 = vunpack.c.h.b16 %v3456
      %v3816 = vunpack.c.l.b16 %v3457
      %v3817 = vunpack.c.h.b16 %v3457
      %v3818 = vunpack.c.l.b16 %v3458
      %v3819 = vunpack.c.h.b16 %v3458
      %v3820 = vunpack.c.l.b16 %v3459
      %v3821 = vunpack.c.l.b16 %v3460
      %v3822 = vunpack.c.h.b16 %v3460
      %v3823 = vunpack.c.l.b16 %v3461
      %v3824 = vunpack.c.h.b16 %v3461
      %v3825 = vunpack.c.l.b16 %v3462
      %v3826 = vunpack.c.h.b16 %v3462
      %v3827 = vunpack.c.l.b16 %v3463
      %v3828 = vunpack.c.h.b16 %v3463
      %v3829 = vunpack.c.l.b16 %v3464
      %v3830 = vunpack.c.l.b16 %v3465
      %v3831 = vunpack.c.h.b16 %v3465
      %v3832 = vunpack.c.l.b16 %v3466
      %v3833 = vunpack.c.h.b16 %v3466
      %v3834 = vunpack.c.l.b16 %v3467
      %v3835 = vunpack.c.h.b16 %v3467
      %v3836 = vunpack.c.l.b16 %v3468
      %v3837 = vunpack.c.h.b16 %v3468
      %v3838 = vunpack.c.l.b16 %v3469
      %v3839 = vpack.c.b16 %v3704, %v3695
      %v3840 = vpack.c.b16 %v3705, %v3696
      %v3841 = vpack.c.b16 %v3706, %v3697
      %v3842 = vpack.c.b16 %v3707, %v3698
      %v3843 = vpack.c.b16 %v3708, %v3699
      %v3844 = vpack.c.b16 %v3709, %v3700
      %v3845 = vpack.c.b16 %v3710, %v3701
      %v3846 = vpack.c.b16 %v3711, %v3702
      %v3847 = vpack.c.b16 %v3712, %v3703
      %v3848 = vpack.c.b16 %v3722, %v3713
      %v3849 = vpack.c.b16 %v3723, %v3714
      %v3850 = vpack.c.b16 %v3724, %v3715
      %v3851 = vpack.c.b16 %v3725, %v3716
      %v3852 = vpack.c.b16 %v3726, %v3717
      %v3853 = vpack.c.b16 %v3727, %v3718
      %v3854 = vpack.c.b16 %v3728, %v3719
      %v3855 = vpack.c.b16 %v3729, %v3720
      %v3856 = vpack.c.b16 %v3730, %v3721
      %v3857 = vpack.c.b16 %v3740, %v3731
      %v3858 = vpack.c.b16 %v3741, %v3732
      %v3859 = vpack.c.b16 %v3742, %v3733
      %v3860 = vpack.c.b16 %v3743, %v3734
      %v3861 = vpack.c.b16 %v3744, %v3735
      %v3862 = vpack.c.b16 %v3745, %v3736
      %v3863 = vpack.c.b16 %v3746, %v3737
      %v3864 = vpack.c.b16 %v3747, %v3738
      %v3865 = vpack.c.b16 %v3748, %v3739
      %v3866 = vpack.c.b16 %v3758, %v3749
      %v3867 = vpack.c.b16 %v3759, %v3750
      %v3868 = vpack.c.b16 %v3760, %v3751
      %v3869 = vpack.c.b16 %v3761, %v3752
      %v3870 = vpack.c.b16 %v3762, %v3753
      %v3871 = vpack.c.b16 %v3763, %v3754
      %v3872 = vpack.c.b16 %v3764, %v3755
      %v3873 = vpack.c.b16 %v3765, %v3756
      %v3874 = vpack.c.b16 %v3766, %v3757
      %v3875 = vpack.c.b16 %v3776, %v3767
      %v3876 = vpack.c.b16 %v3777, %v3768
      %v3877 = vpack.c.b16 %v3778, %v3769
      %v3878 = vpack.c.b16 %v3779, %v3770
      %v3879 = vpack.c.b16 %v3780, %v3771
      %v3880 = vpack.c.b16 %v3781, %v3772
      %v3881 = vpack.c.b16 %v3782, %v3773
      %v3882 = vpack.c.b16 %v3783, %v3774
      %v3883 = vpack.c.b16 %v3784, %v3775
      %v3884 = vpack.c.b16 %v3794, %v3785
      %v3885 = vpack.c.b16 %v3795, %v3786
      %v3886 = vpack.c.b16 %v3796, %v3787
      %v3887 = vpack.c.b16 %v3797, %v3788
      %v3888 = vpack.c.b16 %v3798, %v3789
      %v3889 = vpack.c.b16 %v3799, %v3790
      %v3890 = vpack.c.b16 %v3800, %v3791
      %v3891 = vpack.c.b16 %v3801, %v3792
      %v3892 = vpack.c.b16 %v3802, %v3793
      %v3893 = vpack.c.b16 %v3812, %v3803
      %v3894 = vpack.c.b16 %v3813, %v3804
      %v3895 = vpack.c.b16 %v3814, %v3805
      %v3896 = vpack.c.b16 %v3815, %v3806
      %v3897 = vpack.c.b16 %v3816, %v3807
      %v3898 = vpack.c.b16 %v3817, %v3808
      %v3899 = vpack.c.b16 %v3818, %v3809
      %v3900 = vpack.c.b16 %v3819, %v3810
      %v3901 = vpack.c.b16 %v3820, %v3811
      %v3902 = vpack.c.b16 %v3830, %v3821
      %v3903 = vpack.c.b16 %v3831, %v3822
      %v3904 = vpack.c.b16 %v3832, %v3823
      %v3905 = vpack.c.b16 %v3833, %v3824
      %v3906 = vpack.c.b16 %v3834, %v3825
      %v3907 = vpack.c.b16 %v3835, %v3826
      %v3908 = vpack.c.b16 %v3836, %v3827
      %v3909 = vpack.c.b16 %v3837, %v3828
      %v3910 = vpack.c.b16 %v3838, %v3829
      %v4127 = vunpack.c.l.b16 %v3471
      %v4128 = vunpack.c.l.b16 %v3472
      %v4129 = vunpack.c.l.b16 %v3473
      %v4130 = vunpack.c.l.b16 %v3474
      %v4131 = vunpack.c.l.b16 %v3475
      %v4132 = vunpack.c.l.b16 %v3476
      %v4133 = vunpack.c.l.b16 %v3477
      %v4134 = vunpack.c.l.b16 %v3478
      %v4135 = vunpack.c.l.b16 %v3479
      %v4136 = vunpack.c.l.b16 %v3480
      %v4137 = vunpack.c.l.b16 %v3481
      %v4138 = vunpack.c.l.b16 %v3482
      %v4139 = vunpack.c.l.b16 %v3483
      %v4140 = vunpack.c.l.b16 %v3484
      %v4141 = vunpack.c.l.b16 %v3485
      %v4142 = vunpack.c.l.b16 %v3486
      %v4143 = vunpack.c.l.b16 %v3487
      %v4144 = vunpack.c.l.b16 %v3488
      %v4145 = vunpack.c.l.b16 %v3489
      %v4146 = vunpack.c.l.b16 %v3490
      %v4147 = vunpack.c.l.b16 %v3491
      %v4148 = vunpack.c.l.b16 %v3492
      %v4149 = vunpack.c.l.b16 %v3493
      %v4150 = vunpack.c.l.b16 %v3494
      %v4151 = vunpack.c.l.b16 %v3495
      %v4152 = vunpack.c.l.b16 %v3496
      %v4153 = vunpack.c.l.b16 %v3497
      %v4154 = vunpack.c.l.b16 %v3498
      %v4155 = vunpack.c.l.b16 %v3499
      %v4156 = vunpack.c.l.b16 %v3500
      %v4157 = vunpack.c.l.b16 %v3501
      %v4158 = vunpack.c.l.b16 %v3502
      %v4159 = vunpack.c.l.b16 %v3503
      %v4160 = vunpack.c.l.b16 %v3504
      %v4161 = vunpack.c.l.b16 %v3505
      %v4162 = vunpack.c.l.b16 %v3506
      %v4163 = vunpack.c.l.b16 %v3507
      %v4164 = vunpack.c.l.b16 %v3508
      %v4165 = vunpack.c.l.b16 %v3509
      %v4166 = vunpack.c.l.b16 %v3510
      %v4167 = vunpack.c.l.b16 %v3511
      %v4168 = vunpack.c.l.b16 %v3512
      %v4169 = vunpack.c.l.b16 %v3513
      %v4170 = vunpack.c.l.b16 %v3514
      %v4171 = vunpack.c.l.b16 %v3515
      %v4172 = vunpack.c.l.b16 %v3516
      %v4173 = vunpack.c.l.b16 %v3517
      %v4174 = vunpack.c.l.b16 %v3518
      %v4175 = vunpack.c.l.b16 %v3519
      %v4176 = vunpack.c.l.b16 %v3520
      %v4177 = vunpack.c.l.b16 %v3521
      %v4178 = vunpack.c.l.b16 %v3522
      %v4179 = vunpack.c.l.b16 %v3523
      %v4180 = vunpack.c.l.b16 %v3524
      %v4181 = vunpack.c.l.b16 %v3525
      %v4182 = vunpack.c.l.b16 %v3526
      %v4183 = vunpack.c.l.b16 %v3527
      %v4184 = vunpack.c.l.b16 %v3528
      %v4185 = vunpack.c.l.b16 %v3529
      %v4186 = vunpack.c.l.b16 %v3530
      %v4187 = vunpack.c.l.b16 %v3531
      %v4188 = vunpack.c.l.b16 %v3532
      %v4189 = vunpack.c.l.b16 %v3533
      %v4190 = vunpack.c.l.b16 %v3534
      %v4191 = vunpack.c.l.b16 %v3535
      %v4192 = vunpack.c.l.b16 %v3536
      %v4193 = vunpack.c.l.b16 %v3537
      %v4194 = vunpack.c.l.b16 %v3538
      %v4195 = vunpack.c.l.b16 %v3539
      %v4196 = vunpack.c.l.b16 %v3540
      %v4197 = vunpack.c.l.b16 %v3541
      %v4198 = vunpack.c.l.b16 %v3542
      %v4199 = vunpack.c.l.b16 %v3543
      %v4200 = vunpack.c.l.b16 %v3544
      %v4201 = vunpack.c.l.b16 %v3545
      %v4202 = vunpack.c.l.b16 %v3546
      %v4203 = vunpack.c.l.b16 %v3547
      %v4204 = vunpack.c.l.b16 %v3548
      %v4205 = vunpack.c.l.b16 %v3549
      %v4206 = vunpack.c.l.b16 %v3550
      %v4207 = vunpack.c.l.b16 %v3551
      %v4208 = vunpack.c.l.b16 %v3552
      %v4209 = vunpack.c.l.b16 %v3553
      %v4210 = vunpack.c.l.b16 %v3554
      %v4211 = vunpack.c.l.b16 %v3555
      %v4212 = vunpack.c.l.b16 %v3556
      %v4213 = vunpack.c.l.b16 %v3557
      %v4214 = vunpack.c.l.b16 %v3558
      %v4215 = vunpack.c.l.b16 %v3559
      %v4216 = vunpack.c.l.b16 %v3560
      %v4217 = vunpack.c.l.b16 %v3561
      %v4218 = vunpack.c.l.b16 %v3562
      %v4219 = vunpack.c.l.b16 %v3563
      %v4220 = vunpack.c.l.b16 %v3564
      %v4221 = vunpack.c.l.b16 %v3565
      %v4222 = vunpack.c.l.b16 %v3566
      %v4223 = vunpack.c.l.b16 %v3567
      %v4224 = vunpack.c.l.b16 %v3568
      %v4225 = vunpack.c.l.b16 %v3569
      %v4226 = vunpack.c.l.b16 %v3570
      %v4227 = vunpack.c.l.b16 %v3571
      %v4228 = vunpack.c.l.b16 %v3572
      %v4229 = vunpack.c.l.b16 %v3573
      %v4230 = vunpack.c.l.b16 %v3574
      %v4231 = vunpack.c.l.b16 %v3575
      %v4232 = vunpack.c.l.b16 %v3576
      %v4233 = vunpack.c.l.b16 %v3577
      %v4234 = vunpack.c.l.b16 %v3578
      %v4235 = vunpack.c.l.b16 %v3579
      %v4236 = vunpack.c.l.b16 %v3580
      %v4237 = vunpack.c.l.b16 %v3581
      %v4238 = vunpack.c.l.b16 %v3582
      %v4239 = vunpack.c.l.b16 %v3583
      %v4240 = vunpack.c.l.b16 %v3584
      %v4241 = vunpack.c.l.b16 %v3585
      %v4242 = vunpack.c.l.b16 %v3586
      %v4243 = vunpack.c.l.b16 %v3587
      %v4244 = vunpack.c.l.b16 %v3588
      %v4245 = vunpack.c.l.b16 %v3589
      %v4246 = vunpack.c.l.b16 %v3590
      %v4247 = vunpack.c.l.b16 %v3591
      %v4248 = vunpack.c.l.b16 %v3592
      %v4249 = vunpack.c.l.b16 %v3593
      %v4250 = vunpack.c.l.b16 %v3594
      %v4251 = vunpack.c.l.b16 %v3595
      %v4252 = vunpack.c.l.b16 %v3596
      %v4253 = vunpack.c.l.b16 %v3597
      %v4254 = vunpack.c.l.b16 %v3598
      %v4255 = vunpack.c.l.b16 %v3599
      %v4256 = vunpack.c.l.b16 %v3600
      %v4257 = vunpack.c.l.b16 %v3601
      %v4258 = vunpack.c.l.b16 %v3602
      %v4259 = vunpack.c.l.b16 %v3603
      %v4260 = vunpack.c.l.b16 %v3604
      %v4261 = vunpack.c.l.b16 %v3605
      %v4262 = vunpack.c.l.b16 %v3606
      %v4263 = vunpack.c.l.b16 %v3607
      %v4264 = vunpack.c.l.b16 %v3608
      %v4265 = vunpack.c.l.b16 %v3609
      %v4266 = vunpack.c.l.b16 %v3610
      %v4267 = vunpack.c.l.b16 %v3611
      %v4268 = vunpack.c.l.b16 %v3612
      %v4269 = vunpack.c.l.b16 %v3613
      %v4270 = vunpack.c.l.b16 %v3614
      %v4271 = vpack.c.b16 %v4128, %v4127
      %v4272 = vpack.c.b16 %v4130, %v4129
      %v4273 = vpack.c.b16 %v4132, %v4131
      %v4274 = vpack.c.b16 %v4134, %v4133
      %v4275 = vpack.c.b16 %v4136, %v4135
      %v4276 = vpack.c.b16 %v4138, %v4137
      %v4277 = vpack.c.b16 %v4140, %v4139
      %v4278 = vpack.c.b16 %v4142, %v4141
      %v4279 = vpack.c.b16 %v4144, %v4143
      %v4280 = vpack.c.b16 %v4146, %v4145
      %v4281 = vpack.c.b16 %v4148, %v4147
      %v4282 = vpack.c.b16 %v4150, %v4149
      %v4283 = vpack.c.b16 %v4152, %v4151
      %v4284 = vpack.c.b16 %v4154, %v4153
      %v4285 = vpack.c.b16 %v4156, %v4155
      %v4286 = vpack.c.b16 %v4158, %v4157
      %v4287 = vpack.c.b16 %v4160, %v4159
      %v4288 = vpack.c.b16 %v4162, %v4161
      %v4289 = vpack.c.b16 %v4164, %v4163
      %v4290 = vpack.c.b16 %v4166, %v4165
      %v4291 = vpack.c.b16 %v4168, %v4167
      %v4292 = vpack.c.b16 %v4170, %v4169
      %v4293 = vpack.c.b16 %v4172, %v4171
      %v4294 = vpack.c.b16 %v4174, %v4173
      %v4295 = vpack.c.b16 %v4176, %v4175
      %v4296 = vpack.c.b16 %v4178, %v4177
      %v4297 = vpack.c.b16 %v4180, %v4179
      %v4298 = vpack.c.b16 %v4182, %v4181
      %v4299 = vpack.c.b16 %v4184, %v4183
      %v4300 = vpack.c.b16 %v4186, %v4185
      %v4301 = vpack.c.b16 %v4188, %v4187
      %v4302 = vpack.c.b16 %v4190, %v4189
      %v4303 = vpack.c.b16 %v4192, %v4191
      %v4304 = vpack.c.b16 %v4194, %v4193
      %v4305 = vpack.c.b16 %v4196, %v4195
      %v4306 = vpack.c.b16 %v4198, %v4197
      %v4307 = vpack.c.b16 %v4200, %v4199
      %v4308 = vpack.c.b16 %v4202, %v4201
      %v4309 = vpack.c.b16 %v4204, %v4203
      %v4310 = vpack.c.b16 %v4206, %v4205
      %v4311 = vpack.c.b16 %v4208, %v4207
      %v4312 = vpack.c.b16 %v4210, %v4209
      %v4313 = vpack.c.b16 %v4212, %v4211
      %v4314 = vpack.c.b16 %v4214, %v4213
      %v4315 = vpack.c.b16 %v4216, %v4215
      %v4316 = vpack.c.b16 %v4218, %v4217
      %v4317 = vpack.c.b16 %v4220, %v4219
      %v4318 = vpack.c.b16 %v4222, %v4221
      %v4319 = vpack.c.b16 %v4224, %v4223
      %v4320 = vpack.c.b16 %v4226, %v4225
      %v4321 = vpack.c.b16 %v4228, %v4227
      %v4322 = vpack.c.b16 %v4230, %v4229
      %v4323 = vpack.c.b16 %v4232, %v4231
      %v4324 = vpack.c.b16 %v4234, %v4233
      %v4325 = vpack.c.b16 %v4236, %v4235
      %v4326 = vpack.c.b16 %v4238, %v4237
      %v4327 = vpack.c.b16 %v4240, %v4239
      %v4328 = vpack.c.b16 %v4242, %v4241
      %v4329 = vpack.c.b16 %v4244, %v4243
      %v4330 = vpack.c.b16 %v4246, %v4245
      %v4331 = vpack.c.b16 %v4248, %v4247
      %v4332 = vpack.c.b16 %v4250, %v4249
      %v4333 = vpack.c.b16 %v4252, %v4251
      %v4334 = vpack.c.b16 %v4254, %v4253
      %v4335 = vpack.c.b16 %v4256, %v4255
      %v4336 = vpack.c.b16 %v4258, %v4257
      %v4337 = vpack.c.b16 %v4260, %v4259
      %v4338 = vpack.c.b16 %v4262, %v4261
      %v4339 = vpack.c.b16 %v4264, %v4263
      %v4340 = vpack.c.b16 %v4266, %v4265
      %v4341 = vpack.c.b16 %v4268, %v4267
      %v4342 = vpack.c.b16 %v4270, %v4269
      %4415 = vmatprep.subr.bf16.mxu0 0
      %4416 = vmatpush1.bf16.msra.mxu0 %v4278
      %4417 = vmatprep.subr.bf16.mxu0 0
      %4418 = vmatpush1.bf16.msra.mxu0 %v4277
      %4419 = vmatprep.subr.bf16.mxu0 0
      %4420 = vmatpush1.bf16.msra.mxu0 %v4276
      %4421 = vmatprep.subr.bf16.mxu0 0
      %4422 = vmatpush1.bf16.msra.mxu0 %v4275
      %4423 = vmatprep.subr.bf16.mxu0 0
      %4424 = vmatpush1.bf16.msra.mxu0 %v4274
      %4425 = vmatprep.subr.bf16.mxu0 0
      %4426 = vmatpush1.bf16.msra.mxu0 %v4273
      %4427 = vmatprep.subr.bf16.mxu0 0
      %4428 = vmatpush1.bf16.msra.mxu0 %v4272
      %4429 = vmatprep.subr.bf16.mxu0 0
      %4430 = vmatpush1.bf16.msra.mxu0 %v4271
      %4431 = vmatprep.subr.bf16.mxu0 0
      %4432 = vmatpush2.bf16.msra.mxu0 %v4286
      %4433 = vmatprep.subr.bf16.mxu0 0
      %4434 = vmatpush2.bf16.msra.mxu0 %v4285
      %4435 = vmatprep.subr.bf16.mxu0 0
      %4436 = vmatpush2.bf16.msra.mxu0 %v4284
      %4437 = vmatprep.subr.bf16.mxu0 0
      %4438 = vmatpush2.bf16.msra.mxu0 %v4283
      %4439 = vmatprep.subr.bf16.mxu0 0
      %4440 = vmatpush2.bf16.msra.mxu0 %v4282
      %4441 = vmatprep.subr.bf16.mxu0 0
      %4442 = vmatpush2.bf16.msra.mxu0 %v4281
      %4443 = vmatprep.subr.bf16.mxu0 0
      %4444 = vmatpush2.bf16.msra.mxu0 %v4280
      %4445 = vmatprep.subr.bf16.mxu0 0
      %4446 = vmatpush2.bf16.msra.mxu0 %v4279
      %4447 = vmatprep.mubr.bf16.mxu0 %v3840
      %4448 = vmatmul.mubr.bf16.gmra.mxu0 %v3839
      %v4449 = vpop.f32.mrf.mxu0
      %v4450 = vadd.f32 0.0, %v4449
      %v4451 = vpop.f32.mrf.mxu0
      %v4452 = vpop.f32.mrf.mxu0
      %v4453 = vadd.f32 0.0, %v4452
      %v4454 = vpop.f32.mrf.mxu0
      %4455 = vmatprep.mubr.bf16.mxu0 %v3849
      %4456 = vmatmul.mubr.bf16.gmra.mxu0 %v3848
      %v4457 = vpop.f32.mrf.mxu0
      %v4458 = vadd.f32 0.0, %v4457
      %v4459 = vpop.f32.mrf.mxu0
      %v4460 = vpop.f32.mrf.mxu0
      %v4461 = vadd.f32 0.0, %v4460
      %v4462 = vpop.f32.mrf.mxu0
      %4463 = vmatprep.mubr.bf16.mxu0 %v3858
      %4464 = vmatmul.mubr.bf16.gmra.mxu0 %v3857
      %v4465 = vpop.f32.mrf.mxu0
      %v4466 = vadd.f32 0.0, %v4465
      %v4467 = vpop.f32.mrf.mxu0
      %v4468 = vpop.f32.mrf.mxu0
      %v4469 = vadd.f32 0.0, %v4468
      %v4470 = vpop.f32.mrf.mxu0
      %4471 = vmatprep.mubr.bf16.mxu0 %v3867
      %4472 = vmatmul.mubr.bf16.gmra.mxu0 %v3866
      %v4473 = vpop.f32.mrf.mxu0
      %v4474 = vadd.f32 0.0, %v4473
      %v4475 = vpop.f32.mrf.mxu0
      %v4476 = vpop.f32.mrf.mxu0
      %v4477 = vadd.f32 0.0, %v4476
      %v4478 = vpop.f32.mrf.mxu0
      %4479 = vmatprep.mubr.bf16.mxu0 %v3876
      %4480 = vmatmul.mubr.bf16.gmra.mxu0 %v3875
      %v4481 = vpop.f32.mrf.mxu0
      %v4482 = vadd.f32 0.0, %v4481
      %v4483 = vpop.f32.mrf.mxu0
      %v4484 = vpop.f32.mrf.mxu0
      %v4485 = vadd.f32 0.0, %v4484
      %v4486 = vpop.f32.mrf.mxu0
      %4487 = vmatprep.mubr.bf16.mxu0 %v3885
      %4488 = vmatmul.mubr.bf16.gmra.mxu0 %v3884
      %v4489 = vpop.f32.mrf.mxu0
      %v4490 = vadd.f32 0.0, %v4489
      %v4491 = vpop.f32.mrf.mxu0
      %v4492 = vpop.f32.mrf.mxu0
      %v4493 = vadd.f32 0.0, %v4492
      %v4494 = vpop.f32.mrf.mxu0
      %4495 = vmatprep.mubr.bf16.mxu0 %v3894
      %4496 = vmatmul.mubr.bf16.gmra.mxu0 %v3893
      %v4497 = vpop.f32.mrf.mxu0
      %v4498 = vadd.f32 0.0, %v4497
      %v4499 = vpop.f32.mrf.mxu0
      %v4500 = vpop.f32.mrf.mxu0
      %v4501 = vadd.f32 0.0, %v4500
      %v4502 = vpop.f32.mrf.mxu0
      %4503 = vmatprep.mubr.bf16.mxu0 %v3903
      %4504 = vmatmul.mubr.bf16.gmra.mxu0 %v3902
      %v4505 = vpop.f32.mrf.mxu0
      %v4506 = vadd.f32 0.0, %v4505
      %v4507 = vpop.f32.mrf.mxu0
      %v4508 = vpop.f32.mrf.mxu0
      %v4509 = vadd.f32 0.0, %v4508
      %v4510 = vpop.f32.mrf.mxu0
      %4511 = vdwg.mxu0
      %4512 = vmatprep.subr.bf16.mxu0 0
      %4513 = vmatpush1.bf16.msra.mxu0 %v4294
      %4514 = vmatprep.subr.bf16.mxu0 0
      %4515 = vmatpush1.bf16.msra.mxu0 %v4293
      %4516 = vmatprep.subr.bf16.mxu0 0
      %4517 = vmatpush1.bf16.msra.mxu0 %v4292
      %4518 = vmatprep.subr.bf16.mxu0 0
      %4519 = vmatpush1.bf16.msra.mxu0 %v4291
      %4520 = vmatprep.subr.bf16.mxu0 0
      %4521 = vmatpush1.bf16.msra.mxu0 %v4290
      %4522 = vmatprep.subr.bf16.mxu0 0
      %4523 = vmatpush1.bf16.msra.mxu0 %v4289
      %4524 = vmatprep.subr.bf16.mxu0 0
      %4525 = vmatpush1.bf16.msra.mxu0 %v4288
      %4526 = vmatprep.subr.bf16.mxu0 0
      %4527 = vmatpush1.bf16.msra.mxu0 %v4287
      %4528 = vmatprep.subr.bf16.mxu0 0
      %4529 = vmatpush2.bf16.msra.mxu0 %v4302
      %4530 = vmatprep.subr.bf16.mxu0 0
      %4531 = vmatpush2.bf16.msra.mxu0 %v4301
      %4532 = vmatprep.subr.bf16.mxu0 0
      %4533 = vmatpush2.bf16.msra.mxu0 %v4300
      %4534 = vmatprep.subr.bf16.mxu0 0
      %4535 = vmatpush2.bf16.msra.mxu0 %v4299
      %4536 = vmatprep.subr.bf16.mxu0 0
      %4537 = vmatpush2.bf16.msra.mxu0 %v4298
      %4538 = vmatprep.subr.bf16.mxu0 0
      %4539 = vmatpush2.bf16.msra.mxu0 %v4297
      %4540 = vmatprep.subr.bf16.mxu0 0
      %4541 = vmatpush2.bf16.msra.mxu0 %v4296
      %4542 = vmatprep.subr.bf16.mxu0 0
      %4543 = vmatpush2.bf16.msra.mxu0 %v4295
      %4544 = vmatprep.mubr.bf16.mxu0 %v3842
      %4545 = vmatmul.mubr.bf16.gmra.mxu0 %v3841
      %v4546 = vpop.f32.mrf.mxu0
      %v4547 = vadd.f32 %v4450, %v4546
      %v4548 = vpop.f32.mrf.mxu0
      %v4549 = vpop.f32.mrf.mxu0
      %v4550 = vadd.f32 %v4453, %v4549
      %v4551 = vpop.f32.mrf.mxu0
      %4552 = vmatprep.mubr.bf16.mxu0 %v3851
      %4553 = vmatmul.mubr.bf16.gmra.mxu0 %v3850
      %v4554 = vpop.f32.mrf.mxu0
      %v4555 = vadd.f32 %v4458, %v4554
      %v4556 = vpop.f32.mrf.mxu0
      %v4557 = vpop.f32.mrf.mxu0
      %v4558 = vadd.f32 %v4461, %v4557
      %v4559 = vpop.f32.mrf.mxu0
      %4560 = vmatprep.mubr.bf16.mxu0 %v3860
      %4561 = vmatmul.mubr.bf16.gmra.mxu0 %v3859
      %v4562 = vpop.f32.mrf.mxu0
      %v4563 = vadd.f32 %v4466, %v4562
      %v4564 = vpop.f32.mrf.mxu0
      %v4565 = vpop.f32.mrf.mxu0
      %v4566 = vadd.f32 %v4469, %v4565
      %v4567 = vpop.f32.mrf.mxu0
      %4568 = vmatprep.mubr.bf16.mxu0 %v3869
      %4569 = vmatmul.mubr.bf16.gmra.mxu0 %v3868
      %v4570 = vpop.f32.mrf.mxu0
      %v4571 = vadd.f32 %v4474, %v4570
      %v4572 = vpop.f32.mrf.mxu0
      %v4573 = vpop.f32.mrf.mxu0
      %v4574 = vadd.f32 %v4477, %v4573
      %v4575 = vpop.f32.mrf.mxu0
      %4576 = vmatprep.mubr.bf16.mxu0 %v3878
      %4577 = vmatmul.mubr.bf16.gmra.mxu0 %v3877
      %v4578 = vpop.f32.mrf.mxu0
      %v4579 = vadd.f32 %v4482, %v4578
      %v4580 = vpop.f32.mrf.mxu0
      %v4581 = vpop.f32.mrf.mxu0
      %v4582 = vadd.f32 %v4485, %v4581
      %v4583 = vpop.f32.mrf.mxu0
      %4584 = vmatprep.mubr.bf16.mxu0 %v3887
      %4585 = vmatmul.mubr.bf16.gmra.mxu0 %v3886
      %v4586 = vpop.f32.mrf.mxu0
      %v4587 = vadd.f32 %v4490, %v4586
      %v4588 = vpop.f32.mrf.mxu0
      %v4589 = vpop.f32.mrf.mxu0
      %v4590 = vadd.f32 %v4493, %v4589
      %v4591 = vpop.f32.mrf.mxu0
      %4592 = vmatprep.mubr.bf16.mxu0 %v3896
      %4593 = vmatmul.mubr.bf16.gmra.mxu0 %v3895
      %v4594 = vpop.f32.mrf.mxu0
      %v4595 = vadd.f32 %v4498, %v4594
      %v4596 = vpop.f32.mrf.mxu0
      %v4597 = vpop.f32.mrf.mxu0
      %v4598 = vadd.f32 %v4501, %v4597
      %v4599 = vpop.f32.mrf.mxu0
      %4600 = vmatprep.mubr.bf16.mxu0 %v3905
      %4601 = vmatmul.mubr.bf16.gmra.mxu0 %v3904
      %v4602 = vpop.f32.mrf.mxu0
      %v4603 = vadd.f32 %v4506, %v4602
      %v4604 = vpop.f32.mrf.mxu0
      %v4605 = vpop.f32.mrf.mxu0
      %v4606 = vadd.f32 %v4509, %v4605
      %v4607 = vpop.f32.mrf.mxu0
      %4608 = vdwg.mxu0
      %4609 = vmatprep.subr.bf16.mxu0 0
      %4610 = vmatpush1.bf16.msra.mxu0 %v4310
      %4611 = vmatprep.subr.bf16.mxu0 0
      %4612 = vmatpush1.bf16.msra.mxu0 %v4309
      %4613 = vmatprep.subr.bf16.mxu0 0
      %4614 = vmatpush1.bf16.msra.mxu0 %v4308
      %4615 = vmatprep.subr.bf16.mxu0 0
      %4616 = vmatpush1.bf16.msra.mxu0 %v4307
      %4617 = vmatprep.subr.bf16.mxu0 0
      %4618 = vmatpush1.bf16.msra.mxu0 %v4306
      %4619 = vmatprep.subr.bf16.mxu0 0
      %4620 = vmatpush1.bf16.msra.mxu0 %v4305
      %4621 = vmatprep.subr.bf16.mxu0 0
      %4622 = vmatpush1.bf16.msra.mxu0 %v4304
      %4623 = vmatprep.subr.bf16.mxu0 0
      %4624 = vmatpush1.bf16.msra.mxu0 %v4303
      %4625 = vmatprep.subr.bf16.mxu0 0
      %4626 = vmatpush2.bf16.msra.mxu0 %v4318
      %4627 = vmatprep.subr.bf16.mxu0 0
      %4628 = vmatpush2.bf16.msra.mxu0 %v4317
      %4629 = vmatprep.subr.bf16.mxu0 0
      %4630 = vmatpush2.bf16.msra.mxu0 %v4316
      %4631 = vmatprep.subr.bf16.mxu0 0
      %4632 = vmatpush2.bf16.msra.mxu0 %v4315
      %4633 = vmatprep.subr.bf16.mxu0 0
      %4634 = vmatpush2.bf16.msra.mxu0 %v4314
      %4635 = vmatprep.subr.bf16.mxu0 0
      %4636 = vmatpush2.bf16.msra.mxu0 %v4313
      %4637 = vmatprep.subr.bf16.mxu0 0
      %4638 = vmatpush2.bf16.msra.mxu0 %v4312
      %4639 = vmatprep.subr.bf16.mxu0 0
      %4640 = vmatpush2.bf16.msra.mxu0 %v4311
      %4641 = vmatprep.mubr.bf16.mxu0 %v3844
      %4642 = vmatmul.mubr.bf16.gmra.mxu0 %v3843
      %v4643 = vpop.f32.mrf.mxu0
      %v4644 = vadd.f32 %v4547, %v4643
      %v4645 = vpop.f32.mrf.mxu0
      %v4646 = vpop.f32.mrf.mxu0
      %v4647 = vadd.f32 %v4550, %v4646
      %v4648 = vpop.f32.mrf.mxu0
      %4649 = vmatprep.mubr.bf16.mxu0 %v3853
      %4650 = vmatmul.mubr.bf16.gmra.mxu0 %v3852
      %v4651 = vpop.f32.mrf.mxu0
      %v4652 = vadd.f32 %v4555, %v4651
      %v4653 = vpop.f32.mrf.mxu0
      %v4654 = vpop.f32.mrf.mxu0
      %v4655 = vadd.f32 %v4558, %v4654
      %v4656 = vpop.f32.mrf.mxu0
      %4657 = vmatprep.mubr.bf16.mxu0 %v3862
      %4658 = vmatmul.mubr.bf16.gmra.mxu0 %v3861
      %v4659 = vpop.f32.mrf.mxu0
      %v4660 = vadd.f32 %v4563, %v4659
      %v4661 = vpop.f32.mrf.mxu0
      %v4662 = vpop.f32.mrf.mxu0
      %v4663 = vadd.f32 %v4566, %v4662
      %v4664 = vpop.f32.mrf.mxu0
      %4665 = vmatprep.mubr.bf16.mxu0 %v3871
      %4666 = vmatmul.mubr.bf16.gmra.mxu0 %v3870
      %v4667 = vpop.f32.mrf.mxu0
      %v4668 = vadd.f32 %v4571, %v4667
      %v4669 = vpop.f32.mrf.mxu0
      %v4670 = vpop.f32.mrf.mxu0
      %v4671 = vadd.f32 %v4574, %v4670
      %v4672 = vpop.f32.mrf.mxu0
      %4673 = vmatprep.mubr.bf16.mxu0 %v3880
      %4674 = vmatmul.mubr.bf16.gmra.mxu0 %v3879
      %v4675 = vpop.f32.mrf.mxu0
      %v4676 = vadd.f32 %v4579, %v4675
      %v4677 = vpop.f32.mrf.mxu0
      %v4678 = vpop.f32.mrf.mxu0
      %v4679 = vadd.f32 %v4582, %v4678
      %v4680 = vpop.f32.mrf.mxu0
      %4681 = vmatprep.mubr.bf16.mxu0 %v3889
      %4682 = vmatmul.mubr.bf16.gmra.mxu0 %v3888
      %v4683 = vpop.f32.mrf.mxu0
      %v4684 = vadd.f32 %v4587, %v4683
      %v4685 = vpop.f32.mrf.mxu0
      %v4686 = vpop.f32.mrf.mxu0
      %v4687 = vadd.f32 %v4590, %v4686
      %v4688 = vpop.f32.mrf.mxu0
      %4689 = vmatprep.mubr.bf16.mxu0 %v3898
      %4690 = vmatmul.mubr.bf16.gmra.mxu0 %v3897
      %v4691 = vpop.f32.mrf.mxu0
      %v4692 = vadd.f32 %v4595, %v4691
      %v4693 = vpop.f32.mrf.mxu0
      %v4694 = vpop.f32.mrf.mxu0
      %v4695 = vadd.f32 %v4598, %v4694
      %v4696 = vpop.f32.mrf.mxu0
      %4697 = vmatprep.mubr.bf16.mxu0 %v3907
      %4698 = vmatmul.mubr.bf16.gmra.mxu0 %v3906
      %v4699 = vpop.f32.mrf.mxu0
      %v4700 = vadd.f32 %v4603, %v4699
      %v4701 = vpop.f32.mrf.mxu0
      %v4702 = vpop.f32.mrf.mxu0
      %v4703 = vadd.f32 %v4606, %v4702
      %v4704 = vpop.f32.mrf.mxu0
      %4705 = vdwg.mxu0
      %4706 = vmatprep.subr.bf16.mxu0 0
      %4707 = vmatpush1.bf16.msra.mxu0 %v4326
      %4708 = vmatprep.subr.bf16.mxu0 0
      %4709 = vmatpush1.bf16.msra.mxu0 %v4325
      %4710 = vmatprep.subr.bf16.mxu0 0
      %4711 = vmatpush1.bf16.msra.mxu0 %v4324
      %4712 = vmatprep.subr.bf16.mxu0 0
      %4713 = vmatpush1.bf16.msra.mxu0 %v4323
      %4714 = vmatprep.subr.bf16.mxu0 0
      %4715 = vmatpush1.bf16.msra.mxu0 %v4322
      %4716 = vmatprep.subr.bf16.mxu0 0
      %4717 = vmatpush1.bf16.msra.mxu0 %v4321
      %4718 = vmatprep.subr.bf16.mxu0 0
      %4719 = vmatpush1.bf16.msra.mxu0 %v4320
      %4720 = vmatprep.subr.bf16.mxu0 0
      %4721 = vmatpush1.bf16.msra.mxu0 %v4319
      %4722 = vmatprep.subr.bf16.mxu0 0
      %4723 = vmatpush2.bf16.msra.mxu0 %v4334
      %4724 = vmatprep.subr.bf16.mxu0 0
      %4725 = vmatpush2.bf16.msra.mxu0 %v4333
      %4726 = vmatprep.subr.bf16.mxu0 0
      %4727 = vmatpush2.bf16.msra.mxu0 %v4332
      %4728 = vmatprep.subr.bf16.mxu0 0
      %4729 = vmatpush2.bf16.msra.mxu0 %v4331
      %4730 = vmatprep.subr.bf16.mxu0 0
      %4731 = vmatpush2.bf16.msra.mxu0 %v4330
      %4732 = vmatprep.subr.bf16.mxu0 0
      %4733 = vmatpush2.bf16.msra.mxu0 %v4329
      %4734 = vmatprep.subr.bf16.mxu0 0
      %4735 = vmatpush2.bf16.msra.mxu0 %v4328
      %4736 = vmatprep.subr.bf16.mxu0 0
      %4737 = vmatpush2.bf16.msra.mxu0 %v4327
      %4738 = vmatprep.mubr.bf16.mxu0 %v3846
      %4739 = vmatmul.mubr.bf16.gmra.mxu0 %v3845
      %v4740 = vpop.f32.mrf.mxu0
      %v4741 = vadd.f32 %v4644, %v4740
      %v4742 = vpop.f32.mrf.mxu0
      %v4743 = vpop.f32.mrf.mxu0
      %v4744 = vadd.f32 %v4647, %v4743
      %v4745 = vpop.f32.mrf.mxu0
      %4746 = vmatprep.mubr.bf16.mxu0 %v3855
      %4747 = vmatmul.mubr.bf16.gmra.mxu0 %v3854
      %v4748 = vpop.f32.mrf.mxu0
      %v4749 = vadd.f32 %v4652, %v4748
      %v4750 = vpop.f32.mrf.mxu0
      %v4751 = vpop.f32.mrf.mxu0
      %v4752 = vadd.f32 %v4655, %v4751
      %v4753 = vpop.f32.mrf.mxu0
      %4754 = vmatprep.mubr.bf16.mxu0 %v3864
      %4755 = vmatmul.mubr.bf16.gmra.mxu0 %v3863
      %v4756 = vpop.f32.mrf.mxu0
      %v4757 = vadd.f32 %v4660, %v4756
      %v4758 = vpop.f32.mrf.mxu0
      %v4759 = vpop.f32.mrf.mxu0
      %v4760 = vadd.f32 %v4663, %v4759
      %v4761 = vpop.f32.mrf.mxu0
      %4762 = vmatprep.mubr.bf16.mxu0 %v3873
      %4763 = vmatmul.mubr.bf16.gmra.mxu0 %v3872
      %v4764 = vpop.f32.mrf.mxu0
      %v4765 = vadd.f32 %v4668, %v4764
      %v4766 = vpop.f32.mrf.mxu0
      %v4767 = vpop.f32.mrf.mxu0
      %v4768 = vadd.f32 %v4671, %v4767
      %v4769 = vpop.f32.mrf.mxu0
      %4770 = vmatprep.mubr.bf16.mxu0 %v3882
      %4771 = vmatmul.mubr.bf16.gmra.mxu0 %v3881
      %v4772 = vpop.f32.mrf.mxu0
      %v4773 = vadd.f32 %v4676, %v4772
      %v4774 = vpop.f32.mrf.mxu0
      %v4775 = vpop.f32.mrf.mxu0
      %v4776 = vadd.f32 %v4679, %v4775
      %v4777 = vpop.f32.mrf.mxu0
      %4778 = vmatprep.mubr.bf16.mxu0 %v3891
      %4779 = vmatmul.mubr.bf16.gmra.mxu0 %v3890
      %v4780 = vpop.f32.mrf.mxu0
      %v4781 = vadd.f32 %v4684, %v4780
      %v4782 = vpop.f32.mrf.mxu0
      %v4783 = vpop.f32.mrf.mxu0
      %v4784 = vadd.f32 %v4687, %v4783
      %v4785 = vpop.f32.mrf.mxu0
      %4786 = vmatprep.mubr.bf16.mxu0 %v3900
      %4787 = vmatmul.mubr.bf16.gmra.mxu0 %v3899
      %v4788 = vpop.f32.mrf.mxu0
      %v4789 = vadd.f32 %v4692, %v4788
      %v4790 = vpop.f32.mrf.mxu0
      %v4791 = vpop.f32.mrf.mxu0
      %v4792 = vadd.f32 %v4695, %v4791
      %v4793 = vpop.f32.mrf.mxu0
      %4794 = vmatprep.mubr.bf16.mxu0 %v3909
      %4795 = vmatmul.mubr.bf16.gmra.mxu0 %v3908
      %v4796 = vpop.f32.mrf.mxu0
      %v4797 = vadd.f32 %v4700, %v4796
      %v4798 = vpop.f32.mrf.mxu0
      %v4799 = vpop.f32.mrf.mxu0
      %v4800 = vadd.f32 %v4703, %v4799
      %v4801 = vpop.f32.mrf.mxu0
      %4802 = vdwg.mxu0
      %4803 = vmatprep.subr.bf16.mxu0 0
      %4804 = vmatpush1.bf16.msra.mxu0 %v4342
      %4805 = vmatprep.subr.bf16.mxu0 0
      %4806 = vmatpush1.bf16.msra.mxu0 %v4341
      %4807 = vmatprep.subr.bf16.mxu0 0
      %4808 = vmatpush1.bf16.msra.mxu0 %v4340
      %4809 = vmatprep.subr.bf16.mxu0 0
      %4810 = vmatpush1.bf16.msra.mxu0 %v4339
      %4811 = vmatprep.subr.bf16.mxu0 0
      %4812 = vmatpush1.bf16.msra.mxu0 %v4338
      %4813 = vmatprep.subr.bf16.mxu0 0
      %4814 = vmatpush1.bf16.msra.mxu0 %v4337
      %4815 = vmatprep.subr.bf16.mxu0 0
      %4816 = vmatpush1.bf16.msra.mxu0 %v4336
      %4817 = vmatprep.subr.bf16.mxu0 0
      %4818 = vmatpush1.bf16.msra.mxu0 %v4335
      %4819 = vmatprep.subr.bf16.mxu0 0
      %4820 = vmatpush2.bf16.msra.mxu0 0
      %4821 = vmatprep.subr.bf16.mxu0 0
      %4822 = vmatpush2.bf16.msra.mxu0 0
      %4823 = vmatprep.subr.bf16.mxu0 0
      %4824 = vmatpush2.bf16.msra.mxu0 0
      %4825 = vmatprep.subr.bf16.mxu0 0
      %4826 = vmatpush2.bf16.msra.mxu0 0
      %4827 = vmatprep.subr.bf16.mxu0 0
      %4828 = vmatpush2.bf16.msra.mxu0 0
      %4829 = vmatprep.subr.bf16.mxu0 0
      %4830 = vmatpush2.bf16.msra.mxu0 0
      %4831 = vmatprep.subr.bf16.mxu0 0
      %4832 = vmatpush2.bf16.msra.mxu0 0
      %4833 = vmatprep.subr.bf16.mxu0 0
      %4834 = vmatpush2.bf16.msra.mxu0 0
      %4835 = vmatprep.mubr.bf16.mxu0 0
      %4836 = vmatmul.mubr.bf16.gmra.mxu0 %v3847
      %v4837 = vpop.f32.mrf.mxu0
      %v4838 = vadd.f32 %v4741, %v4837
      %v4839 = vpop.f32.mrf.mxu0
      %v4840 = vpop.f32.mrf.mxu0
      %v4841 = vadd.f32 %v4744, %v4840
      %v4842 = vpop.f32.mrf.mxu0
      %4843 = vmatprep.mubr.bf16.mxu0 0
      %4844 = vmatmul.mubr.bf16.gmra.mxu0 %v3856
      %v4845 = vpop.f32.mrf.mxu0
      %v4846 = vadd.f32 %v4749, %v4845
      %v4847 = vpop.f32.mrf.mxu0
      %v4848 = vpop.f32.mrf.mxu0
      %v4849 = vadd.f32 %v4752, %v4848
      %v4850 = vpop.f32.mrf.mxu0
      %4851 = vmatprep.mubr.bf16.mxu0 0
      %4852 = vmatmul.mubr.bf16.gmra.mxu0 %v3865
      %v4853 = vpop.f32.mrf.mxu0
      %v4854 = vadd.f32 %v4757, %v4853
      %v4855 = vpop.f32.mrf.mxu0
      %v4856 = vpop.f32.mrf.mxu0
      %v4857 = vadd.f32 %v4760, %v4856
      %v4858 = vpop.f32.mrf.mxu0
      %4859 = vmatprep.mubr.bf16.mxu0 0
      %4860 = vmatmul.mubr.bf16.gmra.mxu0 %v3874
      %v4861 = vpop.f32.mrf.mxu0
      %v4862 = vadd.f32 %v4765, %v4861
      %v4863 = vpop.f32.mrf.mxu0
      %v4864 = vpop.f32.mrf.mxu0
      %v4865 = vadd.f32 %v4768, %v4864
      %v4866 = vpop.f32.mrf.mxu0
      %4867 = vmatprep.mubr.bf16.mxu0 0
      %4868 = vmatmul.mubr.bf16.gmra.mxu0 %v3883
      %v4869 = vpop.f32.mrf.mxu0
      %v4870 = vadd.f32 %v4773, %v4869
      %v4871 = vpop.f32.mrf.mxu0
      %v4872 = vpop.f32.mrf.mxu0
      %v4873 = vadd.f32 %v4776, %v4872
      %v4874 = vpop.f32.mrf.mxu0
      %4875 = vmatprep.mubr.bf16.mxu0 0
      %4876 = vmatmul.mubr.bf16.gmra.mxu0 %v3892
      %v4877 = vpop.f32.mrf.mxu0
      %v4878 = vadd.f32 %v4781, %v4877
      %v4879 = vpop.f32.mrf.mxu0
      %v4880 = vpop.f32.mrf.mxu0
      %v4881 = vadd.f32 %v4784, %v4880
      %v4882 = vpop.f32.mrf.mxu0
      %4883 = vmatprep.mubr.bf16.mxu0 0
      %4884 = vmatmul.mubr.bf16.gmra.mxu0 %v3901
      %v4885 = vpop.f32.mrf.mxu0
      %v4886 = vadd.f32 %v4789, %v4885
      %v4887 = vpop.f32.mrf.mxu0
      %v4888 = vpop.f32.mrf.mxu0
      %v4889 = vadd.f32 %v4792, %v4888
      %v4890 = vpop.f32.mrf.mxu0
      %4891 = vmatprep.mubr.bf16.mxu0 0
      %4892 = vmatmul.mubr.bf16.gmra.mxu0 %v3910
      %v4893 = vpop.f32.mrf.mxu0
      %v4894 = vadd.f32 %v4797, %v4893
      %v4895 = vpop.f32.mrf.mxu0
      %v4896 = vpop.f32.mrf.mxu0
      %v4897 = vadd.f32 %v4800, %v4896
      %v4898 = vpop.f32.mrf.mxu0
      %4899 = vdwg.mxu0
      %v4900 = vadd.f32 %v3374, %v4838
      %v4901 = vadd.f32 %v3375, %v4841
      %v4902 = vadd.f32 %v3376, %v4846
      %v4903 = vadd.f32 %v3377, %v4849
      %v4904 = vadd.f32 %v3378, %v4854
      %v4905 = vadd.f32 %v3379, %v4857
      %v4906 = vadd.f32 %v3380, %v4862
      %v4907 = vadd.f32 %v3381, %v4865
      %v4908 = vadd.f32 %v3382, %v4870
      %v4909 = vadd.f32 %v3383, %v4873
      %v4910 = vadd.f32 %v3384, %v4878
      %v4911 = vadd.f32 %v3385, %v4881
      %v4912 = vadd.f32 %v3386, %v4886
      %v4913 = vadd.f32 %v3387, %v4889
      %v4914 = vadd.f32 %v3388, %v4894
      %v4915 = vadd.f32 %v3389, %v4897
      %4916 = vst [vmem:[#allocation3] sm:$0xff] %v4900
      %4917 = vst [vmem:[#allocation3 + $0x8] sm:$0xff] %v4901
      %4918 = vst [vmem:[#allocation3 + $0x10] sm:$0xff] %v4902
      %4919 = vst [vmem:[#allocation3 + $0x18] sm:$0xff] %v4903
      %4920 = vst [vmem:[#allocation3 + $0x20] sm:$0xff] %v4904
      %4921 = vst [vmem:[#allocation3 + $0x28] sm:$0xff] %v4905
      %4922 = vst [vmem:[#allocation3 + $0x30] sm:$0xff] %v4906
      %4923 = vst [vmem:[#allocation3 + $0x38] sm:$0xff] %v4907
      %4924 = vst [vmem:[#allocation3 + $0x40] sm:$0xff] %v4908
      %4925 = vst [vmem:[#allocation3 + $0x48] sm:$0xff] %v4909
      %4926 = vst [vmem:[#allocation3 + $0x50] sm:$0xff] %v4910
      %4927 = vst [vmem:[#allocation3 + $0x58] sm:$0xff] %v4911
      %4928 = vst [vmem:[#allocation3 + $0x60] sm:$0xff] %v4912
      %4929 = vst [vmem:[#allocation3 + $0x68] sm:$0xff] %v4913
      %4930 = vst [vmem:[#allocation3 + $0x70] sm:$0xff] %v4914
      %4931 = vst [vmem:[#allocation3 + $0x78] sm:$0xff] %v4915
      %v4932 = vld [vmem:[#allocation3] sm:$0xff]
      %v4933 = vld [vmem:[#allocation3 + $0x8] sm:$0xff]
      %v4934 = vld [vmem:[#allocation3 + $0x10] sm:$0xff]
      %v4935 = vld [vmem:[#allocation3 + $0x18] sm:$0xff]
      %v4936 = vld [vmem:[#allocation3 + $0x20] sm:$0xff]
      %v4937 = vld [vmem:[#allocation3 + $0x28] sm:$0xff]
      %v4938 = vld [vmem:[#allocation3 + $0x30] sm:$0xff]
      %v4939 = vld [vmem:[#allocation3 + $0x38] sm:$0xff]
      %v4940 = vld [vmem:[#allocation3 + $0x40] sm:$0xff]
      %v4941 = vld [vmem:[#allocation3 + $0x48] sm:$0xff]
      %v4942 = vld [vmem:[#allocation3 + $0x50] sm:$0xff]
      %v4943 = vld [vmem:[#allocation3 + $0x58] sm:$0xff]
      %v4944 = vld [vmem:[#allocation3 + $0x60] sm:$0xff]
      %v4945 = vld [vmem:[#allocation3 + $0x68] sm:$0xff]
      %v4946 = vld [vmem:[#allocation3 + $0x70] sm:$0xff]
      %v4947 = vld [vmem:[#allocation3 + $0x78] sm:$0xff]
      %v4948 = vld [vmem:[#allocation2 + $0x90] sm:$0xff]
      %v4949 = vld [vmem:[#allocation2 + $0x98] sm:$0xff]
      %v4950 = vld [vmem:[#allocation2 + $0xa0] sm:$0xff]
      %v4951 = vld [vmem:[#allocation2 + $0xa8] sm:$0xff]
      %v4952 = vld [vmem:[#allocation2 + $0xb0] sm:$0xf]
      %v4953 = vld [vmem:[#allocation2 + $0xb4] sm:$0xff]
      %v4954 = vld [vmem:[#allocation2 + $0xbc] sm:$0xff]
      %v4955 = vld [vmem:[#allocation2 + $0xc4] sm:$0xff]
      %v4956 = vld [vmem:[#allocation2 + $0xcc] sm:$0xff]
      %v4957 = vld [vmem:[#allocation2 + $0xd4] sm:$0xf]
      %v4958 = vld [vmem:[#allocation2 + $0xd8] sm:$0xff]
      %v4959 = vld [vmem:[#allocation2 + $0xe0] sm:$0xff]
      %v4960 = vld [vmem:[#allocation2 + $0xe8] sm:$0xff]
      %v4961 = vld [vmem:[#allocation2 + $0xf0] sm:$0xff]
      %v4962 = vld [vmem:[#allocation2 + $0xf8] sm:$0xf]
      %v4963 = vld [vmem:[#allocation2 + $0xfc] sm:$0xff]
      %v4964 = vld [vmem:[#allocation2 + $0x104] sm:$0xff]
      %v4965 = vld [vmem:[#allocation2 + $0x10c] sm:$0xff]
      %v4966 = vld [vmem:[#allocation2 + $0x114] sm:$0xff]
      %v4967 = vld [vmem:[#allocation2 + $0x11c] sm:$0xf]
      %v4968 = vld [vmem:[#allocation2 + $0x120] sm:$0xff]
      %v4969 = vld [vmem:[#allocation2 + $0x128] sm:$0xff]
      %v4970 = vld [vmem:[#allocation2 + $0x130] sm:$0xff]
      %v4971 = vld [vmem:[#allocation2 + $0x138] sm:$0xff]
      %v4972 = vld [vmem:[#allocation2 + $0x140] sm:$0xf]
      %v4973 = vld [vmem:[#allocation2 + $0x144] sm:$0xff]
      %v4974 = vld [vmem:[#allocation2 + $0x14c] sm:$0xff]
      %v4975 = vld [vmem:[#allocation2 + $0x154] sm:$0xff]
      %v4976 = vld [vmem:[#allocation2 + $0x15c] sm:$0xff]
      %v4977 = vld [vmem:[#allocation2 + $0x164] sm:$0xf]
      %v4978 = vld [vmem:[#allocation2 + $0x168] sm:$0xff]
      %v4979 = vld [vmem:[#allocation2 + $0x170] sm:$0xff]
      %v4980 = vld [vmem:[#allocation2 + $0x178] sm:$0xff]
      %v4981 = vld [vmem:[#allocation2 + $0x180] sm:$0xff]
      %v4982 = vld [vmem:[#allocation2 + $0x188] sm:$0xf]
      %v4983 = vld [vmem:[#allocation2 + $0x18c] sm:$0xff]
      %v4984 = vld [vmem:[#allocation2 + $0x194] sm:$0xff]
      %v4985 = vld [vmem:[#allocation2 + $0x19c] sm:$0xff]
      %v4986 = vld [vmem:[#allocation2 + $0x1a4] sm:$0xff]
      %v4987 = vld [vmem:[#allocation2 + $0x1ac] sm:$0xf]
      %v4988 = vld [vmem:[#allocation2 + $0x1b0] sm:$0xff]
      %v4989 = vld [vmem:[#allocation2 + $0x1b8] sm:$0xff]
      %v4990 = vld [vmem:[#allocation2 + $0x1c0] sm:$0xff]
      %v4991 = vld [vmem:[#allocation2 + $0x1c8] sm:$0xff]
      %v4992 = vld [vmem:[#allocation2 + $0x1d0] sm:$0xf]
      %v4993 = vld [vmem:[#allocation2 + $0x1d4] sm:$0xff]
      %v4994 = vld [vmem:[#allocation2 + $0x1dc] sm:$0xff]
      %v4995 = vld [vmem:[#allocation2 + $0x1e4] sm:$0xff]
      %v4996 = vld [vmem:[#allocation2 + $0x1ec] sm:$0xff]
      %v4997 = vld [vmem:[#allocation2 + $0x1f4] sm:$0xf]
      %v4998 = vld [vmem:[#allocation2 + $0x1f8] sm:$0xff]
      %v4999 = vld [vmem:[#allocation2 + $0x200] sm:$0xff]
      %v5000 = vld [vmem:[#allocation2 + $0x208] sm:$0xff]
      %v5001 = vld [vmem:[#allocation2 + $0x210] sm:$0xff]
      %v5002 = vld [vmem:[#allocation2 + $0x218] sm:$0xf]
      %v5003 = vld [vmem:[#allocation2 + $0x21c] sm:$0xff]
      %v5004 = vld [vmem:[#allocation2 + $0x224] sm:$0xff]
      %v5005 = vld [vmem:[#allocation2 + $0x22c] sm:$0xff]
      %v5006 = vld [vmem:[#allocation2 + $0x234] sm:$0xff]
      %v5007 = vld [vmem:[#allocation2 + $0x23c] sm:$0xf]
      %v5008 = vld [vmem:[#allocation2 + $0x240] sm:$0xff]
      %v5009 = vld [vmem:[#allocation2 + $0x248] sm:$0xff]
      %v5010 = vld [vmem:[#allocation2 + $0x250] sm:$0xff]
      %v5011 = vld [vmem:[#allocation2 + $0x258] sm:$0xff]
      %v5012 = vld [vmem:[#allocation2 + $0x260] sm:$0xf]
      %v5013 = vld [vmem:[#allocation2 + $0x264] sm:$0xff]
      %v5014 = vld [vmem:[#allocation2 + $0x26c] sm:$0xff]
      %v5015 = vld [vmem:[#allocation2 + $0x274] sm:$0xff]
      %v5016 = vld [vmem:[#allocation2 + $0x27c] sm:$0xff]
      %v5017 = vld [vmem:[#allocation2 + $0x284] sm:$0xf]
      %v5018 = vld [vmem:[#allocation2 + $0x288] sm:$0xff]
      %v5019 = vld [vmem:[#allocation2 + $0x290] sm:$0xff]
      %v5020 = vld [vmem:[#allocation2 + $0x298] sm:$0xff]
      %v5021 = vld [vmem:[#allocation2 + $0x2a0] sm:$0xff]
      %v5022 = vld [vmem:[#allocation2 + $0x2a8] sm:$0xf]
      %v5023 = vld [vmem:[#allocation2 + $0x2ac] sm:$0xff]
      %v5024 = vld [vmem:[#allocation2 + $0x2b4] sm:$0xff]
      %v5025 = vld [vmem:[#allocation2 + $0x2bc] sm:$0xff]
      %v5026 = vld [vmem:[#allocation2 + $0x2c4] sm:$0xff]
      %v5027 = vld [vmem:[#allocation2 + $0x2cc] sm:$0xf]
      %s5028 = scalar_lea.vmem %s3, 1152
      %v5029 = vld [vmem:[%s5028] sm:$0xf]
      %v5030 = vld [vmem:[%s5028 + $0x4] sm:$0xf]
      %v5031 = vld [vmem:[%s5028 + $0x8] sm:$0xf]
      %v5032 = vld [vmem:[%s5028 + $0xc] sm:$0xf]
      %v5033 = vld [vmem:[%s5028 + $0x10] sm:$0xf]
      %v5034 = vld [vmem:[%s5028 + $0x14] sm:$0xf]
      %v5035 = vld [vmem:[%s5028 + $0x18] sm:$0xf]
      %v5036 = vld [vmem:[%s5028 + $0x1c] sm:$0xf]
      %v5037 = vld [vmem:[%s5028 + $0x20] sm:$0xf]
      %v5038 = vld [vmem:[%s5028 + $0x24] sm:$0xf]
      %v5039 = vld [vmem:[%s5028 + $0x28] sm:$0xf]
      %v5040 = vld [vmem:[%s5028 + $0x2c] sm:$0xf]
      %v5041 = vld [vmem:[%s5028 + $0x30] sm:$0xf]
      %v5042 = vld [vmem:[%s5028 + $0x34] sm:$0xf]
      %v5043 = vld [vmem:[%s5028 + $0x38] sm:$0xf]
      %v5044 = vld [vmem:[%s5028 + $0x3c] sm:$0xf]
      %v5045 = vld [vmem:[%s5028 + $0x40] sm:$0xf]
      %v5046 = vld [vmem:[%s5028 + $0x44] sm:$0xf]
      %v5047 = vld [vmem:[%s5028 + $0x48] sm:$0xf]
      %v5048 = vld [vmem:[%s5028 + $0x4c] sm:$0xf]
      %v5049 = vld [vmem:[%s5028 + $0x50] sm:$0xf]
      %v5050 = vld [vmem:[%s5028 + $0x54] sm:$0xf]
      %v5051 = vld [vmem:[%s5028 + $0x58] sm:$0xf]
      %v5052 = vld [vmem:[%s5028 + $0x5c] sm:$0xf]
      %v5053 = vld [vmem:[%s5028 + $0x60] sm:$0xf]
      %v5054 = vld [vmem:[%s5028 + $0x64] sm:$0xf]
      %v5055 = vld [vmem:[%s5028 + $0x68] sm:$0xf]
      %v5056 = vld [vmem:[%s5028 + $0x6c] sm:$0xf]
      %v5057 = vld [vmem:[%s5028 + $0x70] sm:$0xf]
      %v5058 = vld [vmem:[%s5028 + $0x74] sm:$0xf]
      %v5059 = vld [vmem:[%s5028 + $0x78] sm:$0xf]
      %v5060 = vld [vmem:[%s5028 + $0x7c] sm:$0xf]
      %v5061 = vld [vmem:[%s5028 + $0x80] sm:$0xf]
      %v5062 = vld [vmem:[%s5028 + $0x84] sm:$0xf]
      %v5063 = vld [vmem:[%s5028 + $0x88] sm:$0xf]
      %v5064 = vld [vmem:[%s5028 + $0x8c] sm:$0xf]
      %v5065 = vld [vmem:[%s5028 + $0x90] sm:$0xf]
      %v5066 = vld [vmem:[%s5028 + $0x94] sm:$0xf]
      %v5067 = vld [vmem:[%s5028 + $0x98] sm:$0xf]
      %v5068 = vld [vmem:[%s5028 + $0x9c] sm:$0xf]
      %v5069 = vld [vmem:[%s5028 + $0xa0] sm:$0xf]
      %v5070 = vld [vmem:[%s5028 + $0xa4] sm:$0xf]
      %v5071 = vld [vmem:[%s5028 + $0xa8] sm:$0xf]
      %v5072 = vld [vmem:[%s5028 + $0xac] sm:$0xf]
      %v5073 = vld [vmem:[%s5028 + $0xb0] sm:$0xf]
      %v5074 = vld [vmem:[%s5028 + $0xb4] sm:$0xf]
      %v5075 = vld [vmem:[%s5028 + $0xb8] sm:$0xf]
      %v5076 = vld [vmem:[%s5028 + $0xbc] sm:$0xf]
      %v5077 = vld [vmem:[%s5028 + $0xc0] sm:$0xf]
      %v5078 = vld [vmem:[%s5028 + $0xc4] sm:$0xf]
      %v5079 = vld [vmem:[%s5028 + $0xc8] sm:$0xf]
      %v5080 = vld [vmem:[%s5028 + $0xcc] sm:$0xf]
      %v5081 = vld [vmem:[%s5028 + $0xd0] sm:$0xf]
      %v5082 = vld [vmem:[%s5028 + $0xd4] sm:$0xf]
      %v5083 = vld [vmem:[%s5028 + $0xd8] sm:$0xf]
      %v5084 = vld [vmem:[%s5028 + $0xdc] sm:$0xf]
      %v5085 = vld [vmem:[%s5028 + $0xe0] sm:$0xf]
      %v5086 = vld [vmem:[%s5028 + $0xe4] sm:$0xf]
      %v5087 = vld [vmem:[%s5028 + $0xe8] sm:$0xf]
      %v5088 = vld [vmem:[%s5028 + $0xec] sm:$0xf]
      %v5089 = vld [vmem:[%s5028 + $0xf0] sm:$0xf]
      %v5090 = vld [vmem:[%s5028 + $0xf4] sm:$0xf]
      %v5091 = vld [vmem:[%s5028 + $0xf8] sm:$0xf]
      %v5092 = vld [vmem:[%s5028 + $0xfc] sm:$0xf]
      %v5093 = vld [vmem:[%s5028 + $0x100] sm:$0xf]
      %v5094 = vld [vmem:[%s5028 + $0x104] sm:$0xf]
      %v5095 = vld [vmem:[%s5028 + $0x108] sm:$0xf]
      %v5096 = vld [vmem:[%s5028 + $0x10c] sm:$0xf]
      %v5097 = vld [vmem:[%s5028 + $0x110] sm:$0xf]
      %v5098 = vld [vmem:[%s5028 + $0x114] sm:$0xf]
      %v5099 = vld [vmem:[%s5028 + $0x118] sm:$0xf]
      %v5100 = vld [vmem:[%s5028 + $0x11c] sm:$0xf]
      %v5101 = vld [vmem:[%s5028 + $0x120] sm:$0xf]
      %v5102 = vld [vmem:[%s5028 + $0x124] sm:$0xf]
      %v5103 = vld [vmem:[%s5028 + $0x128] sm:$0xf]
      %v5104 = vld [vmem:[%s5028 + $0x12c] sm:$0xf]
      %v5105 = vld [vmem:[%s5028 + $0x130] sm:$0xf]
      %v5106 = vld [vmem:[%s5028 + $0x134] sm:$0xf]
      %v5107 = vld [vmem:[%s5028 + $0x138] sm:$0xf]
      %v5108 = vld [vmem:[%s5028 + $0x13c] sm:$0xf]
      %v5109 = vld [vmem:[%s5028 + $0x140] sm:$0xf]
      %v5110 = vld [vmem:[%s5028 + $0x144] sm:$0xf]
      %v5111 = vld [vmem:[%s5028 + $0x148] sm:$0xf]
      %v5112 = vld [vmem:[%s5028 + $0x14c] sm:$0xf]
      %v5113 = vld [vmem:[%s5028 + $0x150] sm:$0xf]
      %v5114 = vld [vmem:[%s5028 + $0x154] sm:$0xf]
      %v5115 = vld [vmem:[%s5028 + $0x158] sm:$0xf]
      %v5116 = vld [vmem:[%s5028 + $0x15c] sm:$0xf]
      %v5117 = vld [vmem:[%s5028 + $0x160] sm:$0xf]
      %v5118 = vld [vmem:[%s5028 + $0x164] sm:$0xf]
      %v5119 = vld [vmem:[%s5028 + $0x168] sm:$0xf]
      %v5120 = vld [vmem:[%s5028 + $0x16c] sm:$0xf]
      %v5121 = vld [vmem:[%s5028 + $0x170] sm:$0xf]
      %v5122 = vld [vmem:[%s5028 + $0x174] sm:$0xf]
      %v5123 = vld [vmem:[%s5028 + $0x178] sm:$0xf]
      %v5124 = vld [vmem:[%s5028 + $0x17c] sm:$0xf]
      %v5125 = vld [vmem:[%s5028 + $0x180] sm:$0xf]
      %v5126 = vld [vmem:[%s5028 + $0x184] sm:$0xf]
      %v5127 = vld [vmem:[%s5028 + $0x188] sm:$0xf]
      %v5128 = vld [vmem:[%s5028 + $0x18c] sm:$0xf]
      %v5129 = vld [vmem:[%s5028 + $0x190] sm:$0xf]
      %v5130 = vld [vmem:[%s5028 + $0x194] sm:$0xf]
      %v5131 = vld [vmem:[%s5028 + $0x198] sm:$0xf]
      %v5132 = vld [vmem:[%s5028 + $0x19c] sm:$0xf]
      %v5133 = vld [vmem:[%s5028 + $0x1a0] sm:$0xf]
      %v5134 = vld [vmem:[%s5028 + $0x1a4] sm:$0xf]
      %v5135 = vld [vmem:[%s5028 + $0x1a8] sm:$0xf]
      %v5136 = vld [vmem:[%s5028 + $0x1ac] sm:$0xf]
      %v5137 = vld [vmem:[%s5028 + $0x1b0] sm:$0xf]
      %v5138 = vld [vmem:[%s5028 + $0x1b4] sm:$0xf]
      %v5139 = vld [vmem:[%s5028 + $0x1b8] sm:$0xf]
      %v5140 = vld [vmem:[%s5028 + $0x1bc] sm:$0xf]
      %v5141 = vld [vmem:[%s5028 + $0x1c0] sm:$0xf]
      %v5142 = vld [vmem:[%s5028 + $0x1c4] sm:$0xf]
      %v5143 = vld [vmem:[%s5028 + $0x1c8] sm:$0xf]
      %v5144 = vld [vmem:[%s5028 + $0x1cc] sm:$0xf]
      %v5145 = vld [vmem:[%s5028 + $0x1d0] sm:$0xf]
      %v5146 = vld [vmem:[%s5028 + $0x1d4] sm:$0xf]
      %v5147 = vld [vmem:[%s5028 + $0x1d8] sm:$0xf]
      %v5148 = vld [vmem:[%s5028 + $0x1dc] sm:$0xf]
      %v5149 = vld [vmem:[%s5028 + $0x1e0] sm:$0xf]
      %v5150 = vld [vmem:[%s5028 + $0x1e4] sm:$0xf]
      %v5151 = vld [vmem:[%s5028 + $0x1e8] sm:$0xf]
      %v5152 = vld [vmem:[%s5028 + $0x1ec] sm:$0xf]
      %v5153 = vld [vmem:[%s5028 + $0x1f0] sm:$0xf]
      %v5154 = vld [vmem:[%s5028 + $0x1f4] sm:$0xf]
      %v5155 = vld [vmem:[%s5028 + $0x1f8] sm:$0xf]
      %v5156 = vld [vmem:[%s5028 + $0x1fc] sm:$0xf]
      %v5157 = vld [vmem:[%s5028 + $0x200] sm:$0xf]
      %v5158 = vld [vmem:[%s5028 + $0x204] sm:$0xf]
      %v5159 = vld [vmem:[%s5028 + $0x208] sm:$0xf]
      %v5160 = vld [vmem:[%s5028 + $0x20c] sm:$0xf]
      %v5161 = vld [vmem:[%s5028 + $0x210] sm:$0xf]
      %v5162 = vld [vmem:[%s5028 + $0x214] sm:$0xf]
      %v5163 = vld [vmem:[%s5028 + $0x218] sm:$0xf]
      %v5164 = vld [vmem:[%s5028 + $0x21c] sm:$0xf]
      %v5165 = vld [vmem:[%s5028 + $0x220] sm:$0xf]
      %v5166 = vld [vmem:[%s5028 + $0x224] sm:$0xf]
      %v5167 = vld [vmem:[%s5028 + $0x228] sm:$0xf]
      %v5168 = vld [vmem:[%s5028 + $0x22c] sm:$0xf]
      %v5169 = vld [vmem:[%s5028 + $0x230] sm:$0xf]
      %v5170 = vld [vmem:[%s5028 + $0x234] sm:$0xf]
      %v5171 = vld [vmem:[%s5028 + $0x238] sm:$0xf]
      %v5172 = vld [vmem:[%s5028 + $0x23c] sm:$0xf]
      %v5253 = vunpack.c.l.b16 %v4948
      %v5254 = vunpack.c.h.b16 %v4948
      %v5255 = vunpack.c.l.b16 %v4949
      %v5256 = vunpack.c.h.b16 %v4949
      %v5257 = vunpack.c.l.b16 %v4950
      %v5258 = vunpack.c.h.b16 %v4950
      %v5259 = vunpack.c.l.b16 %v4951
      %v5260 = vunpack.c.h.b16 %v4951
      %v5261 = vunpack.c.l.b16 %v4952
      %v5262 = vunpack.c.l.b16 %v4953
      %v5263 = vunpack.c.h.b16 %v4953
      %v5264 = vunpack.c.l.b16 %v4954
      %v5265 = vunpack.c.h.b16 %v4954
      %v5266 = vunpack.c.l.b16 %v4955
      %v5267 = vunpack.c.h.b16 %v4955
      %v5268 = vunpack.c.l.b16 %v4956
      %v5269 = vunpack.c.h.b16 %v4956
      %v5270 = vunpack.c.l.b16 %v4957
      %v5271 = vunpack.c.l.b16 %v4958
      %v5272 = vunpack.c.h.b16 %v4958
      %v5273 = vunpack.c.l.b16 %v4959
      %v5274 = vunpack.c.h.b16 %v4959
      %v5275 = vunpack.c.l.b16 %v4960
      %v5276 = vunpack.c.h.b16 %v4960
      %v5277 = vunpack.c.l.b16 %v4961
      %v5278 = vunpack.c.h.b16 %v4961
      %v5279 = vunpack.c.l.b16 %v4962
      %v5280 = vunpack.c.l.b16 %v4963
      %v5281 = vunpack.c.h.b16 %v4963
      %v5282 = vunpack.c.l.b16 %v4964
      %v5283 = vunpack.c.h.b16 %v4964
      %v5284 = vunpack.c.l.b16 %v4965
      %v5285 = vunpack.c.h.b16 %v4965
      %v5286 = vunpack.c.l.b16 %v4966
      %v5287 = vunpack.c.h.b16 %v4966
      %v5288 = vunpack.c.l.b16 %v4967
      %v5289 = vunpack.c.l.b16 %v4968
      %v5290 = vunpack.c.h.b16 %v4968
      %v5291 = vunpack.c.l.b16 %v4969
      %v5292 = vunpack.c.h.b16 %v4969
      %v5293 = vunpack.c.l.b16 %v4970
      %v5294 = vunpack.c.h.b16 %v4970
      %v5295 = vunpack.c.l.b16 %v4971
      %v5296 = vunpack.c.h.b16 %v4971
      %v5297 = vunpack.c.l.b16 %v4972
      %v5298 = vunpack.c.l.b16 %v4973
      %v5299 = vunpack.c.h.b16 %v4973
      %v5300 = vunpack.c.l.b16 %v4974
      %v5301 = vunpack.c.h.b16 %v4974
      %v5302 = vunpack.c.l.b16 %v4975
      %v5303 = vunpack.c.h.b16 %v4975
      %v5304 = vunpack.c.l.b16 %v4976
      %v5305 = vunpack.c.h.b16 %v4976
      %v5306 = vunpack.c.l.b16 %v4977
      %v5307 = vunpack.c.l.b16 %v4978
      %v5308 = vunpack.c.h.b16 %v4978
      %v5309 = vunpack.c.l.b16 %v4979
      %v5310 = vunpack.c.h.b16 %v4979
      %v5311 = vunpack.c.l.b16 %v4980
      %v5312 = vunpack.c.h.b16 %v4980
      %v5313 = vunpack.c.l.b16 %v4981
      %v5314 = vunpack.c.h.b16 %v4981
      %v5315 = vunpack.c.l.b16 %v4982
      %v5316 = vunpack.c.l.b16 %v4983
      %v5317 = vunpack.c.h.b16 %v4983
      %v5318 = vunpack.c.l.b16 %v4984
      %v5319 = vunpack.c.h.b16 %v4984
      %v5320 = vunpack.c.l.b16 %v4985
      %v5321 = vunpack.c.h.b16 %v4985
      %v5322 = vunpack.c.l.b16 %v4986
      %v5323 = vunpack.c.h.b16 %v4986
      %v5324 = vunpack.c.l.b16 %v4987
      %v5325 = vunpack.c.l.b16 %v4988
      %v5326 = vunpack.c.h.b16 %v4988
      %v5327 = vunpack.c.l.b16 %v4989
      %v5328 = vunpack.c.h.b16 %v4989
      %v5329 = vunpack.c.l.b16 %v4990
      %v5330 = vunpack.c.h.b16 %v4990
      %v5331 = vunpack.c.l.b16 %v4991
      %v5332 = vunpack.c.h.b16 %v4991
      %v5333 = vunpack.c.l.b16 %v4992
      %v5334 = vunpack.c.l.b16 %v4993
      %v5335 = vunpack.c.h.b16 %v4993
      %v5336 = vunpack.c.l.b16 %v4994
      %v5337 = vunpack.c.h.b16 %v4994
      %v5338 = vunpack.c.l.b16 %v4995
      %v5339 = vunpack.c.h.b16 %v4995
      %v5340 = vunpack.c.l.b16 %v4996
      %v5341 = vunpack.c.h.b16 %v4996
      %v5342 = vunpack.c.l.b16 %v4997
      %v5343 = vunpack.c.l.b16 %v4998
      %v5344 = vunpack.c.h.b16 %v4998
      %v5345 = vunpack.c.l.b16 %v4999
      %v5346 = vunpack.c.h.b16 %v4999
      %v5347 = vunpack.c.l.b16 %v5000
      %v5348 = vunpack.c.h.b16 %v5000
      %v5349 = vunpack.c.l.b16 %v5001
      %v5350 = vunpack.c.h.b16 %v5001
      %v5351 = vunpack.c.l.b16 %v5002
      %v5352 = vunpack.c.l.b16 %v5003
      %v5353 = vunpack.c.h.b16 %v5003
      %v5354 = vunpack.c.l.b16 %v5004
      %v5355 = vunpack.c.h.b16 %v5004
      %v5356 = vunpack.c.l.b16 %v5005
      %v5357 = vunpack.c.h.b16 %v5005
      %v5358 = vunpack.c.l.b16 %v5006
      %v5359 = vunpack.c.h.b16 %v5006
      %v5360 = vunpack.c.l.b16 %v5007
      %v5361 = vunpack.c.l.b16 %v5008
      %v5362 = vunpack.c.h.b16 %v5008
      %v5363 = vunpack.c.l.b16 %v5009
      %v5364 = vunpack.c.h.b16 %v5009
      %v5365 = vunpack.c.l.b16 %v5010
      %v5366 = vunpack.c.h.b16 %v5010
      %v5367 = vunpack.c.l.b16 %v5011
      %v5368 = vunpack.c.h.b16 %v5011
      %v5369 = vunpack.c.l.b16 %v5012
      %v5370 = vunpack.c.l.b16 %v5013
      %v5371 = vunpack.c.h.b16 %v5013
      %v5372 = vunpack.c.l.b16 %v5014
      %v5373 = vunpack.c.h.b16 %v5014
      %v5374 = vunpack.c.l.b16 %v5015
      %v5375 = vunpack.c.h.b16 %v5015
      %v5376 = vunpack.c.l.b16 %v5016
      %v5377 = vunpack.c.h.b16 %v5016
      %v5378 = vunpack.c.l.b16 %v5017
      %v5379 = vunpack.c.l.b16 %v5018
      %v5380 = vunpack.c.h.b16 %v5018
      %v5381 = vunpack.c.l.b16 %v5019
      %v5382 = vunpack.c.h.b16 %v5019
      %v5383 = vunpack.c.l.b16 %v5020
      %v5384 = vunpack.c.h.b16 %v5020
      %v5385 = vunpack.c.l.b16 %v5021
      %v5386 = vunpack.c.h.b16 %v5021
      %v5387 = vunpack.c.l.b16 %v5022
      %v5388 = vunpack.c.l.b16 %v5023
      %v5389 = vunpack.c.h.b16 %v5023
      %v5390 = vunpack.c.l.b16 %v5024
      %v5391 = vunpack.c.h.b16 %v5024
      %v5392 = vunpack.c.l.b16 %v5025
      %v5393 = vunpack.c.h.b16 %v5025
      %v5394 = vunpack.c.l.b16 %v5026
      %v5395 = vunpack.c.h.b16 %v5026
      %v5396 = vunpack.c.l.b16 %v5027
      %v5397 = vpack.c.b16 %v5262, %v5253
      %v5398 = vpack.c.b16 %v5263, %v5254
      %v5399 = vpack.c.b16 %v5264, %v5255
      %v5400 = vpack.c.b16 %v5265, %v5256
      %v5401 = vpack.c.b16 %v5266, %v5257
      %v5402 = vpack.c.b16 %v5267, %v5258
      %v5403 = vpack.c.b16 %v5268, %v5259
      %v5404 = vpack.c.b16 %v5269, %v5260
      %v5405 = vpack.c.b16 %v5270, %v5261
      %v5406 = vpack.c.b16 %v5280, %v5271
      %v5407 = vpack.c.b16 %v5281, %v5272
      %v5408 = vpack.c.b16 %v5282, %v5273
      %v5409 = vpack.c.b16 %v5283, %v5274
      %v5410 = vpack.c.b16 %v5284, %v5275
      %v5411 = vpack.c.b16 %v5285, %v5276
      %v5412 = vpack.c.b16 %v5286, %v5277
      %v5413 = vpack.c.b16 %v5287, %v5278
      %v5414 = vpack.c.b16 %v5288, %v5279
      %v5415 = vpack.c.b16 %v5298, %v5289
      %v5416 = vpack.c.b16 %v5299, %v5290
      %v5417 = vpack.c.b16 %v5300, %v5291
      %v5418 = vpack.c.b16 %v5301, %v5292
      %v5419 = vpack.c.b16 %v5302, %v5293
      %v5420 = vpack.c.b16 %v5303, %v5294
      %v5421 = vpack.c.b16 %v5304, %v5295
      %v5422 = vpack.c.b16 %v5305, %v5296
      %v5423 = vpack.c.b16 %v5306, %v5297
      %v5424 = vpack.c.b16 %v5316, %v5307
      %v5425 = vpack.c.b16 %v5317, %v5308
      %v5426 = vpack.c.b16 %v5318, %v5309
      %v5427 = vpack.c.b16 %v5319, %v5310
      %v5428 = vpack.c.b16 %v5320, %v5311
      %v5429 = vpack.c.b16 %v5321, %v5312
      %v5430 = vpack.c.b16 %v5322, %v5313
      %v5431 = vpack.c.b16 %v5323, %v5314
      %v5432 = vpack.c.b16 %v5324, %v5315
      %v5433 = vpack.c.b16 %v5334, %v5325
      %v5434 = vpack.c.b16 %v5335, %v5326
      %v5435 = vpack.c.b16 %v5336, %v5327
      %v5436 = vpack.c.b16 %v5337, %v5328
      %v5437 = vpack.c.b16 %v5338, %v5329
      %v5438 = vpack.c.b16 %v5339, %v5330
      %v5439 = vpack.c.b16 %v5340, %v5331
      %v5440 = vpack.c.b16 %v5341, %v5332
      %v5441 = vpack.c.b16 %v5342, %v5333
      %v5442 = vpack.c.b16 %v5352, %v5343
      %v5443 = vpack.c.b16 %v5353, %v5344
      %v5444 = vpack.c.b16 %v5354, %v5345
      %v5445 = vpack.c.b16 %v5355, %v5346
      %v5446 = vpack.c.b16 %v5356, %v5347
      %v5447 = vpack.c.b16 %v5357, %v5348
      %v5448 = vpack.c.b16 %v5358, %v5349
      %v5449 = vpack.c.b16 %v5359, %v5350
      %v5450 = vpack.c.b16 %v5360, %v5351
      %v5451 = vpack.c.b16 %v5370, %v5361
      %v5452 = vpack.c.b16 %v5371, %v5362
      %v5453 = vpack.c.b16 %v5372, %v5363
      %v5454 = vpack.c.b16 %v5373, %v5364
      %v5455 = vpack.c.b16 %v5374, %v5365
      %v5456 = vpack.c.b16 %v5375, %v5366
      %v5457 = vpack.c.b16 %v5376, %v5367
      %v5458 = vpack.c.b16 %v5377, %v5368
      %v5459 = vpack.c.b16 %v5378, %v5369
      %v5460 = vpack.c.b16 %v5388, %v5379
      %v5461 = vpack.c.b16 %v5389, %v5380
      %v5462 = vpack.c.b16 %v5390, %v5381
      %v5463 = vpack.c.b16 %v5391, %v5382
      %v5464 = vpack.c.b16 %v5392, %v5383
      %v5465 = vpack.c.b16 %v5393, %v5384
      %v5466 = vpack.c.b16 %v5394, %v5385
      %v5467 = vpack.c.b16 %v5395, %v5386
      %v5468 = vpack.c.b16 %v5396, %v5387
      %v5685 = vunpack.c.l.b16 %v5029
      %v5686 = vunpack.c.l.b16 %v5030
      %v5687 = vunpack.c.l.b16 %v5031
      %v5688 = vunpack.c.l.b16 %v5032
      %v5689 = vunpack.c.l.b16 %v5033
      %v5690 = vunpack.c.l.b16 %v5034
      %v5691 = vunpack.c.l.b16 %v5035
      %v5692 = vunpack.c.l.b16 %v5036
      %v5693 = vunpack.c.l.b16 %v5037
      %v5694 = vunpack.c.l.b16 %v5038
      %v5695 = vunpack.c.l.b16 %v5039
      %v5696 = vunpack.c.l.b16 %v5040
      %v5697 = vunpack.c.l.b16 %v5041
      %v5698 = vunpack.c.l.b16 %v5042
      %v5699 = vunpack.c.l.b16 %v5043
      %v5700 = vunpack.c.l.b16 %v5044
      %v5701 = vunpack.c.l.b16 %v5045
      %v5702 = vunpack.c.l.b16 %v5046
      %v5703 = vunpack.c.l.b16 %v5047
      %v5704 = vunpack.c.l.b16 %v5048
      %v5705 = vunpack.c.l.b16 %v5049
      %v5706 = vunpack.c.l.b16 %v5050
      %v5707 = vunpack.c.l.b16 %v5051
      %v5708 = vunpack.c.l.b16 %v5052
      %v5709 = vunpack.c.l.b16 %v5053
      %v5710 = vunpack.c.l.b16 %v5054
      %v5711 = vunpack.c.l.b16 %v5055
      %v5712 = vunpack.c.l.b16 %v5056
      %v5713 = vunpack.c.l.b16 %v5057
      %v5714 = vunpack.c.l.b16 %v5058
      %v5715 = vunpack.c.l.b16 %v5059
      %v5716 = vunpack.c.l.b16 %v5060
      %v5717 = vunpack.c.l.b16 %v5061
      %v5718 = vunpack.c.l.b16 %v5062
      %v5719 = vunpack.c.l.b16 %v5063
      %v5720 = vunpack.c.l.b16 %v5064
      %v5721 = vunpack.c.l.b16 %v5065
      %v5722 = vunpack.c.l.b16 %v5066
      %v5723 = vunpack.c.l.b16 %v5067
      %v5724 = vunpack.c.l.b16 %v5068
      %v5725 = vunpack.c.l.b16 %v5069
      %v5726 = vunpack.c.l.b16 %v5070
      %v5727 = vunpack.c.l.b16 %v5071
      %v5728 = vunpack.c.l.b16 %v5072
      %v5729 = vunpack.c.l.b16 %v5073
      %v5730 = vunpack.c.l.b16 %v5074
      %v5731 = vunpack.c.l.b16 %v5075
      %v5732 = vunpack.c.l.b16 %v5076
      %v5733 = vunpack.c.l.b16 %v5077
      %v5734 = vunpack.c.l.b16 %v5078
      %v5735 = vunpack.c.l.b16 %v5079
      %v5736 = vunpack.c.l.b16 %v5080
      %v5737 = vunpack.c.l.b16 %v5081
      %v5738 = vunpack.c.l.b16 %v5082
      %v5739 = vunpack.c.l.b16 %v5083
      %v5740 = vunpack.c.l.b16 %v5084
      %v5741 = vunpack.c.l.b16 %v5085
      %v5742 = vunpack.c.l.b16 %v5086
      %v5743 = vunpack.c.l.b16 %v5087
      %v5744 = vunpack.c.l.b16 %v5088
      %v5745 = vunpack.c.l.b16 %v5089
      %v5746 = vunpack.c.l.b16 %v5090
      %v5747 = vunpack.c.l.b16 %v5091
      %v5748 = vunpack.c.l.b16 %v5092
      %v5749 = vunpack.c.l.b16 %v5093
      %v5750 = vunpack.c.l.b16 %v5094
      %v5751 = vunpack.c.l.b16 %v5095
      %v5752 = vunpack.c.l.b16 %v5096
      %v5753 = vunpack.c.l.b16 %v5097
      %v5754 = vunpack.c.l.b16 %v5098
      %v5755 = vunpack.c.l.b16 %v5099
      %v5756 = vunpack.c.l.b16 %v5100
      %v5757 = vunpack.c.l.b16 %v5101
      %v5758 = vunpack.c.l.b16 %v5102
      %v5759 = vunpack.c.l.b16 %v5103
      %v5760 = vunpack.c.l.b16 %v5104
      %v5761 = vunpack.c.l.b16 %v5105
      %v5762 = vunpack.c.l.b16 %v5106
      %v5763 = vunpack.c.l.b16 %v5107
      %v5764 = vunpack.c.l.b16 %v5108
      %v5765 = vunpack.c.l.b16 %v5109
      %v5766 = vunpack.c.l.b16 %v5110
      %v5767 = vunpack.c.l.b16 %v5111
      %v5768 = vunpack.c.l.b16 %v5112
      %v5769 = vunpack.c.l.b16 %v5113
      %v5770 = vunpack.c.l.b16 %v5114
      %v5771 = vunpack.c.l.b16 %v5115
      %v5772 = vunpack.c.l.b16 %v5116
      %v5773 = vunpack.c.l.b16 %v5117
      %v5774 = vunpack.c.l.b16 %v5118
      %v5775 = vunpack.c.l.b16 %v5119
      %v5776 = vunpack.c.l.b16 %v5120
      %v5777 = vunpack.c.l.b16 %v5121
      %v5778 = vunpack.c.l.b16 %v5122
      %v5779 = vunpack.c.l.b16 %v5123
      %v5780 = vunpack.c.l.b16 %v5124
      %v5781 = vunpack.c.l.b16 %v5125
      %v5782 = vunpack.c.l.b16 %v5126
      %v5783 = vunpack.c.l.b16 %v5127
      %v5784 = vunpack.c.l.b16 %v5128
      %v5785 = vunpack.c.l.b16 %v5129
      %v5786 = vunpack.c.l.b16 %v5130
      %v5787 = vunpack.c.l.b16 %v5131
      %v5788 = vunpack.c.l.b16 %v5132
      %v5789 = vunpack.c.l.b16 %v5133
      %v5790 = vunpack.c.l.b16 %v5134
      %v5791 = vunpack.c.l.b16 %v5135
      %v5792 = vunpack.c.l.b16 %v5136
      %v5793 = vunpack.c.l.b16 %v5137
      %v5794 = vunpack.c.l.b16 %v5138
      %v5795 = vunpack.c.l.b16 %v5139
      %v5796 = vunpack.c.l.b16 %v5140
      %v5797 = vunpack.c.l.b16 %v5141
      %v5798 = vunpack.c.l.b16 %v5142
      %v5799 = vunpack.c.l.b16 %v5143
      %v5800 = vunpack.c.l.b16 %v5144
      %v5801 = vunpack.c.l.b16 %v5145
      %v5802 = vunpack.c.l.b16 %v5146
      %v5803 = vunpack.c.l.b16 %v5147
      %v5804 = vunpack.c.l.b16 %v5148
      %v5805 = vunpack.c.l.b16 %v5149
      %v5806 = vunpack.c.l.b16 %v5150
      %v5807 = vunpack.c.l.b16 %v5151
      %v5808 = vunpack.c.l.b16 %v5152
      %v5809 = vunpack.c.l.b16 %v5153
      %v5810 = vunpack.c.l.b16 %v5154
      %v5811 = vunpack.c.l.b16 %v5155
      %v5812 = vunpack.c.l.b16 %v5156
      %v5813 = vunpack.c.l.b16 %v5157
      %v5814 = vunpack.c.l.b16 %v5158
      %v5815 = vunpack.c.l.b16 %v5159
      %v5816 = vunpack.c.l.b16 %v5160
      %v5817 = vunpack.c.l.b16 %v5161
      %v5818 = vunpack.c.l.b16 %v5162
      %v5819 = vunpack.c.l.b16 %v5163
      %v5820 = vunpack.c.l.b16 %v5164
      %v5821 = vunpack.c.l.b16 %v5165
      %v5822 = vunpack.c.l.b16 %v5166
      %v5823 = vunpack.c.l.b16 %v5167
      %v5824 = vunpack.c.l.b16 %v5168
      %v5825 = vunpack.c.l.b16 %v5169
      %v5826 = vunpack.c.l.b16 %v5170
      %v5827 = vunpack.c.l.b16 %v5171
      %v5828 = vunpack.c.l.b16 %v5172
      %v5829 = vpack.c.b16 %v5686, %v5685
      %v5830 = vpack.c.b16 %v5688, %v5687
      %v5831 = vpack.c.b16 %v5690, %v5689
      %v5832 = vpack.c.b16 %v5692, %v5691
      %v5833 = vpack.c.b16 %v5694, %v5693
      %v5834 = vpack.c.b16 %v5696, %v5695
      %v5835 = vpack.c.b16 %v5698, %v5697
      %v5836 = vpack.c.b16 %v5700, %v5699
      %v5837 = vpack.c.b16 %v5702, %v5701
      %v5838 = vpack.c.b16 %v5704, %v5703
      %v5839 = vpack.c.b16 %v5706, %v5705
      %v5840 = vpack.c.b16 %v5708, %v5707
      %v5841 = vpack.c.b16 %v5710, %v5709
      %v5842 = vpack.c.b16 %v5712, %v5711
      %v5843 = vpack.c.b16 %v5714, %v5713
      %v5844 = vpack.c.b16 %v5716, %v5715
      %v5845 = vpack.c.b16 %v5718, %v5717
      %v5846 = vpack.c.b16 %v5720, %v5719
      %v5847 = vpack.c.b16 %v5722, %v5721
      %v5848 = vpack.c.b16 %v5724, %v5723
      %v5849 = vpack.c.b16 %v5726, %v5725
      %v5850 = vpack.c.b16 %v5728, %v5727
      %v5851 = vpack.c.b16 %v5730, %v5729
      %v5852 = vpack.c.b16 %v5732, %v5731
      %v5853 = vpack.c.b16 %v5734, %v5733
      %v5854 = vpack.c.b16 %v5736, %v5735
      %v5855 = vpack.c.b16 %v5738, %v5737
      %v5856 = vpack.c.b16 %v5740, %v5739
      %v5857 = vpack.c.b16 %v5742, %v5741
      %v5858 = vpack.c.b16 %v5744, %v5743
      %v5859 = vpack.c.b16 %v5746, %v5745
      %v5860 = vpack.c.b16 %v5748, %v5747
      %v5861 = vpack.c.b16 %v5750, %v5749
      %v5862 = vpack.c.b16 %v5752, %v5751
      %v5863 = vpack.c.b16 %v5754, %v5753
      %v5864 = vpack.c.b16 %v5756, %v5755
      %v5865 = vpack.c.b16 %v5758, %v5757
      %v5866 = vpack.c.b16 %v5760, %v5759
      %v5867 = vpack.c.b16 %v5762, %v5761
      %v5868 = vpack.c.b16 %v5764, %v5763
      %v5869 = vpack.c.b16 %v5766, %v5765
      %v5870 = vpack.c.b16 %v5768, %v5767
      %v5871 = vpack.c.b16 %v5770, %v5769
      %v5872 = vpack.c.b16 %v5772, %v5771
      %v5873 = vpack.c.b16 %v5774, %v5773
      %v5874 = vpack.c.b16 %v5776, %v5775
      %v5875 = vpack.c.b16 %v5778, %v5777
      %v5876 = vpack.c.b16 %v5780, %v5779
      %v5877 = vpack.c.b16 %v5782, %v5781
      %v5878 = vpack.c.b16 %v5784, %v5783
      %v5879 = vpack.c.b16 %v5786, %v5785
      %v5880 = vpack.c.b16 %v5788, %v5787
      %v5881 = vpack.c.b16 %v5790, %v5789
      %v5882 = vpack.c.b16 %v5792, %v5791
      %v5883 = vpack.c.b16 %v5794, %v5793
      %v5884 = vpack.c.b16 %v5796, %v5795
      %v5885 = vpack.c.b16 %v5798, %v5797
      %v5886 = vpack.c.b16 %v5800, %v5799
      %v5887 = vpack.c.b16 %v5802, %v5801
      %v5888 = vpack.c.b16 %v5804, %v5803
      %v5889 = vpack.c.b16 %v5806, %v5805
      %v5890 = vpack.c.b16 %v5808, %v5807
      %v5891 = vpack.c.b16 %v5810, %v5809
      %v5892 = vpack.c.b16 %v5812, %v5811
      %v5893 = vpack.c.b16 %v5814, %v5813
      %v5894 = vpack.c.b16 %v5816, %v5815
      %v5895 = vpack.c.b16 %v5818, %v5817
      %v5896 = vpack.c.b16 %v5820, %v5819
      %v5897 = vpack.c.b16 %v5822, %v5821
      %v5898 = vpack.c.b16 %v5824, %v5823
      %v5899 = vpack.c.b16 %v5826, %v5825
      %v5900 = vpack.c.b16 %v5828, %v5827
      %5973 = vmatprep.subr.bf16.mxu0 0
      %5974 = vmatpush1.bf16.msra.mxu0 %v5836
      %5975 = vmatprep.subr.bf16.mxu0 0
      %5976 = vmatpush1.bf16.msra.mxu0 %v5835
      %5977 = vmatprep.subr.bf16.mxu0 0
      %5978 = vmatpush1.bf16.msra.mxu0 %v5834
      %5979 = vmatprep.subr.bf16.mxu0 0
      %5980 = vmatpush1.bf16.msra.mxu0 %v5833
      %5981 = vmatprep.subr.bf16.mxu0 0
      %5982 = vmatpush1.bf16.msra.mxu0 %v5832
      %5983 = vmatprep.subr.bf16.mxu0 0
      %5984 = vmatpush1.bf16.msra.mxu0 %v5831
      %5985 = vmatprep.subr.bf16.mxu0 0
      %5986 = vmatpush1.bf16.msra.mxu0 %v5830
      %5987 = vmatprep.subr.bf16.mxu0 0
      %5988 = vmatpush1.bf16.msra.mxu0 %v5829
      %5989 = vmatprep.subr.bf16.mxu0 0
      %5990 = vmatpush2.bf16.msra.mxu0 %v5844
      %5991 = vmatprep.subr.bf16.mxu0 0
      %5992 = vmatpush2.bf16.msra.mxu0 %v5843
      %5993 = vmatprep.subr.bf16.mxu0 0
      %5994 = vmatpush2.bf16.msra.mxu0 %v5842
      %5995 = vmatprep.subr.bf16.mxu0 0
      %5996 = vmatpush2.bf16.msra.mxu0 %v5841
      %5997 = vmatprep.subr.bf16.mxu0 0
      %5998 = vmatpush2.bf16.msra.mxu0 %v5840
      %5999 = vmatprep.subr.bf16.mxu0 0
      %6000 = vmatpush2.bf16.msra.mxu0 %v5839
      %6001 = vmatprep.subr.bf16.mxu0 0
      %6002 = vmatpush2.bf16.msra.mxu0 %v5838
      %6003 = vmatprep.subr.bf16.mxu0 0
      %6004 = vmatpush2.bf16.msra.mxu0 %v5837
      %6005 = vmatprep.mubr.bf16.mxu0 %v5398
      %6006 = vmatmul.mubr.bf16.gmra.mxu0 %v5397
      %v6007 = vpop.f32.mrf.mxu0
      %v6008 = vadd.f32 0.0, %v6007
      %v6009 = vpop.f32.mrf.mxu0
      %v6010 = vpop.f32.mrf.mxu0
      %v6011 = vadd.f32 0.0, %v6010
      %v6012 = vpop.f32.mrf.mxu0
      %6013 = vmatprep.mubr.bf16.mxu0 %v5407
      %6014 = vmatmul.mubr.bf16.gmra.mxu0 %v5406
      %v6015 = vpop.f32.mrf.mxu0
      %v6016 = vadd.f32 0.0, %v6015
      %v6017 = vpop.f32.mrf.mxu0
      %v6018 = vpop.f32.mrf.mxu0
      %v6019 = vadd.f32 0.0, %v6018
      %v6020 = vpop.f32.mrf.mxu0
      %6021 = vmatprep.mubr.bf16.mxu0 %v5416
      %6022 = vmatmul.mubr.bf16.gmra.mxu0 %v5415
      %v6023 = vpop.f32.mrf.mxu0
      %v6024 = vadd.f32 0.0, %v6023
      %v6025 = vpop.f32.mrf.mxu0
      %v6026 = vpop.f32.mrf.mxu0
      %v6027 = vadd.f32 0.0, %v6026
      %v6028 = vpop.f32.mrf.mxu0
      %6029 = vmatprep.mubr.bf16.mxu0 %v5425
      %6030 = vmatmul.mubr.bf16.gmra.mxu0 %v5424
      %v6031 = vpop.f32.mrf.mxu0
      %v6032 = vadd.f32 0.0, %v6031
      %v6033 = vpop.f32.mrf.mxu0
      %v6034 = vpop.f32.mrf.mxu0
      %v6035 = vadd.f32 0.0, %v6034
      %v6036 = vpop.f32.mrf.mxu0
      %6037 = vmatprep.mubr.bf16.mxu0 %v5434
      %6038 = vmatmul.mubr.bf16.gmra.mxu0 %v5433
      %v6039 = vpop.f32.mrf.mxu0
      %v6040 = vadd.f32 0.0, %v6039
      %v6041 = vpop.f32.mrf.mxu0
      %v6042 = vpop.f32.mrf.mxu0
      %v6043 = vadd.f32 0.0, %v6042
      %v6044 = vpop.f32.mrf.mxu0
      %6045 = vmatprep.mubr.bf16.mxu0 %v5443
      %6046 = vmatmul.mubr.bf16.gmra.mxu0 %v5442
      %v6047 = vpop.f32.mrf.mxu0
      %v6048 = vadd.f32 0.0, %v6047
      %v6049 = vpop.f32.mrf.mxu0
      %v6050 = vpop.f32.mrf.mxu0
      %v6051 = vadd.f32 0.0, %v6050
      %v6052 = vpop.f32.mrf.mxu0
      %6053 = vmatprep.mubr.bf16.mxu0 %v5452
      %6054 = vmatmul.mubr.bf16.gmra.mxu0 %v5451
      %v6055 = vpop.f32.mrf.mxu0
      %v6056 = vadd.f32 0.0, %v6055
      %v6057 = vpop.f32.mrf.mxu0
      %v6058 = vpop.f32.mrf.mxu0
      %v6059 = vadd.f32 0.0, %v6058
      %v6060 = vpop.f32.mrf.mxu0
      %6061 = vmatprep.mubr.bf16.mxu0 %v5461
      %6062 = vmatmul.mubr.bf16.gmra.mxu0 %v5460
      %v6063 = vpop.f32.mrf.mxu0
      %v6064 = vadd.f32 0.0, %v6063
      %v6065 = vpop.f32.mrf.mxu0
      %v6066 = vpop.f32.mrf.mxu0
      %v6067 = vadd.f32 0.0, %v6066
      %v6068 = vpop.f32.mrf.mxu0
      %6069 = vdwg.mxu0
      %6070 = vmatprep.subr.bf16.mxu0 0
      %6071 = vmatpush1.bf16.msra.mxu0 %v5852
      %6072 = vmatprep.subr.bf16.mxu0 0
      %6073 = vmatpush1.bf16.msra.mxu0 %v5851
      %6074 = vmatprep.subr.bf16.mxu0 0
      %6075 = vmatpush1.bf16.msra.mxu0 %v5850
      %6076 = vmatprep.subr.bf16.mxu0 0
      %6077 = vmatpush1.bf16.msra.mxu0 %v5849
      %6078 = vmatprep.subr.bf16.mxu0 0
      %6079 = vmatpush1.bf16.msra.mxu0 %v5848
      %6080 = vmatprep.subr.bf16.mxu0 0
      %6081 = vmatpush1.bf16.msra.mxu0 %v5847
      %6082 = vmatprep.subr.bf16.mxu0 0
      %6083 = vmatpush1.bf16.msra.mxu0 %v5846
      %6084 = vmatprep.subr.bf16.mxu0 0
      %6085 = vmatpush1.bf16.msra.mxu0 %v5845
      %6086 = vmatprep.subr.bf16.mxu0 0
      %6087 = vmatpush2.bf16.msra.mxu0 %v5860
      %6088 = vmatprep.subr.bf16.mxu0 0
      %6089 = vmatpush2.bf16.msra.mxu0 %v5859
      %6090 = vmatprep.subr.bf16.mxu0 0
      %6091 = vmatpush2.bf16.msra.mxu0 %v5858
      %6092 = vmatprep.subr.bf16.mxu0 0
      %6093 = vmatpush2.bf16.msra.mxu0 %v5857
      %6094 = vmatprep.subr.bf16.mxu0 0
      %6095 = vmatpush2.bf16.msra.mxu0 %v5856
      %6096 = vmatprep.subr.bf16.mxu0 0
      %6097 = vmatpush2.bf16.msra.mxu0 %v5855
      %6098 = vmatprep.subr.bf16.mxu0 0
      %6099 = vmatpush2.bf16.msra.mxu0 %v5854
      %6100 = vmatprep.subr.bf16.mxu0 0
      %6101 = vmatpush2.bf16.msra.mxu0 %v5853
      %6102 = vmatprep.mubr.bf16.mxu0 %v5400
      %6103 = vmatmul.mubr.bf16.gmra.mxu0 %v5399
      %v6104 = vpop.f32.mrf.mxu0
      %v6105 = vadd.f32 %v6008, %v6104
      %v6106 = vpop.f32.mrf.mxu0
      %v6107 = vpop.f32.mrf.mxu0
      %v6108 = vadd.f32 %v6011, %v6107
      %v6109 = vpop.f32.mrf.mxu0
      %6110 = vmatprep.mubr.bf16.mxu0 %v5409
      %6111 = vmatmul.mubr.bf16.gmra.mxu0 %v5408
      %v6112 = vpop.f32.mrf.mxu0
      %v6113 = vadd.f32 %v6016, %v6112
      %v6114 = vpop.f32.mrf.mxu0
      %v6115 = vpop.f32.mrf.mxu0
      %v6116 = vadd.f32 %v6019, %v6115
      %v6117 = vpop.f32.mrf.mxu0
      %6118 = vmatprep.mubr.bf16.mxu0 %v5418
      %6119 = vmatmul.mubr.bf16.gmra.mxu0 %v5417
      %v6120 = vpop.f32.mrf.mxu0
      %v6121 = vadd.f32 %v6024, %v6120
      %v6122 = vpop.f32.mrf.mxu0
      %v6123 = vpop.f32.mrf.mxu0
      %v6124 = vadd.f32 %v6027, %v6123
      %v6125 = vpop.f32.mrf.mxu0
      %6126 = vmatprep.mubr.bf16.mxu0 %v5427
      %6127 = vmatmul.mubr.bf16.gmra.mxu0 %v5426
      %v6128 = vpop.f32.mrf.mxu0
      %v6129 = vadd.f32 %v6032, %v6128
      %v6130 = vpop.f32.mrf.mxu0
      %v6131 = vpop.f32.mrf.mxu0
      %v6132 = vadd.f32 %v6035, %v6131
      %v6133 = vpop.f32.mrf.mxu0
      %6134 = vmatprep.mubr.bf16.mxu0 %v5436
      %6135 = vmatmul.mubr.bf16.gmra.mxu0 %v5435
      %v6136 = vpop.f32.mrf.mxu0
      %v6137 = vadd.f32 %v6040, %v6136
      %v6138 = vpop.f32.mrf.mxu0
      %v6139 = vpop.f32.mrf.mxu0
      %v6140 = vadd.f32 %v6043, %v6139
      %v6141 = vpop.f32.mrf.mxu0
      %6142 = vmatprep.mubr.bf16.mxu0 %v5445
      %6143 = vmatmul.mubr.bf16.gmra.mxu0 %v5444
      %v6144 = vpop.f32.mrf.mxu0
      %v6145 = vadd.f32 %v6048, %v6144
      %v6146 = vpop.f32.mrf.mxu0
      %v6147 = vpop.f32.mrf.mxu0
      %v6148 = vadd.f32 %v6051, %v6147
      %v6149 = vpop.f32.mrf.mxu0
      %6150 = vmatprep.mubr.bf16.mxu0 %v5454
      %6151 = vmatmul.mubr.bf16.gmra.mxu0 %v5453
      %v6152 = vpop.f32.mrf.mxu0
      %v6153 = vadd.f32 %v6056, %v6152
      %v6154 = vpop.f32.mrf.mxu0
      %v6155 = vpop.f32.mrf.mxu0
      %v6156 = vadd.f32 %v6059, %v6155
      %v6157 = vpop.f32.mrf.mxu0
      %6158 = vmatprep.mubr.bf16.mxu0 %v5463
      %6159 = vmatmul.mubr.bf16.gmra.mxu0 %v5462
      %v6160 = vpop.f32.mrf.mxu0
      %v6161 = vadd.f32 %v6064, %v6160
      %v6162 = vpop.f32.mrf.mxu0
      %v6163 = vpop.f32.mrf.mxu0
      %v6164 = vadd.f32 %v6067, %v6163
      %v6165 = vpop.f32.mrf.mxu0
      %6166 = vdwg.mxu0
      %6167 = vmatprep.subr.bf16.mxu0 0
      %6168 = vmatpush1.bf16.msra.mxu0 %v5868
      %6169 = vmatprep.subr.bf16.mxu0 0
      %6170 = vmatpush1.bf16.msra.mxu0 %v5867
      %6171 = vmatprep.subr.bf16.mxu0 0
      %6172 = vmatpush1.bf16.msra.mxu0 %v5866
      %6173 = vmatprep.subr.bf16.mxu0 0
      %6174 = vmatpush1.bf16.msra.mxu0 %v5865
      %6175 = vmatprep.subr.bf16.mxu0 0
      %6176 = vmatpush1.bf16.msra.mxu0 %v5864
      %6177 = vmatprep.subr.bf16.mxu0 0
      %6178 = vmatpush1.bf16.msra.mxu0 %v5863
      %6179 = vmatprep.subr.bf16.mxu0 0
      %6180 = vmatpush1.bf16.msra.mxu0 %v5862
      %6181 = vmatprep.subr.bf16.mxu0 0
      %6182 = vmatpush1.bf16.msra.mxu0 %v5861
      %6183 = vmatprep.subr.bf16.mxu0 0
      %6184 = vmatpush2.bf16.msra.mxu0 %v5876
      %6185 = vmatprep.subr.bf16.mxu0 0
      %6186 = vmatpush2.bf16.msra.mxu0 %v5875
      %6187 = vmatprep.subr.bf16.mxu0 0
      %6188 = vmatpush2.bf16.msra.mxu0 %v5874
      %6189 = vmatprep.subr.bf16.mxu0 0
      %6190 = vmatpush2.bf16.msra.mxu0 %v5873
      %6191 = vmatprep.subr.bf16.mxu0 0
      %6192 = vmatpush2.bf16.msra.mxu0 %v5872
      %6193 = vmatprep.subr.bf16.mxu0 0
      %6194 = vmatpush2.bf16.msra.mxu0 %v5871
      %6195 = vmatprep.subr.bf16.mxu0 0
      %6196 = vmatpush2.bf16.msra.mxu0 %v5870
      %6197 = vmatprep.subr.bf16.mxu0 0
      %6198 = vmatpush2.bf16.msra.mxu0 %v5869
      %6199 = vmatprep.mubr.bf16.mxu0 %v5402
      %6200 = vmatmul.mubr.bf16.gmra.mxu0 %v5401
      %v6201 = vpop.f32.mrf.mxu0
      %v6202 = vadd.f32 %v6105, %v6201
      %v6203 = vpop.f32.mrf.mxu0
      %v6204 = vpop.f32.mrf.mxu0
      %v6205 = vadd.f32 %v6108, %v6204
      %v6206 = vpop.f32.mrf.mxu0
      %6207 = vmatprep.mubr.bf16.mxu0 %v5411
      %6208 = vmatmul.mubr.bf16.gmra.mxu0 %v5410
      %v6209 = vpop.f32.mrf.mxu0
      %v6210 = vadd.f32 %v6113, %v6209
      %v6211 = vpop.f32.mrf.mxu0
      %v6212 = vpop.f32.mrf.mxu0
      %v6213 = vadd.f32 %v6116, %v6212
      %v6214 = vpop.f32.mrf.mxu0
      %6215 = vmatprep.mubr.bf16.mxu0 %v5420
      %6216 = vmatmul.mubr.bf16.gmra.mxu0 %v5419
      %v6217 = vpop.f32.mrf.mxu0
      %v6218 = vadd.f32 %v6121, %v6217
      %v6219 = vpop.f32.mrf.mxu0
      %v6220 = vpop.f32.mrf.mxu0
      %v6221 = vadd.f32 %v6124, %v6220
      %v6222 = vpop.f32.mrf.mxu0
      %6223 = vmatprep.mubr.bf16.mxu0 %v5429
      %6224 = vmatmul.mubr.bf16.gmra.mxu0 %v5428
      %v6225 = vpop.f32.mrf.mxu0
      %v6226 = vadd.f32 %v6129, %v6225
      %v6227 = vpop.f32.mrf.mxu0
      %v6228 = vpop.f32.mrf.mxu0
      %v6229 = vadd.f32 %v6132, %v6228
      %v6230 = vpop.f32.mrf.mxu0
      %6231 = vmatprep.mubr.bf16.mxu0 %v5438
      %6232 = vmatmul.mubr.bf16.gmra.mxu0 %v5437
      %v6233 = vpop.f32.mrf.mxu0
      %v6234 = vadd.f32 %v6137, %v6233
      %v6235 = vpop.f32.mrf.mxu0
      %v6236 = vpop.f32.mrf.mxu0
      %v6237 = vadd.f32 %v6140, %v6236
      %v6238 = vpop.f32.mrf.mxu0
      %6239 = vmatprep.mubr.bf16.mxu0 %v5447
      %6240 = vmatmul.mubr.bf16.gmra.mxu0 %v5446
      %v6241 = vpop.f32.mrf.mxu0
      %v6242 = vadd.f32 %v6145, %v6241
      %v6243 = vpop.f32.mrf.mxu0
      %v6244 = vpop.f32.mrf.mxu0
      %v6245 = vadd.f32 %v6148, %v6244
      %v6246 = vpop.f32.mrf.mxu0
      %6247 = vmatprep.mubr.bf16.mxu0 %v5456
      %6248 = vmatmul.mubr.bf16.gmra.mxu0 %v5455
      %v6249 = vpop.f32.mrf.mxu0
      %v6250 = vadd.f32 %v6153, %v6249
      %v6251 = vpop.f32.mrf.mxu0
      %v6252 = vpop.f32.mrf.mxu0
      %v6253 = vadd.f32 %v6156, %v6252
      %v6254 = vpop.f32.mrf.mxu0
      %6255 = vmatprep.mubr.bf16.mxu0 %v5465
      %6256 = vmatmul.mubr.bf16.gmra.mxu0 %v5464
      %v6257 = vpop.f32.mrf.mxu0
      %v6258 = vadd.f32 %v6161, %v6257
      %v6259 = vpop.f32.mrf.mxu0
      %v6260 = vpop.f32.mrf.mxu0
      %v6261 = vadd.f32 %v6164, %v6260
      %v6262 = vpop.f32.mrf.mxu0
      %6263 = vdwg.mxu0
      %6264 = vmatprep.subr.bf16.mxu0 0
      %6265 = vmatpush1.bf16.msra.mxu0 %v5884
      %6266 = vmatprep.subr.bf16.mxu0 0
      %6267 = vmatpush1.bf16.msra.mxu0 %v5883
      %6268 = vmatprep.subr.bf16.mxu0 0
      %6269 = vmatpush1.bf16.msra.mxu0 %v5882
      %6270 = vmatprep.subr.bf16.mxu0 0
      %6271 = vmatpush1.bf16.msra.mxu0 %v5881
      %6272 = vmatprep.subr.bf16.mxu0 0
      %6273 = vmatpush1.bf16.msra.mxu0 %v5880
      %6274 = vmatprep.subr.bf16.mxu0 0
      %6275 = vmatpush1.bf16.msra.mxu0 %v5879
      %6276 = vmatprep.subr.bf16.mxu0 0
      %6277 = vmatpush1.bf16.msra.mxu0 %v5878
      %6278 = vmatprep.subr.bf16.mxu0 0
      %6279 = vmatpush1.bf16.msra.mxu0 %v5877
      %6280 = vmatprep.subr.bf16.mxu0 0
      %6281 = vmatpush2.bf16.msra.mxu0 %v5892
      %6282 = vmatprep.subr.bf16.mxu0 0
      %6283 = vmatpush2.bf16.msra.mxu0 %v5891
      %6284 = vmatprep.subr.bf16.mxu0 0
      %6285 = vmatpush2.bf16.msra.mxu0 %v5890
      %6286 = vmatprep.subr.bf16.mxu0 0
      %6287 = vmatpush2.bf16.msra.mxu0 %v5889
      %6288 = vmatprep.subr.bf16.mxu0 0
      %6289 = vmatpush2.bf16.msra.mxu0 %v5888
      %6290 = vmatprep.subr.bf16.mxu0 0
      %6291 = vmatpush2.bf16.msra.mxu0 %v5887
      %6292 = vmatprep.subr.bf16.mxu0 0
      %6293 = vmatpush2.bf16.msra.mxu0 %v5886
      %6294 = vmatprep.subr.bf16.mxu0 0
      %6295 = vmatpush2.bf16.msra.mxu0 %v5885
      %6296 = vmatprep.mubr.bf16.mxu0 %v5404
      %6297 = vmatmul.mubr.bf16.gmra.mxu0 %v5403
      %v6298 = vpop.f32.mrf.mxu0
      %v6299 = vadd.f32 %v6202, %v6298
      %v6300 = vpop.f32.mrf.mxu0
      %v6301 = vpop.f32.mrf.mxu0
      %v6302 = vadd.f32 %v6205, %v6301
      %v6303 = vpop.f32.mrf.mxu0
      %6304 = vmatprep.mubr.bf16.mxu0 %v5413
      %6305 = vmatmul.mubr.bf16.gmra.mxu0 %v5412
      %v6306 = vpop.f32.mrf.mxu0
      %v6307 = vadd.f32 %v6210, %v6306
      %v6308 = vpop.f32.mrf.mxu0
      %v6309 = vpop.f32.mrf.mxu0
      %v6310 = vadd.f32 %v6213, %v6309
      %v6311 = vpop.f32.mrf.mxu0
      %6312 = vmatprep.mubr.bf16.mxu0 %v5422
      %6313 = vmatmul.mubr.bf16.gmra.mxu0 %v5421
      %v6314 = vpop.f32.mrf.mxu0
      %v6315 = vadd.f32 %v6218, %v6314
      %v6316 = vpop.f32.mrf.mxu0
      %v6317 = vpop.f32.mrf.mxu0
      %v6318 = vadd.f32 %v6221, %v6317
      %v6319 = vpop.f32.mrf.mxu0
      %6320 = vmatprep.mubr.bf16.mxu0 %v5431
      %6321 = vmatmul.mubr.bf16.gmra.mxu0 %v5430
      %v6322 = vpop.f32.mrf.mxu0
      %v6323 = vadd.f32 %v6226, %v6322
      %v6324 = vpop.f32.mrf.mxu0
      %v6325 = vpop.f32.mrf.mxu0
      %v6326 = vadd.f32 %v6229, %v6325
      %v6327 = vpop.f32.mrf.mxu0
      %6328 = vmatprep.mubr.bf16.mxu0 %v5440
      %6329 = vmatmul.mubr.bf16.gmra.mxu0 %v5439
      %v6330 = vpop.f32.mrf.mxu0
      %v6331 = vadd.f32 %v6234, %v6330
      %v6332 = vpop.f32.mrf.mxu0
      %v6333 = vpop.f32.mrf.mxu0
      %v6334 = vadd.f32 %v6237, %v6333
      %v6335 = vpop.f32.mrf.mxu0
      %6336 = vmatprep.mubr.bf16.mxu0 %v5449
      %6337 = vmatmul.mubr.bf16.gmra.mxu0 %v5448
      %v6338 = vpop.f32.mrf.mxu0
      %v6339 = vadd.f32 %v6242, %v6338
      %v6340 = vpop.f32.mrf.mxu0
      %v6341 = vpop.f32.mrf.mxu0
      %v6342 = vadd.f32 %v6245, %v6341
      %v6343 = vpop.f32.mrf.mxu0
      %6344 = vmatprep.mubr.bf16.mxu0 %v5458
      %6345 = vmatmul.mubr.bf16.gmra.mxu0 %v5457
      %v6346 = vpop.f32.mrf.mxu0
      %v6347 = vadd.f32 %v6250, %v6346
      %v6348 = vpop.f32.mrf.mxu0
      %v6349 = vpop.f32.mrf.mxu0
      %v6350 = vadd.f32 %v6253, %v6349
      %v6351 = vpop.f32.mrf.mxu0
      %6352 = vmatprep.mubr.bf16.mxu0 %v5467
      %6353 = vmatmul.mubr.bf16.gmra.mxu0 %v5466
      %v6354 = vpop.f32.mrf.mxu0
      %v6355 = vadd.f32 %v6258, %v6354
      %v6356 = vpop.f32.mrf.mxu0
      %v6357 = vpop.f32.mrf.mxu0
      %v6358 = vadd.f32 %v6261, %v6357
      %v6359 = vpop.f32.mrf.mxu0
      %6360 = vdwg.mxu0
      %6361 = vmatprep.subr.bf16.mxu0 0
      %6362 = vmatpush1.bf16.msra.mxu0 %v5900
      %6363 = vmatprep.subr.bf16.mxu0 0
      %6364 = vmatpush1.bf16.msra.mxu0 %v5899
      %6365 = vmatprep.subr.bf16.mxu0 0
      %6366 = vmatpush1.bf16.msra.mxu0 %v5898
      %6367 = vmatprep.subr.bf16.mxu0 0
      %6368 = vmatpush1.bf16.msra.mxu0 %v5897
      %6369 = vmatprep.subr.bf16.mxu0 0
      %6370 = vmatpush1.bf16.msra.mxu0 %v5896
      %6371 = vmatprep.subr.bf16.mxu0 0
      %6372 = vmatpush1.bf16.msra.mxu0 %v5895
      %6373 = vmatprep.subr.bf16.mxu0 0
      %6374 = vmatpush1.bf16.msra.mxu0 %v5894
      %6375 = vmatprep.subr.bf16.mxu0 0
      %6376 = vmatpush1.bf16.msra.mxu0 %v5893
      %6377 = vmatprep.subr.bf16.mxu0 0
      %6378 = vmatpush2.bf16.msra.mxu0 0
      %6379 = vmatprep.subr.bf16.mxu0 0
      %6380 = vmatpush2.bf16.msra.mxu0 0
      %6381 = vmatprep.subr.bf16.mxu0 0
      %6382 = vmatpush2.bf16.msra.mxu0 0
      %6383 = vmatprep.subr.bf16.mxu0 0
      %6384 = vmatpush2.bf16.msra.mxu0 0
      %6385 = vmatprep.subr.bf16.mxu0 0
      %6386 = vmatpush2.bf16.msra.mxu0 0
      %6387 = vmatprep.subr.bf16.mxu0 0
      %6388 = vmatpush2.bf16.msra.mxu0 0
      %6389 = vmatprep.subr.bf16.mxu0 0
      %6390 = vmatpush2.bf16.msra.mxu0 0
      %6391 = vmatprep.subr.bf16.mxu0 0
      %6392 = vmatpush2.bf16.msra.mxu0 0
      %6393 = vmatprep.mubr.bf16.mxu0 0
      %6394 = vmatmul.mubr.bf16.gmra.mxu0 %v5405
      %v6395 = vpop.f32.mrf.mxu0
      %v6396 = vadd.f32 %v6299, %v6395
      %v6397 = vpop.f32.mrf.mxu0
      %v6398 = vpop.f32.mrf.mxu0
      %v6399 = vadd.f32 %v6302, %v6398
      %v6400 = vpop.f32.mrf.mxu0
      %6401 = vmatprep.mubr.bf16.mxu0 0
      %6402 = vmatmul.mubr.bf16.gmra.mxu0 %v5414
      %v6403 = vpop.f32.mrf.mxu0
      %v6404 = vadd.f32 %v6307, %v6403
      %v6405 = vpop.f32.mrf.mxu0
      %v6406 = vpop.f32.mrf.mxu0
      %v6407 = vadd.f32 %v6310, %v6406
      %v6408 = vpop.f32.mrf.mxu0
      %6409 = vmatprep.mubr.bf16.mxu0 0
      %6410 = vmatmul.mubr.bf16.gmra.mxu0 %v5423
      %v6411 = vpop.f32.mrf.mxu0
      %v6412 = vadd.f32 %v6315, %v6411
      %v6413 = vpop.f32.mrf.mxu0
      %v6414 = vpop.f32.mrf.mxu0
      %v6415 = vadd.f32 %v6318, %v6414
      %v6416 = vpop.f32.mrf.mxu0
      %6417 = vmatprep.mubr.bf16.mxu0 0
      %6418 = vmatmul.mubr.bf16.gmra.mxu0 %v5432
      %v6419 = vpop.f32.mrf.mxu0
      %v6420 = vadd.f32 %v6323, %v6419
      %v6421 = vpop.f32.mrf.mxu0
      %v6422 = vpop.f32.mrf.mxu0
      %v6423 = vadd.f32 %v6326, %v6422
      %v6424 = vpop.f32.mrf.mxu0
      %6425 = vmatprep.mubr.bf16.mxu0 0
      %6426 = vmatmul.mubr.bf16.gmra.mxu0 %v5441
      %v6427 = vpop.f32.mrf.mxu0
      %v6428 = vadd.f32 %v6331, %v6427
      %v6429 = vpop.f32.mrf.mxu0
      %v6430 = vpop.f32.mrf.mxu0
      %v6431 = vadd.f32 %v6334, %v6430
      %v6432 = vpop.f32.mrf.mxu0
      %6433 = vmatprep.mubr.bf16.mxu0 0
      %6434 = vmatmul.mubr.bf16.gmra.mxu0 %v5450
      %v6435 = vpop.f32.mrf.mxu0
      %v6436 = vadd.f32 %v6339, %v6435
      %v6437 = vpop.f32.mrf.mxu0
      %v6438 = vpop.f32.mrf.mxu0
      %v6439 = vadd.f32 %v6342, %v6438
      %v6440 = vpop.f32.mrf.mxu0
      %6441 = vmatprep.mubr.bf16.mxu0 0
      %6442 = vmatmul.mubr.bf16.gmra.mxu0 %v5459
      %v6443 = vpop.f32.mrf.mxu0
      %v6444 = vadd.f32 %v6347, %v6443
      %v6445 = vpop.f32.mrf.mxu0
      %v6446 = vpop.f32.mrf.mxu0
      %v6447 = vadd.f32 %v6350, %v6446
      %v6448 = vpop.f32.mrf.mxu0
      %6449 = vmatprep.mubr.bf16.mxu0 0
      %6450 = vmatmul.mubr.bf16.gmra.mxu0 %v5468
      %v6451 = vpop.f32.mrf.mxu0
      %v6452 = vadd.f32 %v6355, %v6451
      %v6453 = vpop.f32.mrf.mxu0
      %v6454 = vpop.f32.mrf.mxu0
      %v6455 = vadd.f32 %v6358, %v6454
      %v6456 = vpop.f32.mrf.mxu0
      %6457 = vdwg.mxu0
      %v6458 = vadd.f32 %v4932, %v6396
      %v6459 = vadd.f32 %v4933, %v6399
      %v6460 = vadd.f32 %v4934, %v6404
      %v6461 = vadd.f32 %v4935, %v6407
      %v6462 = vadd.f32 %v4936, %v6412
      %v6463 = vadd.f32 %v4937, %v6415
      %v6464 = vadd.f32 %v4938, %v6420
      %v6465 = vadd.f32 %v4939, %v6423
      %v6466 = vadd.f32 %v4940, %v6428
      %v6467 = vadd.f32 %v4941, %v6431
      %v6468 = vadd.f32 %v4942, %v6436
      %v6469 = vadd.f32 %v4943, %v6439
      %v6470 = vadd.f32 %v4944, %v6444
      %v6471 = vadd.f32 %v4945, %v6447
      %v6472 = vadd.f32 %v4946, %v6452
      %v6473 = vadd.f32 %v4947, %v6455
      %6474 = vst [vmem:[#allocation3] sm:$0xff] %v6458
      %6475 = vst [vmem:[#allocation3 + $0x8] sm:$0xff] %v6459
      %6476 = vst [vmem:[#allocation3 + $0x10] sm:$0xff] %v6460
      %6477 = vst [vmem:[#allocation3 + $0x18] sm:$0xff] %v6461
      %6478 = vst [vmem:[#allocation3 + $0x20] sm:$0xff] %v6462
      %6479 = vst [vmem:[#allocation3 + $0x28] sm:$0xff] %v6463
      %6480 = vst [vmem:[#allocation3 + $0x30] sm:$0xff] %v6464
      %6481 = vst [vmem:[#allocation3 + $0x38] sm:$0xff] %v6465
      %6482 = vst [vmem:[#allocation3 + $0x40] sm:$0xff] %v6466
      %6483 = vst [vmem:[#allocation3 + $0x48] sm:$0xff] %v6467
      %6484 = vst [vmem:[#allocation3 + $0x50] sm:$0xff] %v6468
      %6485 = vst [vmem:[#allocation3 + $0x58] sm:$0xff] %v6469
      %6486 = vst [vmem:[#allocation3 + $0x60] sm:$0xff] %v6470
      %6487 = vst [vmem:[#allocation3 + $0x68] sm:$0xff] %v6471
      %6488 = vst [vmem:[#allocation3 + $0x70] sm:$0xff] %v6472
      %6489 = vst [vmem:[#allocation3 + $0x78] sm:$0xff] %v6473
      %v6490 = vld [vmem:[#allocation3] sm:$0xff]
      %v6491 = vld [vmem:[#allocation3 + $0x8] sm:$0xff]
      %v6492 = vld [vmem:[#allocation3 + $0x10] sm:$0xff]
      %v6493 = vld [vmem:[#allocation3 + $0x18] sm:$0xff]
      %v6494 = vld [vmem:[#allocation3 + $0x20] sm:$0xff]
      %v6495 = vld [vmem:[#allocation3 + $0x28] sm:$0xff]
      %v6496 = vld [vmem:[#allocation3 + $0x30] sm:$0xff]
      %v6497 = vld [vmem:[#allocation3 + $0x38] sm:$0xff]
      %v6498 = vld [vmem:[#allocation3 + $0x40] sm:$0xff]
      %v6499 = vld [vmem:[#allocation3 + $0x48] sm:$0xff]
      %v6500 = vld [vmem:[#allocation3 + $0x50] sm:$0xff]
      %v6501 = vld [vmem:[#allocation3 + $0x58] sm:$0xff]
      %v6502 = vld [vmem:[#allocation3 + $0x60] sm:$0xff]
      %v6503 = vld [vmem:[#allocation3 + $0x68] sm:$0xff]
      %v6504 = vld [vmem:[#allocation3 + $0x70] sm:$0xff]
      %v6505 = vld [vmem:[#allocation3 + $0x78] sm:$0xff]
      %v6506 = vmax.f32 %v6490, 0.0
      %v6507 = vmax.f32 %v6491, 0.0
      %v6508 = vmax.f32 %v6492, 0.0
      %v6509 = vmax.f32 %v6493, 0.0
      %v6510 = vmax.f32 %v6494, 0.0
      %v6511 = vmax.f32 %v6495, 0.0
      %v6512 = vmax.f32 %v6496, 0.0
      %v6513 = vmax.f32 %v6497, 0.0
      %v6514 = vmax.f32 %v6498, 0.0
      %v6515 = vmax.f32 %v6499, 0.0
      %v6516 = vmax.f32 %v6500, 0.0
      %v6517 = vmax.f32 %v6501, 0.0
      %v6518 = vmax.f32 %v6502, 0.0
      %v6519 = vmax.f32 %v6503, 0.0
      %v6520 = vmax.f32 %v6504, 0.0
      %v6521 = vmax.f32 %v6505, 0.0
      %6522 = vst [vmem:[%s410] sm:$0xff] %v6506
      %6523 = vst [vmem:[%s410 + $0x8] sm:$0xff] %v6507
      %6524 = vst [vmem:[%s410 + $0x10] sm:$0xff] %v6508
      %6525 = vst [vmem:[%s410 + $0x18] sm:$0xff] %v6509
      %6526 = vst [vmem:[%s410 + $0x20] sm:$0xff] %v6510
      %6527 = vst [vmem:[%s410 + $0x28] sm:$0xff] %v6511
      %6528 = vst [vmem:[%s410 + $0x30] sm:$0xff] %v6512
      %6529 = vst [vmem:[%s410 + $0x38] sm:$0xff] %v6513
      %6530 = vst [vmem:[%s410 + $0x40] sm:$0xff] %v6514
      %6531 = vst [vmem:[%s410 + $0x48] sm:$0xff] %v6515
      %6532 = vst [vmem:[%s410 + $0x50] sm:$0xff] %v6516
      %6533 = vst [vmem:[%s410 + $0x58] sm:$0xff] %v6517
      %6534 = vst [vmem:[%s410 + $0x60] sm:$0xff] %v6518
      %6535 = vst [vmem:[%s410 + $0x68] sm:$0xff] %v6519
      %6536 = vst [vmem:[%s410 + $0x70] sm:$0xff] %v6520
      %6537 = vst [vmem:[%s410 + $0x78] sm:$0xff] %v6521
      %p6538 = scmp.lt.s32.totalorder %s21, 1
      %s6539 = scalar_select %p6538, %s21, 1
      %p6540 = scmp.lt.s32.totalorder %s22, 7
      %s6541 = scalar_select %p6540, %s22, 7
      %s6542 = smul.addr %s6541, 16
      %s6543 = smul.addr %s6539, 128
      %s6544 = sadd.s32 %s6542, %s6543
      %s6545 = smul.addr %s6544, 8
      %s6546 = scalar_lea.vmem %s6, %s6545
      // Predicated region
      $region45: #{res3d_block_d.3} parent=43 // pred_check
        %p6547 = pneg %p209
      $region46: #{res3d_block_d.3} parent=43 // pred_check_branch
        %6549 = sbr.rel (%p6547) target = $region48
      $region47: #{res3d_block_d.3} parent=43 // pred_region
        _
      $region48: #{res3d_block_d.3} parent=43 // pred_fallthru
        _
    $region44: #{res3d_block_d.3} parent=5 // pred_fallthru
      _
    %p6550 = scmp.le.s32.totalorder 2, %s12
    // Predicated region
    $region49: #{res3d_block_d.3} parent=5 // pred_check
      %p6551 = pneg %p6550
    $region50: #{res3d_block_d.3} parent=5 // pred_check_branch
      %6553 = sbr.rel (%p6551) target = $region52
    $region51: #{res3d_block_d.3} parent=5 // pred_region
      %s6554 = ssub.s32 %s12, 2
      // Predicated region
      $region53: #{res3d_block_d.3} parent=51 // pred_check
        %p6555 = pneg %p215
      $region54: #{res3d_block_d.3} parent=51 // pred_check_branch
        %6557 = sbr.rel (%p6555) target = $region56
      $region55: #{res3d_block_d.3} parent=51 // pred_region
        %p6558 = scmp.lt.s32.totalorder %s23, 1
        %s6559 = scalar_select %p6558, %s23, 1
        %p6560 = scmp.lt.s32.totalorder %s24, 7
        %s6561 = scalar_select %p6560, %s24, 7
        %s6562 = smul.addr %s6561, 16
        %s6563 = smul.addr %s6559, 128
        %s6564 = sadd.s32 %s6562, %s6563
        %s6565 = smul.addr %s6564, 8
        %s6566 = scalar_lea.vmem %s6, %s6565
      $region56: #{res3d_block_d.3} parent=51 // pred_fallthru
        _
    $region52: #{res3d_block_d.3} parent=5 // pred_fallthru
      _
  $region6: #{res3d_block_d.3} parent=0 // loop_footer
    %s16 = sadd.s32 1, %s12
  $region7: #{res3d_block_d.3} parent=0 // loop_footer_branch
    %11 = sbr.rel target = $region3
  $region8: #{res3d_block_d.3} parent=0 // loop_exit
    _

</llo_original>
